<compile_context>
chip_gen: v7x
topology: tpu7x:2x2x1
jax: 0.10.0
libtpu: 0.0.40
codegen_flags: <defaults>
</compile_context>

<pallas_src>
import math
from collections import namedtuple
from collections.abc import Mapping, Sized
from functools import lru_cache, partial

import jax
import jax.numpy as jnp
import numpy as np
from jax.experimental import pallas as pl
from jax.experimental.pallas import tpu as pltpu

VideoSize = namedtuple("VideoSize", ["T", "H", "W"])

_MASK_VALUE = -1e30  # finite sentinel for masked scores (no -inf -> no NaN)
_M_INIT = -1e28      # running-max init; > _MASK_VALUE so exp(mask - m_init) == 0


# ----------------------------------------------------------------------------
# Chip-generation gating (tile sizes, bf16 EUP availability)
# ----------------------------------------------------------------------------
def _is_pre_v6_tpu():
    try:
        kind = jax.devices()[0].device_kind.lower()
    except Exception:
        return False
    return any(tag in kind for tag in ("v2", "v3", "v4", "v5"))


def _default_tile_prefs():
    if _is_pre_v6_tpu():
        # 128x128 MXUs: 128-multiples already fill the MXU; prefer a larger q
        # tile to raise arithmetic intensity (cuts KV re-fetch HBM traffic).
        return (512, 256, 128, 64, 32, 16), (256, 512, 128, 64, 32, 16)
    # v6e / v7x: 256x256 MXUs -> 256-multiples keep the MXU fully filled.
    return (256, 512, 128, 64, 32, 16), (256, 512, 128, 64, 32, 16)


def _pick_tile(L, dtype, prefs):
    sub = 8 * (4 // max(1, np.dtype(dtype).itemsize))  # 8 f32 / 16 bf16 sublane mult
    for cand in prefs:
        if cand <= L and L % cand == 0 and cand % sub == 0:
            return cand
    return L  # whole-axis block (always layout-legal)


# ----------------------------------------------------------------------------
# Pallas kernel
# ----------------------------------------------------------------------------
def _gna_flash_kernel(
    qid_ref, kvid_ref, flg_ref,                  # scalar prefetch (1-D, SMEM)
    qwin_ref, kcoord_ref, q_ref, k_ref, v_ref,   # inputs (VMEM tiles)
    o_ref,                                       # output (VMEM tile)
    m_scr, l_scr, acc_scr, qs_scr,               # scratch (VMEM)
    *, scale, use_bf16_exp, approx_recip,
):
    del qid_ref, kvid_ref  # only used by the index maps
    s_idx = pl.program_id(2)
    flags = flg_ref[s_idx]
    is_first = (flags & 1) != 0
    is_last = (flags & 2) != 0
    is_full = (flags & 4) != 0

    @pl.when(is_first)
    def _init():
        m_scr[...] = jnp.full_like(m_scr, _M_INIT)
        l_scr[...] = jnp.zeros_like(l_scr)
        acc_scr[...] = jnp.zeros_like(acc_scr)
        # Fold the softmax scale into Q once per q tile (saves a (tq,tkv) f32
        # multiply on every kv step).
        qs_scr[...] = (q_ref[0].astype(jnp.float32) * scale).astype(qs_scr.dtype)

    def scores():
        # native-dtype operands, f32 accumulation on the MXU
        return jax.lax.dot_general(
            qs_scr[...], k_ref[0], (((1,), (1,)), ((), ())),
            preferred_element_type=jnp.float32,
        )  # (tq, tkv) f32

    def online_softmax_update(s):
        m_prev = m_scr[...]                                            # (tq,1)
        m_new = jnp.maximum(m_prev, jnp.max(s, axis=-1, keepdims=True))
        alpha = jnp.exp(m_prev - m_new)
        arg = s - m_new
        if use_bf16_exp:        # bf16 EUP (v6e/v7x): ~2x exp throughput
            p = jnp.exp(arg.astype(jnp.bfloat16))
        else:
            p = jnp.exp(arg)
        l_scr[...] = alpha * l_scr[...] + jnp.sum(
            p, axis=-1, dtype=jnp.float32, keepdims=True)
        pv = jax.lax.dot_general(
            p.astype(v_ref.dtype), v_ref[0], (((1,), (0,)), ((), ())),
            preferred_element_type=jnp.float32,
        )                                                              # (tq,D)
        acc_scr[...] = alpha * acc_scr[...] + pv
        m_scr[...] = m_new

    # FULL blocks (every q in the tile attends to every k in the block) skip the
    # mask entirely.
    @pl.when(is_full)
    def _full_block():
        online_softmax_update(scores())

    @pl.when(jnp.logical_not(is_full))
    def _partial_block():
        s = scores()
        # Host-precomputed per-query window bounds + per-key coords -> the
        # neighbourhood mask is 6 compares + 5 ANDs (no div/mod on the VPU).
        t0 = qwin_ref[:, 0:1]; t1 = qwin_ref[:, 1:2]
        h0 = qwin_ref[:, 2:3]; h1 = qwin_ref[:, 3:4]
        w0 = qwin_ref[:, 4:5]; w1 = qwin_ref[:, 5:6]
        kt = kcoord_ref[0:1, :]; kh = kcoord_ref[1:2, :]; kw = kcoord_ref[2:3, :]
        mask = ((kt >= t0) & (kt < t1)
                & (kh >= h0) & (kh < h1)
                & (kw >= w0) & (kw < w1))
        online_softmax_update(jnp.where(mask, s, _MASK_VALUE))

    @pl.when(is_last)
    def _finalize():
        inv_l = pl.reciprocal(l_scr[...], approx=approx_recip)
        o_ref[0] = (acc_scr[...] * inv_l).astype(o_ref.dtype)


# ----------------------------------------------------------------------------
# Static (shape-only) flattened block-sparse schedule + coordinate tables.
# Single source of truth for both the schedule and the in-kernel mask tables.
# ----------------------------------------------------------------------------
@lru_cache(maxsize=64)
def _build_schedule(T, H, W, window, stride, tq, tkv):
    L = T * H * W
    assert L % tq == 0 and L % tkv == 0
    n_q, n_kv = L // tq, L // tkv

    lin = np.arange(L)
    t = lin // (H * W)
    r = lin % (H * W)
    h, w = r // W, r % W

    def starts(c, n, ksz, st):
        # GNA: each stride-group of queries shares its center member's window;
        # the window is clamped to stay fully inside the feature map.
        center = np.minimum((c // st) * st + (st - 1) // 2, n - 1)
        return np.clip(center - (ksz - 1) // 2, 0, n - ksz)

    s_t = starts(t, T, window[0], stride[0])
    s_h = starts(h, H, window[1], stride[1])
    s_w = starts(w, W, window[2], stride[2])

    # Device-side tables fed through data-dependent index maps.
    qwin = np.stack(
        [s_t, s_t + window[0], s_h, s_h + window[1], s_w, s_w + window[2]],
        axis=1).astype(np.int32)                                    # (L, 6)
    kcoord = np.stack([t, h, w], axis=0).astype(np.int32)           # (3, L)

    qids, kvids, flags = [], [], []
    for i in range(n_q):
        qs = slice(i * tq, (i + 1) * tq)
        kt_lo = int(s_t[qs].min())
        kt_hi = int(s_t[qs].max()) + window[0]
        b_lo = (kt_lo * H * W) // tkv
        b_hi = min(n_kv, -(-(kt_hi * H * W) // tkv))
        steps = []
        for b in range(b_lo, b_hi):
            ks = slice(b * tkv, (b + 1) * tkv)
            valid = (
                (t[ks][None, :] >= s_t[qs][:, None])
                & (t[ks][None, :] < s_t[qs][:, None] + window[0])
                & (h[ks][None, :] >= s_h[qs][:, None])
                & (h[ks][None, :] < s_h[qs][:, None] + window[1])
                & (w[ks][None, :] >= s_w[qs][:, None])
                & (w[ks][None, :] < s_w[qs][:, None] + window[2])
            )
            if valid.any():
                steps.append((b, bool(valid.all())))
        assert steps, f"q tile {i} has no neighbourhood KV blocks (invalid schedule)"
        for j, (b, full) in enumerate(steps):
            f = (1 if j == 0 else 0) | (2 if j == len(steps) - 1 else 0) \
                | (4 if full else 0)
            qids.append(i)
            kvids.append(b)
            flags.append(f)

    return (np.asarray(qids, np.int32), np.asarray(kvids, np.int32),
            np.asarray(flags, np.int32), qwin, kcoord)


# ----------------------------------------------------------------------------
# Wrapper around pallas_call
# ----------------------------------------------------------------------------
def neighborhood_attention_pallas(q, k, v, video_size, window_size, stride,
                                  q_tile=None, kv_tile=None, compute_dtype=None,
                                  kv_buffers=3):
    """q, k, v: (B, L, heads, D); returns (B, L, heads, D)."""
    B, L, Hd, D = q.shape
    T, H, W = (int(x) for x in video_size)
    if L != T * H * W:
        raise ValueError("seqlen / video_size mismatch")
    window = tuple(int(x) for x in window_size)
    strd = tuple(int(x) for x in stride)
    scale = 1.0 / math.sqrt(D)

    # Optional operand downcast (recommended: bf16 when upstream activations are
    # f32 -> ~2-3x MXU throughput and half the K/V HBM bytes). Default keeps the
    # caller's dtype so f32 callers retain full-precision semantics.
    if compute_dtype is not None:
        q, k, v = (x.astype(compute_dtype) for x in (q, k, v))
    dtype = q.dtype

    q_prefs, kv_prefs = _default_tile_prefs()
    tq = int(q_tile) if q_tile is not None else _pick_tile(L, dtype, q_prefs)
    tkv = int(kv_tile) if kv_tile is not None else _pick_tile(L, dtype, kv_prefs)
    if L % tq or L % tkv:
        raise ValueError(f"L={L} must be divisible by q_tile={tq}, kv_tile={tkv}")

    qids, kvids, flags, qwin, kcoord = _build_schedule(T, H, W, window, strd, tq, tkv)
    n_steps = int(qids.shape[0])

    # Keep heads fused in the lane dim: (B,L,Hd,D) -> (B,L,Hd*D) is a free
    # contiguous reshape, so no HBM transpose round-trips for layout glue.
    fuse_heads = (D % 128 == 0) or Hd == 1
    if fuse_heads:
        qf, kf, vf = (x.reshape(B, L, Hd * D) for x in (q, k, v))
        n_b, n_h = B, Hd
    else:
        # TODO(synk): fold this transpose into the surrounding QKV projections.
        qf, kf, vf = (x.transpose(0, 2, 1, 3).reshape(B * Hd, L, D) for x in (q, k, v))
        n_b, n_h = B * Hd, 1

    use_bf16_exp = (dtype == jnp.bfloat16) and not _is_pre_v6_tpu()
    approx_recip = jnp.dtype(dtype).itemsize <= 2   # exact 1/l for f32 outputs

    kernel = partial(_gna_flash_kernel, scale=scale,
                     use_bf16_exp=use_bf16_exp, approx_recip=approx_recip)

    def q_map(b, h, s, qid, kvid, flg):
        return (b, qid[s], h)

    def kv_map(b, h, s, qid, kvid, flg):
        return (b, kvid[s], h)

    def qwin_map(b, h, s, qid, kvid, flg):
        return (qid[s], 0)

    def kc_map(b, h, s, qid, kvid, flg):
        return (0, kvid[s])

    def build_call(n_kv_buffers):
        kv_kwargs = ({"pipeline_mode": pl.Buffered(n_kv_buffers)}
                     if n_kv_buffers and n_kv_buffers > 2 else {})
        grid_spec = pltpu.PrefetchScalarGridSpec(
            num_scalar_prefetch=3,
            grid=(n_b, n_h, n_steps),
            in_specs=[
                pl.BlockSpec((tq, 6), qwin_map),                     # q window bounds
                pl.BlockSpec((3, tkv), kc_map),                      # k coords
                pl.BlockSpec((1, tq, D), q_map),                     # Q
                pl.BlockSpec((1, tkv, D), kv_map, **kv_kwargs),      # K (3-deep)
                pl.BlockSpec((1, tkv, D), kv_map, **kv_kwargs),      # V (3-deep)
            ],
            out_specs=pl.BlockSpec((1, tq, D), q_map),
            scratch_shapes=[
                pltpu.VMEM((tq, 1), jnp.float32),   # running max
                pltpu.VMEM((tq, 1), jnp.float32),   # running denom
                pltpu.VMEM((tq, D), jnp.float32),   # running numerator
                pltpu.VMEM((tq, D), dtype),         # scale-folded Q tile
            ],
        )
        return pl.pallas_call(
            kernel,
            out_shape=jax.ShapeDtypeStruct((n_b, L, n_h * D), dtype),
            grid_spec=grid_spec,
            compiler_params=pltpu.CompilerParams(
                # batch / head axes are independent -> megacore "parallel"
                # (split across v7x's 2 TCs); the flattened active-step axis
                # carries the online-softmax state -> "arbitrary".
                dimension_semantics=("parallel", "parallel", "arbitrary")),
        )

    args = (jnp.asarray(qids), jnp.asarray(kvids), jnp.asarray(flags),
            jnp.asarray(qwin), jnp.asarray(kcoord), qf, kf, vf)
    try:
        out = build_call(kv_buffers)(*args)
    except Exception:
        if not (kv_buffers and kv_buffers > 2):
            raise
        # Older jax without pl.Buffered (or a lowering that rejects the deeper
        # pipeline): fall back to default double buffering.
        out = build_call(2)(*args)

    if fuse_heads:
        return out.reshape(B, L, Hd, D)
    return out.reshape(B, Hd, L, D).transpose(0, 2, 1, 3)


# ----------------------------------------------------------------------------
# Module wrapper replicating the PyTorch forward logic
# ----------------------------------------------------------------------------
class NeighborhoodAttention:
    def __init__(self, gna_parameters, base_attn_op=None):
        if (not isinstance(gna_parameters, Mapping)
                or "window_size" not in gna_parameters
                or "stride" not in gna_parameters):
            raise ValueError("Expected gna_parameters dict with window_size and stride.")
        self.natten_window_size = gna_parameters["window_size"]
        self.natten_stride = gna_parameters["stride"]
        self.natten_base_size = gna_parameters.get("base_size", None)
        if not isinstance(self.natten_window_size, Sized) or len(self.natten_window_size) != 3:
            raise ValueError("window_size must have length 3")
        if ((not isinstance(self.natten_stride, Sized) or len(self.natten_stride) != 3)
                and not isinstance(self.natten_stride, int)):
            raise ValueError("stride must be an int or length-3 iterable")
        if (self.natten_base_size is not None
                and (not isinstance(self.natten_base_size, Sized) or len(self.natten_base_size) != 3)):
            raise ValueError("base_size must be None or length-3 iterable")
        self.base_attn_op = base_attn_op

    def __call__(self, q_B_L_H_D, k_B_L_H_D, v_B_L_H_D, video_size):
        if not q_B_L_H_D.shape == k_B_L_H_D.shape == v_B_L_H_D.shape:
            raise ValueError("QKV shapes must match")
        batch, seqlen, heads, head_dim = q_B_L_H_D.shape
        T, H, W = video_size
        if seqlen != T * H * W:
            raise ValueError("seqlen / video_size mismatch")

        if T > 1:
            input_shape = (T, H, W)
            window_size = tuple(
                w if w > 1 else x for x, w in zip(input_shape, self.natten_window_size)
            )
            stride = (
                tuple(self.natten_stride for _ in range(3))
                if isinstance(self.natten_stride, int)
                else tuple(self.natten_stride)
            )
            if self.natten_base_size is not None:
                base_shape = tuple(
                    b if b > 0 else x for x, b in zip(input_shape, self.natten_base_size)
                )
                scale = tuple(x / b for x, b in zip(input_shape, base_shape))
                scaled_window_size = tuple(
                    min(max(2, round(w * s)), x)
                    for w, s, x in zip(window_size, scale, input_shape)
                )
                scaled_stride = tuple(
                    min(max(1, round(st * s)), w)
                    for w, s, st in zip(scaled_window_size, scale, stride)
                )
                window_size = scaled_window_size
                stride = scaled_stride
            assert all(x >= w for x, w in zip(input_shape, window_size))
            assert all(w >= s for w, s in zip(window_size, stride))
            return neighborhood_attention_pallas(
                q_B_L_H_D, k_B_L_H_D, v_B_L_H_D, (T, H, W), window_size, stride
            )
        elif T == 1:
            if self.base_attn_op is not None:
                return self.base_attn_op(q_B_L_H_D, k_B_L_H_D, v_B_L_H_D)
            # TODO(synk): base_attn_op is an external module in the PyTorch spec; when
            # absent we substitute plain full attention (== full-window neighborhood).
            return neighborhood_attention_pallas(
                q_B_L_H_D, k_B_L_H_D, v_B_L_H_D, (1, H, W), (1, H, W), (1, 1, 1)
            )
        else:
            raise ValueError(f"Invalid dimension T={T!r}.")


# ----------------------------------------------------------------------------
# Pure-JAX dense reference (same GNA semantics) for correctness checks
# ----------------------------------------------------------------------------
def _gna_reference(q, k, v, video_size, window, stride):
    B, L, Hd, D = q.shape
    T, H, W = video_size
    scale = 1.0 / math.sqrt(D)
    idx = jnp.arange(L)
    t, h, w = idx // (H * W), (idx % (H * W)) // W, idx % W

    def axis_mask(c, n, ksz, st):
        center = jnp.minimum((c // st) * st + (st - 1) // 2, n - 1)
        start = jnp.clip(center - (ksz - 1) // 2, 0, n - ksz)
        kc = c[None, :]
        return (kc >= start[:, None]) & (kc < start[:, None] + ksz)

    mask = (axis_mask(t, T, window[0], stride[0])
            & axis_mask(h, H, window[1], stride[1])
            & axis_mask(w, W, window[2], stride[2]))
    s = jnp.einsum("blhd,bmhd->bhlm", q.astype(jnp.float32), k.astype(jnp.float32)) * scale
    s = jnp.where(mask[None, None], s, -jnp.inf)
    p = jax.nn.softmax(s, axis=-1)
    return jnp.einsum("bhlm,bmhd->blhd", p, v.astype(jnp.float32))


if __name__ == "__main__":
    B, heads, D = 1, 2, 128          # D=128 keeps blocks lane-dense (fused-head path)
    T, H, W = 8, 8, 8
    L = T * H * W

    key = jax.random.PRNGKey(0)
    kq, kk, kv = jax.random.split(key, 3)
    q = jax.random.normal(kq, (B, L, heads, D), dtype=jnp.float32)
    k = jax.random.normal(kk, (B, L, heads, D), dtype=jnp.float32)
    v = jax.random.normal(kv, (B, L, heads, D), dtype=jnp.float32)

    # 1) strided GNA through the module wrapper (partial-block mask path, default tiles)
    attn = NeighborhoodAttention({"window_size": (3, 5, 5), "stride": (1, 2, 2)})
    out = jax.block_until_ready(attn(q, k, v, VideoSize(T=T, H=H, W=W)))
    assert out.shape == (B, L, heads, D)
    ref = _gna_reference(q, k, v, (T, H, W), (3, 5, 5), (1, 2, 2))
    np.testing.assert_allclose(np.asarray(out), np.asarray(ref), atol=2e-2, rtol=2e-2)

    # 2) smaller explicit tiles -> more active steps / partial blocks in the schedule
    out_small = jax.block_until_ready(
        neighborhood_attention_pallas(q, k, v, (T, H, W), (3, 5, 5), (1, 2, 2),
                                      q_tile=128, kv_tile=128))
    np.testing.assert_allclose(np.asarray(out_small), np.asarray(ref), atol=2e-2, rtol=2e-2)

    # 3) full-window config -> every KV block is FULL (unmasked fast path)
    T2, H2, W2 = 2, 16, 16
    L2 = T2 * H2 * W2
    q2 = jax.random.normal(jax.random.PRNGKey(1), (B, L2, heads, D), dtype=jnp.float32)
    k2 = jax.random.normal(jax.random.PRNGKey(2), (B, L2, heads, D), dtype=jnp.float32)
    v2 = jax.random.normal(jax.random.PRNGKey(3), (B, L2, heads, D), dtype=jnp.float32)
    attn_full = NeighborhoodAttention({"window_size": (2, 16, 16), "stride": 1})
    out2 = jax.block_until_ready(attn_full(q2, k2, v2, VideoSize(T=T2, H=H2, W=W2)))
    ref2 = _gna_reference(q2, k2, v2, (T2, H2, W2), (2, 16, 16), (1, 1, 1))
    np.testing.assert_allclose(np.asarray(out2), np.asarray(ref2), atol=2e-2, rtol=2e-2)

    # 4) bf16 inputs: MXU-native operands, bf16 exp on v6e/v7x, f32 accumulation
    qb, kb, vb = (x.astype(jnp.bfloat16) for x in (q, k, v))
    out_bf = jax.block_until_ready(attn(qb, kb, vb, VideoSize(T=T, H=H, W=W)))
    ref_bf = _gna_reference(qb, kb, vb, (T, H, W), (3, 5, 5), (1, 2, 2))
    assert bool(jnp.all(jnp.isfinite(out_bf.astype(jnp.float32))))
    np.testing.assert_allclose(np.asarray(out_bf, dtype=np.float32), np.asarray(ref_bf),
                               atol=2e-1, rtol=2e-1)

    print("KERNEL_OK")
</pallas_src>

<mosaic_0001>
module attributes {stable_mosaic.version = 11 : i64} {
  func.func @_gna_flash_kernel(%arg0: i32, %arg1: i32, %arg2: i32, %arg3: memref<4xi32, #tpu.memory_space<smem>>, %arg4: memref<4xi32, #tpu.memory_space<smem>>, %arg5: memref<4xi32, #tpu.memory_space<smem>>, %arg6: memref<256x6xi32, #tpu.memory_space<vmem>>, %arg7: memref<3x256xi32, #tpu.memory_space<vmem>>, %arg8: memref<1x256x128xf32, #tpu.memory_space<vmem>>, %arg9: memref<1x256x128xf32, #tpu.memory_space<vmem>>, %arg10: memref<1x256x128xf32, #tpu.memory_space<vmem>>, %arg11: memref<1x256x128xf32, #tpu.memory_space<vmem>>, %arg12: memref<256x1xf32, #tpu.memory_space<vmem>>, %arg13: memref<256x1xf32, #tpu.memory_space<vmem>>, %arg14: memref<256x128xf32, #tpu.memory_space<vmem>>, %arg15: memref<256x128xf32, #tpu.memory_space<vmem>>) attributes {dimension_semantics = [#tpu.dimension_semantics<parallel>, #tpu.dimension_semantics<parallel>, #tpu.dimension_semantics<arbitrary>], iteration_bounds = array<i64: 1, 2, 4>, scalar_prefetch = 3 : i64, scratch_operands = 4 : i64, tpu.core_type = #tpu.core_type<tc>, window_params = [{transform_indices = @transform_0, window_bounds = array<i64: 256, 6>}, {transform_indices = @transform_1, window_bounds = array<i64: 3, 256>}, {transform_indices = @transform_2, window_bounds = array<i64: 1, 256, 128>}, {transform_indices = @transform_3, window_bounds = array<i64: 1, 256, 128>}, {transform_indices = @transform_4, window_bounds = array<i64: 1, 256, 128>}, {transform_indices = @transform_5, window_bounds = array<i64: 1, 256, 128>}]} {
    %0 = arith.index_cast %arg2 : i32 to index
    %1 = memref.load %arg5[%0] : memref<4xi32, #tpu.memory_space<smem>>
    %c1_i32 = arith.constant 1 : i32
    %2 = arith.andi %1, %c1_i32 : i32
    %c0_i32 = arith.constant 0 : i32
    %3 = arith.cmpi ne, %2, %c0_i32 : i32
    %c2_i32 = arith.constant 2 : i32
    %4 = arith.andi %1, %c2_i32 : i32
    %c0_i32_0 = arith.constant 0 : i32
    %5 = arith.cmpi ne, %4, %c0_i32_0 : i32
    %c4_i32 = arith.constant 4 : i32
    %6 = arith.andi %1, %c4_i32 : i32
    %c0_i32_1 = arith.constant 0 : i32
    %7 = arith.cmpi ne, %6, %c0_i32_1 : i32
    %8 = arith.extui %3 : i1 to i32
    %c0_i32_2 = arith.constant 0 : i32
    %9 = arith.cmpi ne, %8, %c0_i32_2 : i32
    scf.if %9 {
      %cst = arith.constant -9.99999944E+27 : f32
      %17 = vector.broadcast %cst : f32 to vector<256x1xf32>
      %c0 = arith.constant 0 : index
      %c0_6 = arith.constant 0 : index
      %18 = vector.load %arg12[%c0, %c0_6] : memref<256x1xf32, #tpu.memory_space<vmem>>, vector<256x1xf32>
      tpu.vector_store %arg12[%c0, %c0_6], %17 {strides = array<i32>} : memref<256x1xf32, #tpu.memory_space<vmem>>, vector<256x1xf32>,
      %cst_7 = arith.constant 0.000000e+00 : f32
      %19 = vector.broadcast %cst_7 : f32 to vector<256x1xf32>
      %c0_8 = arith.constant 0 : index
      %c0_9 = arith.constant 0 : index
      %20 = vector.load %arg13[%c0_8, %c0_9] : memref<256x1xf32, #tpu.memory_space<vmem>>, vector<256x1xf32>
      tpu.vector_store %arg13[%c0_8, %c0_9], %19 {strides = array<i32>} : memref<256x1xf32, #tpu.memory_space<vmem>>, vector<256x1xf32>,
      %cst_10 = arith.constant 0.000000e+00 : f32
      %21 = vector.broadcast %cst_10 : f32 to vector<256x128xf32>
      %c0_11 = arith.constant 0 : index
      %c0_12 = arith.constant 0 : index
      %22 = vector.load %arg14[%c0_11, %c0_12] : memref<256x128xf32, #tpu.memory_space<vmem>>, vector<256x128xf32>
      tpu.vector_store %arg14[%c0_11, %c0_12], %21 {strides = array<i32>} : memref<256x128xf32, #tpu.memory_space<vmem>>, vector<256x128xf32>,
      %c0_13 = arith.constant 0 : index
      %c0_14 = arith.constant 0 : index
      %c0_15 = arith.constant 0 : index
      %23 = vector.load %arg8[%c0_13, %c0_14, %c0_15] : memref<1x256x128xf32, #tpu.memory_space<vmem>>, vector<1x256x128xf32>
      %24 = vector.shape_cast %23 : vector<1x256x128xf32> to vector<256x128xf32>
      %cst_16 = arith.constant 0.0883883461 : f32
      %25 = vector.broadcast %cst_16 : f32 to vector<256x128xf32>
      %26 = arith.mulf %24, %25 : vector<256x128xf32>
      %c0_17 = arith.constant 0 : index
      %c0_18 = arith.constant 0 : index
      %27 = vector.load %arg15[%c0_17, %c0_18] : memref<256x128xf32, #tpu.memory_space<vmem>>, vector<256x128xf32>
      tpu.vector_store %arg15[%c0_17, %c0_18], %26 {strides = array<i32>} : memref<256x128xf32, #tpu.memory_space<vmem>>, vector<256x128xf32>,
    } else {
    }
    %10 = arith.extui %7 : i1 to i32
    %c0_i32_3 = arith.constant 0 : i32
    %11 = arith.cmpi ne, %10, %c0_i32_3 : i32
    scf.if %11 {
      %c0 = arith.constant 0 : index
      %c0_6 = arith.constant 0 : index
      %17 = vector.load %arg15[%c0, %c0_6] : memref<256x128xf32, #tpu.memory_space<vmem>>, vector<256x128xf32>
      %c0_7 = arith.constant 0 : index
      %c0_8 = arith.constant 0 : index
      %c0_9 = arith.constant 0 : index
      %18 = vector.load %arg9[%c0_7, %c0_8, %c0_9] : memref<1x256x128xf32, #tpu.memory_space<vmem>>, vector<1x256x128xf32>
      %19 = vector.shape_cast %18 : vector<1x256x128xf32> to vector<256x128xf32>
      %cst = arith.constant dense<0.000000e+00> : vector<256x256xf32>
      %20 = tpu.matmul %17, %19, %cst {dimension_numbers = #tpu.dot_dimension_numbers<[1], [1], [0], [0], [0, 0, 1, 0], [], []>} : vector<256x128xf32>, vector<256x128xf32>, vector<256x256xf32> -> vector<256x256xf32>
      %c0_10 = arith.constant 0 : index
      %c0_11 = arith.constant 0 : index
      %21 = vector.load %arg12[%c0_10, %c0_11] : memref<256x1xf32, #tpu.memory_space<vmem>>, vector<256x1xf32>
      %cst_12 = arith.constant dense<0xFF800000> : vector<256xf32>
      %22 = vector.multi_reduction <maximumf>, %20, %cst_12 [1] : vector<256x256xf32> to vector<256xf32>
      %23 = vector.shape_cast %22 : vector<256xf32> to vector<256x1xf32>
      %24 = arith.maximumf %21, %23 : vector<256x1xf32>
      %25 = arith.subf %21, %24 : vector<256x1xf32>
      %26 = math.exp %25 : vector<256x1xf32>
      %27 = vector.broadcast %24 : vector<256x1xf32> to vector<256x256xf32>
      %28 = arith.subf %20, %27 : vector<256x256xf32>
      %29 = math.exp %28 : vector<256x256xf32>
      %c0_13 = arith.constant 0 : index
      %c0_14 = arith.constant 0 : index
      %30 = vector.load %arg13[%c0_13, %c0_14] : memref<256x1xf32, #tpu.memory_space<vmem>>, vector<256x1xf32>
      %31 = arith.mulf %26, %30 : vector<256x1xf32>
      %cst_15 = arith.constant dense<0.000000e+00> : vector<256xf32>
      %32 = vector.multi_reduction <add>, %29, %cst_15 [1] : vector<256x256xf32> to vector<256xf32>
      %33 = vector.shape_cast %32 : vector<256xf32> to vector<256x1xf32>
      %34 = arith.addf %31, %33 : vector<256x1xf32>
      %c0_16 = arith.constant 0 : index
      %c0_17 = arith.constant 0 : index
      %35 = vector.load %arg13[%c0_16, %c0_17] : memref<256x1xf32, #tpu.memory_space<vmem>>, vector<256x1xf32>
      tpu.vector_store %arg13[%c0_16, %c0_17], %34 {strides = array<i32>} : memref<256x1xf32, #tpu.memory_space<vmem>>, vector<256x1xf32>,
      %c0_18 = arith.constant 0 : index
      %c0_19 = arith.constant 0 : index
      %c0_20 = arith.constant 0 : index
      %36 = vector.load %arg10[%c0_18, %c0_19, %c0_20] : memref<1x256x128xf32, #tpu.memory_space<vmem>>, vector<1x256x128xf32>
      %37 = vector.shape_cast %36 : vector<1x256x128xf32> to vector<256x128xf32>
      %cst_21 = arith.constant dense<0.000000e+00> : vector<256x128xf32>
      %38 = tpu.matmul %29, %37, %cst_21 {dimension_numbers = #tpu.dot_dimension_numbers<[1], [0], [0], [1], [0, 0, 1, 1], [], []>} : vector<256x256xf32>, vector<256x128xf32>, vector<256x128xf32> -> vector<256x128xf32>
      %c0_22 = arith.constant 0 : index
      %c0_23 = arith.constant 0 : index
      %39 = vector.load %arg14[%c0_22, %c0_23] : memref<256x128xf32, #tpu.memory_space<vmem>>, vector<256x128xf32>
      %40 = vector.broadcast %26 : vector<256x1xf32> to vector<256x128xf32>
      %41 = arith.mulf %40, %39 : vector<256x128xf32>
      %42 = arith.addf %41, %38 : vector<256x128xf32>
      %c0_24 = arith.constant 0 : index
      %c0_25 = arith.constant 0 : index
      %43 = vector.load %arg14[%c0_24, %c0_25] : memref<256x128xf32, #tpu.memory_space<vmem>>, vector<256x128xf32>
      tpu.vector_store %arg14[%c0_24, %c0_25], %42 {strides = array<i32>} : memref<256x128xf32, #tpu.memory_space<vmem>>, vector<256x128xf32>,
      %c0_26 = arith.constant 0 : index
      %c0_27 = arith.constant 0 : index
      %44 = vector.load %arg12[%c0_26, %c0_27] : memref<256x1xf32, #tpu.memory_space<vmem>>, vector<256x1xf32>
      tpu.vector_store %arg12[%c0_26, %c0_27], %24 {strides = array<i32>} : memref<256x1xf32, #tpu.memory_space<vmem>>, vector<256x1xf32>,
    } else {
    }
    %true = arith.constant true
    %12 = arith.xori %7, %true : i1
    %13 = arith.extui %12 : i1 to i32
    %c0_i32_4 = arith.constant 0 : i32
    %14 = arith.cmpi ne, %13, %c0_i32_4 : i32
    scf.if %14 {
      %c0 = arith.constant 0 : index
      %c0_6 = arith.constant 0 : index
      %17 = vector.load %arg15[%c0, %c0_6] : memref<256x128xf32, #tpu.memory_space<vmem>>, vector<256x128xf32>
      %c0_7 = arith.constant 0 : index
      %c0_8 = arith.constant 0 : index
      %c0_9 = arith.constant 0 : index
      %18 = vector.load %arg9[%c0_7, %c0_8, %c0_9] : memref<1x256x128xf32, #tpu.memory_space<vmem>>, vector<1x256x128xf32>
      %19 = vector.shape_cast %18 : vector<1x256x128xf32> to vector<256x128xf32>
      %cst = arith.constant dense<0.000000e+00> : vector<256x256xf32>
      %20 = tpu.matmul %17, %19, %cst {dimension_numbers = #tpu.dot_dimension_numbers<[1], [1], [0], [0], [0, 0, 1, 0], [], []>} : vector<256x128xf32>, vector<256x128xf32>, vector<256x256xf32> -> vector<256x256xf32>
      %c0_10 = arith.constant 0 : index
      %c0_11 = arith.constant 0 : index
      %21 = vector.load %arg6[%c0_10, %c0_11] : memref<256x6xi32, #tpu.memory_space<vmem>>, vector<256x1xi32>
      %c0_12 = arith.constant 0 : index
      %c1 = arith.constant 1 : index
      %22 = vector.load %arg6[%c0_12, %c1] : memref<256x6xi32, #tpu.memory_space<vmem>>, vector<256x1xi32>
      %c0_13 = arith.constant 0 : index
      %c2 = arith.constant 2 : index
      %23 = vector.load %arg6[%c0_13, %c2] : memref<256x6xi32, #tpu.memory_space<vmem>>, vector<256x1xi32>
      %c0_14 = arith.constant 0 : index
      %c3 = arith.constant 3 : index
      %24 = vector.load %arg6[%c0_14, %c3] : memref<256x6xi32, #tpu.memory_space<vmem>>, vector<256x1xi32>
      %c0_15 = arith.constant 0 : index
      %c4 = arith.constant 4 : index
      %25 = vector.load %arg6[%c0_15, %c4] : memref<256x6xi32, #tpu.memory_space<vmem>>, vector<256x1xi32>
      %c0_16 = arith.constant 0 : index
      %c5 = arith.constant 5 : index
      %26 = vector.load %arg6[%c0_16, %c5] : memref<256x6xi32, #tpu.memory_space<vmem>>, vector<256x1xi32>
      %c0_17 = arith.constant 0 : index
      %c0_18 = arith.constant 0 : index
      %27 = vector.load %arg7[%c0_17, %c0_18] : memref<3x256xi32, #tpu.memory_space<vmem>>, vector<1x256xi32>
      %c1_19 = arith.constant 1 : index
      %c0_20 = arith.constant 0 : index
      %28 = vector.load %arg7[%c1_19, %c0_20] : memref<3x256xi32, #tpu.memory_space<vmem>>, vector<1x256xi32>
      %c2_21 = arith.constant 2 : index
      %c0_22 = arith.constant 0 : index
      %29 = vector.load %arg7[%c2_21, %c0_22] : memref<3x256xi32, #tpu.memory_space<vmem>>, vector<1x256xi32>
      %30 = vector.broadcast %27 : vector<1x256xi32> to vector<256x256xi32>
      %31 = vector.broadcast %21 : vector<256x1xi32> to vector<256x256xi32>
      %32 = arith.cmpi sge, %30, %31 : vector<256x256xi32>
      %33 = vector.broadcast %27 : vector<1x256xi32> to vector<256x256xi32>
      %34 = vector.broadcast %22 : vector<256x1xi32> to vector<256x256xi32>
      %35 = arith.cmpi slt, %33, %34 : vector<256x256xi32>
      %36 = arith.andi %32, %35 : vector<256x256xi1>
      %37 = vector.broadcast %28 : vector<1x256xi32> to vector<256x256xi32>
      %38 = vector.broadcast %23 : vector<256x1xi32> to vector<256x256xi32>
      %39 = arith.cmpi sge, %37, %38 : vector<256x256xi32>
      %40 = arith.andi %36, %39 : vector<256x256xi1>
      %41 = vector.broadcast %28 : vector<1x256xi32> to vector<256x256xi32>
      %42 = vector.broadcast %24 : vector<256x1xi32> to vector<256x256xi32>
      %43 = arith.cmpi slt, %41, %42 : vector<256x256xi32>
      %44 = arith.andi %40, %43 : vector<256x256xi1>
      %45 = vector.broadcast %29 : vector<1x256xi32> to vector<256x256xi32>
      %46 = vector.broadcast %25 : vector<256x1xi32> to vector<256x256xi32>
      %47 = arith.cmpi sge, %45, %46 : vector<256x256xi32>
      %48 = arith.andi %44, %47 : vector<256x256xi1>
      %49 = vector.broadcast %29 : vector<1x256xi32> to vector<256x256xi32>
      %50 = vector.broadcast %26 : vector<256x1xi32> to vector<256x256xi32>
      %51 = arith.cmpi slt, %49, %50 : vector<256x256xi32>
      %52 = arith.andi %48, %51 : vector<256x256xi1>
      %cst_23 = arith.constant -1.000000e+30 : f32
      %53 = vector.broadcast %cst_23 : f32 to vector<256x256xf32>
      %54 = arith.select %52, %20, %53 : vector<256x256xi1>, vector<256x256xf32>
      %c0_24 = arith.constant 0 : index
      %c0_25 = arith.constant 0 : index
      %55 = vector.load %arg12[%c0_24, %c0_25] : memref<256x1xf32, #tpu.memory_space<vmem>>, vector<256x1xf32>
      %cst_26 = arith.constant dense<0xFF800000> : vector<256xf32>
      %56 = vector.multi_reduction <maximumf>, %54, %cst_26 [1] : vector<256x256xf32> to vector<256xf32>
      %57 = vector.shape_cast %56 : vector<256xf32> to vector<256x1xf32>
      %58 = arith.maximumf %55, %57 : vector<256x1xf32>
      %59 = arith.subf %55, %58 : vector<256x1xf32>
      %60 = math.exp %59 : vector<256x1xf32>
      %61 = vector.broadcast %58 : vector<256x1xf32> to vector<256x256xf32>
      %62 = arith.subf %54, %61 : vector<256x256xf32>
      %63 = math.exp %62 : vector<256x256xf32>
      %c0_27 = arith.constant 0 : index
      %c0_28 = arith.constant 0 : index
      %64 = vector.load %arg13[%c0_27, %c0_28] : memref<256x1xf32, #tpu.memory_space<vmem>>, vector<256x1xf32>
      %65 = arith.mulf %60, %64 : vector<256x1xf32>
      %cst_29 = arith.constant dense<0.000000e+00> : vector<256xf32>
      %66 = vector.multi_reduction <add>, %63, %cst_29 [1] : vector<256x256xf32> to vector<256xf32>
      %67 = vector.shape_cast %66 : vector<256xf32> to vector<256x1xf32>
      %68 = arith.addf %65, %67 : vector<256x1xf32>
      %c0_30 = arith.constant 0 : index
      %c0_31 = arith.constant 0 : index
      %69 = vector.load %arg13[%c0_30, %c0_31] : memref<256x1xf32, #tpu.memory_space<vmem>>, vector<256x1xf32>
      tpu.vector_store %arg13[%c0_30, %c0_31], %68 {strides = array<i32>} : memref<256x1xf32, #tpu.memory_space<vmem>>, vector<256x1xf32>,
      %c0_32 = arith.constant 0 : index
      %c0_33 = arith.constant 0 : index
      %c0_34 = arith.constant 0 : index
      %70 = vector.load %arg10[%c0_32, %c0_33, %c0_34] : memref<1x256x128xf32, #tpu.memory_space<vmem>>, vector<1x256x128xf32>
      %71 = vector.shape_cast %70 : vector<1x256x128xf32> to vector<256x128xf32>
      %cst_35 = arith.constant dense<0.000000e+00> : vector<256x128xf32>
      %72 = tpu.matmul %63, %71, %cst_35 {dimension_numbers = #tpu.dot_dimension_numbers<[1], [0], [0], [1], [0, 0, 1, 1], [], []>} : vector<256x256xf32>, vector<256x128xf32>, vector<256x128xf32> -> vector<256x128xf32>
      %c0_36 = arith.constant 0 : index
      %c0_37 = arith.constant 0 : index
      %73 = vector.load %arg14[%c0_36, %c0_37] : memref<256x128xf32, #tpu.memory_space<vmem>>, vector<256x128xf32>
      %74 = vector.broadcast %60 : vector<256x1xf32> to vector<256x128xf32>
      %75 = arith.mulf %74, %73 : vector<256x128xf32>
      %76 = arith.addf %75, %72 : vector<256x128xf32>
      %c0_38 = arith.constant 0 : index
      %c0_39 = arith.constant 0 : index
      %77 = vector.load %arg14[%c0_38, %c0_39] : memref<256x128xf32, #tpu.memory_space<vmem>>, vector<256x128xf32>
      tpu.vector_store %arg14[%c0_38, %c0_39], %76 {strides = array<i32>} : memref<256x128xf32, #tpu.memory_space<vmem>>, vector<256x128xf32>,
      %c0_40 = arith.constant 0 : index
      %c0_41 = arith.constant 0 : index
      %78 = vector.load %arg12[%c0_40, %c0_41] : memref<256x1xf32, #tpu.memory_space<vmem>>, vector<256x1xf32>
      tpu.vector_store %arg12[%c0_40, %c0_41], %58 {strides = array<i32>} : memref<256x1xf32, #tpu.memory_space<vmem>>, vector<256x1xf32>,
    } else {
    }
    %15 = arith.extui %5 : i1 to i32
    %c0_i32_5 = arith.constant 0 : i32
    %16 = arith.cmpi ne, %15, %c0_i32_5 : i32
    scf.if %16 {
      %c0 = arith.constant 0 : index
      %c0_6 = arith.constant 0 : index
      %17 = vector.load %arg13[%c0, %c0_6] : memref<256x1xf32, #tpu.memory_space<vmem>>, vector<256x1xf32>
      %18 = tpu.reciprocal %17 : vector<256x1xf32> -> vector<256x1xf32>
      %c0_7 = arith.constant 0 : index
      %c0_8 = arith.constant 0 : index
      %19 = vector.load %arg14[%c0_7, %c0_8] : memref<256x128xf32, #tpu.memory_space<vmem>>, vector<256x128xf32>
      %20 = vector.broadcast %18 : vector<256x1xf32> to vector<256x128xf32>
      %21 = arith.mulf %19, %20 : vector<256x128xf32>
      %c0_9 = arith.constant 0 : index
      %c0_10 = arith.constant 0 : index
      %c0_11 = arith.constant 0 : index
      %22 = vector.load %arg11[%c0_9, %c0_10, %c0_11] : memref<1x256x128xf32, #tpu.memory_space<vmem>>, vector<1x256x128xf32>
      %23 = vector.shape_cast %22 : vector<1x256x128xf32> to vector<256x128xf32>
      %24 = vector.shape_cast %21 : vector<256x128xf32> to vector<1x256x128xf32>
      tpu.vector_store %arg11[%c0_9, %c0_10, %c0_11], %24 {strides = array<i32>} : memref<1x256x128xf32, #tpu.memory_space<vmem>>, vector<1x256x128xf32>,
    } else {
    }
    return
  }
  func.func @transform_0(%arg0: i32, %arg1: i32, %arg2: i32, %arg3: memref<4xi32, #tpu.memory_space<smem>>, %arg4: memref<4xi32, #tpu.memory_space<smem>>, %arg5: memref<4xi32, #tpu.memory_space<smem>>) -> (i32, i32) {
    %0 = arith.index_cast %arg2 : i32 to index
    %1 = memref.load %arg3[%0] : memref<4xi32, #tpu.memory_space<smem>>
    %c0_i32 = arith.constant 0 : i32
    %c0_i32_0 = arith.constant 0 : i32
    return %1, %c0_i32 : i32, i32
  }
  func.func @transform_1(%arg0: i32, %arg1: i32, %arg2: i32, %arg3: memref<4xi32, #tpu.memory_space<smem>>, %arg4: memref<4xi32, #tpu.memory_space<smem>>, %arg5: memref<4xi32, #tpu.memory_space<smem>>) -> (i32, i32) {
    %0 = arith.index_cast %arg2 : i32 to index
    %1 = memref.load %arg4[%0] : memref<4xi32, #tpu.memory_space<smem>>
    %c0_i32 = arith.constant 0 : i32
    %c0_i32_0 = arith.constant 0 : i32
    return %c0_i32, %1 : i32, i32
  }
  func.func @transform_2(%arg0: i32, %arg1: i32, %arg2: i32, %arg3: memref<4xi32, #tpu.memory_space<smem>>, %arg4: memref<4xi32, #tpu.memory_space<smem>>, %arg5: memref<4xi32, #tpu.memory_space<smem>>) -> (i32, i32, i32) {
    %0 = arith.index_cast %arg2 : i32 to index
    %1 = memref.load %arg3[%0] : memref<4xi32, #tpu.memory_space<smem>>
    %c0_i32 = arith.constant 0 : i32
    return %arg0, %1, %arg1 : i32, i32, i32
  }
  func.func @transform_3(%arg0: i32, %arg1: i32, %arg2: i32, %arg3: memref<4xi32, #tpu.memory_space<smem>>, %arg4: memref<4xi32, #tpu.memory_space<smem>>, %arg5: memref<4xi32, #tpu.memory_space<smem>>) -> (i32, i32, i32) {
    %0 = arith.index_cast %arg2 : i32 to index
    %1 = memref.load %arg4[%0] : memref<4xi32, #tpu.memory_space<smem>>
    %c0_i32 = arith.constant 0 : i32
    return %arg0, %1, %arg1 : i32, i32, i32
  }
  func.func @transform_4(%arg0: i32, %arg1: i32, %arg2: i32, %arg3: memref<4xi32, #tpu.memory_space<smem>>, %arg4: memref<4xi32, #tpu.memory_space<smem>>, %arg5: memref<4xi32, #tpu.memory_space<smem>>) -> (i32, i32, i32) {
    %0 = arith.index_cast %arg2 : i32 to index
    %1 = memref.load %arg4[%0] : memref<4xi32, #tpu.memory_space<smem>>
    %c0_i32 = arith.constant 0 : i32
    return %arg0, %1, %arg1 : i32, i32, i32
  }
  func.func @transform_5(%arg0: i32, %arg1: i32, %arg2: i32, %arg3: memref<4xi32, #tpu.memory_space<smem>>, %arg4: memref<4xi32, #tpu.memory_space<smem>>, %arg5: memref<4xi32, #tpu.memory_space<smem>>) -> (i32, i32, i32) {
    %0 = arith.index_cast %arg2 : i32 to index
    %1 = memref.load %arg3[%0] : memref<4xi32, #tpu.memory_space<smem>>
    %c0_i32 = arith.constant 0 : i32
    return %arg0, %1, %arg1 : i32, i32, i32
  }
}

</mosaic_0001>

<llo_original>
// kernel: tpu_custom_call.1
$region0: #{tpu_custom_call.1}
  #allocation0 [shape = 'u32[]', space=smem, size = 0x4, offset = 0x4, fixed_abs, tag = 'smem constant byte address 0x4 - core index']
  #allocation1 [shape = 'u32[144,128]{1,0:T(1,128)}', space=vmem, size = 0x12000, scoped, tag = 'internal scratch']
  #allocation2 [shape = 'f32[256,1]{1,0:T(8,128)}', space=vmem, size = 0x20000, scoped, tag = 'scratch operand']
  #allocation3 [shape = 'f32[256,1]{1,0:T(8,128)}', space=vmem, size = 0x20000, scoped, tag = 'scratch operand']
  #allocation4 [shape = 'f32[256,128]{1,0:T(8,128)}', space=vmem, size = 0x20000, scoped, tag = 'scratch operand']
  #allocation5 [shape = 'f32[256,128]{1,0:T(8,128)}', space=vmem, size = 0x20000, scoped, tag = 'scratch operand']
  #allocation6 [shape = 's32[1]{0}', space=sflag, size = 0x4, scoped, tag = 'scoped memory for tpu_custom_call.1']
  #allocation7 [shape = 'u8[512]{0}', space=smem, size = 0x200, scoped, tag = 'prefetched SMEM operand 0']
  #allocation8 [shape = 'u8[512]{0}', space=smem, size = 0x200, scoped, tag = 'prefetched SMEM operand 1']
  #allocation9 [shape = 'u8[512]{0}', space=smem, size = 0x200, scoped, tag = 'prefetched SMEM operand 2']
  %s0 = inlined_call_operand.vmem [shape: s32[4], index: 0, kind: input, shape index: {}]
  %s1 = inlined_call_operand.vmem [shape: s32[4], index: 1, kind: input, shape index: {}]
  %s2 = inlined_call_operand.vmem [shape: s32[4], index: 2, kind: input, shape index: {}]
  %s3 = inlined_call_operand.vmem [shape: s32[512,6], index: 3, kind: input, shape index: {}]
  %s4 = inlined_call_operand.vmem [shape: s32[3,512], index: 4, kind: input, shape index: {}]
  %s5 = inlined_call_operand.hbm [shape: f32[1,512,256], index: 5, kind: input, shape index: {}]
  %s6 = inlined_call_operand.hbm [shape: f32[1,512,256], index: 6, kind: input, shape index: {}]
  %s7 = inlined_call_operand.hbm [shape: f32[1,512,256], index: 7, kind: input, shape index: {}]
  %s8 = inlined_call_operand.hbm [shape: f32[1,512,256], index: 8, kind: output, shape index: {}]
  %s9 = sld [smem:[#allocation0]]
  $region81: #{tpu_custom_call.1} parent=0
    _
  %s11 = ssub.s32 1, %s9
  %s12 = scalar_select 0, %s11, %s9
  %s13 = sshll.u32 %s0, 4
  %s14 = int_to_ptr.vmem [resolvable:$true] %s13
  %16 = dma.vmem_to_smem %s14, 16, [#allocation7], [#allocation6]
  %s17 = sshll.u32 %s1, 4
  %s18 = int_to_ptr.vmem [resolvable:$true] %s17
  %20 = dma.vmem_to_smem %s18, 16, [#allocation8], [#allocation6]
  %s21 = sshll.u32 %s2, 4
  %s22 = int_to_ptr.vmem [resolvable:$true] %s21
  %24 = dma.vmem_to_smem %s22, 16, [#allocation9], [#allocation6]
  %25 = dma.done [#allocation6], 48
  %26 = sfence
  $region1: #{tpu_custom_call.1} parent=0
    #allocation10 [shape = 'u8[262144]{0}', space=vmem, size = 0x40000, scoped, tag = 'input window, operand 5']
    #allocation11 [shape = 's32[2]{0}', space=sflag, size = 0x8, scoped, tag = 'scoped memory for tpu_custom_call.1']
    #allocation12 [shape = 's32[2]{0}', space=sflag, size = 0x8, scoped, tag = 'scoped memory for tpu_custom_call.1']
    #allocation13 [shape = 'u8[262144]{0}', space=vmem, size = 0x40000, scoped, tag = 'input window, operand 6']
    #allocation14 [shape = 's32[2]{0}', space=sflag, size = 0x8, scoped, tag = 'scoped memory for tpu_custom_call.1']
    #allocation15 [shape = 'u8[262144]{0}', space=vmem, size = 0x40000, scoped, tag = 'input window, operand 7']
    #allocation16 [shape = 'u8[262144]{0}', space=vmem, size = 0x40000, scoped, tag = 'output window, operand 0']
    %27 = vsyncpa [#allocation11], 0
    %s28 = scalar_lea.sflag [#allocation11], 1
    %29 = vsyncpa %s28, 0
    %30 = vsyncpa [#allocation14], 0
    %s31 = scalar_lea.sflag [#allocation14], 1
    %32 = vsyncpa %s31, 0
    %33 = vsyncpa [#allocation12], 0
    %s34 = scalar_lea.sflag [#allocation12], 1
    %35 = vsyncpa %s34, 0
    loop: start=0, step=1, limit=10
    $region2: #{tpu_custom_call.1} parent=1 // loop_pre_header
      _
    $region3: #{tpu_custom_call.1} parent=1 // loop_header
      %s37 = sphi 0, %s41
      %p38 = scmp.ge.s32.totalorder %s37, 10
      %s44 = sphi 0, %s63
      %s45 = sphi 0, %s59
      %s46 = sphi 0, %s55
      %s47 = sphi 0, %s44
      %s48 = sphi 0, %s45
      %s49 = sphi 0, %s46
      %s50 = sphi 0, %s47
      %s51 = sphi 0, %s48
      %s52 = sphi 0, %s49
      %s68 = sphi 0, %s70
      %s71 = sphi 0, %s68
      %s72 = sphi 0, %s71
      %s88 = sphi 0, %s72
      %s96 = sphi 0, %s98
      %s99 = sphi 0, %s96
      %s100 = sphi 0, %s99
      %s116 = sphi 0, %s100
      %s128 = sphi 0, %s130
      %s131 = sphi 0, %s128
      %s132 = sphi 0, %s131
      %s148 = sphi 0, %s132
      %s160 = sphi 0, %s162
      %s163 = sphi 0, %s160
      %s164 = sphi 0, %s163
      %s180 = sphi 0, %s164
      %s192 = sphi 0, %s194
      %s195 = sphi 0, %s192
      %s196 = sphi 0, %s195
      %s212 = sphi 0, %s196
      %s224 = sphi 0, %s226
      %s227 = sphi 0, %s224
      %s228 = sphi 0, %s227
      %s244 = sphi 0, %s228
    $region4: #{tpu_custom_call.1} parent=1 // loop_header_branch
      %40 = sbr.rel (%p38) target = $region8
    $region5: #{tpu_custom_call.1} parent=1 // loop_body
      %s42 = ssub.s32 %s37, 1
      %s43 = ssub.s32 %s37, 2
      %s53 = sadd.s32 1, %s46
      %p54 = scmp.ge.s32.totalorder %s53, 4
      %s55 = scalar_select %p54, 0, %s53
      %s56 = sadd.s32 1, %s45
      %s57 = scalar_select %p54, %s56, %s45
      %p58 = scmp.ge.s32.totalorder %s57, 2
      %s59 = scalar_select %p58, 0, %s57
      %s60 = sadd.s32 1, %s44
      %s61 = scalar_select %p58, %s60, %s44
      %p62 = scmp.ge.s32.totalorder %s61, 1
      %s63 = scalar_select %p62, 0, %s61
      %s64 = sld [smem:[#allocation7 + %s46]]
      %s65 = sld [smem:[#allocation7 + %s55]]
      %s66 = ssub.s32 %s64, %s65
      %p67 = scmp.eq.s32.totalorder %s66, 0
      %s69 = sadd.s32 %s68, 1
      %s70 = scalar_select %p67, %s68, %s69
      %p73 = pneg %p67
      %p74 = scmp.eq.s32.totalorder %s37, 7
      %p75 = por %p73, %p74
      %p76 = scmp.ne.s32.totalorder %s68, %s71
      %p77 = scmp.eq.s32.totalorder %s37, 0
      %p78 = por %p76, %p77
      %p79 = scmp.ne.s32.totalorder %s68, %s71
      %p80 = scmp.eq.s32.totalorder %s42, 7
      %p81 = por %p79, %p80
      %p82 = scmp.ne.s32.totalorder %s71, %s72
      %p83 = scmp.eq.s32.totalorder %s42, 0
      %p84 = por %p82, %p83
      %p85 = scmp.ne.s32.totalorder %s71, %s72
      %p86 = scmp.eq.s32.totalorder %s43, 7
      %p87 = por %p85, %p86
      %p89 = scmp.ne.s32.totalorder %s72, %s88
      %p90 = scmp.eq.s32.totalorder %s43, 0
      %p91 = por %p89, %p90
      %s92 = sld [smem:[#allocation8 + %s46]]
      %s93 = sld [smem:[#allocation8 + %s55]]
      %s94 = ssub.s32 %s92, %s93
      %p95 = scmp.eq.s32.totalorder %s94, 0
      %s97 = sadd.s32 %s96, 1
      %s98 = scalar_select %p95, %s96, %s97
      %p101 = pneg %p95
      %p102 = scmp.eq.s32.totalorder %s37, 7
      %p103 = por %p101, %p102
      %p104 = scmp.ne.s32.totalorder %s96, %s99
      %p105 = scmp.eq.s32.totalorder %s37, 0
      %p106 = por %p104, %p105
      %p107 = scmp.ne.s32.totalorder %s96, %s99
      %p108 = scmp.eq.s32.totalorder %s42, 7
      %p109 = por %p107, %p108
      %p110 = scmp.ne.s32.totalorder %s99, %s100
      %p111 = scmp.eq.s32.totalorder %s42, 0
      %p112 = por %p110, %p111
      %p113 = scmp.ne.s32.totalorder %s99, %s100
      %p114 = scmp.eq.s32.totalorder %s43, 7
      %p115 = por %p113, %p114
      %p117 = scmp.ne.s32.totalorder %s100, %s116
      %p118 = scmp.eq.s32.totalorder %s43, 0
      %p119 = por %p117, %p118
      %s120 = sld [smem:[#allocation7 + %s46]]
      %s121 = sld [smem:[#allocation7 + %s55]]
      %s122 = ssub.s32 %s44, %s63
      %s123 = ssub.s32 %s120, %s121
      %s124 = sor.u32 %s122, %s123
      %s125 = ssub.s32 %s45, %s59
      %s126 = sor.u32 %s124, %s125
      %p127 = scmp.eq.s32.totalorder %s126, 0
      %s129 = sadd.s32 %s128, 1
      %s130 = scalar_select %p127, %s128, %s129
      %p133 = pneg %p127
      %p134 = scmp.eq.s32.totalorder %s37, 7
      %p135 = por %p133, %p134
      %p136 = scmp.ne.s32.totalorder %s128, %s131
      %p137 = scmp.eq.s32.totalorder %s37, 0
      %p138 = por %p136, %p137
      %p139 = scmp.ne.s32.totalorder %s128, %s131
      %p140 = scmp.eq.s32.totalorder %s42, 7
      %p141 = por %p139, %p140
      %p142 = scmp.ne.s32.totalorder %s131, %s132
      %p143 = scmp.eq.s32.totalorder %s42, 0
      %p144 = por %p142, %p143
      %p145 = scmp.ne.s32.totalorder %s131, %s132
      %p146 = scmp.eq.s32.totalorder %s43, 7
      %p147 = por %p145, %p146
      %p149 = scmp.ne.s32.totalorder %s132, %s148
      %p150 = scmp.eq.s32.totalorder %s43, 0
      %p151 = por %p149, %p150
      %s152 = sld [smem:[#allocation8 + %s46]]
      %s153 = sld [smem:[#allocation8 + %s55]]
      %s154 = ssub.s32 %s44, %s63
      %s155 = ssub.s32 %s152, %s153
      %s156 = sor.u32 %s154, %s155
      %s157 = ssub.s32 %s45, %s59
      %s158 = sor.u32 %s156, %s157
      %p159 = scmp.eq.s32.totalorder %s158, 0
      %s161 = sadd.s32 %s160, 1
      %s162 = scalar_select %p159, %s160, %s161
      %p165 = pneg %p159
      %p166 = scmp.eq.s32.totalorder %s37, 7
      %p167 = por %p165, %p166
      %p168 = scmp.ne.s32.totalorder %s160, %s163
      %p169 = scmp.eq.s32.totalorder %s37, 0
      %p170 = por %p168, %p169
      %p171 = scmp.ne.s32.totalorder %s160, %s163
      %p172 = scmp.eq.s32.totalorder %s42, 7
      %p173 = por %p171, %p172
      %p174 = scmp.ne.s32.totalorder %s163, %s164
      %p175 = scmp.eq.s32.totalorder %s42, 0
      %p176 = por %p174, %p175
      %p177 = scmp.ne.s32.totalorder %s163, %s164
      %p178 = scmp.eq.s32.totalorder %s43, 7
      %p179 = por %p177, %p178
      %p181 = scmp.ne.s32.totalorder %s164, %s180
      %p182 = scmp.eq.s32.totalorder %s43, 0
      %p183 = por %p181, %p182
      %s184 = sld [smem:[#allocation8 + %s46]]
      %s185 = sld [smem:[#allocation8 + %s55]]
      %s186 = ssub.s32 %s44, %s63
      %s187 = ssub.s32 %s184, %s185
      %s188 = sor.u32 %s186, %s187
      %s189 = ssub.s32 %s45, %s59
      %s190 = sor.u32 %s188, %s189
      %p191 = scmp.eq.s32.totalorder %s190, 0
      %s193 = sadd.s32 %s192, 1
      %s194 = scalar_select %p191, %s192, %s193
      %p197 = pneg %p191
      %p198 = scmp.eq.s32.totalorder %s37, 7
      %p199 = por %p197, %p198
      %p200 = scmp.ne.s32.totalorder %s192, %s195
      %p201 = scmp.eq.s32.totalorder %s37, 0
      %p202 = por %p200, %p201
      %p203 = scmp.ne.s32.totalorder %s192, %s195
      %p204 = scmp.eq.s32.totalorder %s42, 7
      %p205 = por %p203, %p204
      %p206 = scmp.ne.s32.totalorder %s195, %s196
      %p207 = scmp.eq.s32.totalorder %s42, 0
      %p208 = por %p206, %p207
      %p209 = scmp.ne.s32.totalorder %s195, %s196
      %p210 = scmp.eq.s32.totalorder %s43, 7
      %p211 = por %p209, %p210
      %p213 = scmp.ne.s32.totalorder %s196, %s212
      %p214 = scmp.eq.s32.totalorder %s43, 0
      %p215 = por %p213, %p214
      %s216 = sld [smem:[#allocation7 + %s46]]
      %s217 = sld [smem:[#allocation7 + %s55]]
      %s218 = ssub.s32 %s44, %s63
      %s219 = ssub.s32 %s216, %s217
      %s220 = sor.u32 %s218, %s219
      %s221 = ssub.s32 %s45, %s59
      %s222 = sor.u32 %s220, %s221
      %p223 = scmp.eq.s32.totalorder %s222, 0
      %s225 = sadd.s32 %s224, 1
      %s226 = scalar_select %p223, %s224, %s225
      %p229 = pneg %p223
      %p230 = scmp.eq.s32.totalorder %s37, 7
      %p231 = por %p229, %p230
      %p232 = scmp.ne.s32.totalorder %s224, %s227
      %p233 = scmp.eq.s32.totalorder %s37, 0
      %p234 = por %p232, %p233
      %p235 = scmp.ne.s32.totalorder %s224, %s227
      %p236 = scmp.eq.s32.totalorder %s42, 7
      %p237 = por %p235, %p236
      %p238 = scmp.ne.s32.totalorder %s227, %s228
      %p239 = scmp.eq.s32.totalorder %s42, 0
      %p240 = por %p238, %p239
      %p241 = scmp.ne.s32.totalorder %s227, %s228
      %p242 = scmp.eq.s32.totalorder %s43, 7
      %p243 = por %p241, %p242
      %p245 = scmp.ne.s32.totalorder %s228, %s244
      %p246 = scmp.eq.s32.totalorder %s43, 0
      %p247 = por %p245, %p246
      %p248 = scmp.le.s32.totalorder 1, %s37
      %p249 = scmp.lt.s32.totalorder %s37, 9
      %p250 = pnand %p248, %p249
      %p251 = pneg %p250
      // Predicated region
      $region9: #{tpu_custom_call.1} parent=5 // pred_check
        _
      $region10: #{tpu_custom_call.1} parent=5 // pred_check_branch
        %253 = sbr.rel (%p250) target = $region12
      $region11: #{tpu_custom_call.1} parent=5 // pred_region
        %s254 = ssub.s32 %s37, 1
      $region12: #{tpu_custom_call.1} parent=5 // pred_fallthru
        _
      %p255 = scmp.lt.s32.totalorder %s37, 8
      // Predicated region
      $region13: #{tpu_custom_call.1} parent=5 // pred_check
        %p256 = pneg %p255
      $region14: #{tpu_custom_call.1} parent=5 // pred_check_branch
        %258 = sbr.rel (%p256) target = $region16
      $region15: #{tpu_custom_call.1} parent=5 // pred_region
        // Predicated region
        $region17: #{tpu_custom_call.1} parent=15 // pred_check
          %p259 = pneg %p78
        $region18: #{tpu_custom_call.1} parent=15 // pred_check_branch
          %261 = sbr.rel (%p259) target = $region20
        $region19: #{tpu_custom_call.1} parent=15 // pred_region
          %s262 = sld [smem:[#allocation7 + %s46]]
          %s263 = smul.u32 32, %s262
          %p264 = scmp.lt.s32.totalorder %s263, 63
          %s265 = scalar_select %p264, %s263, 63
          %s266 = smul.addr %s265, 8
          %s267 = scalar_lea.vmem %s3, %s266
          %s268 = sld [smem:[#allocation7 + %s46]]
          %s269 = smul.u32 32, %s268
        $region20: #{tpu_custom_call.1} parent=15 // pred_fallthru
          _
        // Predicated region
        $region21: #{tpu_custom_call.1} parent=15 // pred_check
          %p270 = pneg %p106
        $region22: #{tpu_custom_call.1} parent=15 // pred_check_branch
          %272 = sbr.rel (%p270) target = $region24
        $region23: #{tpu_custom_call.1} parent=15 // pred_region
          %s273 = sld [smem:[#allocation8 + %s46]]
          %s274 = smul.u32 2, %s273
          %p275 = scmp.lt.s32.totalorder %s274, 3
          %s276 = scalar_select %p275, %s274, 3
          %s277 = smul.addr %s276, 4
          %s278 = scalar_lea.vmem %s4, %s277
          %s279 = sld [smem:[#allocation8 + %s46]]
          %s280 = smul.u32 2, %s279
        $region24: #{tpu_custom_call.1} parent=15 // pred_fallthru
          _
        // Predicated region
        $region25: #{tpu_custom_call.1} parent=15 // pred_check
          %p281 = pneg %p138
        $region26: #{tpu_custom_call.1} parent=15 // pred_check_branch
          %283 = sbr.rel (%p281) target = $region28
        $region27: #{tpu_custom_call.1} parent=15 // pred_region
          %s284 = sand.u32 %s128, 1
          %s285 = scalar_lea.sflag [#allocation11], %s284
          %s286 = sand.u32 %s128, 1
          %s287 = smul.addr %s286, 256
          %s288 = scalar_lea.vmem [#allocation10], %s287
          %s289 = sld [smem:[#allocation7 + %s46]]
          %s290 = smul.u32 32, %s289
          %s292 = ssub.s32 4096, 4096
          %293 = vsyncadd %s285, %s292
          %s294 = smul.addr %s290, 2
          %s295 = sadd.s32 %s45, %s294
          %s296 = smul.addr %s44, 128
          %s297 = sadd.s32 %s295, %s296
          %s298 = smul.addr %s297, 128
          %s299 = scalar_lea.hbm %s5, %s298
          %s300 = sshll.u32 %s288, 4
          %s301 = int_to_ptr.vmem [resolvable:$true] %s300
          %306 = dma.hbm_to_vmem [thread:$0]  %s299, 4096, %s301, %s285, 256, 128, 8
        $region28: #{tpu_custom_call.1} parent=15 // pred_fallthru
          _
        // Predicated region
        $region29: #{tpu_custom_call.1} parent=15 // pred_check
          %p307 = pneg %p170
        $region30: #{tpu_custom_call.1} parent=15 // pred_check_branch
          %309 = sbr.rel (%p307) target = $region32
        $region31: #{tpu_custom_call.1} parent=15 // pred_region
          %s310 = sand.u32 %s37, 1
          %s311 = scalar_lea.sflag [#allocation14], %s310
          %s312 = sand.u32 %s160, 1
          %s313 = smul.addr %s312, 256
          %s314 = scalar_lea.vmem [#allocation13], %s313
          %s315 = sld [smem:[#allocation8 + %s46]]
          %s316 = smul.u32 32, %s315
          %s318 = ssub.s32 4096, 4096
          %319 = vsyncadd %s311, %s318
          %s320 = smul.addr %s316, 2
          %s321 = sadd.s32 %s45, %s320
          %s322 = smul.addr %s44, 128
          %s323 = sadd.s32 %s321, %s322
          %s324 = smul.addr %s323, 128
          %s325 = scalar_lea.hbm %s6, %s324
          %s326 = sshll.u32 %s314, 4
          %s327 = int_to_ptr.vmem [resolvable:$true] %s326
          %332 = dma.hbm_to_vmem [thread:$0]  %s325, 4096, %s327, %s311, 256, 128, 8
        $region32: #{tpu_custom_call.1} parent=15 // pred_fallthru
          _
        // Predicated region
        $region33: #{tpu_custom_call.1} parent=15 // pred_check
          %p333 = pneg %p202
        $region34: #{tpu_custom_call.1} parent=15 // pred_check_branch
          %335 = sbr.rel (%p333) target = $region36
        $region35: #{tpu_custom_call.1} parent=15 // pred_region
          %s336 = sand.u32 %s37, 1
          %s337 = scalar_lea.sflag [#allocation14], %s336
          %s338 = sand.u32 %s192, 1
          %s339 = smul.addr %s338, 256
          %s340 = scalar_lea.vmem [#allocation15], %s339
          %s341 = sld [smem:[#allocation8 + %s46]]
          %s342 = smul.u32 32, %s341
          %s344 = ssub.s32 4096, 4096
          %345 = vsyncadd %s337, %s344
          %s346 = smul.addr %s342, 2
          %s347 = sadd.s32 %s45, %s346
          %s348 = smul.addr %s44, 128
          %s349 = sadd.s32 %s347, %s348
          %s350 = smul.addr %s349, 128
          %s351 = scalar_lea.hbm %s7, %s350
          %s352 = sshll.u32 %s340, 4
          %s353 = int_to_ptr.vmem [resolvable:$true] %s352
          %358 = dma.hbm_to_vmem [thread:$0]  %s351, 4096, %s353, %s337, 256, 128, 8
        $region36: #{tpu_custom_call.1} parent=15 // pred_fallthru
          _
      $region16: #{tpu_custom_call.1} parent=5 // pred_fallthru
        _
      %p359 = scmp.le.s32.totalorder 1, %s37
      %p360 = scmp.lt.s32.totalorder %s37, 9
      %p361 = pnand %p359, %p360
      %p362 = pneg %p361
      // Predicated region
      $region37: #{tpu_custom_call.1} parent=5 // pred_check
        _
      $region38: #{tpu_custom_call.1} parent=5 // pred_check_branch
        %364 = sbr.rel (%p361) target = $region40
      $region39: #{tpu_custom_call.1} parent=5 // pred_region
        %s365 = ssub.s32 %s37, 1
        %s366 = sand.u32 %s131, 1
        %s367 = scalar_lea.sflag [#allocation11], %s366
        %s368 = sand.u32 %s131, 1
        %s369 = smul.addr %s368, 256
        %s370 = scalar_lea.vmem [#allocation10], %s369
        // Predicated region
        $region41: #{tpu_custom_call.1} parent=39 // pred_check
          %p371 = pneg %p144
        $region42: #{tpu_custom_call.1} parent=39 // pred_check_branch
          %373 = sbr.rel (%p371) target = $region44
        $region43: #{tpu_custom_call.1} parent=39 // pred_region
          %374 = dma.done %s367, 4096
        $region44: #{tpu_custom_call.1} parent=39 // pred_fallthru
          _
        %s375 = sand.u32 %s42, 1
        %s376 = scalar_lea.sflag [#allocation14], %s375
        %s377 = sand.u32 %s163, 1
        %s378 = smul.addr %s377, 256
        %s379 = scalar_lea.vmem [#allocation13], %s378
        // Predicated region
        $region45: #{tpu_custom_call.1} parent=39 // pred_check
          %p380 = pneg %p176
        $region46: #{tpu_custom_call.1} parent=39 // pred_check_branch
          %382 = sbr.rel (%p380) target = $region48
        $region47: #{tpu_custom_call.1} parent=39 // pred_region
          %383 = dma.done %s376, 4096
        $region48: #{tpu_custom_call.1} parent=39 // pred_fallthru
          _
        %s384 = sand.u32 %s42, 1
        %s385 = scalar_lea.sflag [#allocation14], %s384
        %s386 = sand.u32 %s195, 1
        %s387 = smul.addr %s386, 256
        %s388 = scalar_lea.vmem [#allocation15], %s387
        // Predicated region
        $region49: #{tpu_custom_call.1} parent=39 // pred_check
          %p389 = pneg %p208
        $region50: #{tpu_custom_call.1} parent=39 // pred_check_branch
          %391 = sbr.rel (%p389) target = $region52
        $region51: #{tpu_custom_call.1} parent=39 // pred_region
          %392 = dma.done %s385, 4096
        $region52: #{tpu_custom_call.1} parent=39 // pred_fallthru
          _
        %s393 = sld [smem:[#allocation7 + %s49]]
        %s394 = smul.u32 32, %s393
        %p395 = scmp.lt.s32.totalorder %s394, 63
        %s396 = scalar_select %p395, %s394, 63
        %s397 = smul.addr %s396, 8
        %s398 = scalar_lea.vmem %s3, %s397
        %p399 = pneg %p84
        %p400 = pneg %p81
        %s401 = sld [smem:[#allocation8 + %s49]]
        %s402 = smul.u32 2, %s401
        %p403 = scmp.lt.s32.totalorder %s402, 3
        %s404 = scalar_select %p403, %s402, 3
        %s405 = smul.addr %s404, 4
        %s406 = scalar_lea.vmem %s4, %s405
        %p407 = pneg %p112
        %p408 = pneg %p109
        %s409 = sand.u32 %s131, 1
        %s410 = scalar_lea.sflag [#allocation11], %s409
        %s411 = sand.u32 %s131, 1
        %s412 = smul.addr %s411, 256
        %s413 = scalar_lea.vmem [#allocation10], %s412
        %p414 = pneg %p144
        %p415 = pneg %p141
        %s416 = sand.u32 %s42, 1
        %s417 = scalar_lea.sflag [#allocation14], %s416
        %s418 = sand.u32 %s163, 1
        %s419 = smul.addr %s418, 256
        %s420 = scalar_lea.vmem [#allocation13], %s419
        %p421 = pneg %p176
        %p422 = pneg %p173
        %s423 = sand.u32 %s42, 1
        %s424 = scalar_lea.sflag [#allocation14], %s423
        %s425 = sand.u32 %s195, 1
        %s426 = smul.addr %s425, 256
        %s427 = scalar_lea.vmem [#allocation15], %s426
        %p428 = pneg %p208
        %p429 = pneg %p205
        %p430 = pneg %p240
        %p431 = pneg %p237
        %s432 = sand.u32 %s227, 1
        %s433 = scalar_lea.sflag [#allocation12], %s432
        %s434 = sand.u32 %s227, 1
        %s435 = smul.addr %s434, 256
        %s436 = scalar_lea.vmem [#allocation16], %s435
        %s437 = sld [smem:[#allocation7 + %s49]]
        %s438 = smul.u32 32, %s437
        %p439 = scmp.lt.s32.totalorder %s438, 63
        %s440 = scalar_select %p439, %s438, 63
        %s441 = smul.addr %s440, 8
        %s442 = scalar_lea.vmem %s3, %s441
        %s443 = sld [smem:[#allocation7 + %s49]]
        %s444 = smul.u32 32, %s443
        %s445 = sld [smem:[#allocation8 + %s49]]
        %s446 = smul.u32 2, %s445
        %p447 = scmp.lt.s32.totalorder %s446, 3
        %s448 = scalar_select %p447, %s446, 3
        %s449 = smul.addr %s448, 4
        %s450 = scalar_lea.vmem %s4, %s449
        %s451 = sld [smem:[#allocation8 + %s49]]
        %s452 = smul.u32 2, %s451
        %s453 = sld [smem:[#allocation7 + %s49]]
        %s454 = smul.u32 32, %s453
        %s455 = sld [smem:[#allocation8 + %s49]]
        %s456 = smul.u32 32, %s455
        %s457 = sld [smem:[#allocation8 + %s49]]
        %s458 = smul.u32 32, %s457
        %s459 = sld [smem:[#allocation7 + %s49]]
        %s460 = smul.u32 32, %s459
        %s461 = sld [smem:[#allocation9 + %s49]]
        %s462 = sand.u32 %s461, 1
        %p463 = scmp.ne.s32.totalorder %s462, 0
        %s464 = sand.u32 %s461, 2
        %p465 = scmp.ne.s32.totalorder %s464, 0
        %s466 = sand.u32 %s461, 4
        %p467 = scmp.ne.s32.totalorder %s466, 0
        // Predicated region
        $region53: #{tpu_custom_call.1} parent=39 // pred_check
          %p468 = pneg %p463
        $region54: #{tpu_custom_call.1} parent=39 // pred_check_branch
          %470 = sbr.rel (%p468) target = $region56
        $region55: #{tpu_custom_call.1} parent=39 // pred_region
          %vm471 = vcmask 7168
          %472 = vst.msk [vmem:[#allocation2] sm:$0xff] %vm471, -1e+28
          %473 = vst.msk [vmem:[#allocation2 + $0x8] sm:$0xff] %vm471, -1e+28
          %474 = vst.msk [vmem:[#allocation2 + $0x10] sm:$0xff] %vm471, -1e+28
          %475 = vst.msk [vmem:[#allocation2 + $0x18] sm:$0xff] %vm471, -1e+28
          %476 = vst.msk [vmem:[#allocation2 + $0x20] sm:$0xff] %vm471, -1e+28
          %477 = vst.msk [vmem:[#allocation2 + $0x28] sm:$0xff] %vm471, -1e+28
          %478 = vst.msk [vmem:[#allocation2 + $0x30] sm:$0xff] %vm471, -1e+28
          %479 = vst.msk [vmem:[#allocation2 + $0x38] sm:$0xff] %vm471, -1e+28
          %480 = vst.msk [vmem:[#allocation2 + $0x40] sm:$0xff] %vm471, -1e+28
          %481 = vst.msk [vmem:[#allocation2 + $0x48] sm:$0xff] %vm471, -1e+28
          %482 = vst.msk [vmem:[#allocation2 + $0x50] sm:$0xff] %vm471, -1e+28
          %483 = vst.msk [vmem:[#allocation2 + $0x58] sm:$0xff] %vm471, -1e+28
          %484 = vst.msk [vmem:[#allocation2 + $0x60] sm:$0xff] %vm471, -1e+28
          %485 = vst.msk [vmem:[#allocation2 + $0x68] sm:$0xff] %vm471, -1e+28
          %486 = vst.msk [vmem:[#allocation2 + $0x70] sm:$0xff] %vm471, -1e+28
          %487 = vst.msk [vmem:[#allocation2 + $0x78] sm:$0xff] %vm471, -1e+28
          %488 = vst.msk [vmem:[#allocation2 + $0x80] sm:$0xff] %vm471, -1e+28
          %489 = vst.msk [vmem:[#allocation2 + $0x88] sm:$0xff] %vm471, -1e+28
          %490 = vst.msk [vmem:[#allocation2 + $0x90] sm:$0xff] %vm471, -1e+28
          %491 = vst.msk [vmem:[#allocation2 + $0x98] sm:$0xff] %vm471, -1e+28
          %492 = vst.msk [vmem:[#allocation2 + $0xa0] sm:$0xff] %vm471, -1e+28
          %493 = vst.msk [vmem:[#allocation2 + $0xa8] sm:$0xff] %vm471, -1e+28
          %494 = vst.msk [vmem:[#allocation2 + $0xb0] sm:$0xff] %vm471, -1e+28
          %495 = vst.msk [vmem:[#allocation2 + $0xb8] sm:$0xff] %vm471, -1e+28
          %496 = vst.msk [vmem:[#allocation2 + $0xc0] sm:$0xff] %vm471, -1e+28
          %497 = vst.msk [vmem:[#allocation2 + $0xc8] sm:$0xff] %vm471, -1e+28
          %498 = vst.msk [vmem:[#allocation2 + $0xd0] sm:$0xff] %vm471, -1e+28
          %499 = vst.msk [vmem:[#allocation2 + $0xd8] sm:$0xff] %vm471, -1e+28
          %500 = vst.msk [vmem:[#allocation2 + $0xe0] sm:$0xff] %vm471, -1e+28
          %501 = vst.msk [vmem:[#allocation2 + $0xe8] sm:$0xff] %vm471, -1e+28
          %502 = vst.msk [vmem:[#allocation2 + $0xf0] sm:$0xff] %vm471, -1e+28
          %503 = vst.msk [vmem:[#allocation2 + $0xf8] sm:$0xff] %vm471, -1e+28
          %504 = vst.msk [vmem:[#allocation3] sm:$0xff] %vm471, 0.0
          %505 = vst.msk [vmem:[#allocation3 + $0x8] sm:$0xff] %vm471, 0.0
          %506 = vst.msk [vmem:[#allocation3 + $0x10] sm:$0xff] %vm471, 0.0
          %507 = vst.msk [vmem:[#allocation3 + $0x18] sm:$0xff] %vm471, 0.0
          %508 = vst.msk [vmem:[#allocation3 + $0x20] sm:$0xff] %vm471, 0.0
          %509 = vst.msk [vmem:[#allocation3 + $0x28] sm:$0xff] %vm471, 0.0
          %510 = vst.msk [vmem:[#allocation3 + $0x30] sm:$0xff] %vm471, 0.0
          %511 = vst.msk [vmem:[#allocation3 + $0x38] sm:$0xff] %vm471, 0.0
          %512 = vst.msk [vmem:[#allocation3 + $0x40] sm:$0xff] %vm471, 0.0
          %513 = vst.msk [vmem:[#allocation3 + $0x48] sm:$0xff] %vm471, 0.0
          %514 = vst.msk [vmem:[#allocation3 + $0x50] sm:$0xff] %vm471, 0.0
          %515 = vst.msk [vmem:[#allocation3 + $0x58] sm:$0xff] %vm471, 0.0
          %516 = vst.msk [vmem:[#allocation3 + $0x60] sm:$0xff] %vm471, 0.0
          %517 = vst.msk [vmem:[#allocation3 + $0x68] sm:$0xff] %vm471, 0.0
          %518 = vst.msk [vmem:[#allocation3 + $0x70] sm:$0xff] %vm471, 0.0
          %519 = vst.msk [vmem:[#allocation3 + $0x78] sm:$0xff] %vm471, 0.0
          %520 = vst.msk [vmem:[#allocation3 + $0x80] sm:$0xff] %vm471, 0.0
          %521 = vst.msk [vmem:[#allocation3 + $0x88] sm:$0xff] %vm471, 0.0
          %522 = vst.msk [vmem:[#allocation3 + $0x90] sm:$0xff] %vm471, 0.0
          %523 = vst.msk [vmem:[#allocation3 + $0x98] sm:$0xff] %vm471, 0.0
          %524 = vst.msk [vmem:[#allocation3 + $0xa0] sm:$0xff] %vm471, 0.0
          %525 = vst.msk [vmem:[#allocation3 + $0xa8] sm:$0xff] %vm471, 0.0
          %526 = vst.msk [vmem:[#allocation3 + $0xb0] sm:$0xff] %vm471, 0.0
          %527 = vst.msk [vmem:[#allocation3 + $0xb8] sm:$0xff] %vm471, 0.0
          %528 = vst.msk [vmem:[#allocation3 + $0xc0] sm:$0xff] %vm471, 0.0
          %529 = vst.msk [vmem:[#allocation3 + $0xc8] sm:$0xff] %vm471, 0.0
          %530 = vst.msk [vmem:[#allocation3 + $0xd0] sm:$0xff] %vm471, 0.0
          %531 = vst.msk [vmem:[#allocation3 + $0xd8] sm:$0xff] %vm471, 0.0
          %532 = vst.msk [vmem:[#allocation3 + $0xe0] sm:$0xff] %vm471, 0.0
          %533 = vst.msk [vmem:[#allocation3 + $0xe8] sm:$0xff] %vm471, 0.0
          %534 = vst.msk [vmem:[#allocation3 + $0xf0] sm:$0xff] %vm471, 0.0
          %535 = vst.msk [vmem:[#allocation3 + $0xf8] sm:$0xff] %vm471, 0.0
          %536 = vst [vmem:[#allocation4] sm:$0xff] 0.0
          %537 = vst [vmem:[#allocation4 + $0x8] sm:$0xff] 0.0
          %538 = vst [vmem:[#allocation4 + $0x10] sm:$0xff] 0.0
          %539 = vst [vmem:[#allocation4 + $0x18] sm:$0xff] 0.0
          %540 = vst [vmem:[#allocation4 + $0x20] sm:$0xff] 0.0
          %541 = vst [vmem:[#allocation4 + $0x28] sm:$0xff] 0.0
          %542 = vst [vmem:[#allocation4 + $0x30] sm:$0xff] 0.0
          %543 = vst [vmem:[#allocation4 + $0x38] sm:$0xff] 0.0
          %544 = vst [vmem:[#allocation4 + $0x40] sm:$0xff] 0.0
          %545 = vst [vmem:[#allocation4 + $0x48] sm:$0xff] 0.0
          %546 = vst [vmem:[#allocation4 + $0x50] sm:$0xff] 0.0
          %547 = vst [vmem:[#allocation4 + $0x58] sm:$0xff] 0.0
          %548 = vst [vmem:[#allocation4 + $0x60] sm:$0xff] 0.0
          %549 = vst [vmem:[#allocation4 + $0x68] sm:$0xff] 0.0
          %550 = vst [vmem:[#allocation4 + $0x70] sm:$0xff] 0.0
          %551 = vst [vmem:[#allocation4 + $0x78] sm:$0xff] 0.0
          %552 = vst [vmem:[#allocation4 + $0x80] sm:$0xff] 0.0
          %553 = vst [vmem:[#allocation4 + $0x88] sm:$0xff] 0.0
          %554 = vst [vmem:[#allocation4 + $0x90] sm:$0xff] 0.0
          %555 = vst [vmem:[#allocation4 + $0x98] sm:$0xff] 0.0
          %556 = vst [vmem:[#allocation4 + $0xa0] sm:$0xff] 0.0
          %557 = vst [vmem:[#allocation4 + $0xa8] sm:$0xff] 0.0
          %558 = vst [vmem:[#allocation4 + $0xb0] sm:$0xff] 0.0
          %559 = vst [vmem:[#allocation4 + $0xb8] sm:$0xff] 0.0
          %560 = vst [vmem:[#allocation4 + $0xc0] sm:$0xff] 0.0
          %561 = vst [vmem:[#allocation4 + $0xc8] sm:$0xff] 0.0
          %562 = vst [vmem:[#allocation4 + $0xd0] sm:$0xff] 0.0
          %563 = vst [vmem:[#allocation4 + $0xd8] sm:$0xff] 0.0
          %564 = vst [vmem:[#allocation4 + $0xe0] sm:$0xff] 0.0
          %565 = vst [vmem:[#allocation4 + $0xe8] sm:$0xff] 0.0
          %566 = vst [vmem:[#allocation4 + $0xf0] sm:$0xff] 0.0
          %567 = vst [vmem:[#allocation4 + $0xf8] sm:$0xff] 0.0
          %v568 = vld [vmem:[%s370] sm:$0xff]
          %v569 = vld [vmem:[%s370 + $0x8] sm:$0xff]
          %v570 = vld [vmem:[%s370 + $0x10] sm:$0xff]
          %v571 = vld [vmem:[%s370 + $0x18] sm:$0xff]
          %v572 = vld [vmem:[%s370 + $0x20] sm:$0xff]
          %v573 = vld [vmem:[%s370 + $0x28] sm:$0xff]
          %v574 = vld [vmem:[%s370 + $0x30] sm:$0xff]
          %v575 = vld [vmem:[%s370 + $0x38] sm:$0xff]
          %v576 = vld [vmem:[%s370 + $0x40] sm:$0xff]
          %v577 = vld [vmem:[%s370 + $0x48] sm:$0xff]
          %v578 = vld [vmem:[%s370 + $0x50] sm:$0xff]
          %v579 = vld [vmem:[%s370 + $0x58] sm:$0xff]
          %v580 = vld [vmem:[%s370 + $0x60] sm:$0xff]
          %v581 = vld [vmem:[%s370 + $0x68] sm:$0xff]
          %v582 = vld [vmem:[%s370 + $0x70] sm:$0xff]
          %v583 = vld [vmem:[%s370 + $0x78] sm:$0xff]
          %v584 = vld [vmem:[%s370 + $0x80] sm:$0xff]
          %v585 = vld [vmem:[%s370 + $0x88] sm:$0xff]
          %v586 = vld [vmem:[%s370 + $0x90] sm:$0xff]
          %v587 = vld [vmem:[%s370 + $0x98] sm:$0xff]
          %v588 = vld [vmem:[%s370 + $0xa0] sm:$0xff]
          %v589 = vld [vmem:[%s370 + $0xa8] sm:$0xff]
          %v590 = vld [vmem:[%s370 + $0xb0] sm:$0xff]
          %v591 = vld [vmem:[%s370 + $0xb8] sm:$0xff]
          %v592 = vld [vmem:[%s370 + $0xc0] sm:$0xff]
          %v593 = vld [vmem:[%s370 + $0xc8] sm:$0xff]
          %v594 = vld [vmem:[%s370 + $0xd0] sm:$0xff]
          %v595 = vld [vmem:[%s370 + $0xd8] sm:$0xff]
          %v596 = vld [vmem:[%s370 + $0xe0] sm:$0xff]
          %v597 = vld [vmem:[%s370 + $0xe8] sm:$0xff]
          %v598 = vld [vmem:[%s370 + $0xf0] sm:$0xff]
          %v599 = vld [vmem:[%s370 + $0xf8] sm:$0xff]
          %v600 = vmul.f32 %v568, 0.088388346
          %v601 = vmul.f32 %v569, 0.088388346
          %v602 = vmul.f32 %v570, 0.088388346
          %v603 = vmul.f32 %v571, 0.088388346
          %v604 = vmul.f32 %v572, 0.088388346
          %v605 = vmul.f32 %v573, 0.088388346
          %v606 = vmul.f32 %v574, 0.088388346
          %v607 = vmul.f32 %v575, 0.088388346
          %v608 = vmul.f32 %v576, 0.088388346
          %v609 = vmul.f32 %v577, 0.088388346
          %v610 = vmul.f32 %v578, 0.088388346
          %v611 = vmul.f32 %v579, 0.088388346
          %v612 = vmul.f32 %v580, 0.088388346
          %v613 = vmul.f32 %v581, 0.088388346
          %v614 = vmul.f32 %v582, 0.088388346
          %v615 = vmul.f32 %v583, 0.088388346
          %v616 = vmul.f32 %v584, 0.088388346
          %v617 = vmul.f32 %v585, 0.088388346
          %v618 = vmul.f32 %v586, 0.088388346
          %v619 = vmul.f32 %v587, 0.088388346
          %v620 = vmul.f32 %v588, 0.088388346
          %v621 = vmul.f32 %v589, 0.088388346
          %v622 = vmul.f32 %v590, 0.088388346
          %v623 = vmul.f32 %v591, 0.088388346
          %v624 = vmul.f32 %v592, 0.088388346
          %v625 = vmul.f32 %v593, 0.088388346
          %v626 = vmul.f32 %v594, 0.088388346
          %v627 = vmul.f32 %v595, 0.088388346
          %v628 = vmul.f32 %v596, 0.088388346
          %v629 = vmul.f32 %v597, 0.088388346
          %v630 = vmul.f32 %v598, 0.088388346
          %v631 = vmul.f32 %v599, 0.088388346
          %632 = vst [vmem:[#allocation5] sm:$0xff] %v600
          %633 = vst [vmem:[#allocation5 + $0x8] sm:$0xff] %v601
          %634 = vst [vmem:[#allocation5 + $0x10] sm:$0xff] %v602
          %635 = vst [vmem:[#allocation5 + $0x18] sm:$0xff] %v603
          %636 = vst [vmem:[#allocation5 + $0x20] sm:$0xff] %v604
          %637 = vst [vmem:[#allocation5 + $0x28] sm:$0xff] %v605
          %638 = vst [vmem:[#allocation5 + $0x30] sm:$0xff] %v606
          %639 = vst [vmem:[#allocation5 + $0x38] sm:$0xff] %v607
          %640 = vst [vmem:[#allocation5 + $0x40] sm:$0xff] %v608
          %641 = vst [vmem:[#allocation5 + $0x48] sm:$0xff] %v609
          %642 = vst [vmem:[#allocation5 + $0x50] sm:$0xff] %v610
          %643 = vst [vmem:[#allocation5 + $0x58] sm:$0xff] %v611
          %644 = vst [vmem:[#allocation5 + $0x60] sm:$0xff] %v612
          %645 = vst [vmem:[#allocation5 + $0x68] sm:$0xff] %v613
          %646 = vst [vmem:[#allocation5 + $0x70] sm:$0xff] %v614
          %647 = vst [vmem:[#allocation5 + $0x78] sm:$0xff] %v615
          %648 = vst [vmem:[#allocation5 + $0x80] sm:$0xff] %v616
          %649 = vst [vmem:[#allocation5 + $0x88] sm:$0xff] %v617
          %650 = vst [vmem:[#allocation5 + $0x90] sm:$0xff] %v618
          %651 = vst [vmem:[#allocation5 + $0x98] sm:$0xff] %v619
          %652 = vst [vmem:[#allocation5 + $0xa0] sm:$0xff] %v620
          %653 = vst [vmem:[#allocation5 + $0xa8] sm:$0xff] %v621
          %654 = vst [vmem:[#allocation5 + $0xb0] sm:$0xff] %v622
          %655 = vst [vmem:[#allocation5 + $0xb8] sm:$0xff] %v623
          %656 = vst [vmem:[#allocation5 + $0xc0] sm:$0xff] %v624
          %657 = vst [vmem:[#allocation5 + $0xc8] sm:$0xff] %v625
          %658 = vst [vmem:[#allocation5 + $0xd0] sm:$0xff] %v626
          %659 = vst [vmem:[#allocation5 + $0xd8] sm:$0xff] %v627
          %660 = vst [vmem:[#allocation5 + $0xe0] sm:$0xff] %v628
          %661 = vst [vmem:[#allocation5 + $0xe8] sm:$0xff] %v629
          %662 = vst [vmem:[#allocation5 + $0xf0] sm:$0xff] %v630
          %663 = vst [vmem:[#allocation5 + $0xf8] sm:$0xff] %v631
        $region56: #{tpu_custom_call.1} parent=39 // pred_fallthru
          _
        // Predicated region
        $region57: #{tpu_custom_call.1} parent=39 // pred_check
          %p664 = pneg %p467
        $region58: #{tpu_custom_call.1} parent=39 // pred_check_branch
          %666 = sbr.rel (%p664) target = $region60
        $region59: #{tpu_custom_call.1} parent=39 // pred_region
          %v667 = vld [vmem:[#allocation5] sm:$0xff]
          %v668 = vld [vmem:[#allocation5 + $0x8] sm:$0xff]
          %v669 = vld [vmem:[#allocation5 + $0x10] sm:$0xff]
          %v670 = vld [vmem:[#allocation5 + $0x18] sm:$0xff]
          %v671 = vld [vmem:[#allocation5 + $0x20] sm:$0xff]
          %v672 = vld [vmem:[#allocation5 + $0x28] sm:$0xff]
          %v673 = vld [vmem:[#allocation5 + $0x30] sm:$0xff]
          %v674 = vld [vmem:[#allocation5 + $0x38] sm:$0xff]
          %v675 = vld [vmem:[#allocation5 + $0x40] sm:$0xff]
          %v676 = vld [vmem:[#allocation5 + $0x48] sm:$0xff]
          %v677 = vld [vmem:[#allocation5 + $0x50] sm:$0xff]
          %v678 = vld [vmem:[#allocation5 + $0x58] sm:$0xff]
          %v679 = vld [vmem:[#allocation5 + $0x60] sm:$0xff]
          %v680 = vld [vmem:[#allocation5 + $0x68] sm:$0xff]
          %v681 = vld [vmem:[#allocation5 + $0x70] sm:$0xff]
          %v682 = vld [vmem:[#allocation5 + $0x78] sm:$0xff]
          %v683 = vld [vmem:[#allocation5 + $0x80] sm:$0xff]
          %v684 = vld [vmem:[#allocation5 + $0x88] sm:$0xff]
          %v685 = vld [vmem:[#allocation5 + $0x90] sm:$0xff]
          %v686 = vld [vmem:[#allocation5 + $0x98] sm:$0xff]
          %v687 = vld [vmem:[#allocation5 + $0xa0] sm:$0xff]
          %v688 = vld [vmem:[#allocation5 + $0xa8] sm:$0xff]
          %v689 = vld [vmem:[#allocation5 + $0xb0] sm:$0xff]
          %v690 = vld [vmem:[#allocation5 + $0xb8] sm:$0xff]
          %v691 = vld [vmem:[#allocation5 + $0xc0] sm:$0xff]
          %v692 = vld [vmem:[#allocation5 + $0xc8] sm:$0xff]
          %v693 = vld [vmem:[#allocation5 + $0xd0] sm:$0xff]
          %v694 = vld [vmem:[#allocation5 + $0xd8] sm:$0xff]
          %v695 = vld [vmem:[#allocation5 + $0xe0] sm:$0xff]
          %v696 = vld [vmem:[#allocation5 + $0xe8] sm:$0xff]
          %v697 = vld [vmem:[#allocation5 + $0xf0] sm:$0xff]
          %v698 = vld [vmem:[#allocation5 + $0xf8] sm:$0xff]
          %v699 = vld [vmem:[%s379] sm:$0xff]
          %v700 = vld [vmem:[%s379 + $0x8] sm:$0xff]
          %v701 = vld [vmem:[%s379 + $0x10] sm:$0xff]
          %v702 = vld [vmem:[%s379 + $0x18] sm:$0xff]
          %v703 = vld [vmem:[%s379 + $0x20] sm:$0xff]
          %v704 = vld [vmem:[%s379 + $0x28] sm:$0xff]
          %v705 = vld [vmem:[%s379 + $0x30] sm:$0xff]
          %v706 = vld [vmem:[%s379 + $0x38] sm:$0xff]
          %v707 = vld [vmem:[%s379 + $0x40] sm:$0xff]
          %v708 = vld [vmem:[%s379 + $0x48] sm:$0xff]
          %v709 = vld [vmem:[%s379 + $0x50] sm:$0xff]
          %v710 = vld [vmem:[%s379 + $0x58] sm:$0xff]
          %v711 = vld [vmem:[%s379 + $0x60] sm:$0xff]
          %v712 = vld [vmem:[%s379 + $0x68] sm:$0xff]
          %v713 = vld [vmem:[%s379 + $0x70] sm:$0xff]
          %v714 = vld [vmem:[%s379 + $0x78] sm:$0xff]
          %v715 = vld [vmem:[%s379 + $0x80] sm:$0xff]
          %v716 = vld [vmem:[%s379 + $0x88] sm:$0xff]
          %v717 = vld [vmem:[%s379 + $0x90] sm:$0xff]
          %v718 = vld [vmem:[%s379 + $0x98] sm:$0xff]
          %v719 = vld [vmem:[%s379 + $0xa0] sm:$0xff]
          %v720 = vld [vmem:[%s379 + $0xa8] sm:$0xff]
          %v721 = vld [vmem:[%s379 + $0xb0] sm:$0xff]
          %v722 = vld [vmem:[%s379 + $0xb8] sm:$0xff]
          %v723 = vld [vmem:[%s379 + $0xc0] sm:$0xff]
          %v724 = vld [vmem:[%s379 + $0xc8] sm:$0xff]
          %v725 = vld [vmem:[%s379 + $0xd0] sm:$0xff]
          %v726 = vld [vmem:[%s379 + $0xd8] sm:$0xff]
          %v727 = vld [vmem:[%s379 + $0xe0] sm:$0xff]
          %v728 = vld [vmem:[%s379 + $0xe8] sm:$0xff]
          %v729 = vld [vmem:[%s379 + $0xf0] sm:$0xff]
          %v730 = vld [vmem:[%s379 + $0xf8] sm:$0xff]
          %731 = vmatprep.subr.mxu0 0.0
          %732 = vmatpush1.xpose.msra.mxu0 %v699
          %733 = vmatprep.subr.mxu0 0.0
          %734 = vmatpush1.xpose.msra.mxu0 %v700
          %735 = vmatprep.subr.mxu0 0.0
          %736 = vmatpush1.xpose.msra.mxu0 %v701
          %737 = vmatprep.subr.mxu0 0.0
          %738 = vmatpush1.xpose.msra.mxu0 %v702
          %739 = vmatprep.subr.mxu0 0.0
          %740 = vmatpush1.xpose.msra.mxu0 %v703
          %741 = vmatprep.subr.mxu0 0.0
          %742 = vmatpush1.xpose.msra.mxu0 %v704
          %743 = vmatprep.subr.mxu0 0.0
          %744 = vmatpush1.xpose.msra.mxu0 %v705
          %745 = vmatprep.subr.mxu0 0.0
          %746 = vmatpush1.xpose.msra.mxu0 %v706
          %747 = vmatprep.subr.mxu0 0.0
          %748 = vmatpush1.xpose.msra.mxu0 %v707
          %749 = vmatprep.subr.mxu0 0.0
          %750 = vmatpush1.xpose.msra.mxu0 %v708
          %751 = vmatprep.subr.mxu0 0.0
          %752 = vmatpush1.xpose.msra.mxu0 %v709
          %753 = vmatprep.subr.mxu0 0.0
          %754 = vmatpush1.xpose.msra.mxu0 %v710
          %755 = vmatprep.subr.mxu0 0.0
          %756 = vmatpush1.xpose.msra.mxu0 %v711
          %757 = vmatprep.subr.mxu0 0.0
          %758 = vmatpush1.xpose.msra.mxu0 %v712
          %759 = vmatprep.subr.mxu0 0.0
          %760 = vmatpush1.xpose.msra.mxu0 %v713
          %761 = vmatprep.subr.mxu0 0.0
          %762 = vmatpush1.xpose.msra.mxu0 %v714
          %763 = vmatprep.subr.mxu0 0.0
          %764 = vmatpush1.xpose.msra.mxu0 %v715
          %765 = vmatprep.subr.mxu0 0.0
          %766 = vmatpush1.xpose.msra.mxu0 %v716
          %767 = vmatprep.subr.mxu0 0.0
          %768 = vmatpush1.xpose.msra.mxu0 %v717
          %769 = vmatprep.subr.mxu0 0.0
          %770 = vmatpush1.xpose.msra.mxu0 %v718
          %771 = vmatprep.subr.mxu0 0.0
          %772 = vmatpush1.xpose.msra.mxu0 %v719
          %773 = vmatprep.subr.mxu0 0.0
          %774 = vmatpush1.xpose.msra.mxu0 %v720
          %775 = vmatprep.subr.mxu0 0.0
          %776 = vmatpush1.xpose.msra.mxu0 %v721
          %777 = vmatprep.subr.mxu0 0.0
          %778 = vmatpush1.xpose.msra.mxu0 %v722
          %779 = vmatprep.subr.mxu0 0.0
          %780 = vmatpush1.xpose.msra.mxu0 %v723
          %781 = vmatprep.subr.mxu0 0.0
          %782 = vmatpush1.xpose.msra.mxu0 %v724
          %783 = vmatprep.subr.mxu0 0.0
          %784 = vmatpush1.xpose.msra.mxu0 %v725
          %785 = vmatprep.subr.mxu0 0.0
          %786 = vmatpush1.xpose.msra.mxu0 %v726
          %787 = vmatprep.subr.mxu0 0.0
          %788 = vmatpush1.xpose.msra.mxu0 %v727
          %789 = vmatprep.subr.mxu0 0.0
          %790 = vmatpush1.xpose.msra.mxu0 %v728
          %791 = vmatprep.subr.mxu0 0.0
          %792 = vmatpush1.xpose.msra.mxu0 %v729
          %793 = vmatprep.subr.mxu0 0.0
          %794 = vmatpush1.xpose.msra.mxu0 %v730
          %795 = vmatprep.mubr.f32.mxu0 0.0
          %796 = vmatmul.mubr.f32.gmra.mrb[0].mxu0 %v667
          %v797 = vpop.f32.mrb[0].mxu0
          %v798 = vadd.f32 0.0, %v797
          %v799 = vpop.f32.mrb[0].mxu0
          %v800 = vadd.f32 0.0, %v799
          %801 = vmatprep.mubr.f32.mxu0 0.0
          %802 = vmatmul.mubr.f32.gmra.mrb[0].mxu0 %v668
          %v803 = vpop.f32.mrb[0].mxu0
          %v804 = vadd.f32 0.0, %v803
          %v805 = vpop.f32.mrb[0].mxu0
          %v806 = vadd.f32 0.0, %v805
          %807 = vmatprep.mubr.f32.mxu0 0.0
          %808 = vmatmul.mubr.f32.gmra.mrb[0].mxu0 %v669
          %v809 = vpop.f32.mrb[0].mxu0
          %v810 = vadd.f32 0.0, %v809
          %v811 = vpop.f32.mrb[0].mxu0
          %v812 = vadd.f32 0.0, %v811
          %813 = vmatprep.mubr.f32.mxu0 0.0
          %814 = vmatmul.mubr.f32.gmra.mrb[0].mxu0 %v670
          %v815 = vpop.f32.mrb[0].mxu0
          %v816 = vadd.f32 0.0, %v815
          %v817 = vpop.f32.mrb[0].mxu0
          %v818 = vadd.f32 0.0, %v817
          %819 = vmatprep.mubr.f32.mxu0 0.0
          %820 = vmatmul.mubr.f32.gmra.mrb[0].mxu0 %v671
          %v821 = vpop.f32.mrb[0].mxu0
          %v822 = vadd.f32 0.0, %v821
          %v823 = vpop.f32.mrb[0].mxu0
          %v824 = vadd.f32 0.0, %v823
          %825 = vmatprep.mubr.f32.mxu0 0.0
          %826 = vmatmul.mubr.f32.gmra.mrb[0].mxu0 %v672
          %v827 = vpop.f32.mrb[0].mxu0
          %v828 = vadd.f32 0.0, %v827
          %v829 = vpop.f32.mrb[0].mxu0
          %v830 = vadd.f32 0.0, %v829
          %831 = vmatprep.mubr.f32.mxu0 0.0
          %832 = vmatmul.mubr.f32.gmra.mrb[0].mxu0 %v673
          %v833 = vpop.f32.mrb[0].mxu0
          %v834 = vadd.f32 0.0, %v833
          %v835 = vpop.f32.mrb[0].mxu0
          %v836 = vadd.f32 0.0, %v835
          %837 = vmatprep.mubr.f32.mxu0 0.0
          %838 = vmatmul.mubr.f32.gmra.mrb[0].mxu0 %v674
          %v839 = vpop.f32.mrb[0].mxu0
          %v840 = vadd.f32 0.0, %v839
          %v841 = vpop.f32.mrb[0].mxu0
          %v842 = vadd.f32 0.0, %v841
          %843 = vmatprep.mubr.f32.mxu0 0.0
          %844 = vmatmul.mubr.f32.gmra.mrb[0].mxu0 %v675
          %v845 = vpop.f32.mrb[0].mxu0
          %v846 = vadd.f32 0.0, %v845
          %v847 = vpop.f32.mrb[0].mxu0
          %v848 = vadd.f32 0.0, %v847
          %849 = vmatprep.mubr.f32.mxu0 0.0
          %850 = vmatmul.mubr.f32.gmra.mrb[0].mxu0 %v676
          %v851 = vpop.f32.mrb[0].mxu0
          %v852 = vadd.f32 0.0, %v851
          %v853 = vpop.f32.mrb[0].mxu0
          %v854 = vadd.f32 0.0, %v853
          %855 = vmatprep.mubr.f32.mxu0 0.0
          %856 = vmatmul.mubr.f32.gmra.mrb[0].mxu0 %v677
          %v857 = vpop.f32.mrb[0].mxu0
          %v858 = vadd.f32 0.0, %v857
          %v859 = vpop.f32.mrb[0].mxu0
          %v860 = vadd.f32 0.0, %v859
          %861 = vmatprep.mubr.f32.mxu0 0.0
          %862 = vmatmul.mubr.f32.gmra.mrb[0].mxu0 %v678
          %v863 = vpop.f32.mrb[0].mxu0
          %v864 = vadd.f32 0.0, %v863
          %v865 = vpop.f32.mrb[0].mxu0
          %v866 = vadd.f32 0.0, %v865
          %867 = vmatprep.mubr.f32.mxu0 0.0
          %868 = vmatmul.mubr.f32.gmra.mrb[0].mxu0 %v679
          %v869 = vpop.f32.mrb[0].mxu0
          %v870 = vadd.f32 0.0, %v869
          %v871 = vpop.f32.mrb[0].mxu0
          %v872 = vadd.f32 0.0, %v871
          %873 = vmatprep.mubr.f32.mxu0 0.0
          %874 = vmatmul.mubr.f32.gmra.mrb[0].mxu0 %v680
          %v875 = vpop.f32.mrb[0].mxu0
          %v876 = vadd.f32 0.0, %v875
          %v877 = vpop.f32.mrb[0].mxu0
          %v878 = vadd.f32 0.0, %v877
          %879 = vmatprep.mubr.f32.mxu0 0.0
          %880 = vmatmul.mubr.f32.gmra.mrb[0].mxu0 %v681
          %v881 = vpop.f32.mrb[0].mxu0
          %v882 = vadd.f32 0.0, %v881
          %v883 = vpop.f32.mrb[0].mxu0
          %v884 = vadd.f32 0.0, %v883
          %885 = vmatprep.mubr.f32.mxu0 0.0
          %886 = vmatmul.mubr.f32.gmra.mrb[0].mxu0 %v682
          %v887 = vpop.f32.mrb[0].mxu0
          %v888 = vadd.f32 0.0, %v887
          %v889 = vpop.f32.mrb[0].mxu0
          %v890 = vadd.f32 0.0, %v889
          %891 = vmatprep.mubr.f32.mxu0 0.0
          %892 = vmatmul.mubr.f32.gmra.mrb[0].mxu0 %v683
          %v893 = vpop.f32.mrb[0].mxu0
          %v894 = vadd.f32 0.0, %v893
          %v895 = vpop.f32.mrb[0].mxu0
          %v896 = vadd.f32 0.0, %v895
          %897 = vmatprep.mubr.f32.mxu0 0.0
          %898 = vmatmul.mubr.f32.gmra.mrb[0].mxu0 %v684
          %v899 = vpop.f32.mrb[0].mxu0
          %v900 = vadd.f32 0.0, %v899
          %v901 = vpop.f32.mrb[0].mxu0
          %v902 = vadd.f32 0.0, %v901
          %903 = vmatprep.mubr.f32.mxu0 0.0
          %904 = vmatmul.mubr.f32.gmra.mrb[0].mxu0 %v685
          %v905 = vpop.f32.mrb[0].mxu0
          %v906 = vadd.f32 0.0, %v905
          %v907 = vpop.f32.mrb[0].mxu0
          %v908 = vadd.f32 0.0, %v907
          %909 = vmatprep.mubr.f32.mxu0 0.0
          %910 = vmatmul.mubr.f32.gmra.mrb[0].mxu0 %v686
          %v911 = vpop.f32.mrb[0].mxu0
          %v912 = vadd.f32 0.0, %v911
          %v913 = vpop.f32.mrb[0].mxu0
          %v914 = vadd.f32 0.0, %v913
          %915 = vmatprep.mubr.f32.mxu0 0.0
          %916 = vmatmul.mubr.f32.gmra.mrb[0].mxu0 %v687
          %v917 = vpop.f32.mrb[0].mxu0
          %v918 = vadd.f32 0.0, %v917
          %v919 = vpop.f32.mrb[0].mxu0
          %v920 = vadd.f32 0.0, %v919
          %921 = vmatprep.mubr.f32.mxu0 0.0
          %922 = vmatmul.mubr.f32.gmra.mrb[0].mxu0 %v688
          %v923 = vpop.f32.mrb[0].mxu0
          %v924 = vadd.f32 0.0, %v923
          %v925 = vpop.f32.mrb[0].mxu0
          %v926 = vadd.f32 0.0, %v925
          %927 = vmatprep.mubr.f32.mxu0 0.0
          %928 = vmatmul.mubr.f32.gmra.mrb[0].mxu0 %v689
          %v929 = vpop.f32.mrb[0].mxu0
          %v930 = vadd.f32 0.0, %v929
          %v931 = vpop.f32.mrb[0].mxu0
          %v932 = vadd.f32 0.0, %v931
          %933 = vmatprep.mubr.f32.mxu0 0.0
          %934 = vmatmul.mubr.f32.gmra.mrb[0].mxu0 %v690
          %v935 = vpop.f32.mrb[0].mxu0
          %v936 = vadd.f32 0.0, %v935
          %v937 = vpop.f32.mrb[0].mxu0
          %v938 = vadd.f32 0.0, %v937
          %939 = vmatprep.mubr.f32.mxu0 0.0
          %940 = vmatmul.mubr.f32.gmra.mrb[0].mxu0 %v691
          %v941 = vpop.f32.mrb[0].mxu0
          %v942 = vadd.f32 0.0, %v941
          %v943 = vpop.f32.mrb[0].mxu0
          %v944 = vadd.f32 0.0, %v943
          %945 = vmatprep.mubr.f32.mxu0 0.0
          %946 = vmatmul.mubr.f32.gmra.mrb[0].mxu0 %v692
          %v947 = vpop.f32.mrb[0].mxu0
          %v948 = vadd.f32 0.0, %v947
          %v949 = vpop.f32.mrb[0].mxu0
          %v950 = vadd.f32 0.0, %v949
          %951 = vmatprep.mubr.f32.mxu0 0.0
          %952 = vmatmul.mubr.f32.gmra.mrb[0].mxu0 %v693
          %v953 = vpop.f32.mrb[0].mxu0
          %v954 = vadd.f32 0.0, %v953
          %v955 = vpop.f32.mrb[0].mxu0
          %v956 = vadd.f32 0.0, %v955
          %957 = vmatprep.mubr.f32.mxu0 0.0
          %958 = vmatmul.mubr.f32.gmra.mrb[0].mxu0 %v694
          %v959 = vpop.f32.mrb[0].mxu0
          %v960 = vadd.f32 0.0, %v959
          %v961 = vpop.f32.mrb[0].mxu0
          %v962 = vadd.f32 0.0, %v961
          %963 = vmatprep.mubr.f32.mxu0 0.0
          %964 = vmatmul.mubr.f32.gmra.mrb[0].mxu0 %v695
          %v965 = vpop.f32.mrb[0].mxu0
          %v966 = vadd.f32 0.0, %v965
          %v967 = vpop.f32.mrb[0].mxu0
          %v968 = vadd.f32 0.0, %v967
          %969 = vmatprep.mubr.f32.mxu0 0.0
          %970 = vmatmul.mubr.f32.gmra.mrb[0].mxu0 %v696
          %v971 = vpop.f32.mrb[0].mxu0
          %v972 = vadd.f32 0.0, %v971
          %v973 = vpop.f32.mrb[0].mxu0
          %v974 = vadd.f32 0.0, %v973
          %975 = vmatprep.mubr.f32.mxu0 0.0
          %976 = vmatmul.mubr.f32.gmra.mrb[0].mxu0 %v697
          %v977 = vpop.f32.mrb[0].mxu0
          %v978 = vadd.f32 0.0, %v977
          %v979 = vpop.f32.mrb[0].mxu0
          %v980 = vadd.f32 0.0, %v979
          %981 = vmatprep.mubr.f32.mxu0 0.0
          %982 = vmatmul.mubr.f32.gmra.mrb[0].mxu0 %v698
          %v983 = vpop.f32.mrb[0].mxu0
          %v984 = vadd.f32 0.0, %v983
          %v985 = vpop.f32.mrb[0].mxu0
          %v986 = vadd.f32 0.0, %v985
          %987 = vdwg.mxu0
          %v988 = vld [vmem:[#allocation2] sm:$0xff]
          %v989 = vld [vmem:[#allocation2 + $0x8] sm:$0xff]
          %v990 = vld [vmem:[#allocation2 + $0x10] sm:$0xff]
          %v991 = vld [vmem:[#allocation2 + $0x18] sm:$0xff]
          %v992 = vld [vmem:[#allocation2 + $0x20] sm:$0xff]
          %v993 = vld [vmem:[#allocation2 + $0x28] sm:$0xff]
          %v994 = vld [vmem:[#allocation2 + $0x30] sm:$0xff]
          %v995 = vld [vmem:[#allocation2 + $0x38] sm:$0xff]
          %v996 = vld [vmem:[#allocation2 + $0x40] sm:$0xff]
          %v997 = vld [vmem:[#allocation2 + $0x48] sm:$0xff]
          %v998 = vld [vmem:[#allocation2 + $0x50] sm:$0xff]
          %v999 = vld [vmem:[#allocation2 + $0x58] sm:$0xff]
          %v1000 = vld [vmem:[#allocation2 + $0x60] sm:$0xff]
          %v1001 = vld [vmem:[#allocation2 + $0x68] sm:$0xff]
          %v1002 = vld [vmem:[#allocation2 + $0x70] sm:$0xff]
          %v1003 = vld [vmem:[#allocation2 + $0x78] sm:$0xff]
          %v1004 = vld [vmem:[#allocation2 + $0x80] sm:$0xff]
          %v1005 = vld [vmem:[#allocation2 + $0x88] sm:$0xff]
          %v1006 = vld [vmem:[#allocation2 + $0x90] sm:$0xff]
          %v1007 = vld [vmem:[#allocation2 + $0x98] sm:$0xff]
          %v1008 = vld [vmem:[#allocation2 + $0xa0] sm:$0xff]
          %v1009 = vld [vmem:[#allocation2 + $0xa8] sm:$0xff]
          %v1010 = vld [vmem:[#allocation2 + $0xb0] sm:$0xff]
          %v1011 = vld [vmem:[#allocation2 + $0xb8] sm:$0xff]
          %v1012 = vld [vmem:[#allocation2 + $0xc0] sm:$0xff]
          %v1013 = vld [vmem:[#allocation2 + $0xc8] sm:$0xff]
          %v1014 = vld [vmem:[#allocation2 + $0xd0] sm:$0xff]
          %v1015 = vld [vmem:[#allocation2 + $0xd8] sm:$0xff]
          %v1016 = vld [vmem:[#allocation2 + $0xe0] sm:$0xff]
          %v1017 = vld [vmem:[#allocation2 + $0xe8] sm:$0xff]
          %v1018 = vld [vmem:[#allocation2 + $0xf0] sm:$0xff]
          %v1019 = vld [vmem:[#allocation2 + $0xf8] sm:$0xff]
          %v1020 = vmax.f32 %v798, %v800
          %1021 = vmax.xlane.f32.xlu0 %v1020
          %v1022 = vpop.xlane.xlu0 %1021
          %v1023 = vmax.f32 %v804, %v806
          %1024 = vmax.xlane.f32.xlu0 %v1023
          %v1025 = vpop.xlane.xlu0 %1024
          %v1026 = vmax.f32 %v810, %v812
          %1027 = vmax.xlane.f32.xlu0 %v1026
          %v1028 = vpop.xlane.xlu0 %1027
          %v1029 = vmax.f32 %v816, %v818
          %1030 = vmax.xlane.f32.xlu0 %v1029
          %v1031 = vpop.xlane.xlu0 %1030
          %v1032 = vmax.f32 %v822, %v824
          %1033 = vmax.xlane.f32.xlu0 %v1032
          %v1034 = vpop.xlane.xlu0 %1033
          %v1035 = vmax.f32 %v828, %v830
          %1036 = vmax.xlane.f32.xlu0 %v1035
          %v1037 = vpop.xlane.xlu0 %1036
          %v1038 = vmax.f32 %v834, %v836
          %1039 = vmax.xlane.f32.xlu0 %v1038
          %v1040 = vpop.xlane.xlu0 %1039
          %v1041 = vmax.f32 %v840, %v842
          %1042 = vmax.xlane.f32.xlu0 %v1041
          %v1043 = vpop.xlane.xlu0 %1042
          %v1044 = vmax.f32 %v846, %v848
          %1045 = vmax.xlane.f32.xlu0 %v1044
          %v1046 = vpop.xlane.xlu0 %1045
          %v1047 = vmax.f32 %v852, %v854
          %1048 = vmax.xlane.f32.xlu0 %v1047
          %v1049 = vpop.xlane.xlu0 %1048
          %v1050 = vmax.f32 %v858, %v860
          %1051 = vmax.xlane.f32.xlu0 %v1050
          %v1052 = vpop.xlane.xlu0 %1051
          %v1053 = vmax.f32 %v864, %v866
          %1054 = vmax.xlane.f32.xlu0 %v1053
          %v1055 = vpop.xlane.xlu0 %1054
          %v1056 = vmax.f32 %v870, %v872
          %1057 = vmax.xlane.f32.xlu0 %v1056
          %v1058 = vpop.xlane.xlu0 %1057
          %v1059 = vmax.f32 %v876, %v878
          %1060 = vmax.xlane.f32.xlu0 %v1059
          %v1061 = vpop.xlane.xlu0 %1060
          %v1062 = vmax.f32 %v882, %v884
          %1063 = vmax.xlane.f32.xlu0 %v1062
          %v1064 = vpop.xlane.xlu0 %1063
          %v1065 = vmax.f32 %v888, %v890
          %1066 = vmax.xlane.f32.xlu0 %v1065
          %v1067 = vpop.xlane.xlu0 %1066
          %v1068 = vmax.f32 %v894, %v896
          %1069 = vmax.xlane.f32.xlu0 %v1068
          %v1070 = vpop.xlane.xlu0 %1069
          %v1071 = vmax.f32 %v900, %v902
          %1072 = vmax.xlane.f32.xlu0 %v1071
          %v1073 = vpop.xlane.xlu0 %1072
          %v1074 = vmax.f32 %v906, %v908
          %1075 = vmax.xlane.f32.xlu0 %v1074
          %v1076 = vpop.xlane.xlu0 %1075
          %v1077 = vmax.f32 %v912, %v914
          %1078 = vmax.xlane.f32.xlu0 %v1077
          %v1079 = vpop.xlane.xlu0 %1078
          %v1080 = vmax.f32 %v918, %v920
          %1081 = vmax.xlane.f32.xlu0 %v1080
          %v1082 = vpop.xlane.xlu0 %1081
          %v1083 = vmax.f32 %v924, %v926
          %1084 = vmax.xlane.f32.xlu0 %v1083
          %v1085 = vpop.xlane.xlu0 %1084
          %v1086 = vmax.f32 %v930, %v932
          %1087 = vmax.xlane.f32.xlu0 %v1086
          %v1088 = vpop.xlane.xlu0 %1087
          %v1089 = vmax.f32 %v936, %v938
          %1090 = vmax.xlane.f32.xlu0 %v1089
          %v1091 = vpop.xlane.xlu0 %1090
          %v1092 = vmax.f32 %v942, %v944
          %1093 = vmax.xlane.f32.xlu0 %v1092
          %v1094 = vpop.xlane.xlu0 %1093
          %v1095 = vmax.f32 %v948, %v950
          %1096 = vmax.xlane.f32.xlu0 %v1095
          %v1097 = vpop.xlane.xlu0 %1096
          %v1098 = vmax.f32 %v954, %v956
          %1099 = vmax.xlane.f32.xlu0 %v1098
          %v1100 = vpop.xlane.xlu0 %1099
          %v1101 = vmax.f32 %v960, %v962
          %1102 = vmax.xlane.f32.xlu0 %v1101
          %v1103 = vpop.xlane.xlu0 %1102
          %v1104 = vmax.f32 %v966, %v968
          %1105 = vmax.xlane.f32.xlu0 %v1104
          %v1106 = vpop.xlane.xlu0 %1105
          %v1107 = vmax.f32 %v972, %v974
          %1108 = vmax.xlane.f32.xlu0 %v1107
          %v1109 = vpop.xlane.xlu0 %1108
          %v1110 = vmax.f32 %v978, %v980
          %1111 = vmax.xlane.f32.xlu0 %v1110
          %v1112 = vpop.xlane.xlu0 %1111
          %v1113 = vmax.f32 %v984, %v986
          %1114 = vmax.xlane.f32.xlu0 %v1113
          %v1115 = vpop.xlane.xlu0 %1114
          %v1116 = vmax.f32 %v988, %v1022
          %v1117 = vmax.f32 %v989, %v1025
          %v1118 = vmax.f32 %v990, %v1028
          %v1119 = vmax.f32 %v991, %v1031
          %v1120 = vmax.f32 %v992, %v1034
          %v1121 = vmax.f32 %v993, %v1037
          %v1122 = vmax.f32 %v994, %v1040
          %v1123 = vmax.f32 %v995, %v1043
          %v1124 = vmax.f32 %v996, %v1046
          %v1125 = vmax.f32 %v997, %v1049
          %v1126 = vmax.f32 %v998, %v1052
          %v1127 = vmax.f32 %v999, %v1055
          %v1128 = vmax.f32 %v1000, %v1058
          %v1129 = vmax.f32 %v1001, %v1061
          %v1130 = vmax.f32 %v1002, %v1064
          %v1131 = vmax.f32 %v1003, %v1067
          %v1132 = vmax.f32 %v1004, %v1070
          %v1133 = vmax.f32 %v1005, %v1073
          %v1134 = vmax.f32 %v1006, %v1076
          %v1135 = vmax.f32 %v1007, %v1079
          %v1136 = vmax.f32 %v1008, %v1082
          %v1137 = vmax.f32 %v1009, %v1085
          %v1138 = vmax.f32 %v1010, %v1088
          %v1139 = vmax.f32 %v1011, %v1091
          %v1140 = vmax.f32 %v1012, %v1094
          %v1141 = vmax.f32 %v1013, %v1097
          %v1142 = vmax.f32 %v1014, %v1100
          %v1143 = vmax.f32 %v1015, %v1103
          %v1144 = vmax.f32 %v1016, %v1106
          %v1145 = vmax.f32 %v1017, %v1109
          %v1146 = vmax.f32 %v1018, %v1112
          %v1147 = vmax.f32 %v1019, %v1115
          %v1148 = vsub.f32 %v988, %v1116
          %v1149 = vsub.f32 %v989, %v1117
          %v1150 = vsub.f32 %v990, %v1118
          %v1151 = vsub.f32 %v991, %v1119
          %v1152 = vsub.f32 %v992, %v1120
          %v1153 = vsub.f32 %v993, %v1121
          %v1154 = vsub.f32 %v994, %v1122
          %v1155 = vsub.f32 %v995, %v1123
          %v1156 = vsub.f32 %v996, %v1124
          %v1157 = vsub.f32 %v997, %v1125
          %v1158 = vsub.f32 %v998, %v1126
          %v1159 = vsub.f32 %v999, %v1127
          %v1160 = vsub.f32 %v1000, %v1128
          %v1161 = vsub.f32 %v1001, %v1129
          %v1162 = vsub.f32 %v1002, %v1130
          %v1163 = vsub.f32 %v1003, %v1131
          %v1164 = vsub.f32 %v1004, %v1132
          %v1165 = vsub.f32 %v1005, %v1133
          %v1166 = vsub.f32 %v1006, %v1134
          %v1167 = vsub.f32 %v1007, %v1135
          %v1168 = vsub.f32 %v1008, %v1136
          %v1169 = vsub.f32 %v1009, %v1137
          %v1170 = vsub.f32 %v1010, %v1138
          %v1171 = vsub.f32 %v1011, %v1139
          %v1172 = vsub.f32 %v1012, %v1140
          %v1173 = vsub.f32 %v1013, %v1141
          %v1174 = vsub.f32 %v1014, %v1142
          %v1175 = vsub.f32 %v1015, %v1143
          %v1176 = vsub.f32 %v1016, %v1144
          %v1177 = vsub.f32 %v1017, %v1145
          %v1178 = vsub.f32 %v1018, %v1146
          %v1179 = vsub.f32 %v1019, %v1147
          %v1180 = vmul.f32 %v1148, 1.442695
          %v1181 = vpow.pop %v1180
          %v1182 = vmul.f32 %v1149, 1.442695
          %v1183 = vpow.pop %v1182
          %v1184 = vmul.f32 %v1150, 1.442695
          %v1185 = vpow.pop %v1184
          %v1186 = vmul.f32 %v1151, 1.442695
          %v1187 = vpow.pop %v1186
          %v1188 = vmul.f32 %v1152, 1.442695
          %v1189 = vpow.pop %v1188
          %v1190 = vmul.f32 %v1153, 1.442695
          %v1191 = vpow.pop %v1190
          %v1192 = vmul.f32 %v1154, 1.442695
          %v1193 = vpow.pop %v1192
          %v1194 = vmul.f32 %v1155, 1.442695
          %v1195 = vpow.pop %v1194
          %v1196 = vmul.f32 %v1156, 1.442695
          %v1197 = vpow.pop %v1196
          %v1198 = vmul.f32 %v1157, 1.442695
          %v1199 = vpow.pop %v1198
          %v1200 = vmul.f32 %v1158, 1.442695
          %v1201 = vpow.pop %v1200
          %v1202 = vmul.f32 %v1159, 1.442695
          %v1203 = vpow.pop %v1202
          %v1204 = vmul.f32 %v1160, 1.442695
          %v1205 = vpow.pop %v1204
          %v1206 = vmul.f32 %v1161, 1.442695
          %v1207 = vpow.pop %v1206
          %v1208 = vmul.f32 %v1162, 1.442695
          %v1209 = vpow.pop %v1208
          %v1210 = vmul.f32 %v1163, 1.442695
          %v1211 = vpow.pop %v1210
          %v1212 = vmul.f32 %v1164, 1.442695
          %v1213 = vpow.pop %v1212
          %v1214 = vmul.f32 %v1165, 1.442695
          %v1215 = vpow.pop %v1214
          %v1216 = vmul.f32 %v1166, 1.442695
          %v1217 = vpow.pop %v1216
          %v1218 = vmul.f32 %v1167, 1.442695
          %v1219 = vpow.pop %v1218
          %v1220 = vmul.f32 %v1168, 1.442695
          %v1221 = vpow.pop %v1220
          %v1222 = vmul.f32 %v1169, 1.442695
          %v1223 = vpow.pop %v1222
          %v1224 = vmul.f32 %v1170, 1.442695
          %v1225 = vpow.pop %v1224
          %v1226 = vmul.f32 %v1171, 1.442695
          %v1227 = vpow.pop %v1226
          %v1228 = vmul.f32 %v1172, 1.442695
          %v1229 = vpow.pop %v1228
          %v1230 = vmul.f32 %v1173, 1.442695
          %v1231 = vpow.pop %v1230
          %v1232 = vmul.f32 %v1174, 1.442695
          %v1233 = vpow.pop %v1232
          %v1234 = vmul.f32 %v1175, 1.442695
          %v1235 = vpow.pop %v1234
          %v1236 = vmul.f32 %v1176, 1.442695
          %v1237 = vpow.pop %v1236
          %v1238 = vmul.f32 %v1177, 1.442695
          %v1239 = vpow.pop %v1238
          %v1240 = vmul.f32 %v1178, 1.442695
          %v1241 = vpow.pop %v1240
          %v1242 = vmul.f32 %v1179, 1.442695
          %v1243 = vpow.pop %v1242
          %1245 = vset.pattern.permute.xlu0 0
          %1246 = vperm.xlu0 %1245, %v1116
          %v1247 = vpop.permute.xlu0 %1246
          %1250 = vset.pattern.permute.xlu0 0
          %1251 = vperm.xlu0 %1250, %v1117
          %v1252 = vpop.permute.xlu0 %1251
          %1255 = vset.pattern.permute.xlu0 0
          %1256 = vperm.xlu0 %1255, %v1118
          %v1257 = vpop.permute.xlu0 %1256
          %1260 = vset.pattern.permute.xlu0 0
          %1261 = vperm.xlu0 %1260, %v1119
          %v1262 = vpop.permute.xlu0 %1261
          %1265 = vset.pattern.permute.xlu0 0
          %1266 = vperm.xlu0 %1265, %v1120
          %v1267 = vpop.permute.xlu0 %1266
          %1270 = vset.pattern.permute.xlu0 0
          %1271 = vperm.xlu0 %1270, %v1121
          %v1272 = vpop.permute.xlu0 %1271
          %1275 = vset.pattern.permute.xlu0 0
          %1276 = vperm.xlu0 %1275, %v1122
          %v1277 = vpop.permute.xlu0 %1276
          %1280 = vset.pattern.permute.xlu0 0
          %1281 = vperm.xlu0 %1280, %v1123
          %v1282 = vpop.permute.xlu0 %1281
          %1285 = vset.pattern.permute.xlu0 0
          %1286 = vperm.xlu0 %1285, %v1124
          %v1287 = vpop.permute.xlu0 %1286
          %1290 = vset.pattern.permute.xlu0 0
          %1291 = vperm.xlu0 %1290, %v1125
          %v1292 = vpop.permute.xlu0 %1291
          %1295 = vset.pattern.permute.xlu0 0
          %1296 = vperm.xlu0 %1295, %v1126
          %v1297 = vpop.permute.xlu0 %1296
          %1300 = vset.pattern.permute.xlu0 0
          %1301 = vperm.xlu0 %1300, %v1127
          %v1302 = vpop.permute.xlu0 %1301
          %1305 = vset.pattern.permute.xlu0 0
          %1306 = vperm.xlu0 %1305, %v1128
          %v1307 = vpop.permute.xlu0 %1306
          %1310 = vset.pattern.permute.xlu0 0
          %1311 = vperm.xlu0 %1310, %v1129
          %v1312 = vpop.permute.xlu0 %1311
          %1315 = vset.pattern.permute.xlu0 0
          %1316 = vperm.xlu0 %1315, %v1130
          %v1317 = vpop.permute.xlu0 %1316
          %1320 = vset.pattern.permute.xlu0 0
          %1321 = vperm.xlu0 %1320, %v1131
          %v1322 = vpop.permute.xlu0 %1321
          %1325 = vset.pattern.permute.xlu0 0
          %1326 = vperm.xlu0 %1325, %v1132
          %v1327 = vpop.permute.xlu0 %1326
          %1330 = vset.pattern.permute.xlu0 0
          %1331 = vperm.xlu0 %1330, %v1133
          %v1332 = vpop.permute.xlu0 %1331
          %1335 = vset.pattern.permute.xlu0 0
          %1336 = vperm.xlu0 %1335, %v1134
          %v1337 = vpop.permute.xlu0 %1336
          %1340 = vset.pattern.permute.xlu0 0
          %1341 = vperm.xlu0 %1340, %v1135
          %v1342 = vpop.permute.xlu0 %1341
          %1345 = vset.pattern.permute.xlu0 0
          %1346 = vperm.xlu0 %1345, %v1136
          %v1347 = vpop.permute.xlu0 %1346
          %1350 = vset.pattern.permute.xlu0 0
          %1351 = vperm.xlu0 %1350, %v1137
          %v1352 = vpop.permute.xlu0 %1351
          %1355 = vset.pattern.permute.xlu0 0
          %1356 = vperm.xlu0 %1355, %v1138
          %v1357 = vpop.permute.xlu0 %1356
          %1360 = vset.pattern.permute.xlu0 0
          %1361 = vperm.xlu0 %1360, %v1139
          %v1362 = vpop.permute.xlu0 %1361
          %1365 = vset.pattern.permute.xlu0 0
          %1366 = vperm.xlu0 %1365, %v1140
          %v1367 = vpop.permute.xlu0 %1366
          %1370 = vset.pattern.permute.xlu0 0
          %1371 = vperm.xlu0 %1370, %v1141
          %v1372 = vpop.permute.xlu0 %1371
          %1375 = vset.pattern.permute.xlu0 0
          %1376 = vperm.xlu0 %1375, %v1142
          %v1377 = vpop.permute.xlu0 %1376
          %1380 = vset.pattern.permute.xlu0 0
          %1381 = vperm.xlu0 %1380, %v1143
          %v1382 = vpop.permute.xlu0 %1381
          %1385 = vset.pattern.permute.xlu0 0
          %1386 = vperm.xlu0 %1385, %v1144
          %v1387 = vpop.permute.xlu0 %1386
          %1390 = vset.pattern.permute.xlu0 0
          %1391 = vperm.xlu0 %1390, %v1145
          %v1392 = vpop.permute.xlu0 %1391
          %1395 = vset.pattern.permute.xlu0 0
          %1396 = vperm.xlu0 %1395, %v1146
          %v1397 = vpop.permute.xlu0 %1396
          %1400 = vset.pattern.permute.xlu0 0
          %1401 = vperm.xlu0 %1400, %v1147
          %v1402 = vpop.permute.xlu0 %1401
          %v1404 = vsub.f32 %v798, %v1247
          %v1405 = vsub.f32 %v800, %v1247
          %v1406 = vsub.f32 %v804, %v1252
          %v1407 = vsub.f32 %v806, %v1252
          %v1408 = vsub.f32 %v810, %v1257
          %v1409 = vsub.f32 %v812, %v1257
          %v1410 = vsub.f32 %v816, %v1262
          %v1411 = vsub.f32 %v818, %v1262
          %v1412 = vsub.f32 %v822, %v1267
          %v1413 = vsub.f32 %v824, %v1267
          %v1414 = vsub.f32 %v828, %v1272
          %v1415 = vsub.f32 %v830, %v1272
          %v1416 = vsub.f32 %v834, %v1277
          %v1417 = vsub.f32 %v836, %v1277
          %v1418 = vsub.f32 %v840, %v1282
          %v1419 = vsub.f32 %v842, %v1282
          %v1420 = vsub.f32 %v846, %v1287
          %v1421 = vsub.f32 %v848, %v1287
          %v1422 = vsub.f32 %v852, %v1292
          %v1423 = vsub.f32 %v854, %v1292
          %v1424 = vsub.f32 %v858, %v1297
          %v1425 = vsub.f32 %v860, %v1297
          %v1426 = vsub.f32 %v864, %v1302
          %v1427 = vsub.f32 %v866, %v1302
          %v1428 = vsub.f32 %v870, %v1307
          %v1429 = vsub.f32 %v872, %v1307
          %v1430 = vsub.f32 %v876, %v1312
          %v1431 = vsub.f32 %v878, %v1312
          %v1432 = vsub.f32 %v882, %v1317
          %v1433 = vsub.f32 %v884, %v1317
          %v1434 = vsub.f32 %v888, %v1322
          %v1435 = vsub.f32 %v890, %v1322
          %v1436 = vsub.f32 %v894, %v1327
          %v1437 = vsub.f32 %v896, %v1327
          %v1438 = vsub.f32 %v900, %v1332
          %v1439 = vsub.f32 %v902, %v1332
          %v1440 = vsub.f32 %v906, %v1337
          %v1441 = vsub.f32 %v908, %v1337
          %v1442 = vsub.f32 %v912, %v1342
          %v1443 = vsub.f32 %v914, %v1342
          %v1444 = vsub.f32 %v918, %v1347
          %v1445 = vsub.f32 %v920, %v1347
          %v1446 = vsub.f32 %v924, %v1352
          %v1447 = vsub.f32 %v926, %v1352
          %v1448 = vsub.f32 %v930, %v1357
          %v1449 = vsub.f32 %v932, %v1357
          %v1450 = vsub.f32 %v936, %v1362
          %v1451 = vsub.f32 %v938, %v1362
          %v1452 = vsub.f32 %v942, %v1367
          %v1453 = vsub.f32 %v944, %v1367
          %v1454 = vsub.f32 %v948, %v1372
          %v1455 = vsub.f32 %v950, %v1372
          %v1456 = vsub.f32 %v954, %v1377
          %v1457 = vsub.f32 %v956, %v1377
          %v1458 = vsub.f32 %v960, %v1382
          %v1459 = vsub.f32 %v962, %v1382
          %v1460 = vsub.f32 %v966, %v1387
          %v1461 = vsub.f32 %v968, %v1387
          %v1462 = vsub.f32 %v972, %v1392
          %v1463 = vsub.f32 %v974, %v1392
          %v1464 = vsub.f32 %v978, %v1397
          %v1465 = vsub.f32 %v980, %v1397
          %v1466 = vsub.f32 %v984, %v1402
          %v1467 = vsub.f32 %v986, %v1402
          %v1468 = vmul.f32 %v1404, 1.442695
          %v1469 = vpow.pop %v1468
          %v1470 = vmul.f32 %v1405, 1.442695
          %v1471 = vpow.pop %v1470
          %v1472 = vmul.f32 %v1406, 1.442695
          %v1473 = vpow.pop %v1472
          %v1474 = vmul.f32 %v1407, 1.442695
          %v1475 = vpow.pop %v1474
          %v1476 = vmul.f32 %v1408, 1.442695
          %v1477 = vpow.pop %v1476
          %v1478 = vmul.f32 %v1409, 1.442695
          %v1479 = vpow.pop %v1478
          %v1480 = vmul.f32 %v1410, 1.442695
          %v1481 = vpow.pop %v1480
          %v1482 = vmul.f32 %v1411, 1.442695
          %v1483 = vpow.pop %v1482
          %v1484 = vmul.f32 %v1412, 1.442695
          %v1485 = vpow.pop %v1484
          %v1486 = vmul.f32 %v1413, 1.442695
          %v1487 = vpow.pop %v1486
          %v1488 = vmul.f32 %v1414, 1.442695
          %v1489 = vpow.pop %v1488
          %v1490 = vmul.f32 %v1415, 1.442695
          %v1491 = vpow.pop %v1490
          %v1492 = vmul.f32 %v1416, 1.442695
          %v1493 = vpow.pop %v1492
          %v1494 = vmul.f32 %v1417, 1.442695
          %v1495 = vpow.pop %v1494
          %v1496 = vmul.f32 %v1418, 1.442695
          %v1497 = vpow.pop %v1496
          %v1498 = vmul.f32 %v1419, 1.442695
          %v1499 = vpow.pop %v1498
          %v1500 = vmul.f32 %v1420, 1.442695
          %v1501 = vpow.pop %v1500
          %v1502 = vmul.f32 %v1421, 1.442695
          %v1503 = vpow.pop %v1502
          %v1504 = vmul.f32 %v1422, 1.442695
          %v1505 = vpow.pop %v1504
          %v1506 = vmul.f32 %v1423, 1.442695
          %v1507 = vpow.pop %v1506
          %v1508 = vmul.f32 %v1424, 1.442695
          %v1509 = vpow.pop %v1508
          %v1510 = vmul.f32 %v1425, 1.442695
          %v1511 = vpow.pop %v1510
          %v1512 = vmul.f32 %v1426, 1.442695
          %v1513 = vpow.pop %v1512
          %v1514 = vmul.f32 %v1427, 1.442695
          %v1515 = vpow.pop %v1514
          %v1516 = vmul.f32 %v1428, 1.442695
          %v1517 = vpow.pop %v1516
          %v1518 = vmul.f32 %v1429, 1.442695
          %v1519 = vpow.pop %v1518
          %v1520 = vmul.f32 %v1430, 1.442695
          %v1521 = vpow.pop %v1520
          %v1522 = vmul.f32 %v1431, 1.442695
          %v1523 = vpow.pop %v1522
          %v1524 = vmul.f32 %v1432, 1.442695
          %v1525 = vpow.pop %v1524
          %v1526 = vmul.f32 %v1433, 1.442695
          %v1527 = vpow.pop %v1526
          %v1528 = vmul.f32 %v1434, 1.442695
          %v1529 = vpow.pop %v1528
          %v1530 = vmul.f32 %v1435, 1.442695
          %v1531 = vpow.pop %v1530
          %v1532 = vmul.f32 %v1436, 1.442695
          %v1533 = vpow.pop %v1532
          %v1534 = vmul.f32 %v1437, 1.442695
          %v1535 = vpow.pop %v1534
          %v1536 = vmul.f32 %v1438, 1.442695
          %v1537 = vpow.pop %v1536
          %v1538 = vmul.f32 %v1439, 1.442695
          %v1539 = vpow.pop %v1538
          %v1540 = vmul.f32 %v1440, 1.442695
          %v1541 = vpow.pop %v1540
          %v1542 = vmul.f32 %v1441, 1.442695
          %v1543 = vpow.pop %v1542
          %v1544 = vmul.f32 %v1442, 1.442695
          %v1545 = vpow.pop %v1544
          %v1546 = vmul.f32 %v1443, 1.442695
          %v1547 = vpow.pop %v1546
          %v1548 = vmul.f32 %v1444, 1.442695
          %v1549 = vpow.pop %v1548
          %v1550 = vmul.f32 %v1445, 1.442695
          %v1551 = vpow.pop %v1550
          %v1552 = vmul.f32 %v1446, 1.442695
          %v1553 = vpow.pop %v1552
          %v1554 = vmul.f32 %v1447, 1.442695
          %v1555 = vpow.pop %v1554
          %v1556 = vmul.f32 %v1448, 1.442695
          %v1557 = vpow.pop %v1556
          %v1558 = vmul.f32 %v1449, 1.442695
          %v1559 = vpow.pop %v1558
          %v1560 = vmul.f32 %v1450, 1.442695
          %v1561 = vpow.pop %v1560
          %v1562 = vmul.f32 %v1451, 1.442695
          %v1563 = vpow.pop %v1562
          %v1564 = vmul.f32 %v1452, 1.442695
          %v1565 = vpow.pop %v1564
          %v1566 = vmul.f32 %v1453, 1.442695
          %v1567 = vpow.pop %v1566
          %v1568 = vmul.f32 %v1454, 1.442695
          %v1569 = vpow.pop %v1568
          %v1570 = vmul.f32 %v1455, 1.442695
          %v1571 = vpow.pop %v1570
          %v1572 = vmul.f32 %v1456, 1.442695
          %v1573 = vpow.pop %v1572
          %v1574 = vmul.f32 %v1457, 1.442695
          %v1575 = vpow.pop %v1574
          %v1576 = vmul.f32 %v1458, 1.442695
          %v1577 = vpow.pop %v1576
          %v1578 = vmul.f32 %v1459, 1.442695
          %v1579 = vpow.pop %v1578
          %v1580 = vmul.f32 %v1460, 1.442695
          %v1581 = vpow.pop %v1580
          %v1582 = vmul.f32 %v1461, 1.442695
          %v1583 = vpow.pop %v1582
          %v1584 = vmul.f32 %v1462, 1.442695
          %v1585 = vpow.pop %v1584
          %v1586 = vmul.f32 %v1463, 1.442695
          %v1587 = vpow.pop %v1586
          %v1588 = vmul.f32 %v1464, 1.442695
          %v1589 = vpow.pop %v1588
          %v1590 = vmul.f32 %v1465, 1.442695
          %v1591 = vpow.pop %v1590
          %v1592 = vmul.f32 %v1466, 1.442695
          %v1593 = vpow.pop %v1592
          %v1594 = vmul.f32 %v1467, 1.442695
          %v1595 = vpow.pop %v1594
          %v1596 = vld [vmem:[#allocation3] sm:$0xff]
          %v1597 = vld [vmem:[#allocation3 + $0x8] sm:$0xff]
          %v1598 = vld [vmem:[#allocation3 + $0x10] sm:$0xff]
          %v1599 = vld [vmem:[#allocation3 + $0x18] sm:$0xff]
          %v1600 = vld [vmem:[#allocation3 + $0x20] sm:$0xff]
          %v1601 = vld [vmem:[#allocation3 + $0x28] sm:$0xff]
          %v1602 = vld [vmem:[#allocation3 + $0x30] sm:$0xff]
          %v1603 = vld [vmem:[#allocation3 + $0x38] sm:$0xff]
          %v1604 = vld [vmem:[#allocation3 + $0x40] sm:$0xff]
          %v1605 = vld [vmem:[#allocation3 + $0x48] sm:$0xff]
          %v1606 = vld [vmem:[#allocation3 + $0x50] sm:$0xff]
          %v1607 = vld [vmem:[#allocation3 + $0x58] sm:$0xff]
          %v1608 = vld [vmem:[#allocation3 + $0x60] sm:$0xff]
          %v1609 = vld [vmem:[#allocation3 + $0x68] sm:$0xff]
          %v1610 = vld [vmem:[#allocation3 + $0x70] sm:$0xff]
          %v1611 = vld [vmem:[#allocation3 + $0x78] sm:$0xff]
          %v1612 = vld [vmem:[#allocation3 + $0x80] sm:$0xff]
          %v1613 = vld [vmem:[#allocation3 + $0x88] sm:$0xff]
          %v1614 = vld [vmem:[#allocation3 + $0x90] sm:$0xff]
          %v1615 = vld [vmem:[#allocation3 + $0x98] sm:$0xff]
          %v1616 = vld [vmem:[#allocation3 + $0xa0] sm:$0xff]
          %v1617 = vld [vmem:[#allocation3 + $0xa8] sm:$0xff]
          %v1618 = vld [vmem:[#allocation3 + $0xb0] sm:$0xff]
          %v1619 = vld [vmem:[#allocation3 + $0xb8] sm:$0xff]
          %v1620 = vld [vmem:[#allocation3 + $0xc0] sm:$0xff]
          %v1621 = vld [vmem:[#allocation3 + $0xc8] sm:$0xff]
          %v1622 = vld [vmem:[#allocation3 + $0xd0] sm:$0xff]
          %v1623 = vld [vmem:[#allocation3 + $0xd8] sm:$0xff]
          %v1624 = vld [vmem:[#allocation3 + $0xe0] sm:$0xff]
          %v1625 = vld [vmem:[#allocation3 + $0xe8] sm:$0xff]
          %v1626 = vld [vmem:[#allocation3 + $0xf0] sm:$0xff]
          %v1627 = vld [vmem:[#allocation3 + $0xf8] sm:$0xff]
          %v1628 = vmul.f32 %v1181, %v1596
          %v1629 = vmul.f32 %v1183, %v1597
          %v1630 = vmul.f32 %v1185, %v1598
          %v1631 = vmul.f32 %v1187, %v1599
          %v1632 = vmul.f32 %v1189, %v1600
          %v1633 = vmul.f32 %v1191, %v1601
          %v1634 = vmul.f32 %v1193, %v1602
          %v1635 = vmul.f32 %v1195, %v1603
          %v1636 = vmul.f32 %v1197, %v1604
          %v1637 = vmul.f32 %v1199, %v1605
          %v1638 = vmul.f32 %v1201, %v1606
          %v1639 = vmul.f32 %v1203, %v1607
          %v1640 = vmul.f32 %v1205, %v1608
          %v1641 = vmul.f32 %v1207, %v1609
          %v1642 = vmul.f32 %v1209, %v1610
          %v1643 = vmul.f32 %v1211, %v1611
          %v1644 = vmul.f32 %v1213, %v1612
          %v1645 = vmul.f32 %v1215, %v1613
          %v1646 = vmul.f32 %v1217, %v1614
          %v1647 = vmul.f32 %v1219, %v1615
          %v1648 = vmul.f32 %v1221, %v1616
          %v1649 = vmul.f32 %v1223, %v1617
          %v1650 = vmul.f32 %v1225, %v1618
          %v1651 = vmul.f32 %v1227, %v1619
          %v1652 = vmul.f32 %v1229, %v1620
          %v1653 = vmul.f32 %v1231, %v1621
          %v1654 = vmul.f32 %v1233, %v1622
          %v1655 = vmul.f32 %v1235, %v1623
          %v1656 = vmul.f32 %v1237, %v1624
          %v1657 = vmul.f32 %v1239, %v1625
          %v1658 = vmul.f32 %v1241, %v1626
          %v1659 = vmul.f32 %v1243, %v1627
          %v1660 = vadd.f32 %v1469, %v1471
          %1661 = vadd.xlane.f32.xlu0 %v1660
          %v1662 = vpop.xlane.xlu0 %1661
          %v1663 = vadd.f32 %v1473, %v1475
          %1664 = vadd.xlane.f32.xlu0 %v1663
          %v1665 = vpop.xlane.xlu0 %1664
          %v1666 = vadd.f32 %v1477, %v1479
          %1667 = vadd.xlane.f32.xlu0 %v1666
          %v1668 = vpop.xlane.xlu0 %1667
          %v1669 = vadd.f32 %v1481, %v1483
          %1670 = vadd.xlane.f32.xlu0 %v1669
          %v1671 = vpop.xlane.xlu0 %1670
          %v1672 = vadd.f32 %v1485, %v1487
          %1673 = vadd.xlane.f32.xlu0 %v1672
          %v1674 = vpop.xlane.xlu0 %1673
          %v1675 = vadd.f32 %v1489, %v1491
          %1676 = vadd.xlane.f32.xlu0 %v1675
          %v1677 = vpop.xlane.xlu0 %1676
          %v1678 = vadd.f32 %v1493, %v1495
          %1679 = vadd.xlane.f32.xlu0 %v1678
          %v1680 = vpop.xlane.xlu0 %1679
          %v1681 = vadd.f32 %v1497, %v1499
          %1682 = vadd.xlane.f32.xlu0 %v1681
          %v1683 = vpop.xlane.xlu0 %1682
          %v1684 = vadd.f32 %v1501, %v1503
          %1685 = vadd.xlane.f32.xlu0 %v1684
          %v1686 = vpop.xlane.xlu0 %1685
          %v1687 = vadd.f32 %v1505, %v1507
          %1688 = vadd.xlane.f32.xlu0 %v1687
          %v1689 = vpop.xlane.xlu0 %1688
          %v1690 = vadd.f32 %v1509, %v1511
          %1691 = vadd.xlane.f32.xlu0 %v1690
          %v1692 = vpop.xlane.xlu0 %1691
          %v1693 = vadd.f32 %v1513, %v1515
          %1694 = vadd.xlane.f32.xlu0 %v1693
          %v1695 = vpop.xlane.xlu0 %1694
          %v1696 = vadd.f32 %v1517, %v1519
          %1697 = vadd.xlane.f32.xlu0 %v1696
          %v1698 = vpop.xlane.xlu0 %1697
          %v1699 = vadd.f32 %v1521, %v1523
          %1700 = vadd.xlane.f32.xlu0 %v1699
          %v1701 = vpop.xlane.xlu0 %1700
          %v1702 = vadd.f32 %v1525, %v1527
          %1703 = vadd.xlane.f32.xlu0 %v1702
          %v1704 = vpop.xlane.xlu0 %1703
          %v1705 = vadd.f32 %v1529, %v1531
          %1706 = vadd.xlane.f32.xlu0 %v1705
          %v1707 = vpop.xlane.xlu0 %1706
          %v1708 = vadd.f32 %v1533, %v1535
          %1709 = vadd.xlane.f32.xlu0 %v1708
          %v1710 = vpop.xlane.xlu0 %1709
          %v1711 = vadd.f32 %v1537, %v1539
          %1712 = vadd.xlane.f32.xlu0 %v1711
          %v1713 = vpop.xlane.xlu0 %1712
          %v1714 = vadd.f32 %v1541, %v1543
          %1715 = vadd.xlane.f32.xlu0 %v1714
          %v1716 = vpop.xlane.xlu0 %1715
          %v1717 = vadd.f32 %v1545, %v1547
          %1718 = vadd.xlane.f32.xlu0 %v1717
          %v1719 = vpop.xlane.xlu0 %1718
          %v1720 = vadd.f32 %v1549, %v1551
          %1721 = vadd.xlane.f32.xlu0 %v1720
          %v1722 = vpop.xlane.xlu0 %1721
          %v1723 = vadd.f32 %v1553, %v1555
          %1724 = vadd.xlane.f32.xlu0 %v1723
          %v1725 = vpop.xlane.xlu0 %1724
          %v1726 = vadd.f32 %v1557, %v1559
          %1727 = vadd.xlane.f32.xlu0 %v1726
          %v1728 = vpop.xlane.xlu0 %1727
          %v1729 = vadd.f32 %v1561, %v1563
          %1730 = vadd.xlane.f32.xlu0 %v1729
          %v1731 = vpop.xlane.xlu0 %1730
          %v1732 = vadd.f32 %v1565, %v1567
          %1733 = vadd.xlane.f32.xlu0 %v1732
          %v1734 = vpop.xlane.xlu0 %1733
          %v1735 = vadd.f32 %v1569, %v1571
          %1736 = vadd.xlane.f32.xlu0 %v1735
          %v1737 = vpop.xlane.xlu0 %1736
          %v1738 = vadd.f32 %v1573, %v1575
          %1739 = vadd.xlane.f32.xlu0 %v1738
          %v1740 = vpop.xlane.xlu0 %1739
          %v1741 = vadd.f32 %v1577, %v1579
          %1742 = vadd.xlane.f32.xlu0 %v1741
          %v1743 = vpop.xlane.xlu0 %1742
          %v1744 = vadd.f32 %v1581, %v1583
          %1745 = vadd.xlane.f32.xlu0 %v1744
          %v1746 = vpop.xlane.xlu0 %1745
          %v1747 = vadd.f32 %v1585, %v1587
          %1748 = vadd.xlane.f32.xlu0 %v1747
          %v1749 = vpop.xlane.xlu0 %1748
          %v1750 = vadd.f32 %v1589, %v1591
          %1751 = vadd.xlane.f32.xlu0 %v1750
          %v1752 = vpop.xlane.xlu0 %1751
          %v1753 = vadd.f32 %v1593, %v1595
          %1754 = vadd.xlane.f32.xlu0 %v1753
          %v1755 = vpop.xlane.xlu0 %1754
          %v1756 = vadd.f32 %v1628, %v1662
          %v1757 = vadd.f32 %v1629, %v1665
          %v1758 = vadd.f32 %v1630, %v1668
          %v1759 = vadd.f32 %v1631, %v1671
          %v1760 = vadd.f32 %v1632, %v1674
          %v1761 = vadd.f32 %v1633, %v1677
          %v1762 = vadd.f32 %v1634, %v1680
          %v1763 = vadd.f32 %v1635, %v1683
          %v1764 = vadd.f32 %v1636, %v1686
          %v1765 = vadd.f32 %v1637, %v1689
          %v1766 = vadd.f32 %v1638, %v1692
          %v1767 = vadd.f32 %v1639, %v1695
          %v1768 = vadd.f32 %v1640, %v1698
          %v1769 = vadd.f32 %v1641, %v1701
          %v1770 = vadd.f32 %v1642, %v1704
          %v1771 = vadd.f32 %v1643, %v1707
          %v1772 = vadd.f32 %v1644, %v1710
          %v1773 = vadd.f32 %v1645, %v1713
          %v1774 = vadd.f32 %v1646, %v1716
          %v1775 = vadd.f32 %v1647, %v1719
          %v1776 = vadd.f32 %v1648, %v1722
          %v1777 = vadd.f32 %v1649, %v1725
          %v1778 = vadd.f32 %v1650, %v1728
          %v1779 = vadd.f32 %v1651, %v1731
          %v1780 = vadd.f32 %v1652, %v1734
          %v1781 = vadd.f32 %v1653, %v1737
          %v1782 = vadd.f32 %v1654, %v1740
          %v1783 = vadd.f32 %v1655, %v1743
          %v1784 = vadd.f32 %v1656, %v1746
          %v1785 = vadd.f32 %v1657, %v1749
          %v1786 = vadd.f32 %v1658, %v1752
          %v1787 = vadd.f32 %v1659, %v1755
          %vm1788 = vcmask 7168
          %1789 = vst.msk [vmem:[#allocation3] sm:$0xff] %vm1788, %v1756
          %1790 = vst.msk [vmem:[#allocation3 + $0x8] sm:$0xff] %vm1788, %v1757
          %1791 = vst.msk [vmem:[#allocation3 + $0x10] sm:$0xff] %vm1788, %v1758
          %1792 = vst.msk [vmem:[#allocation3 + $0x18] sm:$0xff] %vm1788, %v1759
          %1793 = vst.msk [vmem:[#allocation3 + $0x20] sm:$0xff] %vm1788, %v1760
          %1794 = vst.msk [vmem:[#allocation3 + $0x28] sm:$0xff] %vm1788, %v1761
          %1795 = vst.msk [vmem:[#allocation3 + $0x30] sm:$0xff] %vm1788, %v1762
          %1796 = vst.msk [vmem:[#allocation3 + $0x38] sm:$0xff] %vm1788, %v1763
          %1797 = vst.msk [vmem:[#allocation3 + $0x40] sm:$0xff] %vm1788, %v1764
          %1798 = vst.msk [vmem:[#allocation3 + $0x48] sm:$0xff] %vm1788, %v1765
          %1799 = vst.msk [vmem:[#allocation3 + $0x50] sm:$0xff] %vm1788, %v1766
          %1800 = vst.msk [vmem:[#allocation3 + $0x58] sm:$0xff] %vm1788, %v1767
          %1801 = vst.msk [vmem:[#allocation3 + $0x60] sm:$0xff] %vm1788, %v1768
          %1802 = vst.msk [vmem:[#allocation3 + $0x68] sm:$0xff] %vm1788, %v1769
          %1803 = vst.msk [vmem:[#allocation3 + $0x70] sm:$0xff] %vm1788, %v1770
          %1804 = vst.msk [vmem:[#allocation3 + $0x78] sm:$0xff] %vm1788, %v1771
          %1805 = vst.msk [vmem:[#allocation3 + $0x80] sm:$0xff] %vm1788, %v1772
          %1806 = vst.msk [vmem:[#allocation3 + $0x88] sm:$0xff] %vm1788, %v1773
          %1807 = vst.msk [vmem:[#allocation3 + $0x90] sm:$0xff] %vm1788, %v1774
          %1808 = vst.msk [vmem:[#allocation3 + $0x98] sm:$0xff] %vm1788, %v1775
          %1809 = vst.msk [vmem:[#allocation3 + $0xa0] sm:$0xff] %vm1788, %v1776
          %1810 = vst.msk [vmem:[#allocation3 + $0xa8] sm:$0xff] %vm1788, %v1777
          %1811 = vst.msk [vmem:[#allocation3 + $0xb0] sm:$0xff] %vm1788, %v1778
          %1812 = vst.msk [vmem:[#allocation3 + $0xb8] sm:$0xff] %vm1788, %v1779
          %1813 = vst.msk [vmem:[#allocation3 + $0xc0] sm:$0xff] %vm1788, %v1780
          %1814 = vst.msk [vmem:[#allocation3 + $0xc8] sm:$0xff] %vm1788, %v1781
          %1815 = vst.msk [vmem:[#allocation3 + $0xd0] sm:$0xff] %vm1788, %v1782
          %1816 = vst.msk [vmem:[#allocation3 + $0xd8] sm:$0xff] %vm1788, %v1783
          %1817 = vst.msk [vmem:[#allocation3 + $0xe0] sm:$0xff] %vm1788, %v1784
          %1818 = vst.msk [vmem:[#allocation3 + $0xe8] sm:$0xff] %vm1788, %v1785
          %1819 = vst.msk [vmem:[#allocation3 + $0xf0] sm:$0xff] %vm1788, %v1786
          %1820 = vst.msk [vmem:[#allocation3 + $0xf8] sm:$0xff] %vm1788, %v1787
          %v1821 = vld [vmem:[%s388] sm:$0xff]
          %v1822 = vld [vmem:[%s388 + $0x8] sm:$0xff]
          %v1823 = vld [vmem:[%s388 + $0x10] sm:$0xff]
          %v1824 = vld [vmem:[%s388 + $0x18] sm:$0xff]
          %v1825 = vld [vmem:[%s388 + $0x20] sm:$0xff]
          %v1826 = vld [vmem:[%s388 + $0x28] sm:$0xff]
          %v1827 = vld [vmem:[%s388 + $0x30] sm:$0xff]
          %v1828 = vld [vmem:[%s388 + $0x38] sm:$0xff]
          %v1829 = vld [vmem:[%s388 + $0x40] sm:$0xff]
          %v1830 = vld [vmem:[%s388 + $0x48] sm:$0xff]
          %v1831 = vld [vmem:[%s388 + $0x50] sm:$0xff]
          %v1832 = vld [vmem:[%s388 + $0x58] sm:$0xff]
          %v1833 = vld [vmem:[%s388 + $0x60] sm:$0xff]
          %v1834 = vld [vmem:[%s388 + $0x68] sm:$0xff]
          %v1835 = vld [vmem:[%s388 + $0x70] sm:$0xff]
          %v1836 = vld [vmem:[%s388 + $0x78] sm:$0xff]
          %v1837 = vld [vmem:[%s388 + $0x80] sm:$0xff]
          %v1838 = vld [vmem:[%s388 + $0x88] sm:$0xff]
          %v1839 = vld [vmem:[%s388 + $0x90] sm:$0xff]
          %v1840 = vld [vmem:[%s388 + $0x98] sm:$0xff]
          %v1841 = vld [vmem:[%s388 + $0xa0] sm:$0xff]
          %v1842 = vld [vmem:[%s388 + $0xa8] sm:$0xff]
          %v1843 = vld [vmem:[%s388 + $0xb0] sm:$0xff]
          %v1844 = vld [vmem:[%s388 + $0xb8] sm:$0xff]
          %v1845 = vld [vmem:[%s388 + $0xc0] sm:$0xff]
          %v1846 = vld [vmem:[%s388 + $0xc8] sm:$0xff]
          %v1847 = vld [vmem:[%s388 + $0xd0] sm:$0xff]
          %v1848 = vld [vmem:[%s388 + $0xd8] sm:$0xff]
          %v1849 = vld [vmem:[%s388 + $0xe0] sm:$0xff]
          %v1850 = vld [vmem:[%s388 + $0xe8] sm:$0xff]
          %v1851 = vld [vmem:[%s388 + $0xf0] sm:$0xff]
          %v1852 = vld [vmem:[%s388 + $0xf8] sm:$0xff]
          %1853 = vmatprep.subr.mxu0 0.0
          %1854 = vmatpush1.msra.mxu0 %v1821
          %1855 = vmatprep.subr.mxu0 0.0
          %1856 = vmatpush1.msra.mxu0 %v1822
          %1857 = vmatprep.subr.mxu0 0.0
          %1858 = vmatpush1.msra.mxu0 %v1823
          %1859 = vmatprep.subr.mxu0 0.0
          %1860 = vmatpush1.msra.mxu0 %v1824
          %1861 = vmatprep.subr.mxu0 0.0
          %1862 = vmatpush1.msra.mxu0 %v1825
          %1863 = vmatprep.subr.mxu0 0.0
          %1864 = vmatpush1.msra.mxu0 %v1826
          %1865 = vmatprep.subr.mxu0 0.0
          %1866 = vmatpush1.msra.mxu0 %v1827
          %1867 = vmatprep.subr.mxu0 0.0
          %1868 = vmatpush1.msra.mxu0 %v1828
          %1869 = vmatprep.subr.mxu0 0.0
          %1870 = vmatpush1.msra.mxu0 %v1829
          %1871 = vmatprep.subr.mxu0 0.0
          %1872 = vmatpush1.msra.mxu0 %v1830
          %1873 = vmatprep.subr.mxu0 0.0
          %1874 = vmatpush1.msra.mxu0 %v1831
          %1875 = vmatprep.subr.mxu0 0.0
          %1876 = vmatpush1.msra.mxu0 %v1832
          %1877 = vmatprep.subr.mxu0 0.0
          %1878 = vmatpush1.msra.mxu0 %v1833
          %1879 = vmatprep.subr.mxu0 0.0
          %1880 = vmatpush1.msra.mxu0 %v1834
          %1881 = vmatprep.subr.mxu0 0.0
          %1882 = vmatpush1.msra.mxu0 %v1835
          %1883 = vmatprep.subr.mxu0 0.0
          %1884 = vmatpush1.msra.mxu0 %v1836
          %1885 = vmatprep.subr.mxu0 0.0
          %1886 = vmatpush1.msra.mxu0 %v1837
          %1887 = vmatprep.subr.mxu0 0.0
          %1888 = vmatpush1.msra.mxu0 %v1838
          %1889 = vmatprep.subr.mxu0 0.0
          %1890 = vmatpush1.msra.mxu0 %v1839
          %1891 = vmatprep.subr.mxu0 0.0
          %1892 = vmatpush1.msra.mxu0 %v1840
          %1893 = vmatprep.subr.mxu0 0.0
          %1894 = vmatpush1.msra.mxu0 %v1841
          %1895 = vmatprep.subr.mxu0 0.0
          %1896 = vmatpush1.msra.mxu0 %v1842
          %1897 = vmatprep.subr.mxu0 0.0
          %1898 = vmatpush1.msra.mxu0 %v1843
          %1899 = vmatprep.subr.mxu0 0.0
          %1900 = vmatpush1.msra.mxu0 %v1844
          %1901 = vmatprep.subr.mxu0 0.0
          %1902 = vmatpush1.msra.mxu0 %v1845
          %1903 = vmatprep.subr.mxu0 0.0
          %1904 = vmatpush1.msra.mxu0 %v1846
          %1905 = vmatprep.subr.mxu0 0.0
          %1906 = vmatpush1.msra.mxu0 %v1847
          %1907 = vmatprep.subr.mxu0 0.0
          %1908 = vmatpush1.msra.mxu0 %v1848
          %1909 = vmatprep.subr.mxu0 0.0
          %1910 = vmatpush1.msra.mxu0 %v1849
          %1911 = vmatprep.subr.mxu0 0.0
          %1912 = vmatpush1.msra.mxu0 %v1850
          %1913 = vmatprep.subr.mxu0 0.0
          %1914 = vmatpush1.msra.mxu0 %v1851
          %1915 = vmatprep.subr.mxu0 0.0
          %1916 = vmatpush1.msra.mxu0 %v1852
          %1917 = vmatprep.mubr.f32.mxu0 %v1471
          %1918 = vmatmul.mubr.f32.gmra.mrb[0].mxu0 %v1469
          %v1919 = vpop.f32.mrb[0].mxu0
          %v1920 = vadd.f32 0.0, %v1919
          %v1921 = vpop.f32.mrb[0].mxu0
          %1922 = vmatprep.mubr.f32.mxu0 %v1475
          %1923 = vmatmul.mubr.f32.gmra.mrb[0].mxu0 %v1473
          %v1924 = vpop.f32.mrb[0].mxu0
          %v1925 = vadd.f32 0.0, %v1924
          %v1926 = vpop.f32.mrb[0].mxu0
          %1927 = vmatprep.mubr.f32.mxu0 %v1479
          %1928 = vmatmul.mubr.f32.gmra.mrb[0].mxu0 %v1477
          %v1929 = vpop.f32.mrb[0].mxu0
          %v1930 = vadd.f32 0.0, %v1929
          %v1931 = vpop.f32.mrb[0].mxu0
          %1932 = vmatprep.mubr.f32.mxu0 %v1483
          %1933 = vmatmul.mubr.f32.gmra.mrb[0].mxu0 %v1481
          %v1934 = vpop.f32.mrb[0].mxu0
          %v1935 = vadd.f32 0.0, %v1934
          %v1936 = vpop.f32.mrb[0].mxu0
          %1937 = vmatprep.mubr.f32.mxu0 %v1487
          %1938 = vmatmul.mubr.f32.gmra.mrb[0].mxu0 %v1485
          %v1939 = vpop.f32.mrb[0].mxu0
          %v1940 = vadd.f32 0.0, %v1939
          %v1941 = vpop.f32.mrb[0].mxu0
          %1942 = vmatprep.mubr.f32.mxu0 %v1491
          %1943 = vmatmul.mubr.f32.gmra.mrb[0].mxu0 %v1489
          %v1944 = vpop.f32.mrb[0].mxu0
          %v1945 = vadd.f32 0.0, %v1944
          %v1946 = vpop.f32.mrb[0].mxu0
          %1947 = vmatprep.mubr.f32.mxu0 %v1495
          %1948 = vmatmul.mubr.f32.gmra.mrb[0].mxu0 %v1493
          %v1949 = vpop.f32.mrb[0].mxu0
          %v1950 = vadd.f32 0.0, %v1949
          %v1951 = vpop.f32.mrb[0].mxu0
          %1952 = vmatprep.mubr.f32.mxu0 %v1499
          %1953 = vmatmul.mubr.f32.gmra.mrb[0].mxu0 %v1497
          %v1954 = vpop.f32.mrb[0].mxu0
          %v1955 = vadd.f32 0.0, %v1954
          %v1956 = vpop.f32.mrb[0].mxu0
          %1957 = vmatprep.mubr.f32.mxu0 %v1503
          %1958 = vmatmul.mubr.f32.gmra.mrb[0].mxu0 %v1501
          %v1959 = vpop.f32.mrb[0].mxu0
          %v1960 = vadd.f32 0.0, %v1959
          %v1961 = vpop.f32.mrb[0].mxu0
          %1962 = vmatprep.mubr.f32.mxu0 %v1507
          %1963 = vmatmul.mubr.f32.gmra.mrb[0].mxu0 %v1505
          %v1964 = vpop.f32.mrb[0].mxu0
          %v1965 = vadd.f32 0.0, %v1964
          %v1966 = vpop.f32.mrb[0].mxu0
          %1967 = vmatprep.mubr.f32.mxu0 %v1511
          %1968 = vmatmul.mubr.f32.gmra.mrb[0].mxu0 %v1509
          %v1969 = vpop.f32.mrb[0].mxu0
          %v1970 = vadd.f32 0.0, %v1969
          %v1971 = vpop.f32.mrb[0].mxu0
          %1972 = vmatprep.mubr.f32.mxu0 %v1515
          %1973 = vmatmul.mubr.f32.gmra.mrb[0].mxu0 %v1513
          %v1974 = vpop.f32.mrb[0].mxu0
          %v1975 = vadd.f32 0.0, %v1974
          %v1976 = vpop.f32.mrb[0].mxu0
          %1977 = vmatprep.mubr.f32.mxu0 %v1519
          %1978 = vmatmul.mubr.f32.gmra.mrb[0].mxu0 %v1517
          %v1979 = vpop.f32.mrb[0].mxu0
          %v1980 = vadd.f32 0.0, %v1979
          %v1981 = vpop.f32.mrb[0].mxu0
          %1982 = vmatprep.mubr.f32.mxu0 %v1523
          %1983 = vmatmul.mubr.f32.gmra.mrb[0].mxu0 %v1521
          %v1984 = vpop.f32.mrb[0].mxu0
          %v1985 = vadd.f32 0.0, %v1984
          %v1986 = vpop.f32.mrb[0].mxu0
          %1987 = vmatprep.mubr.f32.mxu0 %v1527
          %1988 = vmatmul.mubr.f32.gmra.mrb[0].mxu0 %v1525
          %v1989 = vpop.f32.mrb[0].mxu0
          %v1990 = vadd.f32 0.0, %v1989
          %v1991 = vpop.f32.mrb[0].mxu0
          %1992 = vmatprep.mubr.f32.mxu0 %v1531
          %1993 = vmatmul.mubr.f32.gmra.mrb[0].mxu0 %v1529
          %v1994 = vpop.f32.mrb[0].mxu0
          %v1995 = vadd.f32 0.0, %v1994
          %v1996 = vpop.f32.mrb[0].mxu0
          %1997 = vmatprep.mubr.f32.mxu0 %v1535
          %1998 = vmatmul.mubr.f32.gmra.mrb[0].mxu0 %v1533
          %v1999 = vpop.f32.mrb[0].mxu0
          %v2000 = vadd.f32 0.0, %v1999
          %v2001 = vpop.f32.mrb[0].mxu0
          %2002 = vmatprep.mubr.f32.mxu0 %v1539
          %2003 = vmatmul.mubr.f32.gmra.mrb[0].mxu0 %v1537
          %v2004 = vpop.f32.mrb[0].mxu0
          %v2005 = vadd.f32 0.0, %v2004
          %v2006 = vpop.f32.mrb[0].mxu0
          %2007 = vmatprep.mubr.f32.mxu0 %v1543
          %2008 = vmatmul.mubr.f32.gmra.mrb[0].mxu0 %v1541
          %v2009 = vpop.f32.mrb[0].mxu0
          %v2010 = vadd.f32 0.0, %v2009
          %v2011 = vpop.f32.mrb[0].mxu0
          %2012 = vmatprep.mubr.f32.mxu0 %v1547
          %2013 = vmatmul.mubr.f32.gmra.mrb[0].mxu0 %v1545
          %v2014 = vpop.f32.mrb[0].mxu0
          %v2015 = vadd.f32 0.0, %v2014
          %v2016 = vpop.f32.mrb[0].mxu0
          %2017 = vmatprep.mubr.f32.mxu0 %v1551
          %2018 = vmatmul.mubr.f32.gmra.mrb[0].mxu0 %v1549
          %v2019 = vpop.f32.mrb[0].mxu0
          %v2020 = vadd.f32 0.0, %v2019
          %v2021 = vpop.f32.mrb[0].mxu0
          %2022 = vmatprep.mubr.f32.mxu0 %v1555
          %2023 = vmatmul.mubr.f32.gmra.mrb[0].mxu0 %v1553
          %v2024 = vpop.f32.mrb[0].mxu0
          %v2025 = vadd.f32 0.0, %v2024
          %v2026 = vpop.f32.mrb[0].mxu0
          %2027 = vmatprep.mubr.f32.mxu0 %v1559
          %2028 = vmatmul.mubr.f32.gmra.mrb[0].mxu0 %v1557
          %v2029 = vpop.f32.mrb[0].mxu0
          %v2030 = vadd.f32 0.0, %v2029
          %v2031 = vpop.f32.mrb[0].mxu0
          %2032 = vmatprep.mubr.f32.mxu0 %v1563
          %2033 = vmatmul.mubr.f32.gmra.mrb[0].mxu0 %v1561
          %v2034 = vpop.f32.mrb[0].mxu0
          %v2035 = vadd.f32 0.0, %v2034
          %v2036 = vpop.f32.mrb[0].mxu0
          %2037 = vmatprep.mubr.f32.mxu0 %v1567
          %2038 = vmatmul.mubr.f32.gmra.mrb[0].mxu0 %v1565
          %v2039 = vpop.f32.mrb[0].mxu0
          %v2040 = vadd.f32 0.0, %v2039
          %v2041 = vpop.f32.mrb[0].mxu0
          %2042 = vmatprep.mubr.f32.mxu0 %v1571
          %2043 = vmatmul.mubr.f32.gmra.mrb[0].mxu0 %v1569
          %v2044 = vpop.f32.mrb[0].mxu0
          %v2045 = vadd.f32 0.0, %v2044
          %v2046 = vpop.f32.mrb[0].mxu0
          %2047 = vmatprep.mubr.f32.mxu0 %v1575
          %2048 = vmatmul.mubr.f32.gmra.mrb[0].mxu0 %v1573
          %v2049 = vpop.f32.mrb[0].mxu0
          %v2050 = vadd.f32 0.0, %v2049
          %v2051 = vpop.f32.mrb[0].mxu0
          %2052 = vmatprep.mubr.f32.mxu0 %v1579
          %2053 = vmatmul.mubr.f32.gmra.mrb[0].mxu0 %v1577
          %v2054 = vpop.f32.mrb[0].mxu0
          %v2055 = vadd.f32 0.0, %v2054
          %v2056 = vpop.f32.mrb[0].mxu0
          %2057 = vmatprep.mubr.f32.mxu0 %v1583
          %2058 = vmatmul.mubr.f32.gmra.mrb[0].mxu0 %v1581
          %v2059 = vpop.f32.mrb[0].mxu0
          %v2060 = vadd.f32 0.0, %v2059
          %v2061 = vpop.f32.mrb[0].mxu0
          %2062 = vmatprep.mubr.f32.mxu0 %v1587
          %2063 = vmatmul.mubr.f32.gmra.mrb[0].mxu0 %v1585
          %v2064 = vpop.f32.mrb[0].mxu0
          %v2065 = vadd.f32 0.0, %v2064
          %v2066 = vpop.f32.mrb[0].mxu0
          %2067 = vmatprep.mubr.f32.mxu0 %v1591
          %2068 = vmatmul.mubr.f32.gmra.mrb[0].mxu0 %v1589
          %v2069 = vpop.f32.mrb[0].mxu0
          %v2070 = vadd.f32 0.0, %v2069
          %v2071 = vpop.f32.mrb[0].mxu0
          %2072 = vmatprep.mubr.f32.mxu0 %v1595
          %2073 = vmatmul.mubr.f32.gmra.mrb[0].mxu0 %v1593
          %v2074 = vpop.f32.mrb[0].mxu0
          %v2075 = vadd.f32 0.0, %v2074
          %v2076 = vpop.f32.mrb[0].mxu0
          %2077 = vdwg.mxu0
          %v2078 = vld [vmem:[#allocation4] sm:$0xff]
          %v2079 = vld [vmem:[#allocation4 + $0x8] sm:$0xff]
          %v2080 = vld [vmem:[#allocation4 + $0x10] sm:$0xff]
          %v2081 = vld [vmem:[#allocation4 + $0x18] sm:$0xff]
          %v2082 = vld [vmem:[#allocation4 + $0x20] sm:$0xff]
          %v2083 = vld [vmem:[#allocation4 + $0x28] sm:$0xff]
          %v2084 = vld [vmem:[#allocation4 + $0x30] sm:$0xff]
          %v2085 = vld [vmem:[#allocation4 + $0x38] sm:$0xff]
          %v2086 = vld [vmem:[#allocation4 + $0x40] sm:$0xff]
          %v2087 = vld [vmem:[#allocation4 + $0x48] sm:$0xff]
          %v2088 = vld [vmem:[#allocation4 + $0x50] sm:$0xff]
          %v2089 = vld [vmem:[#allocation4 + $0x58] sm:$0xff]
          %v2090 = vld [vmem:[#allocation4 + $0x60] sm:$0xff]
          %v2091 = vld [vmem:[#allocation4 + $0x68] sm:$0xff]
          %v2092 = vld [vmem:[#allocation4 + $0x70] sm:$0xff]
          %v2093 = vld [vmem:[#allocation4 + $0x78] sm:$0xff]
          %v2094 = vld [vmem:[#allocation4 + $0x80] sm:$0xff]
          %v2095 = vld [vmem:[#allocation4 + $0x88] sm:$0xff]
          %v2096 = vld [vmem:[#allocation4 + $0x90] sm:$0xff]
          %v2097 = vld [vmem:[#allocation4 + $0x98] sm:$0xff]
          %v2098 = vld [vmem:[#allocation4 + $0xa0] sm:$0xff]
          %v2099 = vld [vmem:[#allocation4 + $0xa8] sm:$0xff]
          %v2100 = vld [vmem:[#allocation4 + $0xb0] sm:$0xff]
          %v2101 = vld [vmem:[#allocation4 + $0xb8] sm:$0xff]
          %v2102 = vld [vmem:[#allocation4 + $0xc0] sm:$0xff]
          %v2103 = vld [vmem:[#allocation4 + $0xc8] sm:$0xff]
          %v2104 = vld [vmem:[#allocation4 + $0xd0] sm:$0xff]
          %v2105 = vld [vmem:[#allocation4 + $0xd8] sm:$0xff]
          %v2106 = vld [vmem:[#allocation4 + $0xe0] sm:$0xff]
          %v2107 = vld [vmem:[#allocation4 + $0xe8] sm:$0xff]
          %v2108 = vld [vmem:[#allocation4 + $0xf0] sm:$0xff]
          %v2109 = vld [vmem:[#allocation4 + $0xf8] sm:$0xff]
          %2111 = vset.pattern.permute.xlu0 0
          %2112 = vperm.xlu0 %2111, %v1181
          %v2113 = vpop.permute.xlu0 %2112
          %2116 = vset.pattern.permute.xlu0 0
          %2117 = vperm.xlu0 %2116, %v1183
          %v2118 = vpop.permute.xlu0 %2117
          %2121 = vset.pattern.permute.xlu0 0
          %2122 = vperm.xlu0 %2121, %v1185
          %v2123 = vpop.permute.xlu0 %2122
          %2126 = vset.pattern.permute.xlu0 0
          %2127 = vperm.xlu0 %2126, %v1187
          %v2128 = vpop.permute.xlu0 %2127
          %2131 = vset.pattern.permute.xlu0 0
          %2132 = vperm.xlu0 %2131, %v1189
          %v2133 = vpop.permute.xlu0 %2132
          %2136 = vset.pattern.permute.xlu0 0
          %2137 = vperm.xlu0 %2136, %v1191
          %v2138 = vpop.permute.xlu0 %2137
          %2141 = vset.pattern.permute.xlu0 0
          %2142 = vperm.xlu0 %2141, %v1193
          %v2143 = vpop.permute.xlu0 %2142
          %2146 = vset.pattern.permute.xlu0 0
          %2147 = vperm.xlu0 %2146, %v1195
          %v2148 = vpop.permute.xlu0 %2147
          %2151 = vset.pattern.permute.xlu0 0
          %2152 = vperm.xlu0 %2151, %v1197
          %v2153 = vpop.permute.xlu0 %2152
          %2156 = vset.pattern.permute.xlu0 0
          %2157 = vperm.xlu0 %2156, %v1199
          %v2158 = vpop.permute.xlu0 %2157
          %2161 = vset.pattern.permute.xlu0 0
          %2162 = vperm.xlu0 %2161, %v1201
          %v2163 = vpop.permute.xlu0 %2162
          %2166 = vset.pattern.permute.xlu0 0
          %2167 = vperm.xlu0 %2166, %v1203
          %v2168 = vpop.permute.xlu0 %2167
          %2171 = vset.pattern.permute.xlu0 0
          %2172 = vperm.xlu0 %2171, %v1205
          %v2173 = vpop.permute.xlu0 %2172
          %2176 = vset.pattern.permute.xlu0 0
          %2177 = vperm.xlu0 %2176, %v1207
          %v2178 = vpop.permute.xlu0 %2177
          %2181 = vset.pattern.permute.xlu0 0
          %2182 = vperm.xlu0 %2181, %v1209
          %v2183 = vpop.permute.xlu0 %2182
          %2186 = vset.pattern.permute.xlu0 0
          %2187 = vperm.xlu0 %2186, %v1211
          %v2188 = vpop.permute.xlu0 %2187
          %2191 = vset.pattern.permute.xlu0 0
          %2192 = vperm.xlu0 %2191, %v1213
          %v2193 = vpop.permute.xlu0 %2192
          %2196 = vset.pattern.permute.xlu0 0
          %2197 = vperm.xlu0 %2196, %v1215
          %v2198 = vpop.permute.xlu0 %2197
          %2201 = vset.pattern.permute.xlu0 0
          %2202 = vperm.xlu0 %2201, %v1217
          %v2203 = vpop.permute.xlu0 %2202
          %2206 = vset.pattern.permute.xlu0 0
          %2207 = vperm.xlu0 %2206, %v1219
          %v2208 = vpop.permute.xlu0 %2207
          %2211 = vset.pattern.permute.xlu0 0
          %2212 = vperm.xlu0 %2211, %v1221
          %v2213 = vpop.permute.xlu0 %2212
          %2216 = vset.pattern.permute.xlu0 0
          %2217 = vperm.xlu0 %2216, %v1223
          %v2218 = vpop.permute.xlu0 %2217
          %2221 = vset.pattern.permute.xlu0 0
          %2222 = vperm.xlu0 %2221, %v1225
          %v2223 = vpop.permute.xlu0 %2222
          %2226 = vset.pattern.permute.xlu0 0
          %2227 = vperm.xlu0 %2226, %v1227
          %v2228 = vpop.permute.xlu0 %2227
          %2231 = vset.pattern.permute.xlu0 0
          %2232 = vperm.xlu0 %2231, %v1229
          %v2233 = vpop.permute.xlu0 %2232
          %2236 = vset.pattern.permute.xlu0 0
          %2237 = vperm.xlu0 %2236, %v1231
          %v2238 = vpop.permute.xlu0 %2237
          %2241 = vset.pattern.permute.xlu0 0
          %2242 = vperm.xlu0 %2241, %v1233
          %v2243 = vpop.permute.xlu0 %2242
          %2246 = vset.pattern.permute.xlu0 0
          %2247 = vperm.xlu0 %2246, %v1235
          %v2248 = vpop.permute.xlu0 %2247
          %2251 = vset.pattern.permute.xlu0 0
          %2252 = vperm.xlu0 %2251, %v1237
          %v2253 = vpop.permute.xlu0 %2252
          %2256 = vset.pattern.permute.xlu0 0
          %2257 = vperm.xlu0 %2256, %v1239
          %v2258 = vpop.permute.xlu0 %2257
          %2261 = vset.pattern.permute.xlu0 0
          %2262 = vperm.xlu0 %2261, %v1241
          %v2263 = vpop.permute.xlu0 %2262
          %2266 = vset.pattern.permute.xlu0 0
          %2267 = vperm.xlu0 %2266, %v1243
          %v2268 = vpop.permute.xlu0 %2267
          %v2270 = vmul.f32 %v2113, %v2078
          %v2271 = vmul.f32 %v2118, %v2079
          %v2272 = vmul.f32 %v2123, %v2080
          %v2273 = vmul.f32 %v2128, %v2081
          %v2274 = vmul.f32 %v2133, %v2082
          %v2275 = vmul.f32 %v2138, %v2083
          %v2276 = vmul.f32 %v2143, %v2084
          %v2277 = vmul.f32 %v2148, %v2085
          %v2278 = vmul.f32 %v2153, %v2086
          %v2279 = vmul.f32 %v2158, %v2087
          %v2280 = vmul.f32 %v2163, %v2088
          %v2281 = vmul.f32 %v2168, %v2089
          %v2282 = vmul.f32 %v2173, %v2090
          %v2283 = vmul.f32 %v2178, %v2091
          %v2284 = vmul.f32 %v2183, %v2092
          %v2285 = vmul.f32 %v2188, %v2093
          %v2286 = vmul.f32 %v2193, %v2094
          %v2287 = vmul.f32 %v2198, %v2095
          %v2288 = vmul.f32 %v2203, %v2096
          %v2289 = vmul.f32 %v2208, %v2097
          %v2290 = vmul.f32 %v2213, %v2098
          %v2291 = vmul.f32 %v2218, %v2099
          %v2292 = vmul.f32 %v2223, %v2100
          %v2293 = vmul.f32 %v2228, %v2101
          %v2294 = vmul.f32 %v2233, %v2102
          %v2295 = vmul.f32 %v2238, %v2103
          %v2296 = vmul.f32 %v2243, %v2104
          %v2297 = vmul.f32 %v2248, %v2105
          %v2298 = vmul.f32 %v2253, %v2106
          %v2299 = vmul.f32 %v2258, %v2107
          %v2300 = vmul.f32 %v2263, %v2108
          %v2301 = vmul.f32 %v2268, %v2109
          %v2302 = vadd.f32 %v2270, %v1920
          %v2303 = vadd.f32 %v2271, %v1925
          %v2304 = vadd.f32 %v2272, %v1930
          %v2305 = vadd.f32 %v2273, %v1935
          %v2306 = vadd.f32 %v2274, %v1940
          %v2307 = vadd.f32 %v2275, %v1945
          %v2308 = vadd.f32 %v2276, %v1950
          %v2309 = vadd.f32 %v2277, %v1955
          %v2310 = vadd.f32 %v2278, %v1960
          %v2311 = vadd.f32 %v2279, %v1965
          %v2312 = vadd.f32 %v2280, %v1970
          %v2313 = vadd.f32 %v2281, %v1975
          %v2314 = vadd.f32 %v2282, %v1980
          %v2315 = vadd.f32 %v2283, %v1985
          %v2316 = vadd.f32 %v2284, %v1990
          %v2317 = vadd.f32 %v2285, %v1995
          %v2318 = vadd.f32 %v2286, %v2000
          %v2319 = vadd.f32 %v2287, %v2005
          %v2320 = vadd.f32 %v2288, %v2010
          %v2321 = vadd.f32 %v2289, %v2015
          %v2322 = vadd.f32 %v2290, %v2020
          %v2323 = vadd.f32 %v2291, %v2025
          %v2324 = vadd.f32 %v2292, %v2030
          %v2325 = vadd.f32 %v2293, %v2035
          %v2326 = vadd.f32 %v2294, %v2040
          %v2327 = vadd.f32 %v2295, %v2045
          %v2328 = vadd.f32 %v2296, %v2050
          %v2329 = vadd.f32 %v2297, %v2055
          %v2330 = vadd.f32 %v2298, %v2060
          %v2331 = vadd.f32 %v2299, %v2065
          %v2332 = vadd.f32 %v2300, %v2070
          %v2333 = vadd.f32 %v2301, %v2075
          %2334 = vst [vmem:[#allocation4] sm:$0xff] %v2302
          %2335 = vst [vmem:[#allocation4 + $0x8] sm:$0xff] %v2303
          %2336 = vst [vmem:[#allocation4 + $0x10] sm:$0xff] %v2304
          %2337 = vst [vmem:[#allocation4 + $0x18] sm:$0xff] %v2305
          %2338 = vst [vmem:[#allocation4 + $0x20] sm:$0xff] %v2306
          %2339 = vst [vmem:[#allocation4 + $0x28] sm:$0xff] %v2307
          %2340 = vst [vmem:[#allocation4 + $0x30] sm:$0xff] %v2308
          %2341 = vst [vmem:[#allocation4 + $0x38] sm:$0xff] %v2309
          %2342 = vst [vmem:[#allocation4 + $0x40] sm:$0xff] %v2310
          %2343 = vst [vmem:[#allocation4 + $0x48] sm:$0xff] %v2311
          %2344 = vst [vmem:[#allocation4 + $0x50] sm:$0xff] %v2312
          %2345 = vst [vmem:[#allocation4 + $0x58] sm:$0xff] %v2313
          %2346 = vst [vmem:[#allocation4 + $0x60] sm:$0xff] %v2314
          %2347 = vst [vmem:[#allocation4 + $0x68] sm:$0xff] %v2315
          %2348 = vst [vmem:[#allocation4 + $0x70] sm:$0xff] %v2316
          %2349 = vst [vmem:[#allocation4 + $0x78] sm:$0xff] %v2317
          %2350 = vst [vmem:[#allocation4 + $0x80] sm:$0xff] %v2318
          %2351 = vst [vmem:[#allocation4 + $0x88] sm:$0xff] %v2319
          %2352 = vst [vmem:[#allocation4 + $0x90] sm:$0xff] %v2320
          %2353 = vst [vmem:[#allocation4 + $0x98] sm:$0xff] %v2321
          %2354 = vst [vmem:[#allocation4 + $0xa0] sm:$0xff] %v2322
          %2355 = vst [vmem:[#allocation4 + $0xa8] sm:$0xff] %v2323
          %2356 = vst [vmem:[#allocation4 + $0xb0] sm:$0xff] %v2324
          %2357 = vst [vmem:[#allocation4 + $0xb8] sm:$0xff] %v2325
          %2358 = vst [vmem:[#allocation4 + $0xc0] sm:$0xff] %v2326
          %2359 = vst [vmem:[#allocation4 + $0xc8] sm:$0xff] %v2327
          %2360 = vst [vmem:[#allocation4 + $0xd0] sm:$0xff] %v2328
          %2361 = vst [vmem:[#allocation4 + $0xd8] sm:$0xff] %v2329
          %2362 = vst [vmem:[#allocation4 + $0xe0] sm:$0xff] %v2330
          %2363 = vst [vmem:[#allocation4 + $0xe8] sm:$0xff] %v2331
          %2364 = vst [vmem:[#allocation4 + $0xf0] sm:$0xff] %v2332
          %2365 = vst [vmem:[#allocation4 + $0xf8] sm:$0xff] %v2333
          %2366 = vst.msk [vmem:[#allocation2] sm:$0xff] %vm1788, %v1116
          %2367 = vst.msk [vmem:[#allocation2 + $0x8] sm:$0xff] %vm1788, %v1117
          %2368 = vst.msk [vmem:[#allocation2 + $0x10] sm:$0xff] %vm1788, %v1118
          %2369 = vst.msk [vmem:[#allocation2 + $0x18] sm:$0xff] %vm1788, %v1119
          %2370 = vst.msk [vmem:[#allocation2 + $0x20] sm:$0xff] %vm1788, %v1120
          %2371 = vst.msk [vmem:[#allocation2 + $0x28] sm:$0xff] %vm1788, %v1121
          %2372 = vst.msk [vmem:[#allocation2 + $0x30] sm:$0xff] %vm1788, %v1122
          %2373 = vst.msk [vmem:[#allocation2 + $0x38] sm:$0xff] %vm1788, %v1123
          %2374 = vst.msk [vmem:[#allocation2 + $0x40] sm:$0xff] %vm1788, %v1124
          %2375 = vst.msk [vmem:[#allocation2 + $0x48] sm:$0xff] %vm1788, %v1125
          %2376 = vst.msk [vmem:[#allocation2 + $0x50] sm:$0xff] %vm1788, %v1126
          %2377 = vst.msk [vmem:[#allocation2 + $0x58] sm:$0xff] %vm1788, %v1127
          %2378 = vst.msk [vmem:[#allocation2 + $0x60] sm:$0xff] %vm1788, %v1128
          %2379 = vst.msk [vmem:[#allocation2 + $0x68] sm:$0xff] %vm1788, %v1129
          %2380 = vst.msk [vmem:[#allocation2 + $0x70] sm:$0xff] %vm1788, %v1130
          %2381 = vst.msk [vmem:[#allocation2 + $0x78] sm:$0xff] %vm1788, %v1131
          %2382 = vst.msk [vmem:[#allocation2 + $0x80] sm:$0xff] %vm1788, %v1132
          %2383 = vst.msk [vmem:[#allocation2 + $0x88] sm:$0xff] %vm1788, %v1133
          %2384 = vst.msk [vmem:[#allocation2 + $0x90] sm:$0xff] %vm1788, %v1134
          %2385 = vst.msk [vmem:[#allocation2 + $0x98] sm:$0xff] %vm1788, %v1135
          %2386 = vst.msk [vmem:[#allocation2 + $0xa0] sm:$0xff] %vm1788, %v1136
          %2387 = vst.msk [vmem:[#allocation2 + $0xa8] sm:$0xff] %vm1788, %v1137
          %2388 = vst.msk [vmem:[#allocation2 + $0xb0] sm:$0xff] %vm1788, %v1138
          %2389 = vst.msk [vmem:[#allocation2 + $0xb8] sm:$0xff] %vm1788, %v1139
          %2390 = vst.msk [vmem:[#allocation2 + $0xc0] sm:$0xff] %vm1788, %v1140
          %2391 = vst.msk [vmem:[#allocation2 + $0xc8] sm:$0xff] %vm1788, %v1141
          %2392 = vst.msk [vmem:[#allocation2 + $0xd0] sm:$0xff] %vm1788, %v1142
          %2393 = vst.msk [vmem:[#allocation2 + $0xd8] sm:$0xff] %vm1788, %v1143
          %2394 = vst.msk [vmem:[#allocation2 + $0xe0] sm:$0xff] %vm1788, %v1144
          %2395 = vst.msk [vmem:[#allocation2 + $0xe8] sm:$0xff] %vm1788, %v1145
          %2396 = vst.msk [vmem:[#allocation2 + $0xf0] sm:$0xff] %vm1788, %v1146
          %2397 = vst.msk [vmem:[#allocation2 + $0xf8] sm:$0xff] %vm1788, %v1147
        $region60: #{tpu_custom_call.1} parent=39 // pred_fallthru
          _
        %p2398 = scmp.eq.s32.totalorder %s466, 0
        // Predicated region
        $region61: #{tpu_custom_call.1} parent=39 // pred_check
          %p2399 = pneg %p2398
        $region62: #{tpu_custom_call.1} parent=39 // pred_check_branch
          %2401 = sbr.rel (%p2399) target = $region64
        $region63: #{tpu_custom_call.1} parent=39 // pred_region
          %v2402 = vld [vmem:[#allocation5] sm:$0xff]
          %v2403 = vld [vmem:[#allocation5 + $0x8] sm:$0xff]
          %v2404 = vld [vmem:[#allocation5 + $0x10] sm:$0xff]
          %v2405 = vld [vmem:[#allocation5 + $0x18] sm:$0xff]
          %v2406 = vld [vmem:[#allocation5 + $0x20] sm:$0xff]
          %v2407 = vld [vmem:[#allocation5 + $0x28] sm:$0xff]
          %v2408 = vld [vmem:[#allocation5 + $0x30] sm:$0xff]
          %v2409 = vld [vmem:[#allocation5 + $0x38] sm:$0xff]
          %v2410 = vld [vmem:[#allocation5 + $0x40] sm:$0xff]
          %v2411 = vld [vmem:[#allocation5 + $0x48] sm:$0xff]
          %v2412 = vld [vmem:[#allocation5 + $0x50] sm:$0xff]
          %v2413 = vld [vmem:[#allocation5 + $0x58] sm:$0xff]
          %v2414 = vld [vmem:[#allocation5 + $0x60] sm:$0xff]
          %v2415 = vld [vmem:[#allocation5 + $0x68] sm:$0xff]
          %v2416 = vld [vmem:[#allocation5 + $0x70] sm:$0xff]
          %v2417 = vld [vmem:[#allocation5 + $0x78] sm:$0xff]
          %v2418 = vld [vmem:[#allocation5 + $0x80] sm:$0xff]
          %v2419 = vld [vmem:[#allocation5 + $0x88] sm:$0xff]
          %v2420 = vld [vmem:[#allocation5 + $0x90] sm:$0xff]
          %v2421 = vld [vmem:[#allocation5 + $0x98] sm:$0xff]
          %v2422 = vld [vmem:[#allocation5 + $0xa0] sm:$0xff]
          %v2423 = vld [vmem:[#allocation5 + $0xa8] sm:$0xff]
          %v2424 = vld [vmem:[#allocation5 + $0xb0] sm:$0xff]
          %v2425 = vld [vmem:[#allocation5 + $0xb8] sm:$0xff]
          %v2426 = vld [vmem:[#allocation5 + $0xc0] sm:$0xff]
          %v2427 = vld [vmem:[#allocation5 + $0xc8] sm:$0xff]
          %v2428 = vld [vmem:[#allocation5 + $0xd0] sm:$0xff]
          %v2429 = vld [vmem:[#allocation5 + $0xd8] sm:$0xff]
          %v2430 = vld [vmem:[#allocation5 + $0xe0] sm:$0xff]
          %v2431 = vld [vmem:[#allocation5 + $0xe8] sm:$0xff]
          %v2432 = vld [vmem:[#allocation5 + $0xf0] sm:$0xff]
          %v2433 = vld [vmem:[#allocation5 + $0xf8] sm:$0xff]
          %v2434 = vld [vmem:[%s379] sm:$0xff]
          %v2435 = vld [vmem:[%s379 + $0x8] sm:$0xff]
          %v2436 = vld [vmem:[%s379 + $0x10] sm:$0xff]
          %v2437 = vld [vmem:[%s379 + $0x18] sm:$0xff]
          %v2438 = vld [vmem:[%s379 + $0x20] sm:$0xff]
          %v2439 = vld [vmem:[%s379 + $0x28] sm:$0xff]
          %v2440 = vld [vmem:[%s379 + $0x30] sm:$0xff]
          %v2441 = vld [vmem:[%s379 + $0x38] sm:$0xff]
          %v2442 = vld [vmem:[%s379 + $0x40] sm:$0xff]
          %v2443 = vld [vmem:[%s379 + $0x48] sm:$0xff]
          %v2444 = vld [vmem:[%s379 + $0x50] sm:$0xff]
          %v2445 = vld [vmem:[%s379 + $0x58] sm:$0xff]
          %v2446 = vld [vmem:[%s379 + $0x60] sm:$0xff]
          %v2447 = vld [vmem:[%s379 + $0x68] sm:$0xff]
          %v2448 = vld [vmem:[%s379 + $0x70] sm:$0xff]
          %v2449 = vld [vmem:[%s379 + $0x78] sm:$0xff]
          %v2450 = vld [vmem:[%s379 + $0x80] sm:$0xff]
          %v2451 = vld [vmem:[%s379 + $0x88] sm:$0xff]
          %v2452 = vld [vmem:[%s379 + $0x90] sm:$0xff]
          %v2453 = vld [vmem:[%s379 + $0x98] sm:$0xff]
          %v2454 = vld [vmem:[%s379 + $0xa0] sm:$0xff]
          %v2455 = vld [vmem:[%s379 + $0xa8] sm:$0xff]
          %v2456 = vld [vmem:[%s379 + $0xb0] sm:$0xff]
          %v2457 = vld [vmem:[%s379 + $0xb8] sm:$0xff]
          %v2458 = vld [vmem:[%s379 + $0xc0] sm:$0xff]
          %v2459 = vld [vmem:[%s379 + $0xc8] sm:$0xff]
          %v2460 = vld [vmem:[%s379 + $0xd0] sm:$0xff]
          %v2461 = vld [vmem:[%s379 + $0xd8] sm:$0xff]
          %v2462 = vld [vmem:[%s379 + $0xe0] sm:$0xff]
          %v2463 = vld [vmem:[%s379 + $0xe8] sm:$0xff]
          %v2464 = vld [vmem:[%s379 + $0xf0] sm:$0xff]
          %v2465 = vld [vmem:[%s379 + $0xf8] sm:$0xff]
          %2466 = vmatprep.subr.mxu0 0.0
          %2467 = vmatpush1.xpose.msra.mxu0 %v2434
          %2468 = vmatprep.subr.mxu0 0.0
          %2469 = vmatpush1.xpose.msra.mxu0 %v2435
          %2470 = vmatprep.subr.mxu0 0.0
          %2471 = vmatpush1.xpose.msra.mxu0 %v2436
          %2472 = vmatprep.subr.mxu0 0.0
          %2473 = vmatpush1.xpose.msra.mxu0 %v2437
          %2474 = vmatprep.subr.mxu0 0.0
          %2475 = vmatpush1.xpose.msra.mxu0 %v2438
          %2476 = vmatprep.subr.mxu0 0.0
          %2477 = vmatpush1.xpose.msra.mxu0 %v2439
          %2478 = vmatprep.subr.mxu0 0.0
          %2479 = vmatpush1.xpose.msra.mxu0 %v2440
          %2480 = vmatprep.subr.mxu0 0.0
          %2481 = vmatpush1.xpose.msra.mxu0 %v2441
          %2482 = vmatprep.subr.mxu0 0.0
          %2483 = vmatpush1.xpose.msra.mxu0 %v2442
          %2484 = vmatprep.subr.mxu0 0.0
          %2485 = vmatpush1.xpose.msra.mxu0 %v2443
          %2486 = vmatprep.subr.mxu0 0.0
          %2487 = vmatpush1.xpose.msra.mxu0 %v2444
          %2488 = vmatprep.subr.mxu0 0.0
          %2489 = vmatpush1.xpose.msra.mxu0 %v2445
          %2490 = vmatprep.subr.mxu0 0.0
          %2491 = vmatpush1.xpose.msra.mxu0 %v2446
          %2492 = vmatprep.subr.mxu0 0.0
          %2493 = vmatpush1.xpose.msra.mxu0 %v2447
          %2494 = vmatprep.subr.mxu0 0.0
          %2495 = vmatpush1.xpose.msra.mxu0 %v2448
          %2496 = vmatprep.subr.mxu0 0.0
          %2497 = vmatpush1.xpose.msra.mxu0 %v2449
          %2498 = vmatprep.subr.mxu0 0.0
          %2499 = vmatpush1.xpose.msra.mxu0 %v2450
          %2500 = vmatprep.subr.mxu0 0.0
          %2501 = vmatpush1.xpose.msra.mxu0 %v2451
          %2502 = vmatprep.subr.mxu0 0.0
          %2503 = vmatpush1.xpose.msra.mxu0 %v2452
          %2504 = vmatprep.subr.mxu0 0.0
          %2505 = vmatpush1.xpose.msra.mxu0 %v2453
          %2506 = vmatprep.subr.mxu0 0.0
          %2507 = vmatpush1.xpose.msra.mxu0 %v2454
          %2508 = vmatprep.subr.mxu0 0.0
          %2509 = vmatpush1.xpose.msra.mxu0 %v2455
          %2510 = vmatprep.subr.mxu0 0.0
          %2511 = vmatpush1.xpose.msra.mxu0 %v2456
          %2512 = vmatprep.subr.mxu0 0.0
          %2513 = vmatpush1.xpose.msra.mxu0 %v2457
          %2514 = vmatprep.subr.mxu0 0.0
          %2515 = vmatpush1.xpose.msra.mxu0 %v2458
          %2516 = vmatprep.subr.mxu0 0.0
          %2517 = vmatpush1.xpose.msra.mxu0 %v2459
          %2518 = vmatprep.subr.mxu0 0.0
          %2519 = vmatpush1.xpose.msra.mxu0 %v2460
          %2520 = vmatprep.subr.mxu0 0.0
          %2521 = vmatpush1.xpose.msra.mxu0 %v2461
          %2522 = vmatprep.subr.mxu0 0.0
          %2523 = vmatpush1.xpose.msra.mxu0 %v2462
          %2524 = vmatprep.subr.mxu0 0.0
          %2525 = vmatpush1.xpose.msra.mxu0 %v2463
          %2526 = vmatprep.subr.mxu0 0.0
          %2527 = vmatpush1.xpose.msra.mxu0 %v2464
          %2528 = vmatprep.subr.mxu0 0.0
          %2529 = vmatpush1.xpose.msra.mxu0 %v2465
          %2530 = vmatprep.mubr.f32.mxu0 0.0
          %2531 = vmatmul.mubr.f32.gmra.mrb[0].mxu0 %v2402
          %v2532 = vpop.f32.mrb[0].mxu0
          %v2533 = vadd.f32 0.0, %v2532
          %v2534 = vpop.f32.mrb[0].mxu0
          %v2535 = vadd.f32 0.0, %v2534
          %2536 = vmatprep.mubr.f32.mxu0 0.0
          %2537 = vmatmul.mubr.f32.gmra.mrb[0].mxu0 %v2403
          %v2538 = vpop.f32.mrb[0].mxu0
          %v2539 = vadd.f32 0.0, %v2538
          %v2540 = vpop.f32.mrb[0].mxu0
          %v2541 = vadd.f32 0.0, %v2540
          %2542 = vmatprep.mubr.f32.mxu0 0.0
          %2543 = vmatmul.mubr.f32.gmra.mrb[0].mxu0 %v2404
          %v2544 = vpop.f32.mrb[0].mxu0
          %v2545 = vadd.f32 0.0, %v2544
          %v2546 = vpop.f32.mrb[0].mxu0
          %v2547 = vadd.f32 0.0, %v2546
          %2548 = vmatprep.mubr.f32.mxu0 0.0
          %2549 = vmatmul.mubr.f32.gmra.mrb[0].mxu0 %v2405
          %v2550 = vpop.f32.mrb[0].mxu0
          %v2551 = vadd.f32 0.0, %v2550
          %v2552 = vpop.f32.mrb[0].mxu0
          %v2553 = vadd.f32 0.0, %v2552
          %2554 = vmatprep.mubr.f32.mxu0 0.0
          %2555 = vmatmul.mubr.f32.gmra.mrb[0].mxu0 %v2406
          %v2556 = vpop.f32.mrb[0].mxu0
          %v2557 = vadd.f32 0.0, %v2556
          %v2558 = vpop.f32.mrb[0].mxu0
          %v2559 = vadd.f32 0.0, %v2558
          %2560 = vmatprep.mubr.f32.mxu0 0.0
          %2561 = vmatmul.mubr.f32.gmra.mrb[0].mxu0 %v2407
          %v2562 = vpop.f32.mrb[0].mxu0
          %v2563 = vadd.f32 0.0, %v2562
          %v2564 = vpop.f32.mrb[0].mxu0
          %v2565 = vadd.f32 0.0, %v2564
          %2566 = vmatprep.mubr.f32.mxu0 0.0
          %2567 = vmatmul.mubr.f32.gmra.mrb[0].mxu0 %v2408
          %v2568 = vpop.f32.mrb[0].mxu0
          %v2569 = vadd.f32 0.0, %v2568
          %v2570 = vpop.f32.mrb[0].mxu0
          %v2571 = vadd.f32 0.0, %v2570
          %2572 = vmatprep.mubr.f32.mxu0 0.0
          %2573 = vmatmul.mubr.f32.gmra.mrb[0].mxu0 %v2409
          %v2574 = vpop.f32.mrb[0].mxu0
          %v2575 = vadd.f32 0.0, %v2574
          %v2576 = vpop.f32.mrb[0].mxu0
          %v2577 = vadd.f32 0.0, %v2576
          %2578 = vmatprep.mubr.f32.mxu0 0.0
          %2579 = vmatmul.mubr.f32.gmra.mrb[0].mxu0 %v2410
          %v2580 = vpop.f32.mrb[0].mxu0
          %v2581 = vadd.f32 0.0, %v2580
          %v2582 = vpop.f32.mrb[0].mxu0
          %v2583 = vadd.f32 0.0, %v2582
          %2584 = vmatprep.mubr.f32.mxu0 0.0
          %2585 = vmatmul.mubr.f32.gmra.mrb[0].mxu0 %v2411
          %v2586 = vpop.f32.mrb[0].mxu0
          %v2587 = vadd.f32 0.0, %v2586
          %v2588 = vpop.f32.mrb[0].mxu0
          %v2589 = vadd.f32 0.0, %v2588
          %2590 = vmatprep.mubr.f32.mxu0 0.0
          %2591 = vmatmul.mubr.f32.gmra.mrb[0].mxu0 %v2412
          %v2592 = vpop.f32.mrb[0].mxu0
          %v2593 = vadd.f32 0.0, %v2592
          %v2594 = vpop.f32.mrb[0].mxu0
          %v2595 = vadd.f32 0.0, %v2594
          %2596 = vmatprep.mubr.f32.mxu0 0.0
          %2597 = vmatmul.mubr.f32.gmra.mrb[0].mxu0 %v2413
          %v2598 = vpop.f32.mrb[0].mxu0
          %v2599 = vadd.f32 0.0, %v2598
          %v2600 = vpop.f32.mrb[0].mxu0
          %v2601 = vadd.f32 0.0, %v2600
          %2602 = vmatprep.mubr.f32.mxu0 0.0
          %2603 = vmatmul.mubr.f32.gmra.mrb[0].mxu0 %v2414
          %v2604 = vpop.f32.mrb[0].mxu0
          %v2605 = vadd.f32 0.0, %v2604
          %v2606 = vpop.f32.mrb[0].mxu0
          %v2607 = vadd.f32 0.0, %v2606
          %2608 = vmatprep.mubr.f32.mxu0 0.0
          %2609 = vmatmul.mubr.f32.gmra.mrb[0].mxu0 %v2415
          %v2610 = vpop.f32.mrb[0].mxu0
          %v2611 = vadd.f32 0.0, %v2610
          %v2612 = vpop.f32.mrb[0].mxu0
          %v2613 = vadd.f32 0.0, %v2612
          %2614 = vmatprep.mubr.f32.mxu0 0.0
          %2615 = vmatmul.mubr.f32.gmra.mrb[0].mxu0 %v2416
          %v2616 = vpop.f32.mrb[0].mxu0
          %v2617 = vadd.f32 0.0, %v2616
          %v2618 = vpop.f32.mrb[0].mxu0
          %v2619 = vadd.f32 0.0, %v2618
          %2620 = vmatprep.mubr.f32.mxu0 0.0
          %2621 = vmatmul.mubr.f32.gmra.mrb[0].mxu0 %v2417
          %v2622 = vpop.f32.mrb[0].mxu0
          %v2623 = vadd.f32 0.0, %v2622
          %v2624 = vpop.f32.mrb[0].mxu0
          %v2625 = vadd.f32 0.0, %v2624
          %2626 = vmatprep.mubr.f32.mxu0 0.0
          %2627 = vmatmul.mubr.f32.gmra.mrb[0].mxu0 %v2418
          %v2628 = vpop.f32.mrb[0].mxu0
          %v2629 = vadd.f32 0.0, %v2628
          %v2630 = vpop.f32.mrb[0].mxu0
          %v2631 = vadd.f32 0.0, %v2630
          %2632 = vmatprep.mubr.f32.mxu0 0.0
          %2633 = vmatmul.mubr.f32.gmra.mrb[0].mxu0 %v2419
          %v2634 = vpop.f32.mrb[0].mxu0
          %v2635 = vadd.f32 0.0, %v2634
          %v2636 = vpop.f32.mrb[0].mxu0
          %v2637 = vadd.f32 0.0, %v2636
          %2638 = vmatprep.mubr.f32.mxu0 0.0
          %2639 = vmatmul.mubr.f32.gmra.mrb[0].mxu0 %v2420
          %v2640 = vpop.f32.mrb[0].mxu0
          %v2641 = vadd.f32 0.0, %v2640
          %v2642 = vpop.f32.mrb[0].mxu0
          %v2643 = vadd.f32 0.0, %v2642
          %2644 = vmatprep.mubr.f32.mxu0 0.0
          %2645 = vmatmul.mubr.f32.gmra.mrb[0].mxu0 %v2421
          %v2646 = vpop.f32.mrb[0].mxu0
          %v2647 = vadd.f32 0.0, %v2646
          %v2648 = vpop.f32.mrb[0].mxu0
          %v2649 = vadd.f32 0.0, %v2648
          %2650 = vmatprep.mubr.f32.mxu0 0.0
          %2651 = vmatmul.mubr.f32.gmra.mrb[0].mxu0 %v2422
          %v2652 = vpop.f32.mrb[0].mxu0
          %v2653 = vadd.f32 0.0, %v2652
          %v2654 = vpop.f32.mrb[0].mxu0
          %v2655 = vadd.f32 0.0, %v2654
          %2656 = vmatprep.mubr.f32.mxu0 0.0
          %2657 = vmatmul.mubr.f32.gmra.mrb[0].mxu0 %v2423
          %v2658 = vpop.f32.mrb[0].mxu0
          %v2659 = vadd.f32 0.0, %v2658
          %v2660 = vpop.f32.mrb[0].mxu0
          %v2661 = vadd.f32 0.0, %v2660
          %2662 = vmatprep.mubr.f32.mxu0 0.0
          %2663 = vmatmul.mubr.f32.gmra.mrb[0].mxu0 %v2424
          %v2664 = vpop.f32.mrb[0].mxu0
          %v2665 = vadd.f32 0.0, %v2664
          %v2666 = vpop.f32.mrb[0].mxu0
          %v2667 = vadd.f32 0.0, %v2666
          %2668 = vmatprep.mubr.f32.mxu0 0.0
          %2669 = vmatmul.mubr.f32.gmra.mrb[0].mxu0 %v2425
          %v2670 = vpop.f32.mrb[0].mxu0
          %v2671 = vadd.f32 0.0, %v2670
          %v2672 = vpop.f32.mrb[0].mxu0
          %v2673 = vadd.f32 0.0, %v2672
          %2674 = vmatprep.mubr.f32.mxu0 0.0
          %2675 = vmatmul.mubr.f32.gmra.mrb[0].mxu0 %v2426
          %v2676 = vpop.f32.mrb[0].mxu0
          %v2677 = vadd.f32 0.0, %v2676
          %v2678 = vpop.f32.mrb[0].mxu0
          %v2679 = vadd.f32 0.0, %v2678
          %2680 = vmatprep.mubr.f32.mxu0 0.0
          %2681 = vmatmul.mubr.f32.gmra.mrb[0].mxu0 %v2427
          %v2682 = vpop.f32.mrb[0].mxu0
          %v2683 = vadd.f32 0.0, %v2682
          %v2684 = vpop.f32.mrb[0].mxu0
          %v2685 = vadd.f32 0.0, %v2684
          %2686 = vmatprep.mubr.f32.mxu0 0.0
          %2687 = vmatmul.mubr.f32.gmra.mrb[0].mxu0 %v2428
          %v2688 = vpop.f32.mrb[0].mxu0
          %v2689 = vadd.f32 0.0, %v2688
          %v2690 = vpop.f32.mrb[0].mxu0
          %v2691 = vadd.f32 0.0, %v2690
          %2692 = vmatprep.mubr.f32.mxu0 0.0
          %2693 = vmatmul.mubr.f32.gmra.mrb[0].mxu0 %v2429
          %v2694 = vpop.f32.mrb[0].mxu0
          %v2695 = vadd.f32 0.0, %v2694
          %v2696 = vpop.f32.mrb[0].mxu0
          %v2697 = vadd.f32 0.0, %v2696
          %2698 = vmatprep.mubr.f32.mxu0 0.0
          %2699 = vmatmul.mubr.f32.gmra.mrb[0].mxu0 %v2430
          %v2700 = vpop.f32.mrb[0].mxu0
          %v2701 = vadd.f32 0.0, %v2700
          %v2702 = vpop.f32.mrb[0].mxu0
          %v2703 = vadd.f32 0.0, %v2702
          %2704 = vmatprep.mubr.f32.mxu0 0.0
          %2705 = vmatmul.mubr.f32.gmra.mrb[0].mxu0 %v2431
          %v2706 = vpop.f32.mrb[0].mxu0
          %v2707 = vadd.f32 0.0, %v2706
          %v2708 = vpop.f32.mrb[0].mxu0
          %v2709 = vadd.f32 0.0, %v2708
          %2710 = vmatprep.mubr.f32.mxu0 0.0
          %2711 = vmatmul.mubr.f32.gmra.mrb[0].mxu0 %v2432
          %v2712 = vpop.f32.mrb[0].mxu0
          %v2713 = vadd.f32 0.0, %v2712
          %v2714 = vpop.f32.mrb[0].mxu0
          %v2715 = vadd.f32 0.0, %v2714
          %2716 = vmatprep.mubr.f32.mxu0 0.0
          %2717 = vmatmul.mubr.f32.gmra.mrb[0].mxu0 %v2433
          %v2718 = vpop.f32.mrb[0].mxu0
          %v2719 = vadd.f32 0.0, %v2718
          %v2720 = vpop.f32.mrb[0].mxu0
          %v2721 = vadd.f32 0.0, %v2720
          %2722 = vdwg.mxu0
          %v2723 = vld [vmem:[%s442] sm:$0xff]
          %v2724 = vld [vmem:[%s442 + $0x8] sm:$0xff]
          %v2725 = vld [vmem:[%s442 + $0x10] sm:$0xff]
          %v2726 = vld [vmem:[%s442 + $0x18] sm:$0xff]
          %v2727 = vld [vmem:[%s442 + $0x20] sm:$0xff]
          %v2728 = vld [vmem:[%s442 + $0x28] sm:$0xff]
          %v2729 = vld [vmem:[%s442 + $0x30] sm:$0xff]
          %v2730 = vld [vmem:[%s442 + $0x38] sm:$0xff]
          %v2731 = vld [vmem:[%s442 + $0x40] sm:$0xff]
          %v2732 = vld [vmem:[%s442 + $0x48] sm:$0xff]
          %v2733 = vld [vmem:[%s442 + $0x50] sm:$0xff]
          %v2734 = vld [vmem:[%s442 + $0x58] sm:$0xff]
          %v2735 = vld [vmem:[%s442 + $0x60] sm:$0xff]
          %v2736 = vld [vmem:[%s442 + $0x68] sm:$0xff]
          %v2737 = vld [vmem:[%s442 + $0x70] sm:$0xff]
          %v2738 = vld [vmem:[%s442 + $0x78] sm:$0xff]
          %v2739 = vld [vmem:[%s442 + $0x80] sm:$0xff]
          %v2740 = vld [vmem:[%s442 + $0x88] sm:$0xff]
          %v2741 = vld [vmem:[%s442 + $0x90] sm:$0xff]
          %v2742 = vld [vmem:[%s442 + $0x98] sm:$0xff]
          %v2743 = vld [vmem:[%s442 + $0xa0] sm:$0xff]
          %v2744 = vld [vmem:[%s442 + $0xa8] sm:$0xff]
          %v2745 = vld [vmem:[%s442 + $0xb0] sm:$0xff]
          %v2746 = vld [vmem:[%s442 + $0xb8] sm:$0xff]
          %v2747 = vld [vmem:[%s442 + $0xc0] sm:$0xff]
          %v2748 = vld [vmem:[%s442 + $0xc8] sm:$0xff]
          %v2749 = vld [vmem:[%s442 + $0xd0] sm:$0xff]
          %v2750 = vld [vmem:[%s442 + $0xd8] sm:$0xff]
          %v2751 = vld [vmem:[%s442 + $0xe0] sm:$0xff]
          %v2752 = vld [vmem:[%s442 + $0xe8] sm:$0xff]
          %v2753 = vld [vmem:[%s442 + $0xf0] sm:$0xff]
          %v2754 = vld [vmem:[%s442 + $0xf8] sm:$0xff]
          %v2755 = vld [vmem:[%s450] ss:$4 sm:$0x3]
          %s2756 = scalar_lea.vmem %s450, 1
          %v2757 = vld [vmem:[%s2756] ss:$4 sm:$0x3]
          %s2758 = scalar_lea.vmem %s450, 2
          %v2759 = vld [vmem:[%s2758] ss:$4 sm:$0x3]
          %v2760 = vlaneseq
          %v2761 = vshrl.u32 %v2760, 7
          %v2762 = vsub.s32 0, %v2761
          %v2763 = vrot.slane %v2755, %v2762
          %v2764 = vlaneseq
          %v2765 = vshrl.u32 %v2764, 7
          %v2766 = vsub.s32 1, %v2765
          %v2767 = vrot.slane %v2755, %v2766
          %2768 = vset.pattern.permute.xlu0 0
          %2769 = vperm.xlu0 %2768, %v2723
          %v2770 = vpop.permute.xlu0 %2769
          %2771 = vset.pattern.permute.xlu0 0
          %2772 = vperm.xlu0 %2771, %v2724
          %v2773 = vpop.permute.xlu0 %2772
          %2774 = vset.pattern.permute.xlu0 0
          %2775 = vperm.xlu0 %2774, %v2725
          %v2776 = vpop.permute.xlu0 %2775
          %2777 = vset.pattern.permute.xlu0 0
          %2778 = vperm.xlu0 %2777, %v2726
          %v2779 = vpop.permute.xlu0 %2778
          %2780 = vset.pattern.permute.xlu0 0
          %2781 = vperm.xlu0 %2780, %v2727
          %v2782 = vpop.permute.xlu0 %2781
          %2783 = vset.pattern.permute.xlu0 0
          %2784 = vperm.xlu0 %2783, %v2728
          %v2785 = vpop.permute.xlu0 %2784
          %2786 = vset.pattern.permute.xlu0 0
          %2787 = vperm.xlu0 %2786, %v2729
          %v2788 = vpop.permute.xlu0 %2787
          %2789 = vset.pattern.permute.xlu0 0
          %2790 = vperm.xlu0 %2789, %v2730
          %v2791 = vpop.permute.xlu0 %2790
          %2792 = vset.pattern.permute.xlu0 0
          %2793 = vperm.xlu0 %2792, %v2731
          %v2794 = vpop.permute.xlu0 %2793
          %2795 = vset.pattern.permute.xlu0 0
          %2796 = vperm.xlu0 %2795, %v2732
          %v2797 = vpop.permute.xlu0 %2796
          %2798 = vset.pattern.permute.xlu0 0
          %2799 = vperm.xlu0 %2798, %v2733
          %v2800 = vpop.permute.xlu0 %2799
          %2801 = vset.pattern.permute.xlu0 0
          %2802 = vperm.xlu0 %2801, %v2734
          %v2803 = vpop.permute.xlu0 %2802
          %2804 = vset.pattern.permute.xlu0 0
          %2805 = vperm.xlu0 %2804, %v2735
          %v2806 = vpop.permute.xlu0 %2805
          %2807 = vset.pattern.permute.xlu0 0
          %2808 = vperm.xlu0 %2807, %v2736
          %v2809 = vpop.permute.xlu0 %2808
          %2810 = vset.pattern.permute.xlu0 0
          %2811 = vperm.xlu0 %2810, %v2737
          %v2812 = vpop.permute.xlu0 %2811
          %2813 = vset.pattern.permute.xlu0 0
          %2814 = vperm.xlu0 %2813, %v2738
          %v2815 = vpop.permute.xlu0 %2814
          %2816 = vset.pattern.permute.xlu0 0
          %2817 = vperm.xlu0 %2816, %v2739
          %v2818 = vpop.permute.xlu0 %2817
          %2819 = vset.pattern.permute.xlu0 0
          %2820 = vperm.xlu0 %2819, %v2740
          %v2821 = vpop.permute.xlu0 %2820
          %2822 = vset.pattern.permute.xlu0 0
          %2823 = vperm.xlu0 %2822, %v2741
          %v2824 = vpop.permute.xlu0 %2823
          %2825 = vset.pattern.permute.xlu0 0
          %2826 = vperm.xlu0 %2825, %v2742
          %v2827 = vpop.permute.xlu0 %2826
          %2828 = vset.pattern.permute.xlu0 0
          %2829 = vperm.xlu0 %2828, %v2743
          %v2830 = vpop.permute.xlu0 %2829
          %2831 = vset.pattern.permute.xlu0 0
          %2832 = vperm.xlu0 %2831, %v2744
          %v2833 = vpop.permute.xlu0 %2832
          %2834 = vset.pattern.permute.xlu0 0
          %2835 = vperm.xlu0 %2834, %v2745
          %v2836 = vpop.permute.xlu0 %2835
          %2837 = vset.pattern.permute.xlu0 0
          %2838 = vperm.xlu0 %2837, %v2746
          %v2839 = vpop.permute.xlu0 %2838
          %2840 = vset.pattern.permute.xlu0 0
          %2841 = vperm.xlu0 %2840, %v2747
          %v2842 = vpop.permute.xlu0 %2841
          %2843 = vset.pattern.permute.xlu0 0
          %2844 = vperm.xlu0 %2843, %v2748
          %v2845 = vpop.permute.xlu0 %2844
          %2846 = vset.pattern.permute.xlu0 0
          %2847 = vperm.xlu0 %2846, %v2749
          %v2848 = vpop.permute.xlu0 %2847
          %2849 = vset.pattern.permute.xlu0 0
          %2850 = vperm.xlu0 %2849, %v2750
          %v2851 = vpop.permute.xlu0 %2850
          %2852 = vset.pattern.permute.xlu0 0
          %2853 = vperm.xlu0 %2852, %v2751
          %v2854 = vpop.permute.xlu0 %2853
          %2855 = vset.pattern.permute.xlu0 0
          %2856 = vperm.xlu0 %2855, %v2752
          %v2857 = vpop.permute.xlu0 %2856
          %2858 = vset.pattern.permute.xlu0 0
          %2859 = vperm.xlu0 %2858, %v2753
          %v2860 = vpop.permute.xlu0 %2859
          %2861 = vset.pattern.permute.xlu0 0
          %2862 = vperm.xlu0 %2861, %v2754
          %v2863 = vpop.permute.xlu0 %2862
          %vm2864 = vcmp.ge.s32.totalorder %v2763, %v2770
          %vm2865 = vcmp.ge.s32.totalorder %v2767, %v2770
          %vm2866 = vcmp.ge.s32.totalorder %v2763, %v2773
          %vm2867 = vcmp.ge.s32.totalorder %v2767, %v2773
          %vm2868 = vcmp.ge.s32.totalorder %v2763, %v2776
          %vm2869 = vcmp.ge.s32.totalorder %v2767, %v2776
          %vm2870 = vcmp.ge.s32.totalorder %v2763, %v2779
          %vm2871 = vcmp.ge.s32.totalorder %v2767, %v2779
          %vm2872 = vcmp.ge.s32.totalorder %v2763, %v2782
          %vm2873 = vcmp.ge.s32.totalorder %v2767, %v2782
          %vm2874 = vcmp.ge.s32.totalorder %v2763, %v2785
          %vm2875 = vcmp.ge.s32.totalorder %v2767, %v2785
          %vm2876 = vcmp.ge.s32.totalorder %v2763, %v2788
          %vm2877 = vcmp.ge.s32.totalorder %v2767, %v2788
          %vm2878 = vcmp.ge.s32.totalorder %v2763, %v2791
          %vm2879 = vcmp.ge.s32.totalorder %v2767, %v2791
          %vm2880 = vcmp.ge.s32.totalorder %v2763, %v2794
          %vm2881 = vcmp.ge.s32.totalorder %v2767, %v2794
          %vm2882 = vcmp.ge.s32.totalorder %v2763, %v2797
          %vm2883 = vcmp.ge.s32.totalorder %v2767, %v2797
          %vm2884 = vcmp.ge.s32.totalorder %v2763, %v2800
          %vm2885 = vcmp.ge.s32.totalorder %v2767, %v2800
          %vm2886 = vcmp.ge.s32.totalorder %v2763, %v2803
          %vm2887 = vcmp.ge.s32.totalorder %v2767, %v2803
          %vm2888 = vcmp.ge.s32.totalorder %v2763, %v2806
          %vm2889 = vcmp.ge.s32.totalorder %v2767, %v2806
          %vm2890 = vcmp.ge.s32.totalorder %v2763, %v2809
          %vm2891 = vcmp.ge.s32.totalorder %v2767, %v2809
          %vm2892 = vcmp.ge.s32.totalorder %v2763, %v2812
          %vm2893 = vcmp.ge.s32.totalorder %v2767, %v2812
          %vm2894 = vcmp.ge.s32.totalorder %v2763, %v2815
          %vm2895 = vcmp.ge.s32.totalorder %v2767, %v2815
          %vm2896 = vcmp.ge.s32.totalorder %v2763, %v2818
          %vm2897 = vcmp.ge.s32.totalorder %v2767, %v2818
          %vm2898 = vcmp.ge.s32.totalorder %v2763, %v2821
          %vm2899 = vcmp.ge.s32.totalorder %v2767, %v2821
          %vm2900 = vcmp.ge.s32.totalorder %v2763, %v2824
          %vm2901 = vcmp.ge.s32.totalorder %v2767, %v2824
          %vm2902 = vcmp.ge.s32.totalorder %v2763, %v2827
          %vm2903 = vcmp.ge.s32.totalorder %v2767, %v2827
          %vm2904 = vcmp.ge.s32.totalorder %v2763, %v2830
          %vm2905 = vcmp.ge.s32.totalorder %v2767, %v2830
          %vm2906 = vcmp.ge.s32.totalorder %v2763, %v2833
          %vm2907 = vcmp.ge.s32.totalorder %v2767, %v2833
          %vm2908 = vcmp.ge.s32.totalorder %v2763, %v2836
          %vm2909 = vcmp.ge.s32.totalorder %v2767, %v2836
          %vm2910 = vcmp.ge.s32.totalorder %v2763, %v2839
          %vm2911 = vcmp.ge.s32.totalorder %v2767, %v2839
          %vm2912 = vcmp.ge.s32.totalorder %v2763, %v2842
          %vm2913 = vcmp.ge.s32.totalorder %v2767, %v2842
          %vm2914 = vcmp.ge.s32.totalorder %v2763, %v2845
          %vm2915 = vcmp.ge.s32.totalorder %v2767, %v2845
          %vm2916 = vcmp.ge.s32.totalorder %v2763, %v2848
          %vm2917 = vcmp.ge.s32.totalorder %v2767, %v2848
          %vm2918 = vcmp.ge.s32.totalorder %v2763, %v2851
          %vm2919 = vcmp.ge.s32.totalorder %v2767, %v2851
          %vm2920 = vcmp.ge.s32.totalorder %v2763, %v2854
          %vm2921 = vcmp.ge.s32.totalorder %v2767, %v2854
          %vm2922 = vcmp.ge.s32.totalorder %v2763, %v2857
          %vm2923 = vcmp.ge.s32.totalorder %v2767, %v2857
          %vm2924 = vcmp.ge.s32.totalorder %v2763, %v2860
          %vm2925 = vcmp.ge.s32.totalorder %v2767, %v2860
          %vm2926 = vcmp.ge.s32.totalorder %v2763, %v2863
          %vm2927 = vcmp.ge.s32.totalorder %v2767, %v2863
          %2928 = vset.pattern.permute.xlu0 1
          %2929 = vperm.xlu0 %2928, %v2723
          %v2930 = vpop.permute.xlu0 %2929
          %2931 = vset.pattern.permute.xlu0 1
          %2932 = vperm.xlu0 %2931, %v2724
          %v2933 = vpop.permute.xlu0 %2932
          %2934 = vset.pattern.permute.xlu0 1
          %2935 = vperm.xlu0 %2934, %v2725
          %v2936 = vpop.permute.xlu0 %2935
          %2937 = vset.pattern.permute.xlu0 1
          %2938 = vperm.xlu0 %2937, %v2726
          %v2939 = vpop.permute.xlu0 %2938
          %2940 = vset.pattern.permute.xlu0 1
          %2941 = vperm.xlu0 %2940, %v2727
          %v2942 = vpop.permute.xlu0 %2941
          %2943 = vset.pattern.permute.xlu0 1
          %2944 = vperm.xlu0 %2943, %v2728
          %v2945 = vpop.permute.xlu0 %2944
          %2946 = vset.pattern.permute.xlu0 1
          %2947 = vperm.xlu0 %2946, %v2729
          %v2948 = vpop.permute.xlu0 %2947
          %2949 = vset.pattern.permute.xlu0 1
          %2950 = vperm.xlu0 %2949, %v2730
          %v2951 = vpop.permute.xlu0 %2950
          %2952 = vset.pattern.permute.xlu0 1
          %2953 = vperm.xlu0 %2952, %v2731
          %v2954 = vpop.permute.xlu0 %2953
          %2955 = vset.pattern.permute.xlu0 1
          %2956 = vperm.xlu0 %2955, %v2732
          %v2957 = vpop.permute.xlu0 %2956
          %2958 = vset.pattern.permute.xlu0 1
          %2959 = vperm.xlu0 %2958, %v2733
          %v2960 = vpop.permute.xlu0 %2959
          %2961 = vset.pattern.permute.xlu0 1
          %2962 = vperm.xlu0 %2961, %v2734
          %v2963 = vpop.permute.xlu0 %2962
          %2964 = vset.pattern.permute.xlu0 1
          %2965 = vperm.xlu0 %2964, %v2735
          %v2966 = vpop.permute.xlu0 %2965
          %2967 = vset.pattern.permute.xlu0 1
          %2968 = vperm.xlu0 %2967, %v2736
          %v2969 = vpop.permute.xlu0 %2968
          %2970 = vset.pattern.permute.xlu0 1
          %2971 = vperm.xlu0 %2970, %v2737
          %v2972 = vpop.permute.xlu0 %2971
          %2973 = vset.pattern.permute.xlu0 1
          %2974 = vperm.xlu0 %2973, %v2738
          %v2975 = vpop.permute.xlu0 %2974
          %2976 = vset.pattern.permute.xlu0 1
          %2977 = vperm.xlu0 %2976, %v2739
          %v2978 = vpop.permute.xlu0 %2977
          %2979 = vset.pattern.permute.xlu0 1
          %2980 = vperm.xlu0 %2979, %v2740
          %v2981 = vpop.permute.xlu0 %2980
          %2982 = vset.pattern.permute.xlu0 1
          %2983 = vperm.xlu0 %2982, %v2741
          %v2984 = vpop.permute.xlu0 %2983
          %2985 = vset.pattern.permute.xlu0 1
          %2986 = vperm.xlu0 %2985, %v2742
          %v2987 = vpop.permute.xlu0 %2986
          %2988 = vset.pattern.permute.xlu0 1
          %2989 = vperm.xlu0 %2988, %v2743
          %v2990 = vpop.permute.xlu0 %2989
          %2991 = vset.pattern.permute.xlu0 1
          %2992 = vperm.xlu0 %2991, %v2744
          %v2993 = vpop.permute.xlu0 %2992
          %2994 = vset.pattern.permute.xlu0 1
          %2995 = vperm.xlu0 %2994, %v2745
          %v2996 = vpop.permute.xlu0 %2995
          %2997 = vset.pattern.permute.xlu0 1
          %2998 = vperm.xlu0 %2997, %v2746
          %v2999 = vpop.permute.xlu0 %2998
          %3000 = vset.pattern.permute.xlu0 1
          %3001 = vperm.xlu0 %3000, %v2747
          %v3002 = vpop.permute.xlu0 %3001
          %3003 = vset.pattern.permute.xlu0 1
          %3004 = vperm.xlu0 %3003, %v2748
          %v3005 = vpop.permute.xlu0 %3004
          %3006 = vset.pattern.permute.xlu0 1
          %3007 = vperm.xlu0 %3006, %v2749
          %v3008 = vpop.permute.xlu0 %3007
          %3009 = vset.pattern.permute.xlu0 1
          %3010 = vperm.xlu0 %3009, %v2750
          %v3011 = vpop.permute.xlu0 %3010
          %3012 = vset.pattern.permute.xlu0 1
          %3013 = vperm.xlu0 %3012, %v2751
          %v3014 = vpop.permute.xlu0 %3013
          %3015 = vset.pattern.permute.xlu0 1
          %3016 = vperm.xlu0 %3015, %v2752
          %v3017 = vpop.permute.xlu0 %3016
          %3018 = vset.pattern.permute.xlu0 1
          %3019 = vperm.xlu0 %3018, %v2753
          %v3020 = vpop.permute.xlu0 %3019
          %3021 = vset.pattern.permute.xlu0 1
          %3022 = vperm.xlu0 %3021, %v2754
          %v3023 = vpop.permute.xlu0 %3022
          %vm3024 = vcmp.lt.s32.totalorder %v2763, %v2930
          %vm3025 = vcmp.lt.s32.totalorder %v2767, %v2930
          %vm3026 = vcmp.lt.s32.totalorder %v2763, %v2933
          %vm3027 = vcmp.lt.s32.totalorder %v2767, %v2933
          %vm3028 = vcmp.lt.s32.totalorder %v2763, %v2936
          %vm3029 = vcmp.lt.s32.totalorder %v2767, %v2936
          %vm3030 = vcmp.lt.s32.totalorder %v2763, %v2939
          %vm3031 = vcmp.lt.s32.totalorder %v2767, %v2939
          %vm3032 = vcmp.lt.s32.totalorder %v2763, %v2942
          %vm3033 = vcmp.lt.s32.totalorder %v2767, %v2942
          %vm3034 = vcmp.lt.s32.totalorder %v2763, %v2945
          %vm3035 = vcmp.lt.s32.totalorder %v2767, %v2945
          %vm3036 = vcmp.lt.s32.totalorder %v2763, %v2948
          %vm3037 = vcmp.lt.s32.totalorder %v2767, %v2948
          %vm3038 = vcmp.lt.s32.totalorder %v2763, %v2951
          %vm3039 = vcmp.lt.s32.totalorder %v2767, %v2951
          %vm3040 = vcmp.lt.s32.totalorder %v2763, %v2954
          %vm3041 = vcmp.lt.s32.totalorder %v2767, %v2954
          %vm3042 = vcmp.lt.s32.totalorder %v2763, %v2957
          %vm3043 = vcmp.lt.s32.totalorder %v2767, %v2957
          %vm3044 = vcmp.lt.s32.totalorder %v2763, %v2960
          %vm3045 = vcmp.lt.s32.totalorder %v2767, %v2960
          %vm3046 = vcmp.lt.s32.totalorder %v2763, %v2963
          %vm3047 = vcmp.lt.s32.totalorder %v2767, %v2963
          %vm3048 = vcmp.lt.s32.totalorder %v2763, %v2966
          %vm3049 = vcmp.lt.s32.totalorder %v2767, %v2966
          %vm3050 = vcmp.lt.s32.totalorder %v2763, %v2969
          %vm3051 = vcmp.lt.s32.totalorder %v2767, %v2969
          %vm3052 = vcmp.lt.s32.totalorder %v2763, %v2972
          %vm3053 = vcmp.lt.s32.totalorder %v2767, %v2972
          %vm3054 = vcmp.lt.s32.totalorder %v2763, %v2975
          %vm3055 = vcmp.lt.s32.totalorder %v2767, %v2975
          %vm3056 = vcmp.lt.s32.totalorder %v2763, %v2978
          %vm3057 = vcmp.lt.s32.totalorder %v2767, %v2978
          %vm3058 = vcmp.lt.s32.totalorder %v2763, %v2981
          %vm3059 = vcmp.lt.s32.totalorder %v2767, %v2981
          %vm3060 = vcmp.lt.s32.totalorder %v2763, %v2984
          %vm3061 = vcmp.lt.s32.totalorder %v2767, %v2984
          %vm3062 = vcmp.lt.s32.totalorder %v2763, %v2987
          %vm3063 = vcmp.lt.s32.totalorder %v2767, %v2987
          %vm3064 = vcmp.lt.s32.totalorder %v2763, %v2990
          %vm3065 = vcmp.lt.s32.totalorder %v2767, %v2990
          %vm3066 = vcmp.lt.s32.totalorder %v2763, %v2993
          %vm3067 = vcmp.lt.s32.totalorder %v2767, %v2993
          %vm3068 = vcmp.lt.s32.totalorder %v2763, %v2996
          %vm3069 = vcmp.lt.s32.totalorder %v2767, %v2996
          %vm3070 = vcmp.lt.s32.totalorder %v2763, %v2999
          %vm3071 = vcmp.lt.s32.totalorder %v2767, %v2999
          %vm3072 = vcmp.lt.s32.totalorder %v2763, %v3002
          %vm3073 = vcmp.lt.s32.totalorder %v2767, %v3002
          %vm3074 = vcmp.lt.s32.totalorder %v2763, %v3005
          %vm3075 = vcmp.lt.s32.totalorder %v2767, %v3005
          %vm3076 = vcmp.lt.s32.totalorder %v2763, %v3008
          %vm3077 = vcmp.lt.s32.totalorder %v2767, %v3008
          %vm3078 = vcmp.lt.s32.totalorder %v2763, %v3011
          %vm3079 = vcmp.lt.s32.totalorder %v2767, %v3011
          %vm3080 = vcmp.lt.s32.totalorder %v2763, %v3014
          %vm3081 = vcmp.lt.s32.totalorder %v2767, %v3014
          %vm3082 = vcmp.lt.s32.totalorder %v2763, %v3017
          %vm3083 = vcmp.lt.s32.totalorder %v2767, %v3017
          %vm3084 = vcmp.lt.s32.totalorder %v2763, %v3020
          %vm3085 = vcmp.lt.s32.totalorder %v2767, %v3020
          %vm3086 = vcmp.lt.s32.totalorder %v2763, %v3023
          %vm3087 = vcmp.lt.s32.totalorder %v2767, %v3023
          %vm3088 = vmand %vm2864, %vm3024
          %vm3089 = vmand %vm2865, %vm3025
          %vm3090 = vmand %vm2866, %vm3026
          %vm3091 = vmand %vm2867, %vm3027
          %vm3092 = vmand %vm2868, %vm3028
          %vm3093 = vmand %vm2869, %vm3029
          %vm3094 = vmand %vm2870, %vm3030
          %vm3095 = vmand %vm2871, %vm3031
          %vm3096 = vmand %vm2872, %vm3032
          %vm3097 = vmand %vm2873, %vm3033
          %vm3098 = vmand %vm2874, %vm3034
          %vm3099 = vmand %vm2875, %vm3035
          %vm3100 = vmand %vm2876, %vm3036
          %vm3101 = vmand %vm2877, %vm3037
          %vm3102 = vmand %vm2878, %vm3038
          %vm3103 = vmand %vm2879, %vm3039
          %vm3104 = vmand %vm2880, %vm3040
          %vm3105 = vmand %vm2881, %vm3041
          %vm3106 = vmand %vm2882, %vm3042
          %vm3107 = vmand %vm2883, %vm3043
          %vm3108 = vmand %vm2884, %vm3044
          %vm3109 = vmand %vm2885, %vm3045
          %vm3110 = vmand %vm2886, %vm3046
          %vm3111 = vmand %vm2887, %vm3047
          %vm3112 = vmand %vm2888, %vm3048
          %vm3113 = vmand %vm2889, %vm3049
          %vm3114 = vmand %vm2890, %vm3050
          %vm3115 = vmand %vm2891, %vm3051
          %vm3116 = vmand %vm2892, %vm3052
          %vm3117 = vmand %vm2893, %vm3053
          %vm3118 = vmand %vm2894, %vm3054
          %vm3119 = vmand %vm2895, %vm3055
          %vm3120 = vmand %vm2896, %vm3056
          %vm3121 = vmand %vm2897, %vm3057
          %vm3122 = vmand %vm2898, %vm3058
          %vm3123 = vmand %vm2899, %vm3059
          %vm3124 = vmand %vm2900, %vm3060
          %vm3125 = vmand %vm2901, %vm3061
          %vm3126 = vmand %vm2902, %vm3062
          %vm3127 = vmand %vm2903, %vm3063
          %vm3128 = vmand %vm2904, %vm3064
          %vm3129 = vmand %vm2905, %vm3065
          %vm3130 = vmand %vm2906, %vm3066
          %vm3131 = vmand %vm2907, %vm3067
          %vm3132 = vmand %vm2908, %vm3068
          %vm3133 = vmand %vm2909, %vm3069
          %vm3134 = vmand %vm2910, %vm3070
          %vm3135 = vmand %vm2911, %vm3071
          %vm3136 = vmand %vm2912, %vm3072
          %vm3137 = vmand %vm2913, %vm3073
          %vm3138 = vmand %vm2914, %vm3074
          %vm3139 = vmand %vm2915, %vm3075
          %vm3140 = vmand %vm2916, %vm3076
          %vm3141 = vmand %vm2917, %vm3077
          %vm3142 = vmand %vm2918, %vm3078
          %vm3143 = vmand %vm2919, %vm3079
          %vm3144 = vmand %vm2920, %vm3080
          %vm3145 = vmand %vm2921, %vm3081
          %vm3146 = vmand %vm2922, %vm3082
          %vm3147 = vmand %vm2923, %vm3083
          %vm3148 = vmand %vm2924, %vm3084
          %vm3149 = vmand %vm2925, %vm3085
          %vm3150 = vmand %vm2926, %vm3086
          %vm3151 = vmand %vm2927, %vm3087
          %v3152 = vlaneseq
          %v3153 = vshrl.u32 %v3152, 7
          %v3154 = vsub.s32 0, %v3153
          %v3155 = vrot.slane %v2757, %v3154
          %v3156 = vlaneseq
          %v3157 = vshrl.u32 %v3156, 7
          %v3158 = vsub.s32 1, %v3157
          %v3159 = vrot.slane %v2757, %v3158
          %3160 = vset.pattern.permute.xlu0 2
          %3161 = vperm.xlu0 %3160, %v2723
          %v3162 = vpop.permute.xlu0 %3161
          %3163 = vset.pattern.permute.xlu0 2
          %3164 = vperm.xlu0 %3163, %v2724
          %v3165 = vpop.permute.xlu0 %3164
          %3166 = vset.pattern.permute.xlu0 2
          %3167 = vperm.xlu0 %3166, %v2725
          %v3168 = vpop.permute.xlu0 %3167
          %3169 = vset.pattern.permute.xlu0 2
          %3170 = vperm.xlu0 %3169, %v2726
          %v3171 = vpop.permute.xlu0 %3170
          %3172 = vset.pattern.permute.xlu0 2
          %3173 = vperm.xlu0 %3172, %v2727
          %v3174 = vpop.permute.xlu0 %3173
          %3175 = vset.pattern.permute.xlu0 2
          %3176 = vperm.xlu0 %3175, %v2728
          %v3177 = vpop.permute.xlu0 %3176
          %3178 = vset.pattern.permute.xlu0 2
          %3179 = vperm.xlu0 %3178, %v2729
          %v3180 = vpop.permute.xlu0 %3179
          %3181 = vset.pattern.permute.xlu0 2
          %3182 = vperm.xlu0 %3181, %v2730
          %v3183 = vpop.permute.xlu0 %3182
          %3184 = vset.pattern.permute.xlu0 2
          %3185 = vperm.xlu0 %3184, %v2731
          %v3186 = vpop.permute.xlu0 %3185
          %3187 = vset.pattern.permute.xlu0 2
          %3188 = vperm.xlu0 %3187, %v2732
          %v3189 = vpop.permute.xlu0 %3188
          %3190 = vset.pattern.permute.xlu0 2
          %3191 = vperm.xlu0 %3190, %v2733
          %v3192 = vpop.permute.xlu0 %3191
          %3193 = vset.pattern.permute.xlu0 2
          %3194 = vperm.xlu0 %3193, %v2734
          %v3195 = vpop.permute.xlu0 %3194
          %3196 = vset.pattern.permute.xlu0 2
          %3197 = vperm.xlu0 %3196, %v2735
          %v3198 = vpop.permute.xlu0 %3197
          %3199 = vset.pattern.permute.xlu0 2
          %3200 = vperm.xlu0 %3199, %v2736
          %v3201 = vpop.permute.xlu0 %3200
          %3202 = vset.pattern.permute.xlu0 2
          %3203 = vperm.xlu0 %3202, %v2737
          %v3204 = vpop.permute.xlu0 %3203
          %3205 = vset.pattern.permute.xlu0 2
          %3206 = vperm.xlu0 %3205, %v2738
          %v3207 = vpop.permute.xlu0 %3206
          %3208 = vset.pattern.permute.xlu0 2
          %3209 = vperm.xlu0 %3208, %v2739
          %v3210 = vpop.permute.xlu0 %3209
          %3211 = vset.pattern.permute.xlu0 2
          %3212 = vperm.xlu0 %3211, %v2740
          %v3213 = vpop.permute.xlu0 %3212
          %3214 = vset.pattern.permute.xlu0 2
          %3215 = vperm.xlu0 %3214, %v2741
          %v3216 = vpop.permute.xlu0 %3215
          %3217 = vset.pattern.permute.xlu0 2
          %3218 = vperm.xlu0 %3217, %v2742
          %v3219 = vpop.permute.xlu0 %3218
          %3220 = vset.pattern.permute.xlu0 2
          %3221 = vperm.xlu0 %3220, %v2743
          %v3222 = vpop.permute.xlu0 %3221
          %3223 = vset.pattern.permute.xlu0 2
          %3224 = vperm.xlu0 %3223, %v2744
          %v3225 = vpop.permute.xlu0 %3224
          %3226 = vset.pattern.permute.xlu0 2
          %3227 = vperm.xlu0 %3226, %v2745
          %v3228 = vpop.permute.xlu0 %3227
          %3229 = vset.pattern.permute.xlu0 2
          %3230 = vperm.xlu0 %3229, %v2746
          %v3231 = vpop.permute.xlu0 %3230
          %3232 = vset.pattern.permute.xlu0 2
          %3233 = vperm.xlu0 %3232, %v2747
          %v3234 = vpop.permute.xlu0 %3233
          %3235 = vset.pattern.permute.xlu0 2
          %3236 = vperm.xlu0 %3235, %v2748
          %v3237 = vpop.permute.xlu0 %3236
          %3238 = vset.pattern.permute.xlu0 2
          %3239 = vperm.xlu0 %3238, %v2749
          %v3240 = vpop.permute.xlu0 %3239
          %3241 = vset.pattern.permute.xlu0 2
          %3242 = vperm.xlu0 %3241, %v2750
          %v3243 = vpop.permute.xlu0 %3242
          %3244 = vset.pattern.permute.xlu0 2
          %3245 = vperm.xlu0 %3244, %v2751
          %v3246 = vpop.permute.xlu0 %3245
          %3247 = vset.pattern.permute.xlu0 2
          %3248 = vperm.xlu0 %3247, %v2752
          %v3249 = vpop.permute.xlu0 %3248
          %3250 = vset.pattern.permute.xlu0 2
          %3251 = vperm.xlu0 %3250, %v2753
          %v3252 = vpop.permute.xlu0 %3251
          %3253 = vset.pattern.permute.xlu0 2
          %3254 = vperm.xlu0 %3253, %v2754
          %v3255 = vpop.permute.xlu0 %3254
          %vm3256 = vcmp.ge.s32.totalorder %v3155, %v3162
          %vm3257 = vcmp.ge.s32.totalorder %v3159, %v3162
          %vm3258 = vcmp.ge.s32.totalorder %v3155, %v3165
          %vm3259 = vcmp.ge.s32.totalorder %v3159, %v3165
          %vm3260 = vcmp.ge.s32.totalorder %v3155, %v3168
          %vm3261 = vcmp.ge.s32.totalorder %v3159, %v3168
          %vm3262 = vcmp.ge.s32.totalorder %v3155, %v3171
          %vm3263 = vcmp.ge.s32.totalorder %v3159, %v3171
          %vm3264 = vcmp.ge.s32.totalorder %v3155, %v3174
          %vm3265 = vcmp.ge.s32.totalorder %v3159, %v3174
          %vm3266 = vcmp.ge.s32.totalorder %v3155, %v3177
          %vm3267 = vcmp.ge.s32.totalorder %v3159, %v3177
          %vm3268 = vcmp.ge.s32.totalorder %v3155, %v3180
          %vm3269 = vcmp.ge.s32.totalorder %v3159, %v3180
          %vm3270 = vcmp.ge.s32.totalorder %v3155, %v3183
          %vm3271 = vcmp.ge.s32.totalorder %v3159, %v3183
          %vm3272 = vcmp.ge.s32.totalorder %v3155, %v3186
          %vm3273 = vcmp.ge.s32.totalorder %v3159, %v3186
          %vm3274 = vcmp.ge.s32.totalorder %v3155, %v3189
          %vm3275 = vcmp.ge.s32.totalorder %v3159, %v3189
          %vm3276 = vcmp.ge.s32.totalorder %v3155, %v3192
          %vm3277 = vcmp.ge.s32.totalorder %v3159, %v3192
          %vm3278 = vcmp.ge.s32.totalorder %v3155, %v3195
          %vm3279 = vcmp.ge.s32.totalorder %v3159, %v3195
          %vm3280 = vcmp.ge.s32.totalorder %v3155, %v3198
          %vm3281 = vcmp.ge.s32.totalorder %v3159, %v3198
          %vm3282 = vcmp.ge.s32.totalorder %v3155, %v3201
          %vm3283 = vcmp.ge.s32.totalorder %v3159, %v3201
          %vm3284 = vcmp.ge.s32.totalorder %v3155, %v3204
          %vm3285 = vcmp.ge.s32.totalorder %v3159, %v3204
          %vm3286 = vcmp.ge.s32.totalorder %v3155, %v3207
          %vm3287 = vcmp.ge.s32.totalorder %v3159, %v3207
          %vm3288 = vcmp.ge.s32.totalorder %v3155, %v3210
          %vm3289 = vcmp.ge.s32.totalorder %v3159, %v3210
          %vm3290 = vcmp.ge.s32.totalorder %v3155, %v3213
          %vm3291 = vcmp.ge.s32.totalorder %v3159, %v3213
          %vm3292 = vcmp.ge.s32.totalorder %v3155, %v3216
          %vm3293 = vcmp.ge.s32.totalorder %v3159, %v3216
          %vm3294 = vcmp.ge.s32.totalorder %v3155, %v3219
          %vm3295 = vcmp.ge.s32.totalorder %v3159, %v3219
          %vm3296 = vcmp.ge.s32.totalorder %v3155, %v3222
          %vm3297 = vcmp.ge.s32.totalorder %v3159, %v3222
          %vm3298 = vcmp.ge.s32.totalorder %v3155, %v3225
          %vm3299 = vcmp.ge.s32.totalorder %v3159, %v3225
          %vm3300 = vcmp.ge.s32.totalorder %v3155, %v3228
          %vm3301 = vcmp.ge.s32.totalorder %v3159, %v3228
          %vm3302 = vcmp.ge.s32.totalorder %v3155, %v3231
          %vm3303 = vcmp.ge.s32.totalorder %v3159, %v3231
          %vm3304 = vcmp.ge.s32.totalorder %v3155, %v3234
          %vm3305 = vcmp.ge.s32.totalorder %v3159, %v3234
          %vm3306 = vcmp.ge.s32.totalorder %v3155, %v3237
          %vm3307 = vcmp.ge.s32.totalorder %v3159, %v3237
          %vm3308 = vcmp.ge.s32.totalorder %v3155, %v3240
          %vm3309 = vcmp.ge.s32.totalorder %v3159, %v3240
          %vm3310 = vcmp.ge.s32.totalorder %v3155, %v3243
          %vm3311 = vcmp.ge.s32.totalorder %v3159, %v3243
          %vm3312 = vcmp.ge.s32.totalorder %v3155, %v3246
          %vm3313 = vcmp.ge.s32.totalorder %v3159, %v3246
          %vm3314 = vcmp.ge.s32.totalorder %v3155, %v3249
          %vm3315 = vcmp.ge.s32.totalorder %v3159, %v3249
          %vm3316 = vcmp.ge.s32.totalorder %v3155, %v3252
          %vm3317 = vcmp.ge.s32.totalorder %v3159, %v3252
          %vm3318 = vcmp.ge.s32.totalorder %v3155, %v3255
          %vm3319 = vcmp.ge.s32.totalorder %v3159, %v3255
          %vm3320 = vmand %vm3088, %vm3256
          %vm3321 = vmand %vm3089, %vm3257
          %vm3322 = vmand %vm3090, %vm3258
          %vm3323 = vmand %vm3091, %vm3259
          %vm3324 = vmand %vm3092, %vm3260
          %vm3325 = vmand %vm3093, %vm3261
          %vm3326 = vmand %vm3094, %vm3262
          %vm3327 = vmand %vm3095, %vm3263
          %vm3328 = vmand %vm3096, %vm3264
          %vm3329 = vmand %vm3097, %vm3265
          %vm3330 = vmand %vm3098, %vm3266
          %vm3331 = vmand %vm3099, %vm3267
          %vm3332 = vmand %vm3100, %vm3268
          %vm3333 = vmand %vm3101, %vm3269
          %vm3334 = vmand %vm3102, %vm3270
          %vm3335 = vmand %vm3103, %vm3271
          %vm3336 = vmand %vm3104, %vm3272
          %vm3337 = vmand %vm3105, %vm3273
          %vm3338 = vmand %vm3106, %vm3274
          %vm3339 = vmand %vm3107, %vm3275
          %vm3340 = vmand %vm3108, %vm3276
          %vm3341 = vmand %vm3109, %vm3277
          %vm3342 = vmand %vm3110, %vm3278
          %vm3343 = vmand %vm3111, %vm3279
          %vm3344 = vmand %vm3112, %vm3280
          %vm3345 = vmand %vm3113, %vm3281
          %vm3346 = vmand %vm3114, %vm3282
          %vm3347 = vmand %vm3115, %vm3283
          %vm3348 = vmand %vm3116, %vm3284
          %vm3349 = vmand %vm3117, %vm3285
          %vm3350 = vmand %vm3118, %vm3286
          %vm3351 = vmand %vm3119, %vm3287
          %vm3352 = vmand %vm3120, %vm3288
          %vm3353 = vmand %vm3121, %vm3289
          %vm3354 = vmand %vm3122, %vm3290
          %vm3355 = vmand %vm3123, %vm3291
          %vm3356 = vmand %vm3124, %vm3292
          %vm3357 = vmand %vm3125, %vm3293
          %vm3358 = vmand %vm3126, %vm3294
          %vm3359 = vmand %vm3127, %vm3295
          %vm3360 = vmand %vm3128, %vm3296
          %vm3361 = vmand %vm3129, %vm3297
          %vm3362 = vmand %vm3130, %vm3298
          %vm3363 = vmand %vm3131, %vm3299
          %vm3364 = vmand %vm3132, %vm3300
          %vm3365 = vmand %vm3133, %vm3301
          %vm3366 = vmand %vm3134, %vm3302
          %vm3367 = vmand %vm3135, %vm3303
          %vm3368 = vmand %vm3136, %vm3304
          %vm3369 = vmand %vm3137, %vm3305
          %vm3370 = vmand %vm3138, %vm3306
          %vm3371 = vmand %vm3139, %vm3307
          %vm3372 = vmand %vm3140, %vm3308
          %vm3373 = vmand %vm3141, %vm3309
          %vm3374 = vmand %vm3142, %vm3310
          %vm3375 = vmand %vm3143, %vm3311
          %vm3376 = vmand %vm3144, %vm3312
          %vm3377 = vmand %vm3145, %vm3313
          %vm3378 = vmand %vm3146, %vm3314
          %vm3379 = vmand %vm3147, %vm3315
          %vm3380 = vmand %vm3148, %vm3316
          %vm3381 = vmand %vm3149, %vm3317
          %vm3382 = vmand %vm3150, %vm3318
          %vm3383 = vmand %vm3151, %vm3319
          %3384 = vset.pattern.permute.xlu0 3
          %3385 = vperm.xlu0 %3384, %v2723
          %v3386 = vpop.permute.xlu0 %3385
          %3387 = vset.pattern.permute.xlu0 3
          %3388 = vperm.xlu0 %3387, %v2724
          %v3389 = vpop.permute.xlu0 %3388
          %3390 = vset.pattern.permute.xlu0 3
          %3391 = vperm.xlu0 %3390, %v2725
          %v3392 = vpop.permute.xlu0 %3391
          %3393 = vset.pattern.permute.xlu0 3
          %3394 = vperm.xlu0 %3393, %v2726
          %v3395 = vpop.permute.xlu0 %3394
          %3396 = vset.pattern.permute.xlu0 3
          %3397 = vperm.xlu0 %3396, %v2727
          %v3398 = vpop.permute.xlu0 %3397
          %3399 = vset.pattern.permute.xlu0 3
          %3400 = vperm.xlu0 %3399, %v2728
          %v3401 = vpop.permute.xlu0 %3400
          %3402 = vset.pattern.permute.xlu0 3
          %3403 = vperm.xlu0 %3402, %v2729
          %v3404 = vpop.permute.xlu0 %3403
          %3405 = vset.pattern.permute.xlu0 3
          %3406 = vperm.xlu0 %3405, %v2730
          %v3407 = vpop.permute.xlu0 %3406
          %3408 = vset.pattern.permute.xlu0 3
          %3409 = vperm.xlu0 %3408, %v2731
          %v3410 = vpop.permute.xlu0 %3409
          %3411 = vset.pattern.permute.xlu0 3
          %3412 = vperm.xlu0 %3411, %v2732
          %v3413 = vpop.permute.xlu0 %3412
          %3414 = vset.pattern.permute.xlu0 3
          %3415 = vperm.xlu0 %3414, %v2733
          %v3416 = vpop.permute.xlu0 %3415
          %3417 = vset.pattern.permute.xlu0 3
          %3418 = vperm.xlu0 %3417, %v2734
          %v3419 = vpop.permute.xlu0 %3418
          %3420 = vset.pattern.permute.xlu0 3
          %3421 = vperm.xlu0 %3420, %v2735
          %v3422 = vpop.permute.xlu0 %3421
          %3423 = vset.pattern.permute.xlu0 3
          %3424 = vperm.xlu0 %3423, %v2736
          %v3425 = vpop.permute.xlu0 %3424
          %3426 = vset.pattern.permute.xlu0 3
          %3427 = vperm.xlu0 %3426, %v2737
          %v3428 = vpop.permute.xlu0 %3427
          %3429 = vset.pattern.permute.xlu0 3
          %3430 = vperm.xlu0 %3429, %v2738
          %v3431 = vpop.permute.xlu0 %3430
          %3432 = vset.pattern.permute.xlu0 3
          %3433 = vperm.xlu0 %3432, %v2739
          %v3434 = vpop.permute.xlu0 %3433
          %3435 = vset.pattern.permute.xlu0 3
          %3436 = vperm.xlu0 %3435, %v2740
          %v3437 = vpop.permute.xlu0 %3436
          %3438 = vset.pattern.permute.xlu0 3
          %3439 = vperm.xlu0 %3438, %v2741
          %v3440 = vpop.permute.xlu0 %3439
          %3441 = vset.pattern.permute.xlu0 3
          %3442 = vperm.xlu0 %3441, %v2742
          %v3443 = vpop.permute.xlu0 %3442
          %3444 = vset.pattern.permute.xlu0 3
          %3445 = vperm.xlu0 %3444, %v2743
          %v3446 = vpop.permute.xlu0 %3445
          %3447 = vset.pattern.permute.xlu0 3
          %3448 = vperm.xlu0 %3447, %v2744
          %v3449 = vpop.permute.xlu0 %3448
          %3450 = vset.pattern.permute.xlu0 3
          %3451 = vperm.xlu0 %3450, %v2745
          %v3452 = vpop.permute.xlu0 %3451
          %3453 = vset.pattern.permute.xlu0 3
          %3454 = vperm.xlu0 %3453, %v2746
          %v3455 = vpop.permute.xlu0 %3454
          %3456 = vset.pattern.permute.xlu0 3
          %3457 = vperm.xlu0 %3456, %v2747
          %v3458 = vpop.permute.xlu0 %3457
          %3459 = vset.pattern.permute.xlu0 3
          %3460 = vperm.xlu0 %3459, %v2748
          %v3461 = vpop.permute.xlu0 %3460
          %3462 = vset.pattern.permute.xlu0 3
          %3463 = vperm.xlu0 %3462, %v2749
          %v3464 = vpop.permute.xlu0 %3463
          %3465 = vset.pattern.permute.xlu0 3
          %3466 = vperm.xlu0 %3465, %v2750
          %v3467 = vpop.permute.xlu0 %3466
          %3468 = vset.pattern.permute.xlu0 3
          %3469 = vperm.xlu0 %3468, %v2751
          %v3470 = vpop.permute.xlu0 %3469
          %3471 = vset.pattern.permute.xlu0 3
          %3472 = vperm.xlu0 %3471, %v2752
          %v3473 = vpop.permute.xlu0 %3472
          %3474 = vset.pattern.permute.xlu0 3
          %3475 = vperm.xlu0 %3474, %v2753
          %v3476 = vpop.permute.xlu0 %3475
          %3477 = vset.pattern.permute.xlu0 3
          %3478 = vperm.xlu0 %3477, %v2754
          %v3479 = vpop.permute.xlu0 %3478
          %vm3480 = vcmp.lt.s32.totalorder %v3155, %v3386
          %vm3481 = vcmp.lt.s32.totalorder %v3159, %v3386
          %vm3482 = vcmp.lt.s32.totalorder %v3155, %v3389
          %vm3483 = vcmp.lt.s32.totalorder %v3159, %v3389
          %vm3484 = vcmp.lt.s32.totalorder %v3155, %v3392
          %vm3485 = vcmp.lt.s32.totalorder %v3159, %v3392
          %vm3486 = vcmp.lt.s32.totalorder %v3155, %v3395
          %vm3487 = vcmp.lt.s32.totalorder %v3159, %v3395
          %vm3488 = vcmp.lt.s32.totalorder %v3155, %v3398
          %vm3489 = vcmp.lt.s32.totalorder %v3159, %v3398
          %vm3490 = vcmp.lt.s32.totalorder %v3155, %v3401
          %vm3491 = vcmp.lt.s32.totalorder %v3159, %v3401
          %vm3492 = vcmp.lt.s32.totalorder %v3155, %v3404
          %vm3493 = vcmp.lt.s32.totalorder %v3159, %v3404
          %vm3494 = vcmp.lt.s32.totalorder %v3155, %v3407
          %vm3495 = vcmp.lt.s32.totalorder %v3159, %v3407
          %vm3496 = vcmp.lt.s32.totalorder %v3155, %v3410
          %vm3497 = vcmp.lt.s32.totalorder %v3159, %v3410
          %vm3498 = vcmp.lt.s32.totalorder %v3155, %v3413
          %vm3499 = vcmp.lt.s32.totalorder %v3159, %v3413
          %vm3500 = vcmp.lt.s32.totalorder %v3155, %v3416
          %vm3501 = vcmp.lt.s32.totalorder %v3159, %v3416
          %vm3502 = vcmp.lt.s32.totalorder %v3155, %v3419
          %vm3503 = vcmp.lt.s32.totalorder %v3159, %v3419
          %vm3504 = vcmp.lt.s32.totalorder %v3155, %v3422
          %vm3505 = vcmp.lt.s32.totalorder %v3159, %v3422
          %vm3506 = vcmp.lt.s32.totalorder %v3155, %v3425
          %vm3507 = vcmp.lt.s32.totalorder %v3159, %v3425
          %vm3508 = vcmp.lt.s32.totalorder %v3155, %v3428
          %vm3509 = vcmp.lt.s32.totalorder %v3159, %v3428
          %vm3510 = vcmp.lt.s32.totalorder %v3155, %v3431
          %vm3511 = vcmp.lt.s32.totalorder %v3159, %v3431
          %vm3512 = vcmp.lt.s32.totalorder %v3155, %v3434
          %vm3513 = vcmp.lt.s32.totalorder %v3159, %v3434
          %vm3514 = vcmp.lt.s32.totalorder %v3155, %v3437
          %vm3515 = vcmp.lt.s32.totalorder %v3159, %v3437
          %vm3516 = vcmp.lt.s32.totalorder %v3155, %v3440
          %vm3517 = vcmp.lt.s32.totalorder %v3159, %v3440
          %vm3518 = vcmp.lt.s32.totalorder %v3155, %v3443
          %vm3519 = vcmp.lt.s32.totalorder %v3159, %v3443
          %vm3520 = vcmp.lt.s32.totalorder %v3155, %v3446
          %vm3521 = vcmp.lt.s32.totalorder %v3159, %v3446
          %vm3522 = vcmp.lt.s32.totalorder %v3155, %v3449
          %vm3523 = vcmp.lt.s32.totalorder %v3159, %v3449
          %vm3524 = vcmp.lt.s32.totalorder %v3155, %v3452
          %vm3525 = vcmp.lt.s32.totalorder %v3159, %v3452
          %vm3526 = vcmp.lt.s32.totalorder %v3155, %v3455
          %vm3527 = vcmp.lt.s32.totalorder %v3159, %v3455
          %vm3528 = vcmp.lt.s32.totalorder %v3155, %v3458
          %vm3529 = vcmp.lt.s32.totalorder %v3159, %v3458
          %vm3530 = vcmp.lt.s32.totalorder %v3155, %v3461
          %vm3531 = vcmp.lt.s32.totalorder %v3159, %v3461
          %vm3532 = vcmp.lt.s32.totalorder %v3155, %v3464
          %vm3533 = vcmp.lt.s32.totalorder %v3159, %v3464
          %vm3534 = vcmp.lt.s32.totalorder %v3155, %v3467
          %vm3535 = vcmp.lt.s32.totalorder %v3159, %v3467
          %vm3536 = vcmp.lt.s32.totalorder %v3155, %v3470
          %vm3537 = vcmp.lt.s32.totalorder %v3159, %v3470
          %vm3538 = vcmp.lt.s32.totalorder %v3155, %v3473
          %vm3539 = vcmp.lt.s32.totalorder %v3159, %v3473
          %vm3540 = vcmp.lt.s32.totalorder %v3155, %v3476
          %vm3541 = vcmp.lt.s32.totalorder %v3159, %v3476
          %vm3542 = vcmp.lt.s32.totalorder %v3155, %v3479
          %vm3543 = vcmp.lt.s32.totalorder %v3159, %v3479
          %vm3544 = vmand %vm3320, %vm3480
          %vm3545 = vmand %vm3321, %vm3481
          %vm3546 = vmand %vm3322, %vm3482
          %vm3547 = vmand %vm3323, %vm3483
          %vm3548 = vmand %vm3324, %vm3484
          %vm3549 = vmand %vm3325, %vm3485
          %vm3550 = vmand %vm3326, %vm3486
          %vm3551 = vmand %vm3327, %vm3487
          %vm3552 = vmand %vm3328, %vm3488
          %vm3553 = vmand %vm3329, %vm3489
          %vm3554 = vmand %vm3330, %vm3490
          %vm3555 = vmand %vm3331, %vm3491
          %vm3556 = vmand %vm3332, %vm3492
          %vm3557 = vmand %vm3333, %vm3493
          %vm3558 = vmand %vm3334, %vm3494
          %vm3559 = vmand %vm3335, %vm3495
          %vm3560 = vmand %vm3336, %vm3496
          %vm3561 = vmand %vm3337, %vm3497
          %vm3562 = vmand %vm3338, %vm3498
          %vm3563 = vmand %vm3339, %vm3499
          %vm3564 = vmand %vm3340, %vm3500
          %vm3565 = vmand %vm3341, %vm3501
          %vm3566 = vmand %vm3342, %vm3502
          %vm3567 = vmand %vm3343, %vm3503
          %vm3568 = vmand %vm3344, %vm3504
          %vm3569 = vmand %vm3345, %vm3505
          %vm3570 = vmand %vm3346, %vm3506
          %vm3571 = vmand %vm3347, %vm3507
          %vm3572 = vmand %vm3348, %vm3508
          %vm3573 = vmand %vm3349, %vm3509
          %vm3574 = vmand %vm3350, %vm3510
          %vm3575 = vmand %vm3351, %vm3511
          %vm3576 = vmand %vm3352, %vm3512
          %vm3577 = vmand %vm3353, %vm3513
          %vm3578 = vmand %vm3354, %vm3514
          %vm3579 = vmand %vm3355, %vm3515
          %vm3580 = vmand %vm3356, %vm3516
          %vm3581 = vmand %vm3357, %vm3517
          %vm3582 = vmand %vm3358, %vm3518
          %vm3583 = vmand %vm3359, %vm3519
          %vm3584 = vmand %vm3360, %vm3520
          %vm3585 = vmand %vm3361, %vm3521
          %vm3586 = vmand %vm3362, %vm3522
          %vm3587 = vmand %vm3363, %vm3523
          %vm3588 = vmand %vm3364, %vm3524
          %vm3589 = vmand %vm3365, %vm3525
          %vm3590 = vmand %vm3366, %vm3526
          %vm3591 = vmand %vm3367, %vm3527
          %vm3592 = vmand %vm3368, %vm3528
          %vm3593 = vmand %vm3369, %vm3529
          %vm3594 = vmand %vm3370, %vm3530
          %vm3595 = vmand %vm3371, %vm3531
          %vm3596 = vmand %vm3372, %vm3532
          %vm3597 = vmand %vm3373, %vm3533
          %vm3598 = vmand %vm3374, %vm3534
          %vm3599 = vmand %vm3375, %vm3535
          %vm3600 = vmand %vm3376, %vm3536
          %vm3601 = vmand %vm3377, %vm3537
          %vm3602 = vmand %vm3378, %vm3538
          %vm3603 = vmand %vm3379, %vm3539
          %vm3604 = vmand %vm3380, %vm3540
          %vm3605 = vmand %vm3381, %vm3541
          %vm3606 = vmand %vm3382, %vm3542
          %vm3607 = vmand %vm3383, %vm3543
          %v3608 = vlaneseq
          %v3609 = vshrl.u32 %v3608, 7
          %v3610 = vsub.s32 0, %v3609
          %v3611 = vrot.slane %v2759, %v3610
          %v3612 = vlaneseq
          %v3613 = vshrl.u32 %v3612, 7
          %v3614 = vsub.s32 1, %v3613
          %v3615 = vrot.slane %v2759, %v3614
          %3616 = vset.pattern.permute.xlu0 4
          %3617 = vperm.xlu0 %3616, %v2723
          %v3618 = vpop.permute.xlu0 %3617
          %3619 = vset.pattern.permute.xlu0 4
          %3620 = vperm.xlu0 %3619, %v2724
          %v3621 = vpop.permute.xlu0 %3620
          %3622 = vset.pattern.permute.xlu0 4
          %3623 = vperm.xlu0 %3622, %v2725
          %v3624 = vpop.permute.xlu0 %3623
          %3625 = vset.pattern.permute.xlu0 4
          %3626 = vperm.xlu0 %3625, %v2726
          %v3627 = vpop.permute.xlu0 %3626
          %3628 = vset.pattern.permute.xlu0 4
          %3629 = vperm.xlu0 %3628, %v2727
          %v3630 = vpop.permute.xlu0 %3629
          %3631 = vset.pattern.permute.xlu0 4
          %3632 = vperm.xlu0 %3631, %v2728
          %v3633 = vpop.permute.xlu0 %3632
          %3634 = vset.pattern.permute.xlu0 4
          %3635 = vperm.xlu0 %3634, %v2729
          %v3636 = vpop.permute.xlu0 %3635
          %3637 = vset.pattern.permute.xlu0 4
          %3638 = vperm.xlu0 %3637, %v2730
          %v3639 = vpop.permute.xlu0 %3638
          %3640 = vset.pattern.permute.xlu0 4
          %3641 = vperm.xlu0 %3640, %v2731
          %v3642 = vpop.permute.xlu0 %3641
          %3643 = vset.pattern.permute.xlu0 4
          %3644 = vperm.xlu0 %3643, %v2732
          %v3645 = vpop.permute.xlu0 %3644
          %3646 = vset.pattern.permute.xlu0 4
          %3647 = vperm.xlu0 %3646, %v2733
          %v3648 = vpop.permute.xlu0 %3647
          %3649 = vset.pattern.permute.xlu0 4
          %3650 = vperm.xlu0 %3649, %v2734
          %v3651 = vpop.permute.xlu0 %3650
          %3652 = vset.pattern.permute.xlu0 4
          %3653 = vperm.xlu0 %3652, %v2735
          %v3654 = vpop.permute.xlu0 %3653
          %3655 = vset.pattern.permute.xlu0 4
          %3656 = vperm.xlu0 %3655, %v2736
          %v3657 = vpop.permute.xlu0 %3656
          %3658 = vset.pattern.permute.xlu0 4
          %3659 = vperm.xlu0 %3658, %v2737
          %v3660 = vpop.permute.xlu0 %3659
          %3661 = vset.pattern.permute.xlu0 4
          %3662 = vperm.xlu0 %3661, %v2738
          %v3663 = vpop.permute.xlu0 %3662
          %3664 = vset.pattern.permute.xlu0 4
          %3665 = vperm.xlu0 %3664, %v2739
          %v3666 = vpop.permute.xlu0 %3665
          %3667 = vset.pattern.permute.xlu0 4
          %3668 = vperm.xlu0 %3667, %v2740
          %v3669 = vpop.permute.xlu0 %3668
          %3670 = vset.pattern.permute.xlu0 4
          %3671 = vperm.xlu0 %3670, %v2741
          %v3672 = vpop.permute.xlu0 %3671
          %3673 = vset.pattern.permute.xlu0 4
          %3674 = vperm.xlu0 %3673, %v2742
          %v3675 = vpop.permute.xlu0 %3674
          %3676 = vset.pattern.permute.xlu0 4
          %3677 = vperm.xlu0 %3676, %v2743
          %v3678 = vpop.permute.xlu0 %3677
          %3679 = vset.pattern.permute.xlu0 4
          %3680 = vperm.xlu0 %3679, %v2744
          %v3681 = vpop.permute.xlu0 %3680
          %3682 = vset.pattern.permute.xlu0 4
          %3683 = vperm.xlu0 %3682, %v2745
          %v3684 = vpop.permute.xlu0 %3683
          %3685 = vset.pattern.permute.xlu0 4
          %3686 = vperm.xlu0 %3685, %v2746
          %v3687 = vpop.permute.xlu0 %3686
          %3688 = vset.pattern.permute.xlu0 4
          %3689 = vperm.xlu0 %3688, %v2747
          %v3690 = vpop.permute.xlu0 %3689
          %3691 = vset.pattern.permute.xlu0 4
          %3692 = vperm.xlu0 %3691, %v2748
          %v3693 = vpop.permute.xlu0 %3692
          %3694 = vset.pattern.permute.xlu0 4
          %3695 = vperm.xlu0 %3694, %v2749
          %v3696 = vpop.permute.xlu0 %3695
          %3697 = vset.pattern.permute.xlu0 4
          %3698 = vperm.xlu0 %3697, %v2750
          %v3699 = vpop.permute.xlu0 %3698
          %3700 = vset.pattern.permute.xlu0 4
          %3701 = vperm.xlu0 %3700, %v2751
          %v3702 = vpop.permute.xlu0 %3701
          %3703 = vset.pattern.permute.xlu0 4
          %3704 = vperm.xlu0 %3703, %v2752
          %v3705 = vpop.permute.xlu0 %3704
          %3706 = vset.pattern.permute.xlu0 4
          %3707 = vperm.xlu0 %3706, %v2753
          %v3708 = vpop.permute.xlu0 %3707
          %3709 = vset.pattern.permute.xlu0 4
          %3710 = vperm.xlu0 %3709, %v2754
          %v3711 = vpop.permute.xlu0 %3710
          %vm3712 = vcmp.ge.s32.totalorder %v3611, %v3618
          %vm3713 = vcmp.ge.s32.totalorder %v3615, %v3618
          %vm3714 = vcmp.ge.s32.totalorder %v3611, %v3621
          %vm3715 = vcmp.ge.s32.totalorder %v3615, %v3621
          %vm3716 = vcmp.ge.s32.totalorder %v3611, %v3624
          %vm3717 = vcmp.ge.s32.totalorder %v3615, %v3624
          %vm3718 = vcmp.ge.s32.totalorder %v3611, %v3627
          %vm3719 = vcmp.ge.s32.totalorder %v3615, %v3627
          %vm3720 = vcmp.ge.s32.totalorder %v3611, %v3630
          %vm3721 = vcmp.ge.s32.totalorder %v3615, %v3630
          %vm3722 = vcmp.ge.s32.totalorder %v3611, %v3633
          %vm3723 = vcmp.ge.s32.totalorder %v3615, %v3633
          %vm3724 = vcmp.ge.s32.totalorder %v3611, %v3636
          %vm3725 = vcmp.ge.s32.totalorder %v3615, %v3636
          %vm3726 = vcmp.ge.s32.totalorder %v3611, %v3639
          %vm3727 = vcmp.ge.s32.totalorder %v3615, %v3639
          %vm3728 = vcmp.ge.s32.totalorder %v3611, %v3642
          %vm3729 = vcmp.ge.s32.totalorder %v3615, %v3642
          %vm3730 = vcmp.ge.s32.totalorder %v3611, %v3645
          %vm3731 = vcmp.ge.s32.totalorder %v3615, %v3645
          %vm3732 = vcmp.ge.s32.totalorder %v3611, %v3648
          %vm3733 = vcmp.ge.s32.totalorder %v3615, %v3648
          %vm3734 = vcmp.ge.s32.totalorder %v3611, %v3651
          %vm3735 = vcmp.ge.s32.totalorder %v3615, %v3651
          %vm3736 = vcmp.ge.s32.totalorder %v3611, %v3654
          %vm3737 = vcmp.ge.s32.totalorder %v3615, %v3654
          %vm3738 = vcmp.ge.s32.totalorder %v3611, %v3657
          %vm3739 = vcmp.ge.s32.totalorder %v3615, %v3657
          %vm3740 = vcmp.ge.s32.totalorder %v3611, %v3660
          %vm3741 = vcmp.ge.s32.totalorder %v3615, %v3660
          %vm3742 = vcmp.ge.s32.totalorder %v3611, %v3663
          %vm3743 = vcmp.ge.s32.totalorder %v3615, %v3663
          %vm3744 = vcmp.ge.s32.totalorder %v3611, %v3666
          %vm3745 = vcmp.ge.s32.totalorder %v3615, %v3666
          %vm3746 = vcmp.ge.s32.totalorder %v3611, %v3669
          %vm3747 = vcmp.ge.s32.totalorder %v3615, %v3669
          %vm3748 = vcmp.ge.s32.totalorder %v3611, %v3672
          %vm3749 = vcmp.ge.s32.totalorder %v3615, %v3672
          %vm3750 = vcmp.ge.s32.totalorder %v3611, %v3675
          %vm3751 = vcmp.ge.s32.totalorder %v3615, %v3675
          %vm3752 = vcmp.ge.s32.totalorder %v3611, %v3678
          %vm3753 = vcmp.ge.s32.totalorder %v3615, %v3678
          %vm3754 = vcmp.ge.s32.totalorder %v3611, %v3681
          %vm3755 = vcmp.ge.s32.totalorder %v3615, %v3681
          %vm3756 = vcmp.ge.s32.totalorder %v3611, %v3684
          %vm3757 = vcmp.ge.s32.totalorder %v3615, %v3684
          %vm3758 = vcmp.ge.s32.totalorder %v3611, %v3687
          %vm3759 = vcmp.ge.s32.totalorder %v3615, %v3687
          %vm3760 = vcmp.ge.s32.totalorder %v3611, %v3690
          %vm3761 = vcmp.ge.s32.totalorder %v3615, %v3690
          %vm3762 = vcmp.ge.s32.totalorder %v3611, %v3693
          %vm3763 = vcmp.ge.s32.totalorder %v3615, %v3693
          %vm3764 = vcmp.ge.s32.totalorder %v3611, %v3696
          %vm3765 = vcmp.ge.s32.totalorder %v3615, %v3696
          %vm3766 = vcmp.ge.s32.totalorder %v3611, %v3699
          %vm3767 = vcmp.ge.s32.totalorder %v3615, %v3699
          %vm3768 = vcmp.ge.s32.totalorder %v3611, %v3702
          %vm3769 = vcmp.ge.s32.totalorder %v3615, %v3702
          %vm3770 = vcmp.ge.s32.totalorder %v3611, %v3705
          %vm3771 = vcmp.ge.s32.totalorder %v3615, %v3705
          %vm3772 = vcmp.ge.s32.totalorder %v3611, %v3708
          %vm3773 = vcmp.ge.s32.totalorder %v3615, %v3708
          %vm3774 = vcmp.ge.s32.totalorder %v3611, %v3711
          %vm3775 = vcmp.ge.s32.totalorder %v3615, %v3711
          %vm3776 = vmand %vm3544, %vm3712
          %vm3777 = vmand %vm3545, %vm3713
          %vm3778 = vmand %vm3546, %vm3714
          %vm3779 = vmand %vm3547, %vm3715
          %vm3780 = vmand %vm3548, %vm3716
          %vm3781 = vmand %vm3549, %vm3717
          %vm3782 = vmand %vm3550, %vm3718
          %vm3783 = vmand %vm3551, %vm3719
          %vm3784 = vmand %vm3552, %vm3720
          %vm3785 = vmand %vm3553, %vm3721
          %vm3786 = vmand %vm3554, %vm3722
          %vm3787 = vmand %vm3555, %vm3723
          %vm3788 = vmand %vm3556, %vm3724
          %vm3789 = vmand %vm3557, %vm3725
          %vm3790 = vmand %vm3558, %vm3726
          %vm3791 = vmand %vm3559, %vm3727
          %vm3792 = vmand %vm3560, %vm3728
          %vm3793 = vmand %vm3561, %vm3729
          %vm3794 = vmand %vm3562, %vm3730
          %vm3795 = vmand %vm3563, %vm3731
          %vm3796 = vmand %vm3564, %vm3732
          %vm3797 = vmand %vm3565, %vm3733
          %vm3798 = vmand %vm3566, %vm3734
          %vm3799 = vmand %vm3567, %vm3735
          %vm3800 = vmand %vm3568, %vm3736
          %vm3801 = vmand %vm3569, %vm3737
          %vm3802 = vmand %vm3570, %vm3738
          %vm3803 = vmand %vm3571, %vm3739
          %vm3804 = vmand %vm3572, %vm3740
          %vm3805 = vmand %vm3573, %vm3741
          %vm3806 = vmand %vm3574, %vm3742
          %vm3807 = vmand %vm3575, %vm3743
          %vm3808 = vmand %vm3576, %vm3744
          %vm3809 = vmand %vm3577, %vm3745
          %vm3810 = vmand %vm3578, %vm3746
          %vm3811 = vmand %vm3579, %vm3747
          %vm3812 = vmand %vm3580, %vm3748
          %vm3813 = vmand %vm3581, %vm3749
          %vm3814 = vmand %vm3582, %vm3750
          %vm3815 = vmand %vm3583, %vm3751
          %vm3816 = vmand %vm3584, %vm3752
          %vm3817 = vmand %vm3585, %vm3753
          %vm3818 = vmand %vm3586, %vm3754
          %vm3819 = vmand %vm3587, %vm3755
          %vm3820 = vmand %vm3588, %vm3756
          %vm3821 = vmand %vm3589, %vm3757
          %vm3822 = vmand %vm3590, %vm3758
          %vm3823 = vmand %vm3591, %vm3759
          %vm3824 = vmand %vm3592, %vm3760
          %vm3825 = vmand %vm3593, %vm3761
          %vm3826 = vmand %vm3594, %vm3762
          %vm3827 = vmand %vm3595, %vm3763
          %vm3828 = vmand %vm3596, %vm3764
          %vm3829 = vmand %vm3597, %vm3765
          %vm3830 = vmand %vm3598, %vm3766
          %vm3831 = vmand %vm3599, %vm3767
          %vm3832 = vmand %vm3600, %vm3768
          %vm3833 = vmand %vm3601, %vm3769
          %vm3834 = vmand %vm3602, %vm3770
          %vm3835 = vmand %vm3603, %vm3771
          %vm3836 = vmand %vm3604, %vm3772
          %vm3837 = vmand %vm3605, %vm3773
          %vm3838 = vmand %vm3606, %vm3774
          %vm3839 = vmand %vm3607, %vm3775
          %3840 = vset.pattern.permute.xlu0 5
          %3841 = vperm.xlu0 %3840, %v2723
          %v3842 = vpop.permute.xlu0 %3841
          %3843 = vset.pattern.permute.xlu0 5
          %3844 = vperm.xlu0 %3843, %v2724
          %v3845 = vpop.permute.xlu0 %3844
          %3846 = vset.pattern.permute.xlu0 5
          %3847 = vperm.xlu0 %3846, %v2725
          %v3848 = vpop.permute.xlu0 %3847
          %3849 = vset.pattern.permute.xlu0 5
          %3850 = vperm.xlu0 %3849, %v2726
          %v3851 = vpop.permute.xlu0 %3850
          %3852 = vset.pattern.permute.xlu0 5
          %3853 = vperm.xlu0 %3852, %v2727
          %v3854 = vpop.permute.xlu0 %3853
          %3855 = vset.pattern.permute.xlu0 5
          %3856 = vperm.xlu0 %3855, %v2728
          %v3857 = vpop.permute.xlu0 %3856
          %3858 = vset.pattern.permute.xlu0 5
          %3859 = vperm.xlu0 %3858, %v2729
          %v3860 = vpop.permute.xlu0 %3859
          %3861 = vset.pattern.permute.xlu0 5
          %3862 = vperm.xlu0 %3861, %v2730
          %v3863 = vpop.permute.xlu0 %3862
          %3864 = vset.pattern.permute.xlu0 5
          %3865 = vperm.xlu0 %3864, %v2731
          %v3866 = vpop.permute.xlu0 %3865
          %3867 = vset.pattern.permute.xlu0 5
          %3868 = vperm.xlu0 %3867, %v2732
          %v3869 = vpop.permute.xlu0 %3868
          %3870 = vset.pattern.permute.xlu0 5
          %3871 = vperm.xlu0 %3870, %v2733
          %v3872 = vpop.permute.xlu0 %3871
          %3873 = vset.pattern.permute.xlu0 5
          %3874 = vperm.xlu0 %3873, %v2734
          %v3875 = vpop.permute.xlu0 %3874
          %3876 = vset.pattern.permute.xlu0 5
          %3877 = vperm.xlu0 %3876, %v2735
          %v3878 = vpop.permute.xlu0 %3877
          %3879 = vset.pattern.permute.xlu0 5
          %3880 = vperm.xlu0 %3879, %v2736
          %v3881 = vpop.permute.xlu0 %3880
          %3882 = vset.pattern.permute.xlu0 5
          %3883 = vperm.xlu0 %3882, %v2737
          %v3884 = vpop.permute.xlu0 %3883
          %3885 = vset.pattern.permute.xlu0 5
          %3886 = vperm.xlu0 %3885, %v2738
          %v3887 = vpop.permute.xlu0 %3886
          %3888 = vset.pattern.permute.xlu0 5
          %3889 = vperm.xlu0 %3888, %v2739
          %v3890 = vpop.permute.xlu0 %3889
          %3891 = vset.pattern.permute.xlu0 5
          %3892 = vperm.xlu0 %3891, %v2740
          %v3893 = vpop.permute.xlu0 %3892
          %3894 = vset.pattern.permute.xlu0 5
          %3895 = vperm.xlu0 %3894, %v2741
          %v3896 = vpop.permute.xlu0 %3895
          %3897 = vset.pattern.permute.xlu0 5
          %3898 = vperm.xlu0 %3897, %v2742
          %v3899 = vpop.permute.xlu0 %3898
          %3900 = vset.pattern.permute.xlu0 5
          %3901 = vperm.xlu0 %3900, %v2743
          %v3902 = vpop.permute.xlu0 %3901
          %3903 = vset.pattern.permute.xlu0 5
          %3904 = vperm.xlu0 %3903, %v2744
          %v3905 = vpop.permute.xlu0 %3904
          %3906 = vset.pattern.permute.xlu0 5
          %3907 = vperm.xlu0 %3906, %v2745
          %v3908 = vpop.permute.xlu0 %3907
          %3909 = vset.pattern.permute.xlu0 5
          %3910 = vperm.xlu0 %3909, %v2746
          %v3911 = vpop.permute.xlu0 %3910
          %3912 = vset.pattern.permute.xlu0 5
          %3913 = vperm.xlu0 %3912, %v2747
          %v3914 = vpop.permute.xlu0 %3913
          %3915 = vset.pattern.permute.xlu0 5
          %3916 = vperm.xlu0 %3915, %v2748
          %v3917 = vpop.permute.xlu0 %3916
          %3918 = vset.pattern.permute.xlu0 5
          %3919 = vperm.xlu0 %3918, %v2749
          %v3920 = vpop.permute.xlu0 %3919
          %3921 = vset.pattern.permute.xlu0 5
          %3922 = vperm.xlu0 %3921, %v2750
          %v3923 = vpop.permute.xlu0 %3922
          %3924 = vset.pattern.permute.xlu0 5
          %3925 = vperm.xlu0 %3924, %v2751
          %v3926 = vpop.permute.xlu0 %3925
          %3927 = vset.pattern.permute.xlu0 5
          %3928 = vperm.xlu0 %3927, %v2752
          %v3929 = vpop.permute.xlu0 %3928
          %3930 = vset.pattern.permute.xlu0 5
          %3931 = vperm.xlu0 %3930, %v2753
          %v3932 = vpop.permute.xlu0 %3931
          %3933 = vset.pattern.permute.xlu0 5
          %3934 = vperm.xlu0 %3933, %v2754
          %v3935 = vpop.permute.xlu0 %3934
          %vm3936 = vcmp.lt.s32.totalorder %v3611, %v3842
          %vm3937 = vcmp.lt.s32.totalorder %v3615, %v3842
          %vm3938 = vcmp.lt.s32.totalorder %v3611, %v3845
          %vm3939 = vcmp.lt.s32.totalorder %v3615, %v3845
          %vm3940 = vcmp.lt.s32.totalorder %v3611, %v3848
          %vm3941 = vcmp.lt.s32.totalorder %v3615, %v3848
          %vm3942 = vcmp.lt.s32.totalorder %v3611, %v3851
          %vm3943 = vcmp.lt.s32.totalorder %v3615, %v3851
          %vm3944 = vcmp.lt.s32.totalorder %v3611, %v3854
          %vm3945 = vcmp.lt.s32.totalorder %v3615, %v3854
          %vm3946 = vcmp.lt.s32.totalorder %v3611, %v3857
          %vm3947 = vcmp.lt.s32.totalorder %v3615, %v3857
          %vm3948 = vcmp.lt.s32.totalorder %v3611, %v3860
          %vm3949 = vcmp.lt.s32.totalorder %v3615, %v3860
          %vm3950 = vcmp.lt.s32.totalorder %v3611, %v3863
          %vm3951 = vcmp.lt.s32.totalorder %v3615, %v3863
          %vm3952 = vcmp.lt.s32.totalorder %v3611, %v3866
          %vm3953 = vcmp.lt.s32.totalorder %v3615, %v3866
          %vm3954 = vcmp.lt.s32.totalorder %v3611, %v3869
          %vm3955 = vcmp.lt.s32.totalorder %v3615, %v3869
          %vm3956 = vcmp.lt.s32.totalorder %v3611, %v3872
          %vm3957 = vcmp.lt.s32.totalorder %v3615, %v3872
          %vm3958 = vcmp.lt.s32.totalorder %v3611, %v3875
          %vm3959 = vcmp.lt.s32.totalorder %v3615, %v3875
          %vm3960 = vcmp.lt.s32.totalorder %v3611, %v3878
          %vm3961 = vcmp.lt.s32.totalorder %v3615, %v3878
          %vm3962 = vcmp.lt.s32.totalorder %v3611, %v3881
          %vm3963 = vcmp.lt.s32.totalorder %v3615, %v3881
          %vm3964 = vcmp.lt.s32.totalorder %v3611, %v3884
          %vm3965 = vcmp.lt.s32.totalorder %v3615, %v3884
          %vm3966 = vcmp.lt.s32.totalorder %v3611, %v3887
          %vm3967 = vcmp.lt.s32.totalorder %v3615, %v3887
          %vm3968 = vcmp.lt.s32.totalorder %v3611, %v3890
          %vm3969 = vcmp.lt.s32.totalorder %v3615, %v3890
          %vm3970 = vcmp.lt.s32.totalorder %v3611, %v3893
          %vm3971 = vcmp.lt.s32.totalorder %v3615, %v3893
          %vm3972 = vcmp.lt.s32.totalorder %v3611, %v3896
          %vm3973 = vcmp.lt.s32.totalorder %v3615, %v3896
          %vm3974 = vcmp.lt.s32.totalorder %v3611, %v3899
          %vm3975 = vcmp.lt.s32.totalorder %v3615, %v3899
          %vm3976 = vcmp.lt.s32.totalorder %v3611, %v3902
          %vm3977 = vcmp.lt.s32.totalorder %v3615, %v3902
          %vm3978 = vcmp.lt.s32.totalorder %v3611, %v3905
          %vm3979 = vcmp.lt.s32.totalorder %v3615, %v3905
          %vm3980 = vcmp.lt.s32.totalorder %v3611, %v3908
          %vm3981 = vcmp.lt.s32.totalorder %v3615, %v3908
          %vm3982 = vcmp.lt.s32.totalorder %v3611, %v3911
          %vm3983 = vcmp.lt.s32.totalorder %v3615, %v3911
          %vm3984 = vcmp.lt.s32.totalorder %v3611, %v3914
          %vm3985 = vcmp.lt.s32.totalorder %v3615, %v3914
          %vm3986 = vcmp.lt.s32.totalorder %v3611, %v3917
          %vm3987 = vcmp.lt.s32.totalorder %v3615, %v3917
          %vm3988 = vcmp.lt.s32.totalorder %v3611, %v3920
          %vm3989 = vcmp.lt.s32.totalorder %v3615, %v3920
          %vm3990 = vcmp.lt.s32.totalorder %v3611, %v3923
          %vm3991 = vcmp.lt.s32.totalorder %v3615, %v3923
          %vm3992 = vcmp.lt.s32.totalorder %v3611, %v3926
          %vm3993 = vcmp.lt.s32.totalorder %v3615, %v3926
          %vm3994 = vcmp.lt.s32.totalorder %v3611, %v3929
          %vm3995 = vcmp.lt.s32.totalorder %v3615, %v3929
          %vm3996 = vcmp.lt.s32.totalorder %v3611, %v3932
          %vm3997 = vcmp.lt.s32.totalorder %v3615, %v3932
          %vm3998 = vcmp.lt.s32.totalorder %v3611, %v3935
          %vm3999 = vcmp.lt.s32.totalorder %v3615, %v3935
          %vm4000 = vmand %vm3776, %vm3936
          %vm4001 = vmand %vm3777, %vm3937
          %vm4002 = vmand %vm3778, %vm3938
          %vm4003 = vmand %vm3779, %vm3939
          %vm4004 = vmand %vm3780, %vm3940
          %vm4005 = vmand %vm3781, %vm3941
          %vm4006 = vmand %vm3782, %vm3942
          %vm4007 = vmand %vm3783, %vm3943
          %vm4008 = vmand %vm3784, %vm3944
          %vm4009 = vmand %vm3785, %vm3945
          %vm4010 = vmand %vm3786, %vm3946
          %vm4011 = vmand %vm3787, %vm3947
          %vm4012 = vmand %vm3788, %vm3948
          %vm4013 = vmand %vm3789, %vm3949
          %vm4014 = vmand %vm3790, %vm3950
          %vm4015 = vmand %vm3791, %vm3951
          %vm4016 = vmand %vm3792, %vm3952
          %vm4017 = vmand %vm3793, %vm3953
          %vm4018 = vmand %vm3794, %vm3954
          %vm4019 = vmand %vm3795, %vm3955
          %vm4020 = vmand %vm3796, %vm3956
          %vm4021 = vmand %vm3797, %vm3957
          %vm4022 = vmand %vm3798, %vm3958
          %vm4023 = vmand %vm3799, %vm3959
          %vm4024 = vmand %vm3800, %vm3960
          %vm4025 = vmand %vm3801, %vm3961
          %vm4026 = vmand %vm3802, %vm3962
          %vm4027 = vmand %vm3803, %vm3963
          %vm4028 = vmand %vm3804, %vm3964
          %vm4029 = vmand %vm3805, %vm3965
          %vm4030 = vmand %vm3806, %vm3966
          %vm4031 = vmand %vm3807, %vm3967
          %vm4032 = vmand %vm3808, %vm3968
          %vm4033 = vmand %vm3809, %vm3969
          %vm4034 = vmand %vm3810, %vm3970
          %vm4035 = vmand %vm3811, %vm3971
          %vm4036 = vmand %vm3812, %vm3972
          %vm4037 = vmand %vm3813, %vm3973
          %vm4038 = vmand %vm3814, %vm3974
          %vm4039 = vmand %vm3815, %vm3975
          %vm4040 = vmand %vm3816, %vm3976
          %vm4041 = vmand %vm3817, %vm3977
          %vm4042 = vmand %vm3818, %vm3978
          %vm4043 = vmand %vm3819, %vm3979
          %vm4044 = vmand %vm3820, %vm3980
          %vm4045 = vmand %vm3821, %vm3981
          %vm4046 = vmand %vm3822, %vm3982
          %vm4047 = vmand %vm3823, %vm3983
          %vm4048 = vmand %vm3824, %vm3984
          %vm4049 = vmand %vm3825, %vm3985
          %vm4050 = vmand %vm3826, %vm3986
          %vm4051 = vmand %vm3827, %vm3987
          %vm4052 = vmand %vm3828, %vm3988
          %vm4053 = vmand %vm3829, %vm3989
          %vm4054 = vmand %vm3830, %vm3990
          %vm4055 = vmand %vm3831, %vm3991
          %vm4056 = vmand %vm3832, %vm3992
          %vm4057 = vmand %vm3833, %vm3993
          %vm4058 = vmand %vm3834, %vm3994
          %vm4059 = vmand %vm3835, %vm3995
          %vm4060 = vmand %vm3836, %vm3996
          %vm4061 = vmand %vm3837, %vm3997
          %vm4062 = vmand %vm3838, %vm3998
          %vm4063 = vmand %vm3839, %vm3999
          %v4064 = vsel %vm4000, %v2533, -1e+30
          %v4065 = vsel %vm4001, %v2535, -1e+30
          %v4066 = vsel %vm4002, %v2539, -1e+30
          %v4067 = vsel %vm4003, %v2541, -1e+30
          %v4068 = vsel %vm4004, %v2545, -1e+30
          %v4069 = vsel %vm4005, %v2547, -1e+30
          %v4070 = vsel %vm4006, %v2551, -1e+30
          %v4071 = vsel %vm4007, %v2553, -1e+30
          %v4072 = vsel %vm4008, %v2557, -1e+30
          %v4073 = vsel %vm4009, %v2559, -1e+30
          %v4074 = vsel %vm4010, %v2563, -1e+30
          %v4075 = vsel %vm4011, %v2565, -1e+30
          %v4076 = vsel %vm4012, %v2569, -1e+30
          %v4077 = vsel %vm4013, %v2571, -1e+30
          %v4078 = vsel %vm4014, %v2575, -1e+30
          %v4079 = vsel %vm4015, %v2577, -1e+30
          %v4080 = vsel %vm4016, %v2581, -1e+30
          %v4081 = vsel %vm4017, %v2583, -1e+30
          %v4082 = vsel %vm4018, %v2587, -1e+30
          %v4083 = vsel %vm4019, %v2589, -1e+30
          %v4084 = vsel %vm4020, %v2593, -1e+30
          %v4085 = vsel %vm4021, %v2595, -1e+30
          %v4086 = vsel %vm4022, %v2599, -1e+30
          %v4087 = vsel %vm4023, %v2601, -1e+30
          %v4088 = vsel %vm4024, %v2605, -1e+30
          %v4089 = vsel %vm4025, %v2607, -1e+30
          %v4090 = vsel %vm4026, %v2611, -1e+30
          %v4091 = vsel %vm4027, %v2613, -1e+30
          %v4092 = vsel %vm4028, %v2617, -1e+30
          %v4093 = vsel %vm4029, %v2619, -1e+30
          %v4094 = vsel %vm4030, %v2623, -1e+30
          %v4095 = vsel %vm4031, %v2625, -1e+30
          %v4096 = vsel %vm4032, %v2629, -1e+30
          %v4097 = vsel %vm4033, %v2631, -1e+30
          %v4098 = vsel %vm4034, %v2635, -1e+30
          %v4099 = vsel %vm4035, %v2637, -1e+30
          %v4100 = vsel %vm4036, %v2641, -1e+30
          %v4101 = vsel %vm4037, %v2643, -1e+30
          %v4102 = vsel %vm4038, %v2647, -1e+30
          %v4103 = vsel %vm4039, %v2649, -1e+30
          %v4104 = vsel %vm4040, %v2653, -1e+30
          %v4105 = vsel %vm4041, %v2655, -1e+30
          %v4106 = vsel %vm4042, %v2659, -1e+30
          %v4107 = vsel %vm4043, %v2661, -1e+30
          %v4108 = vsel %vm4044, %v2665, -1e+30
          %v4109 = vsel %vm4045, %v2667, -1e+30
          %v4110 = vsel %vm4046, %v2671, -1e+30
          %v4111 = vsel %vm4047, %v2673, -1e+30
          %v4112 = vsel %vm4048, %v2677, -1e+30
          %v4113 = vsel %vm4049, %v2679, -1e+30
          %v4114 = vsel %vm4050, %v2683, -1e+30
          %v4115 = vsel %vm4051, %v2685, -1e+30
          %v4116 = vsel %vm4052, %v2689, -1e+30
          %v4117 = vsel %vm4053, %v2691, -1e+30
          %v4118 = vsel %vm4054, %v2695, -1e+30
          %v4119 = vsel %vm4055, %v2697, -1e+30
          %v4120 = vsel %vm4056, %v2701, -1e+30
          %v4121 = vsel %vm4057, %v2703, -1e+30
          %v4122 = vsel %vm4058, %v2707, -1e+30
          %v4123 = vsel %vm4059, %v2709, -1e+30
          %v4124 = vsel %vm4060, %v2713, -1e+30
          %v4125 = vsel %vm4061, %v2715, -1e+30
          %v4126 = vsel %vm4062, %v2719, -1e+30
          %v4127 = vsel %vm4063, %v2721, -1e+30
          %v4128 = vld [vmem:[#allocation2] sm:$0xff]
          %v4129 = vld [vmem:[#allocation2 + $0x8] sm:$0xff]
          %v4130 = vld [vmem:[#allocation2 + $0x10] sm:$0xff]
          %v4131 = vld [vmem:[#allocation2 + $0x18] sm:$0xff]
          %v4132 = vld [vmem:[#allocation2 + $0x20] sm:$0xff]
          %v4133 = vld [vmem:[#allocation2 + $0x28] sm:$0xff]
          %v4134 = vld [vmem:[#allocation2 + $0x30] sm:$0xff]
          %v4135 = vld [vmem:[#allocation2 + $0x38] sm:$0xff]
          %v4136 = vld [vmem:[#allocation2 + $0x40] sm:$0xff]
          %v4137 = vld [vmem:[#allocation2 + $0x48] sm:$0xff]
          %v4138 = vld [vmem:[#allocation2 + $0x50] sm:$0xff]
          %v4139 = vld [vmem:[#allocation2 + $0x58] sm:$0xff]
          %v4140 = vld [vmem:[#allocation2 + $0x60] sm:$0xff]
          %v4141 = vld [vmem:[#allocation2 + $0x68] sm:$0xff]
          %v4142 = vld [vmem:[#allocation2 + $0x70] sm:$0xff]
          %v4143 = vld [vmem:[#allocation2 + $0x78] sm:$0xff]
          %v4144 = vld [vmem:[#allocation2 + $0x80] sm:$0xff]
          %v4145 = vld [vmem:[#allocation2 + $0x88] sm:$0xff]
          %v4146 = vld [vmem:[#allocation2 + $0x90] sm:$0xff]
          %v4147 = vld [vmem:[#allocation2 + $0x98] sm:$0xff]
          %v4148 = vld [vmem:[#allocation2 + $0xa0] sm:$0xff]
          %v4149 = vld [vmem:[#allocation2 + $0xa8] sm:$0xff]
          %v4150 = vld [vmem:[#allocation2 + $0xb0] sm:$0xff]
          %v4151 = vld [vmem:[#allocation2 + $0xb8] sm:$0xff]
          %v4152 = vld [vmem:[#allocation2 + $0xc0] sm:$0xff]
          %v4153 = vld [vmem:[#allocation2 + $0xc8] sm:$0xff]
          %v4154 = vld [vmem:[#allocation2 + $0xd0] sm:$0xff]
          %v4155 = vld [vmem:[#allocation2 + $0xd8] sm:$0xff]
          %v4156 = vld [vmem:[#allocation2 + $0xe0] sm:$0xff]
          %v4157 = vld [vmem:[#allocation2 + $0xe8] sm:$0xff]
          %v4158 = vld [vmem:[#allocation2 + $0xf0] sm:$0xff]
          %v4159 = vld [vmem:[#allocation2 + $0xf8] sm:$0xff]
          %v4160 = vmax.f32 %v4064, %v4065
          %4161 = vmax.xlane.f32.xlu0 %v4160
          %v4162 = vpop.xlane.xlu0 %4161
          %v4163 = vmax.f32 %v4066, %v4067
          %4164 = vmax.xlane.f32.xlu0 %v4163
          %v4165 = vpop.xlane.xlu0 %4164
          %v4166 = vmax.f32 %v4068, %v4069
          %4167 = vmax.xlane.f32.xlu0 %v4166
          %v4168 = vpop.xlane.xlu0 %4167
          %v4169 = vmax.f32 %v4070, %v4071
          %4170 = vmax.xlane.f32.xlu0 %v4169
          %v4171 = vpop.xlane.xlu0 %4170
          %v4172 = vmax.f32 %v4072, %v4073
          %4173 = vmax.xlane.f32.xlu0 %v4172
          %v4174 = vpop.xlane.xlu0 %4173
          %v4175 = vmax.f32 %v4074, %v4075
          %4176 = vmax.xlane.f32.xlu0 %v4175
          %v4177 = vpop.xlane.xlu0 %4176
          %v4178 = vmax.f32 %v4076, %v4077
          %4179 = vmax.xlane.f32.xlu0 %v4178
          %v4180 = vpop.xlane.xlu0 %4179
          %v4181 = vmax.f32 %v4078, %v4079
          %4182 = vmax.xlane.f32.xlu0 %v4181
          %v4183 = vpop.xlane.xlu0 %4182
          %v4184 = vmax.f32 %v4080, %v4081
          %4185 = vmax.xlane.f32.xlu0 %v4184
          %v4186 = vpop.xlane.xlu0 %4185
          %v4187 = vmax.f32 %v4082, %v4083
          %4188 = vmax.xlane.f32.xlu0 %v4187
          %v4189 = vpop.xlane.xlu0 %4188
          %v4190 = vmax.f32 %v4084, %v4085
          %4191 = vmax.xlane.f32.xlu0 %v4190
          %v4192 = vpop.xlane.xlu0 %4191
          %v4193 = vmax.f32 %v4086, %v4087
          %4194 = vmax.xlane.f32.xlu0 %v4193
          %v4195 = vpop.xlane.xlu0 %4194
          %v4196 = vmax.f32 %v4088, %v4089
          %4197 = vmax.xlane.f32.xlu0 %v4196
          %v4198 = vpop.xlane.xlu0 %4197
          %v4199 = vmax.f32 %v4090, %v4091
          %4200 = vmax.xlane.f32.xlu0 %v4199
          %v4201 = vpop.xlane.xlu0 %4200
          %v4202 = vmax.f32 %v4092, %v4093
          %4203 = vmax.xlane.f32.xlu0 %v4202
          %v4204 = vpop.xlane.xlu0 %4203
          %v4205 = vmax.f32 %v4094, %v4095
          %4206 = vmax.xlane.f32.xlu0 %v4205
          %v4207 = vpop.xlane.xlu0 %4206
          %v4208 = vmax.f32 %v4096, %v4097
          %4209 = vmax.xlane.f32.xlu0 %v4208
          %v4210 = vpop.xlane.xlu0 %4209
          %v4211 = vmax.f32 %v4098, %v4099
          %4212 = vmax.xlane.f32.xlu0 %v4211
          %v4213 = vpop.xlane.xlu0 %4212
          %v4214 = vmax.f32 %v4100, %v4101
          %4215 = vmax.xlane.f32.xlu0 %v4214
          %v4216 = vpop.xlane.xlu0 %4215
          %v4217 = vmax.f32 %v4102, %v4103
          %4218 = vmax.xlane.f32.xlu0 %v4217
          %v4219 = vpop.xlane.xlu0 %4218
          %v4220 = vmax.f32 %v4104, %v4105
          %4221 = vmax.xlane.f32.xlu0 %v4220
          %v4222 = vpop.xlane.xlu0 %4221
          %v4223 = vmax.f32 %v4106, %v4107
          %4224 = vmax.xlane.f32.xlu0 %v4223
          %v4225 = vpop.xlane.xlu0 %4224
          %v4226 = vmax.f32 %v4108, %v4109
          %4227 = vmax.xlane.f32.xlu0 %v4226
          %v4228 = vpop.xlane.xlu0 %4227
          %v4229 = vmax.f32 %v4110, %v4111
          %4230 = vmax.xlane.f32.xlu0 %v4229
          %v4231 = vpop.xlane.xlu0 %4230
          %v4232 = vmax.f32 %v4112, %v4113
          %4233 = vmax.xlane.f32.xlu0 %v4232
          %v4234 = vpop.xlane.xlu0 %4233
          %v4235 = vmax.f32 %v4114, %v4115
          %4236 = vmax.xlane.f32.xlu0 %v4235
          %v4237 = vpop.xlane.xlu0 %4236
          %v4238 = vmax.f32 %v4116, %v4117
          %4239 = vmax.xlane.f32.xlu0 %v4238
          %v4240 = vpop.xlane.xlu0 %4239
          %v4241 = vmax.f32 %v4118, %v4119
          %4242 = vmax.xlane.f32.xlu0 %v4241
          %v4243 = vpop.xlane.xlu0 %4242
          %v4244 = vmax.f32 %v4120, %v4121
          %4245 = vmax.xlane.f32.xlu0 %v4244
          %v4246 = vpop.xlane.xlu0 %4245
          %v4247 = vmax.f32 %v4122, %v4123
          %4248 = vmax.xlane.f32.xlu0 %v4247
          %v4249 = vpop.xlane.xlu0 %4248
          %v4250 = vmax.f32 %v4124, %v4125
          %4251 = vmax.xlane.f32.xlu0 %v4250
          %v4252 = vpop.xlane.xlu0 %4251
          %v4253 = vmax.f32 %v4126, %v4127
          %4254 = vmax.xlane.f32.xlu0 %v4253
          %v4255 = vpop.xlane.xlu0 %4254
          %v4256 = vmax.f32 %v4128, %v4162
          %v4257 = vmax.f32 %v4129, %v4165
          %v4258 = vmax.f32 %v4130, %v4168
          %v4259 = vmax.f32 %v4131, %v4171
          %v4260 = vmax.f32 %v4132, %v4174
          %v4261 = vmax.f32 %v4133, %v4177
          %v4262 = vmax.f32 %v4134, %v4180
          %v4263 = vmax.f32 %v4135, %v4183
          %v4264 = vmax.f32 %v4136, %v4186
          %v4265 = vmax.f32 %v4137, %v4189
          %v4266 = vmax.f32 %v4138, %v4192
          %v4267 = vmax.f32 %v4139, %v4195
          %v4268 = vmax.f32 %v4140, %v4198
          %v4269 = vmax.f32 %v4141, %v4201
          %v4270 = vmax.f32 %v4142, %v4204
          %v4271 = vmax.f32 %v4143, %v4207
          %v4272 = vmax.f32 %v4144, %v4210
          %v4273 = vmax.f32 %v4145, %v4213
          %v4274 = vmax.f32 %v4146, %v4216
          %v4275 = vmax.f32 %v4147, %v4219
          %v4276 = vmax.f32 %v4148, %v4222
          %v4277 = vmax.f32 %v4149, %v4225
          %v4278 = vmax.f32 %v4150, %v4228
          %v4279 = vmax.f32 %v4151, %v4231
          %v4280 = vmax.f32 %v4152, %v4234
          %v4281 = vmax.f32 %v4153, %v4237
          %v4282 = vmax.f32 %v4154, %v4240
          %v4283 = vmax.f32 %v4155, %v4243
          %v4284 = vmax.f32 %v4156, %v4246
          %v4285 = vmax.f32 %v4157, %v4249
          %v4286 = vmax.f32 %v4158, %v4252
          %v4287 = vmax.f32 %v4159, %v4255
          %v4288 = vsub.f32 %v4128, %v4256
          %v4289 = vsub.f32 %v4129, %v4257
          %v4290 = vsub.f32 %v4130, %v4258
          %v4291 = vsub.f32 %v4131, %v4259
          %v4292 = vsub.f32 %v4132, %v4260
          %v4293 = vsub.f32 %v4133, %v4261
          %v4294 = vsub.f32 %v4134, %v4262
          %v4295 = vsub.f32 %v4135, %v4263
          %v4296 = vsub.f32 %v4136, %v4264
          %v4297 = vsub.f32 %v4137, %v4265
          %v4298 = vsub.f32 %v4138, %v4266
          %v4299 = vsub.f32 %v4139, %v4267
          %v4300 = vsub.f32 %v4140, %v4268
          %v4301 = vsub.f32 %v4141, %v4269
          %v4302 = vsub.f32 %v4142, %v4270
          %v4303 = vsub.f32 %v4143, %v4271
          %v4304 = vsub.f32 %v4144, %v4272
          %v4305 = vsub.f32 %v4145, %v4273
          %v4306 = vsub.f32 %v4146, %v4274
          %v4307 = vsub.f32 %v4147, %v4275
          %v4308 = vsub.f32 %v4148, %v4276
          %v4309 = vsub.f32 %v4149, %v4277
          %v4310 = vsub.f32 %v4150, %v4278
          %v4311 = vsub.f32 %v4151, %v4279
          %v4312 = vsub.f32 %v4152, %v4280
          %v4313 = vsub.f32 %v4153, %v4281
          %v4314 = vsub.f32 %v4154, %v4282
          %v4315 = vsub.f32 %v4155, %v4283
          %v4316 = vsub.f32 %v4156, %v4284
          %v4317 = vsub.f32 %v4157, %v4285
          %v4318 = vsub.f32 %v4158, %v4286
          %v4319 = vsub.f32 %v4159, %v4287
          %v4320 = vmul.f32 %v4288, 1.442695
          %v4321 = vpow.pop %v4320
          %v4322 = vmul.f32 %v4289, 1.442695
          %v4323 = vpow.pop %v4322
          %v4324 = vmul.f32 %v4290, 1.442695
          %v4325 = vpow.pop %v4324
          %v4326 = vmul.f32 %v4291, 1.442695
          %v4327 = vpow.pop %v4326
          %v4328 = vmul.f32 %v4292, 1.442695
          %v4329 = vpow.pop %v4328
          %v4330 = vmul.f32 %v4293, 1.442695
          %v4331 = vpow.pop %v4330
          %v4332 = vmul.f32 %v4294, 1.442695
          %v4333 = vpow.pop %v4332
          %v4334 = vmul.f32 %v4295, 1.442695
          %v4335 = vpow.pop %v4334
          %v4336 = vmul.f32 %v4296, 1.442695
          %v4337 = vpow.pop %v4336
          %v4338 = vmul.f32 %v4297, 1.442695
          %v4339 = vpow.pop %v4338
          %v4340 = vmul.f32 %v4298, 1.442695
          %v4341 = vpow.pop %v4340
          %v4342 = vmul.f32 %v4299, 1.442695
          %v4343 = vpow.pop %v4342
          %v4344 = vmul.f32 %v4300, 1.442695
          %v4345 = vpow.pop %v4344
          %v4346 = vmul.f32 %v4301, 1.442695
          %v4347 = vpow.pop %v4346
          %v4348 = vmul.f32 %v4302, 1.442695
          %v4349 = vpow.pop %v4348
          %v4350 = vmul.f32 %v4303, 1.442695
          %v4351 = vpow.pop %v4350
          %v4352 = vmul.f32 %v4304, 1.442695
          %v4353 = vpow.pop %v4352
          %v4354 = vmul.f32 %v4305, 1.442695
          %v4355 = vpow.pop %v4354
          %v4356 = vmul.f32 %v4306, 1.442695
          %v4357 = vpow.pop %v4356
          %v4358 = vmul.f32 %v4307, 1.442695
          %v4359 = vpow.pop %v4358
          %v4360 = vmul.f32 %v4308, 1.442695
          %v4361 = vpow.pop %v4360
          %v4362 = vmul.f32 %v4309, 1.442695
          %v4363 = vpow.pop %v4362
          %v4364 = vmul.f32 %v4310, 1.442695
          %v4365 = vpow.pop %v4364
          %v4366 = vmul.f32 %v4311, 1.442695
          %v4367 = vpow.pop %v4366
          %v4368 = vmul.f32 %v4312, 1.442695
          %v4369 = vpow.pop %v4368
          %v4370 = vmul.f32 %v4313, 1.442695
          %v4371 = vpow.pop %v4370
          %v4372 = vmul.f32 %v4314, 1.442695
          %v4373 = vpow.pop %v4372
          %v4374 = vmul.f32 %v4315, 1.442695
          %v4375 = vpow.pop %v4374
          %v4376 = vmul.f32 %v4316, 1.442695
          %v4377 = vpow.pop %v4376
          %v4378 = vmul.f32 %v4317, 1.442695
          %v4379 = vpow.pop %v4378
          %v4380 = vmul.f32 %v4318, 1.442695
          %v4381 = vpow.pop %v4380
          %v4382 = vmul.f32 %v4319, 1.442695
          %v4383 = vpow.pop %v4382
          %4385 = vset.pattern.permute.xlu0 0
          %4386 = vperm.xlu0 %4385, %v4256
          %v4387 = vpop.permute.xlu0 %4386
          %4390 = vset.pattern.permute.xlu0 0
          %4391 = vperm.xlu0 %4390, %v4257
          %v4392 = vpop.permute.xlu0 %4391
          %4395 = vset.pattern.permute.xlu0 0
          %4396 = vperm.xlu0 %4395, %v4258
          %v4397 = vpop.permute.xlu0 %4396
          %4400 = vset.pattern.permute.xlu0 0
          %4401 = vperm.xlu0 %4400, %v4259
          %v4402 = vpop.permute.xlu0 %4401
          %4405 = vset.pattern.permute.xlu0 0
          %4406 = vperm.xlu0 %4405, %v4260
          %v4407 = vpop.permute.xlu0 %4406
          %4410 = vset.pattern.permute.xlu0 0
          %4411 = vperm.xlu0 %4410, %v4261
          %v4412 = vpop.permute.xlu0 %4411
          %4415 = vset.pattern.permute.xlu0 0
          %4416 = vperm.xlu0 %4415, %v4262
          %v4417 = vpop.permute.xlu0 %4416
          %4420 = vset.pattern.permute.xlu0 0
          %4421 = vperm.xlu0 %4420, %v4263
          %v4422 = vpop.permute.xlu0 %4421
          %4425 = vset.pattern.permute.xlu0 0
          %4426 = vperm.xlu0 %4425, %v4264
          %v4427 = vpop.permute.xlu0 %4426
          %4430 = vset.pattern.permute.xlu0 0
          %4431 = vperm.xlu0 %4430, %v4265
          %v4432 = vpop.permute.xlu0 %4431
          %4435 = vset.pattern.permute.xlu0 0
          %4436 = vperm.xlu0 %4435, %v4266
          %v4437 = vpop.permute.xlu0 %4436
          %4440 = vset.pattern.permute.xlu0 0
          %4441 = vperm.xlu0 %4440, %v4267
          %v4442 = vpop.permute.xlu0 %4441
          %4445 = vset.pattern.permute.xlu0 0
          %4446 = vperm.xlu0 %4445, %v4268
          %v4447 = vpop.permute.xlu0 %4446
          %4450 = vset.pattern.permute.xlu0 0
          %4451 = vperm.xlu0 %4450, %v4269
          %v4452 = vpop.permute.xlu0 %4451
          %4455 = vset.pattern.permute.xlu0 0
          %4456 = vperm.xlu0 %4455, %v4270
          %v4457 = vpop.permute.xlu0 %4456
          %4460 = vset.pattern.permute.xlu0 0
          %4461 = vperm.xlu0 %4460, %v4271
          %v4462 = vpop.permute.xlu0 %4461
          %4465 = vset.pattern.permute.xlu0 0
          %4466 = vperm.xlu0 %4465, %v4272
          %v4467 = vpop.permute.xlu0 %4466
          %4470 = vset.pattern.permute.xlu0 0
          %4471 = vperm.xlu0 %4470, %v4273
          %v4472 = vpop.permute.xlu0 %4471
          %4475 = vset.pattern.permute.xlu0 0
          %4476 = vperm.xlu0 %4475, %v4274
          %v4477 = vpop.permute.xlu0 %4476
          %4480 = vset.pattern.permute.xlu0 0
          %4481 = vperm.xlu0 %4480, %v4275
          %v4482 = vpop.permute.xlu0 %4481
          %4485 = vset.pattern.permute.xlu0 0
          %4486 = vperm.xlu0 %4485, %v4276
          %v4487 = vpop.permute.xlu0 %4486
          %4490 = vset.pattern.permute.xlu0 0
          %4491 = vperm.xlu0 %4490, %v4277
          %v4492 = vpop.permute.xlu0 %4491
          %4495 = vset.pattern.permute.xlu0 0
          %4496 = vperm.xlu0 %4495, %v4278
          %v4497 = vpop.permute.xlu0 %4496
          %4500 = vset.pattern.permute.xlu0 0
          %4501 = vperm.xlu0 %4500, %v4279
          %v4502 = vpop.permute.xlu0 %4501
          %4505 = vset.pattern.permute.xlu0 0
          %4506 = vperm.xlu0 %4505, %v4280
          %v4507 = vpop.permute.xlu0 %4506
          %4510 = vset.pattern.permute.xlu0 0
          %4511 = vperm.xlu0 %4510, %v4281
          %v4512 = vpop.permute.xlu0 %4511
          %4515 = vset.pattern.permute.xlu0 0
          %4516 = vperm.xlu0 %4515, %v4282
          %v4517 = vpop.permute.xlu0 %4516
          %4520 = vset.pattern.permute.xlu0 0
          %4521 = vperm.xlu0 %4520, %v4283
          %v4522 = vpop.permute.xlu0 %4521
          %4525 = vset.pattern.permute.xlu0 0
          %4526 = vperm.xlu0 %4525, %v4284
          %v4527 = vpop.permute.xlu0 %4526
          %4530 = vset.pattern.permute.xlu0 0
          %4531 = vperm.xlu0 %4530, %v4285
          %v4532 = vpop.permute.xlu0 %4531
          %4535 = vset.pattern.permute.xlu0 0
          %4536 = vperm.xlu0 %4535, %v4286
          %v4537 = vpop.permute.xlu0 %4536
          %4540 = vset.pattern.permute.xlu0 0
          %4541 = vperm.xlu0 %4540, %v4287
          %v4542 = vpop.permute.xlu0 %4541
          %v4544 = vsub.f32 %v4064, %v4387
          %v4545 = vsub.f32 %v4065, %v4387
          %v4546 = vsub.f32 %v4066, %v4392
          %v4547 = vsub.f32 %v4067, %v4392
          %v4548 = vsub.f32 %v4068, %v4397
          %v4549 = vsub.f32 %v4069, %v4397
          %v4550 = vsub.f32 %v4070, %v4402
          %v4551 = vsub.f32 %v4071, %v4402
          %v4552 = vsub.f32 %v4072, %v4407
          %v4553 = vsub.f32 %v4073, %v4407
          %v4554 = vsub.f32 %v4074, %v4412
          %v4555 = vsub.f32 %v4075, %v4412
          %v4556 = vsub.f32 %v4076, %v4417
          %v4557 = vsub.f32 %v4077, %v4417
          %v4558 = vsub.f32 %v4078, %v4422
          %v4559 = vsub.f32 %v4079, %v4422
          %v4560 = vsub.f32 %v4080, %v4427
          %v4561 = vsub.f32 %v4081, %v4427
          %v4562 = vsub.f32 %v4082, %v4432
          %v4563 = vsub.f32 %v4083, %v4432
          %v4564 = vsub.f32 %v4084, %v4437
          %v4565 = vsub.f32 %v4085, %v4437
          %v4566 = vsub.f32 %v4086, %v4442
          %v4567 = vsub.f32 %v4087, %v4442
          %v4568 = vsub.f32 %v4088, %v4447
          %v4569 = vsub.f32 %v4089, %v4447
          %v4570 = vsub.f32 %v4090, %v4452
          %v4571 = vsub.f32 %v4091, %v4452
          %v4572 = vsub.f32 %v4092, %v4457
          %v4573 = vsub.f32 %v4093, %v4457
          %v4574 = vsub.f32 %v4094, %v4462
          %v4575 = vsub.f32 %v4095, %v4462
          %v4576 = vsub.f32 %v4096, %v4467
          %v4577 = vsub.f32 %v4097, %v4467
          %v4578 = vsub.f32 %v4098, %v4472
          %v4579 = vsub.f32 %v4099, %v4472
          %v4580 = vsub.f32 %v4100, %v4477
          %v4581 = vsub.f32 %v4101, %v4477
          %v4582 = vsub.f32 %v4102, %v4482
          %v4583 = vsub.f32 %v4103, %v4482
          %v4584 = vsub.f32 %v4104, %v4487
          %v4585 = vsub.f32 %v4105, %v4487
          %v4586 = vsub.f32 %v4106, %v4492
          %v4587 = vsub.f32 %v4107, %v4492
          %v4588 = vsub.f32 %v4108, %v4497
          %v4589 = vsub.f32 %v4109, %v4497
          %v4590 = vsub.f32 %v4110, %v4502
          %v4591 = vsub.f32 %v4111, %v4502
          %v4592 = vsub.f32 %v4112, %v4507
          %v4593 = vsub.f32 %v4113, %v4507
          %v4594 = vsub.f32 %v4114, %v4512
          %v4595 = vsub.f32 %v4115, %v4512
          %v4596 = vsub.f32 %v4116, %v4517
          %v4597 = vsub.f32 %v4117, %v4517
          %v4598 = vsub.f32 %v4118, %v4522
          %v4599 = vsub.f32 %v4119, %v4522
          %v4600 = vsub.f32 %v4120, %v4527
          %v4601 = vsub.f32 %v4121, %v4527
          %v4602 = vsub.f32 %v4122, %v4532
          %v4603 = vsub.f32 %v4123, %v4532
          %v4604 = vsub.f32 %v4124, %v4537
          %v4605 = vsub.f32 %v4125, %v4537
          %v4606 = vsub.f32 %v4126, %v4542
          %v4607 = vsub.f32 %v4127, %v4542
          %v4608 = vmul.f32 %v4544, 1.442695
          %v4609 = vpow.pop %v4608
          %v4610 = vmul.f32 %v4545, 1.442695
          %v4611 = vpow.pop %v4610
          %v4612 = vmul.f32 %v4546, 1.442695
          %v4613 = vpow.pop %v4612
          %v4614 = vmul.f32 %v4547, 1.442695
          %v4615 = vpow.pop %v4614
          %v4616 = vmul.f32 %v4548, 1.442695
          %v4617 = vpow.pop %v4616
          %v4618 = vmul.f32 %v4549, 1.442695
          %v4619 = vpow.pop %v4618
          %v4620 = vmul.f32 %v4550, 1.442695
          %v4621 = vpow.pop %v4620
          %v4622 = vmul.f32 %v4551, 1.442695
          %v4623 = vpow.pop %v4622
          %v4624 = vmul.f32 %v4552, 1.442695
          %v4625 = vpow.pop %v4624
          %v4626 = vmul.f32 %v4553, 1.442695
          %v4627 = vpow.pop %v4626
          %v4628 = vmul.f32 %v4554, 1.442695
          %v4629 = vpow.pop %v4628
          %v4630 = vmul.f32 %v4555, 1.442695
          %v4631 = vpow.pop %v4630
          %v4632 = vmul.f32 %v4556, 1.442695
          %v4633 = vpow.pop %v4632
          %v4634 = vmul.f32 %v4557, 1.442695
          %v4635 = vpow.pop %v4634
          %v4636 = vmul.f32 %v4558, 1.442695
          %v4637 = vpow.pop %v4636
          %v4638 = vmul.f32 %v4559, 1.442695
          %v4639 = vpow.pop %v4638
          %v4640 = vmul.f32 %v4560, 1.442695
          %v4641 = vpow.pop %v4640
          %v4642 = vmul.f32 %v4561, 1.442695
          %v4643 = vpow.pop %v4642
          %v4644 = vmul.f32 %v4562, 1.442695
          %v4645 = vpow.pop %v4644
          %v4646 = vmul.f32 %v4563, 1.442695
          %v4647 = vpow.pop %v4646
          %v4648 = vmul.f32 %v4564, 1.442695
          %v4649 = vpow.pop %v4648
          %v4650 = vmul.f32 %v4565, 1.442695
          %v4651 = vpow.pop %v4650
          %v4652 = vmul.f32 %v4566, 1.442695
          %v4653 = vpow.pop %v4652
          %v4654 = vmul.f32 %v4567, 1.442695
          %v4655 = vpow.pop %v4654
          %v4656 = vmul.f32 %v4568, 1.442695
          %v4657 = vpow.pop %v4656
          %v4658 = vmul.f32 %v4569, 1.442695
          %v4659 = vpow.pop %v4658
          %v4660 = vmul.f32 %v4570, 1.442695
          %v4661 = vpow.pop %v4660
          %v4662 = vmul.f32 %v4571, 1.442695
          %v4663 = vpow.pop %v4662
          %v4664 = vmul.f32 %v4572, 1.442695
          %v4665 = vpow.pop %v4664
          %v4666 = vmul.f32 %v4573, 1.442695
          %v4667 = vpow.pop %v4666
          %v4668 = vmul.f32 %v4574, 1.442695
          %v4669 = vpow.pop %v4668
          %v4670 = vmul.f32 %v4575, 1.442695
          %v4671 = vpow.pop %v4670
          %v4672 = vmul.f32 %v4576, 1.442695
          %v4673 = vpow.pop %v4672
          %v4674 = vmul.f32 %v4577, 1.442695
          %v4675 = vpow.pop %v4674
          %v4676 = vmul.f32 %v4578, 1.442695
          %v4677 = vpow.pop %v4676
          %v4678 = vmul.f32 %v4579, 1.442695
          %v4679 = vpow.pop %v4678
          %v4680 = vmul.f32 %v4580, 1.442695
          %v4681 = vpow.pop %v4680
          %v4682 = vmul.f32 %v4581, 1.442695
          %v4683 = vpow.pop %v4682
          %v4684 = vmul.f32 %v4582, 1.442695
          %v4685 = vpow.pop %v4684
          %v4686 = vmul.f32 %v4583, 1.442695
          %v4687 = vpow.pop %v4686
          %v4688 = vmul.f32 %v4584, 1.442695
          %v4689 = vpow.pop %v4688
          %v4690 = vmul.f32 %v4585, 1.442695
          %v4691 = vpow.pop %v4690
          %v4692 = vmul.f32 %v4586, 1.442695
          %v4693 = vpow.pop %v4692
          %v4694 = vmul.f32 %v4587, 1.442695
          %v4695 = vpow.pop %v4694
          %v4696 = vmul.f32 %v4588, 1.442695
          %v4697 = vpow.pop %v4696
          %v4698 = vmul.f32 %v4589, 1.442695
          %v4699 = vpow.pop %v4698
          %v4700 = vmul.f32 %v4590, 1.442695
          %v4701 = vpow.pop %v4700
          %v4702 = vmul.f32 %v4591, 1.442695
          %v4703 = vpow.pop %v4702
          %v4704 = vmul.f32 %v4592, 1.442695
          %v4705 = vpow.pop %v4704
          %v4706 = vmul.f32 %v4593, 1.442695
          %v4707 = vpow.pop %v4706
          %v4708 = vmul.f32 %v4594, 1.442695
          %v4709 = vpow.pop %v4708
          %v4710 = vmul.f32 %v4595, 1.442695
          %v4711 = vpow.pop %v4710
          %v4712 = vmul.f32 %v4596, 1.442695
          %v4713 = vpow.pop %v4712
          %v4714 = vmul.f32 %v4597, 1.442695
          %v4715 = vpow.pop %v4714
          %v4716 = vmul.f32 %v4598, 1.442695
          %v4717 = vpow.pop %v4716
          %v4718 = vmul.f32 %v4599, 1.442695
          %v4719 = vpow.pop %v4718
          %v4720 = vmul.f32 %v4600, 1.442695
          %v4721 = vpow.pop %v4720
          %v4722 = vmul.f32 %v4601, 1.442695
          %v4723 = vpow.pop %v4722
          %v4724 = vmul.f32 %v4602, 1.442695
          %v4725 = vpow.pop %v4724
          %v4726 = vmul.f32 %v4603, 1.442695
          %v4727 = vpow.pop %v4726
          %v4728 = vmul.f32 %v4604, 1.442695
          %v4729 = vpow.pop %v4728
          %v4730 = vmul.f32 %v4605, 1.442695
          %v4731 = vpow.pop %v4730
          %v4732 = vmul.f32 %v4606, 1.442695
          %v4733 = vpow.pop %v4732
          %v4734 = vmul.f32 %v4607, 1.442695
          %v4735 = vpow.pop %v4734
          %v4736 = vld [vmem:[#allocation3] sm:$0xff]
          %v4737 = vld [vmem:[#allocation3 + $0x8] sm:$0xff]
          %v4738 = vld [vmem:[#allocation3 + $0x10] sm:$0xff]
          %v4739 = vld [vmem:[#allocation3 + $0x18] sm:$0xff]
          %v4740 = vld [vmem:[#allocation3 + $0x20] sm:$0xff]
          %v4741 = vld [vmem:[#allocation3 + $0x28] sm:$0xff]
          %v4742 = vld [vmem:[#allocation3 + $0x30] sm:$0xff]
          %v4743 = vld [vmem:[#allocation3 + $0x38] sm:$0xff]
          %v4744 = vld [vmem:[#allocation3 + $0x40] sm:$0xff]
          %v4745 = vld [vmem:[#allocation3 + $0x48] sm:$0xff]
          %v4746 = vld [vmem:[#allocation3 + $0x50] sm:$0xff]
          %v4747 = vld [vmem:[#allocation3 + $0x58] sm:$0xff]
          %v4748 = vld [vmem:[#allocation3 + $0x60] sm:$0xff]
          %v4749 = vld [vmem:[#allocation3 + $0x68] sm:$0xff]
          %v4750 = vld [vmem:[#allocation3 + $0x70] sm:$0xff]
          %v4751 = vld [vmem:[#allocation3 + $0x78] sm:$0xff]
          %v4752 = vld [vmem:[#allocation3 + $0x80] sm:$0xff]
          %v4753 = vld [vmem:[#allocation3 + $0x88] sm:$0xff]
          %v4754 = vld [vmem:[#allocation3 + $0x90] sm:$0xff]
          %v4755 = vld [vmem:[#allocation3 + $0x98] sm:$0xff]
          %v4756 = vld [vmem:[#allocation3 + $0xa0] sm:$0xff]
          %v4757 = vld [vmem:[#allocation3 + $0xa8] sm:$0xff]
          %v4758 = vld [vmem:[#allocation3 + $0xb0] sm:$0xff]
          %v4759 = vld [vmem:[#allocation3 + $0xb8] sm:$0xff]
          %v4760 = vld [vmem:[#allocation3 + $0xc0] sm:$0xff]
          %v4761 = vld [vmem:[#allocation3 + $0xc8] sm:$0xff]
          %v4762 = vld [vmem:[#allocation3 + $0xd0] sm:$0xff]
          %v4763 = vld [vmem:[#allocation3 + $0xd8] sm:$0xff]
          %v4764 = vld [vmem:[#allocation3 + $0xe0] sm:$0xff]
          %v4765 = vld [vmem:[#allocation3 + $0xe8] sm:$0xff]
          %v4766 = vld [vmem:[#allocation3 + $0xf0] sm:$0xff]
          %v4767 = vld [vmem:[#allocation3 + $0xf8] sm:$0xff]
          %v4768 = vmul.f32 %v4321, %v4736
          %v4769 = vmul.f32 %v4323, %v4737
          %v4770 = vmul.f32 %v4325, %v4738
          %v4771 = vmul.f32 %v4327, %v4739
          %v4772 = vmul.f32 %v4329, %v4740
          %v4773 = vmul.f32 %v4331, %v4741
          %v4774 = vmul.f32 %v4333, %v4742
          %v4775 = vmul.f32 %v4335, %v4743
          %v4776 = vmul.f32 %v4337, %v4744
          %v4777 = vmul.f32 %v4339, %v4745
          %v4778 = vmul.f32 %v4341, %v4746
          %v4779 = vmul.f32 %v4343, %v4747
          %v4780 = vmul.f32 %v4345, %v4748
          %v4781 = vmul.f32 %v4347, %v4749
          %v4782 = vmul.f32 %v4349, %v4750
          %v4783 = vmul.f32 %v4351, %v4751
          %v4784 = vmul.f32 %v4353, %v4752
          %v4785 = vmul.f32 %v4355, %v4753
          %v4786 = vmul.f32 %v4357, %v4754
          %v4787 = vmul.f32 %v4359, %v4755
          %v4788 = vmul.f32 %v4361, %v4756
          %v4789 = vmul.f32 %v4363, %v4757
          %v4790 = vmul.f32 %v4365, %v4758
          %v4791 = vmul.f32 %v4367, %v4759
          %v4792 = vmul.f32 %v4369, %v4760
          %v4793 = vmul.f32 %v4371, %v4761
          %v4794 = vmul.f32 %v4373, %v4762
          %v4795 = vmul.f32 %v4375, %v4763
          %v4796 = vmul.f32 %v4377, %v4764
          %v4797 = vmul.f32 %v4379, %v4765
          %v4798 = vmul.f32 %v4381, %v4766
          %v4799 = vmul.f32 %v4383, %v4767
          %v4800 = vadd.f32 %v4609, %v4611
          %4801 = vadd.xlane.f32.xlu0 %v4800
          %v4802 = vpop.xlane.xlu0 %4801
          %v4803 = vadd.f32 %v4613, %v4615
          %4804 = vadd.xlane.f32.xlu0 %v4803
          %v4805 = vpop.xlane.xlu0 %4804
          %v4806 = vadd.f32 %v4617, %v4619
          %4807 = vadd.xlane.f32.xlu0 %v4806
          %v4808 = vpop.xlane.xlu0 %4807
          %v4809 = vadd.f32 %v4621, %v4623
          %4810 = vadd.xlane.f32.xlu0 %v4809
          %v4811 = vpop.xlane.xlu0 %4810
          %v4812 = vadd.f32 %v4625, %v4627
          %4813 = vadd.xlane.f32.xlu0 %v4812
          %v4814 = vpop.xlane.xlu0 %4813
          %v4815 = vadd.f32 %v4629, %v4631
          %4816 = vadd.xlane.f32.xlu0 %v4815
          %v4817 = vpop.xlane.xlu0 %4816
          %v4818 = vadd.f32 %v4633, %v4635
          %4819 = vadd.xlane.f32.xlu0 %v4818
          %v4820 = vpop.xlane.xlu0 %4819
          %v4821 = vadd.f32 %v4637, %v4639
          %4822 = vadd.xlane.f32.xlu0 %v4821
          %v4823 = vpop.xlane.xlu0 %4822
          %v4824 = vadd.f32 %v4641, %v4643
          %4825 = vadd.xlane.f32.xlu0 %v4824
          %v4826 = vpop.xlane.xlu0 %4825
          %v4827 = vadd.f32 %v4645, %v4647
          %4828 = vadd.xlane.f32.xlu0 %v4827
          %v4829 = vpop.xlane.xlu0 %4828
          %v4830 = vadd.f32 %v4649, %v4651
          %4831 = vadd.xlane.f32.xlu0 %v4830
          %v4832 = vpop.xlane.xlu0 %4831
          %v4833 = vadd.f32 %v4653, %v4655
          %4834 = vadd.xlane.f32.xlu0 %v4833
          %v4835 = vpop.xlane.xlu0 %4834
          %v4836 = vadd.f32 %v4657, %v4659
          %4837 = vadd.xlane.f32.xlu0 %v4836
          %v4838 = vpop.xlane.xlu0 %4837
          %v4839 = vadd.f32 %v4661, %v4663
          %4840 = vadd.xlane.f32.xlu0 %v4839
          %v4841 = vpop.xlane.xlu0 %4840
          %v4842 = vadd.f32 %v4665, %v4667
          %4843 = vadd.xlane.f32.xlu0 %v4842
          %v4844 = vpop.xlane.xlu0 %4843
          %v4845 = vadd.f32 %v4669, %v4671
          %4846 = vadd.xlane.f32.xlu0 %v4845
          %v4847 = vpop.xlane.xlu0 %4846
          %v4848 = vadd.f32 %v4673, %v4675
          %4849 = vadd.xlane.f32.xlu0 %v4848
          %v4850 = vpop.xlane.xlu0 %4849
          %v4851 = vadd.f32 %v4677, %v4679
          %4852 = vadd.xlane.f32.xlu0 %v4851
          %v4853 = vpop.xlane.xlu0 %4852
          %v4854 = vadd.f32 %v4681, %v4683
          %4855 = vadd.xlane.f32.xlu0 %v4854
          %v4856 = vpop.xlane.xlu0 %4855
          %v4857 = vadd.f32 %v4685, %v4687
          %4858 = vadd.xlane.f32.xlu0 %v4857
          %v4859 = vpop.xlane.xlu0 %4858
          %v4860 = vadd.f32 %v4689, %v4691
          %4861 = vadd.xlane.f32.xlu0 %v4860
          %v4862 = vpop.xlane.xlu0 %4861
          %v4863 = vadd.f32 %v4693, %v4695
          %4864 = vadd.xlane.f32.xlu0 %v4863
          %v4865 = vpop.xlane.xlu0 %4864
          %v4866 = vadd.f32 %v4697, %v4699
          %4867 = vadd.xlane.f32.xlu0 %v4866
          %v4868 = vpop.xlane.xlu0 %4867
          %v4869 = vadd.f32 %v4701, %v4703
          %4870 = vadd.xlane.f32.xlu0 %v4869
          %v4871 = vpop.xlane.xlu0 %4870
          %v4872 = vadd.f32 %v4705, %v4707
          %4873 = vadd.xlane.f32.xlu0 %v4872
          %v4874 = vpop.xlane.xlu0 %4873
          %v4875 = vadd.f32 %v4709, %v4711
          %4876 = vadd.xlane.f32.xlu0 %v4875
          %v4877 = vpop.xlane.xlu0 %4876
          %v4878 = vadd.f32 %v4713, %v4715
          %4879 = vadd.xlane.f32.xlu0 %v4878
          %v4880 = vpop.xlane.xlu0 %4879
          %v4881 = vadd.f32 %v4717, %v4719
          %4882 = vadd.xlane.f32.xlu0 %v4881
          %v4883 = vpop.xlane.xlu0 %4882
          %v4884 = vadd.f32 %v4721, %v4723
          %4885 = vadd.xlane.f32.xlu0 %v4884
          %v4886 = vpop.xlane.xlu0 %4885
          %v4887 = vadd.f32 %v4725, %v4727
          %4888 = vadd.xlane.f32.xlu0 %v4887
          %v4889 = vpop.xlane.xlu0 %4888
          %v4890 = vadd.f32 %v4729, %v4731
          %4891 = vadd.xlane.f32.xlu0 %v4890
          %v4892 = vpop.xlane.xlu0 %4891
          %v4893 = vadd.f32 %v4733, %v4735
          %4894 = vadd.xlane.f32.xlu0 %v4893
          %v4895 = vpop.xlane.xlu0 %4894
          %v4896 = vadd.f32 %v4768, %v4802
          %v4897 = vadd.f32 %v4769, %v4805
          %v4898 = vadd.f32 %v4770, %v4808
          %v4899 = vadd.f32 %v4771, %v4811
          %v4900 = vadd.f32 %v4772, %v4814
          %v4901 = vadd.f32 %v4773, %v4817
          %v4902 = vadd.f32 %v4774, %v4820
          %v4903 = vadd.f32 %v4775, %v4823
          %v4904 = vadd.f32 %v4776, %v4826
          %v4905 = vadd.f32 %v4777, %v4829
          %v4906 = vadd.f32 %v4778, %v4832
          %v4907 = vadd.f32 %v4779, %v4835
          %v4908 = vadd.f32 %v4780, %v4838
          %v4909 = vadd.f32 %v4781, %v4841
          %v4910 = vadd.f32 %v4782, %v4844
          %v4911 = vadd.f32 %v4783, %v4847
          %v4912 = vadd.f32 %v4784, %v4850
          %v4913 = vadd.f32 %v4785, %v4853
          %v4914 = vadd.f32 %v4786, %v4856
          %v4915 = vadd.f32 %v4787, %v4859
          %v4916 = vadd.f32 %v4788, %v4862
          %v4917 = vadd.f32 %v4789, %v4865
          %v4918 = vadd.f32 %v4790, %v4868
          %v4919 = vadd.f32 %v4791, %v4871
          %v4920 = vadd.f32 %v4792, %v4874
          %v4921 = vadd.f32 %v4793, %v4877
          %v4922 = vadd.f32 %v4794, %v4880
          %v4923 = vadd.f32 %v4795, %v4883
          %v4924 = vadd.f32 %v4796, %v4886
          %v4925 = vadd.f32 %v4797, %v4889
          %v4926 = vadd.f32 %v4798, %v4892
          %v4927 = vadd.f32 %v4799, %v4895
          %vm4928 = vcmask 7168
          %4929 = vst.msk [vmem:[#allocation3] sm:$0xff] %vm4928, %v4896
          %4930 = vst.msk [vmem:[#allocation3 + $0x8] sm:$0xff] %vm4928, %v4897
          %4931 = vst.msk [vmem:[#allocation3 + $0x10] sm:$0xff] %vm4928, %v4898
          %4932 = vst.msk [vmem:[#allocation3 + $0x18] sm:$0xff] %vm4928, %v4899
          %4933 = vst.msk [vmem:[#allocation3 + $0x20] sm:$0xff] %vm4928, %v4900
          %4934 = vst.msk [vmem:[#allocation3 + $0x28] sm:$0xff] %vm4928, %v4901
          %4935 = vst.msk [vmem:[#allocation3 + $0x30] sm:$0xff] %vm4928, %v4902
          %4936 = vst.msk [vmem:[#allocation3 + $0x38] sm:$0xff] %vm4928, %v4903
          %4937 = vst.msk [vmem:[#allocation3 + $0x40] sm:$0xff] %vm4928, %v4904
          %4938 = vst.msk [vmem:[#allocation3 + $0x48] sm:$0xff] %vm4928, %v4905
          %4939 = vst.msk [vmem:[#allocation3 + $0x50] sm:$0xff] %vm4928, %v4906
          %4940 = vst.msk [vmem:[#allocation3 + $0x58] sm:$0xff] %vm4928, %v4907
          %4941 = vst.msk [vmem:[#allocation3 + $0x60] sm:$0xff] %vm4928, %v4908
          %4942 = vst.msk [vmem:[#allocation3 + $0x68] sm:$0xff] %vm4928, %v4909
          %4943 = vst.msk [vmem:[#allocation3 + $0x70] sm:$0xff] %vm4928, %v4910
          %4944 = vst.msk [vmem:[#allocation3 + $0x78] sm:$0xff] %vm4928, %v4911
          %4945 = vst.msk [vmem:[#allocation3 + $0x80] sm:$0xff] %vm4928, %v4912
          %4946 = vst.msk [vmem:[#allocation3 + $0x88] sm:$0xff] %vm4928, %v4913
          %4947 = vst.msk [vmem:[#allocation3 + $0x90] sm:$0xff] %vm4928, %v4914
          %4948 = vst.msk [vmem:[#allocation3 + $0x98] sm:$0xff] %vm4928, %v4915
          %4949 = vst.msk [vmem:[#allocation3 + $0xa0] sm:$0xff] %vm4928, %v4916
          %4950 = vst.msk [vmem:[#allocation3 + $0xa8] sm:$0xff] %vm4928, %v4917
          %4951 = vst.msk [vmem:[#allocation3 + $0xb0] sm:$0xff] %vm4928, %v4918
          %4952 = vst.msk [vmem:[#allocation3 + $0xb8] sm:$0xff] %vm4928, %v4919
          %4953 = vst.msk [vmem:[#allocation3 + $0xc0] sm:$0xff] %vm4928, %v4920
          %4954 = vst.msk [vmem:[#allocation3 + $0xc8] sm:$0xff] %vm4928, %v4921
          %4955 = vst.msk [vmem:[#allocation3 + $0xd0] sm:$0xff] %vm4928, %v4922
          %4956 = vst.msk [vmem:[#allocation3 + $0xd8] sm:$0xff] %vm4928, %v4923
          %4957 = vst.msk [vmem:[#allocation3 + $0xe0] sm:$0xff] %vm4928, %v4924
          %4958 = vst.msk [vmem:[#allocation3 + $0xe8] sm:$0xff] %vm4928, %v4925
          %4959 = vst.msk [vmem:[#allocation3 + $0xf0] sm:$0xff] %vm4928, %v4926
          %4960 = vst.msk [vmem:[#allocation3 + $0xf8] sm:$0xff] %vm4928, %v4927
          %v4961 = vld [vmem:[%s388] sm:$0xff]
          %v4962 = vld [vmem:[%s388 + $0x8] sm:$0xff]
          %v4963 = vld [vmem:[%s388 + $0x10] sm:$0xff]
          %v4964 = vld [vmem:[%s388 + $0x18] sm:$0xff]
          %v4965 = vld [vmem:[%s388 + $0x20] sm:$0xff]
          %v4966 = vld [vmem:[%s388 + $0x28] sm:$0xff]
          %v4967 = vld [vmem:[%s388 + $0x30] sm:$0xff]
          %v4968 = vld [vmem:[%s388 + $0x38] sm:$0xff]
          %v4969 = vld [vmem:[%s388 + $0x40] sm:$0xff]
          %v4970 = vld [vmem:[%s388 + $0x48] sm:$0xff]
          %v4971 = vld [vmem:[%s388 + $0x50] sm:$0xff]
          %v4972 = vld [vmem:[%s388 + $0x58] sm:$0xff]
          %v4973 = vld [vmem:[%s388 + $0x60] sm:$0xff]
          %v4974 = vld [vmem:[%s388 + $0x68] sm:$0xff]
          %v4975 = vld [vmem:[%s388 + $0x70] sm:$0xff]
          %v4976 = vld [vmem:[%s388 + $0x78] sm:$0xff]
          %v4977 = vld [vmem:[%s388 + $0x80] sm:$0xff]
          %v4978 = vld [vmem:[%s388 + $0x88] sm:$0xff]
          %v4979 = vld [vmem:[%s388 + $0x90] sm:$0xff]
          %v4980 = vld [vmem:[%s388 + $0x98] sm:$0xff]
          %v4981 = vld [vmem:[%s388 + $0xa0] sm:$0xff]
          %v4982 = vld [vmem:[%s388 + $0xa8] sm:$0xff]
          %v4983 = vld [vmem:[%s388 + $0xb0] sm:$0xff]
          %v4984 = vld [vmem:[%s388 + $0xb8] sm:$0xff]
          %v4985 = vld [vmem:[%s388 + $0xc0] sm:$0xff]
          %v4986 = vld [vmem:[%s388 + $0xc8] sm:$0xff]
          %v4987 = vld [vmem:[%s388 + $0xd0] sm:$0xff]
          %v4988 = vld [vmem:[%s388 + $0xd8] sm:$0xff]
          %v4989 = vld [vmem:[%s388 + $0xe0] sm:$0xff]
          %v4990 = vld [vmem:[%s388 + $0xe8] sm:$0xff]
          %v4991 = vld [vmem:[%s388 + $0xf0] sm:$0xff]
          %v4992 = vld [vmem:[%s388 + $0xf8] sm:$0xff]
          %4993 = vmatprep.subr.mxu0 0.0
          %4994 = vmatpush1.msra.mxu0 %v4961
          %4995 = vmatprep.subr.mxu0 0.0
          %4996 = vmatpush1.msra.mxu0 %v4962
          %4997 = vmatprep.subr.mxu0 0.0
          %4998 = vmatpush1.msra.mxu0 %v4963
          %4999 = vmatprep.subr.mxu0 0.0
          %5000 = vmatpush1.msra.mxu0 %v4964
          %5001 = vmatprep.subr.mxu0 0.0
          %5002 = vmatpush1.msra.mxu0 %v4965
          %5003 = vmatprep.subr.mxu0 0.0
          %5004 = vmatpush1.msra.mxu0 %v4966
          %5005 = vmatprep.subr.mxu0 0.0
          %5006 = vmatpush1.msra.mxu0 %v4967
          %5007 = vmatprep.subr.mxu0 0.0
          %5008 = vmatpush1.msra.mxu0 %v4968
          %5009 = vmatprep.subr.mxu0 0.0
          %5010 = vmatpush1.msra.mxu0 %v4969
          %5011 = vmatprep.subr.mxu0 0.0
          %5012 = vmatpush1.msra.mxu0 %v4970
          %5013 = vmatprep.subr.mxu0 0.0
          %5014 = vmatpush1.msra.mxu0 %v4971
          %5015 = vmatprep.subr.mxu0 0.0
          %5016 = vmatpush1.msra.mxu0 %v4972
          %5017 = vmatprep.subr.mxu0 0.0
          %5018 = vmatpush1.msra.mxu0 %v4973
          %5019 = vmatprep.subr.mxu0 0.0
          %5020 = vmatpush1.msra.mxu0 %v4974
          %5021 = vmatprep.subr.mxu0 0.0
          %5022 = vmatpush1.msra.mxu0 %v4975
          %5023 = vmatprep.subr.mxu0 0.0
          %5024 = vmatpush1.msra.mxu0 %v4976
          %5025 = vmatprep.subr.mxu0 0.0
          %5026 = vmatpush1.msra.mxu0 %v4977
          %5027 = vmatprep.subr.mxu0 0.0
          %5028 = vmatpush1.msra.mxu0 %v4978
          %5029 = vmatprep.subr.mxu0 0.0
          %5030 = vmatpush1.msra.mxu0 %v4979
          %5031 = vmatprep.subr.mxu0 0.0
          %5032 = vmatpush1.msra.mxu0 %v4980
          %5033 = vmatprep.subr.mxu0 0.0
          %5034 = vmatpush1.msra.mxu0 %v4981
          %5035 = vmatprep.subr.mxu0 0.0
          %5036 = vmatpush1.msra.mxu0 %v4982
          %5037 = vmatprep.subr.mxu0 0.0
          %5038 = vmatpush1.msra.mxu0 %v4983
          %5039 = vmatprep.subr.mxu0 0.0
          %5040 = vmatpush1.msra.mxu0 %v4984
          %5041 = vmatprep.subr.mxu0 0.0
          %5042 = vmatpush1.msra.mxu0 %v4985
          %5043 = vmatprep.subr.mxu0 0.0
          %5044 = vmatpush1.msra.mxu0 %v4986
          %5045 = vmatprep.subr.mxu0 0.0
          %5046 = vmatpush1.msra.mxu0 %v4987
          %5047 = vmatprep.subr.mxu0 0.0
          %5048 = vmatpush1.msra.mxu0 %v4988
          %5049 = vmatprep.subr.mxu0 0.0
          %5050 = vmatpush1.msra.mxu0 %v4989
          %5051 = vmatprep.subr.mxu0 0.0
          %5052 = vmatpush1.msra.mxu0 %v4990
          %5053 = vmatprep.subr.mxu0 0.0
          %5054 = vmatpush1.msra.mxu0 %v4991
          %5055 = vmatprep.subr.mxu0 0.0
          %5056 = vmatpush1.msra.mxu0 %v4992
          %5057 = vmatprep.mubr.f32.mxu0 %v4611
          %5058 = vmatmul.mubr.f32.gmra.mrb[0].mxu0 %v4609
          %v5059 = vpop.f32.mrb[0].mxu0
          %v5060 = vadd.f32 0.0, %v5059
          %v5061 = vpop.f32.mrb[0].mxu0
          %5062 = vmatprep.mubr.f32.mxu0 %v4615
          %5063 = vmatmul.mubr.f32.gmra.mrb[0].mxu0 %v4613
          %v5064 = vpop.f32.mrb[0].mxu0
          %v5065 = vadd.f32 0.0, %v5064
          %v5066 = vpop.f32.mrb[0].mxu0
          %5067 = vmatprep.mubr.f32.mxu0 %v4619
          %5068 = vmatmul.mubr.f32.gmra.mrb[0].mxu0 %v4617
          %v5069 = vpop.f32.mrb[0].mxu0
          %v5070 = vadd.f32 0.0, %v5069
          %v5071 = vpop.f32.mrb[0].mxu0
          %5072 = vmatprep.mubr.f32.mxu0 %v4623
          %5073 = vmatmul.mubr.f32.gmra.mrb[0].mxu0 %v4621
          %v5074 = vpop.f32.mrb[0].mxu0
          %v5075 = vadd.f32 0.0, %v5074
          %v5076 = vpop.f32.mrb[0].mxu0
          %5077 = vmatprep.mubr.f32.mxu0 %v4627
          %5078 = vmatmul.mubr.f32.gmra.mrb[0].mxu0 %v4625
          %v5079 = vpop.f32.mrb[0].mxu0
          %v5080 = vadd.f32 0.0, %v5079
          %v5081 = vpop.f32.mrb[0].mxu0
          %5082 = vmatprep.mubr.f32.mxu0 %v4631
          %5083 = vmatmul.mubr.f32.gmra.mrb[0].mxu0 %v4629
          %v5084 = vpop.f32.mrb[0].mxu0
          %v5085 = vadd.f32 0.0, %v5084
          %v5086 = vpop.f32.mrb[0].mxu0
          %5087 = vmatprep.mubr.f32.mxu0 %v4635
          %5088 = vmatmul.mubr.f32.gmra.mrb[0].mxu0 %v4633
          %v5089 = vpop.f32.mrb[0].mxu0
          %v5090 = vadd.f32 0.0, %v5089
          %v5091 = vpop.f32.mrb[0].mxu0
          %5092 = vmatprep.mubr.f32.mxu0 %v4639
          %5093 = vmatmul.mubr.f32.gmra.mrb[0].mxu0 %v4637
          %v5094 = vpop.f32.mrb[0].mxu0
          %v5095 = vadd.f32 0.0, %v5094
          %v5096 = vpop.f32.mrb[0].mxu0
          %5097 = vmatprep.mubr.f32.mxu0 %v4643
          %5098 = vmatmul.mubr.f32.gmra.mrb[0].mxu0 %v4641
          %v5099 = vpop.f32.mrb[0].mxu0
          %v5100 = vadd.f32 0.0, %v5099
          %v5101 = vpop.f32.mrb[0].mxu0
          %5102 = vmatprep.mubr.f32.mxu0 %v4647
          %5103 = vmatmul.mubr.f32.gmra.mrb[0].mxu0 %v4645
          %v5104 = vpop.f32.mrb[0].mxu0
          %v5105 = vadd.f32 0.0, %v5104
          %v5106 = vpop.f32.mrb[0].mxu0
          %5107 = vmatprep.mubr.f32.mxu0 %v4651
          %5108 = vmatmul.mubr.f32.gmra.mrb[0].mxu0 %v4649
          %v5109 = vpop.f32.mrb[0].mxu0
          %v5110 = vadd.f32 0.0, %v5109
          %v5111 = vpop.f32.mrb[0].mxu0
          %5112 = vmatprep.mubr.f32.mxu0 %v4655
          %5113 = vmatmul.mubr.f32.gmra.mrb[0].mxu0 %v4653
          %v5114 = vpop.f32.mrb[0].mxu0
          %v5115 = vadd.f32 0.0, %v5114
          %v5116 = vpop.f32.mrb[0].mxu0
          %5117 = vmatprep.mubr.f32.mxu0 %v4659
          %5118 = vmatmul.mubr.f32.gmra.mrb[0].mxu0 %v4657
          %v5119 = vpop.f32.mrb[0].mxu0
          %v5120 = vadd.f32 0.0, %v5119
          %v5121 = vpop.f32.mrb[0].mxu0
          %5122 = vmatprep.mubr.f32.mxu0 %v4663
          %5123 = vmatmul.mubr.f32.gmra.mrb[0].mxu0 %v4661
          %v5124 = vpop.f32.mrb[0].mxu0
          %v5125 = vadd.f32 0.0, %v5124
          %v5126 = vpop.f32.mrb[0].mxu0
          %5127 = vmatprep.mubr.f32.mxu0 %v4667
          %5128 = vmatmul.mubr.f32.gmra.mrb[0].mxu0 %v4665
          %v5129 = vpop.f32.mrb[0].mxu0
          %v5130 = vadd.f32 0.0, %v5129
          %v5131 = vpop.f32.mrb[0].mxu0
          %5132 = vmatprep.mubr.f32.mxu0 %v4671
          %5133 = vmatmul.mubr.f32.gmra.mrb[0].mxu0 %v4669
          %v5134 = vpop.f32.mrb[0].mxu0
          %v5135 = vadd.f32 0.0, %v5134
          %v5136 = vpop.f32.mrb[0].mxu0
          %5137 = vmatprep.mubr.f32.mxu0 %v4675
          %5138 = vmatmul.mubr.f32.gmra.mrb[0].mxu0 %v4673
          %v5139 = vpop.f32.mrb[0].mxu0
          %v5140 = vadd.f32 0.0, %v5139
          %v5141 = vpop.f32.mrb[0].mxu0
          %5142 = vmatprep.mubr.f32.mxu0 %v4679
          %5143 = vmatmul.mubr.f32.gmra.mrb[0].mxu0 %v4677
          %v5144 = vpop.f32.mrb[0].mxu0
          %v5145 = vadd.f32 0.0, %v5144
          %v5146 = vpop.f32.mrb[0].mxu0
          %5147 = vmatprep.mubr.f32.mxu0 %v4683
          %5148 = vmatmul.mubr.f32.gmra.mrb[0].mxu0 %v4681
          %v5149 = vpop.f32.mrb[0].mxu0
          %v5150 = vadd.f32 0.0, %v5149
          %v5151 = vpop.f32.mrb[0].mxu0
          %5152 = vmatprep.mubr.f32.mxu0 %v4687
          %5153 = vmatmul.mubr.f32.gmra.mrb[0].mxu0 %v4685
          %v5154 = vpop.f32.mrb[0].mxu0
          %v5155 = vadd.f32 0.0, %v5154
          %v5156 = vpop.f32.mrb[0].mxu0
          %5157 = vmatprep.mubr.f32.mxu0 %v4691
          %5158 = vmatmul.mubr.f32.gmra.mrb[0].mxu0 %v4689
          %v5159 = vpop.f32.mrb[0].mxu0
          %v5160 = vadd.f32 0.0, %v5159
          %v5161 = vpop.f32.mrb[0].mxu0
          %5162 = vmatprep.mubr.f32.mxu0 %v4695
          %5163 = vmatmul.mubr.f32.gmra.mrb[0].mxu0 %v4693
          %v5164 = vpop.f32.mrb[0].mxu0
          %v5165 = vadd.f32 0.0, %v5164
          %v5166 = vpop.f32.mrb[0].mxu0
          %5167 = vmatprep.mubr.f32.mxu0 %v4699
          %5168 = vmatmul.mubr.f32.gmra.mrb[0].mxu0 %v4697
          %v5169 = vpop.f32.mrb[0].mxu0
          %v5170 = vadd.f32 0.0, %v5169
          %v5171 = vpop.f32.mrb[0].mxu0
          %5172 = vmatprep.mubr.f32.mxu0 %v4703
          %5173 = vmatmul.mubr.f32.gmra.mrb[0].mxu0 %v4701
          %v5174 = vpop.f32.mrb[0].mxu0
          %v5175 = vadd.f32 0.0, %v5174
          %v5176 = vpop.f32.mrb[0].mxu0
          %5177 = vmatprep.mubr.f32.mxu0 %v4707
          %5178 = vmatmul.mubr.f32.gmra.mrb[0].mxu0 %v4705
          %v5179 = vpop.f32.mrb[0].mxu0
          %v5180 = vadd.f32 0.0, %v5179
          %v5181 = vpop.f32.mrb[0].mxu0
          %5182 = vmatprep.mubr.f32.mxu0 %v4711
          %5183 = vmatmul.mubr.f32.gmra.mrb[0].mxu0 %v4709
          %v5184 = vpop.f32.mrb[0].mxu0
          %v5185 = vadd.f32 0.0, %v5184
          %v5186 = vpop.f32.mrb[0].mxu0
          %5187 = vmatprep.mubr.f32.mxu0 %v4715
          %5188 = vmatmul.mubr.f32.gmra.mrb[0].mxu0 %v4713
          %v5189 = vpop.f32.mrb[0].mxu0
          %v5190 = vadd.f32 0.0, %v5189
          %v5191 = vpop.f32.mrb[0].mxu0
          %5192 = vmatprep.mubr.f32.mxu0 %v4719
          %5193 = vmatmul.mubr.f32.gmra.mrb[0].mxu0 %v4717
          %v5194 = vpop.f32.mrb[0].mxu0
          %v5195 = vadd.f32 0.0, %v5194
          %v5196 = vpop.f32.mrb[0].mxu0
          %5197 = vmatprep.mubr.f32.mxu0 %v4723
          %5198 = vmatmul.mubr.f32.gmra.mrb[0].mxu0 %v4721
          %v5199 = vpop.f32.mrb[0].mxu0
          %v5200 = vadd.f32 0.0, %v5199
          %v5201 = vpop.f32.mrb[0].mxu0
          %5202 = vmatprep.mubr.f32.mxu0 %v4727
          %5203 = vmatmul.mubr.f32.gmra.mrb[0].mxu0 %v4725
          %v5204 = vpop.f32.mrb[0].mxu0
          %v5205 = vadd.f32 0.0, %v5204
          %v5206 = vpop.f32.mrb[0].mxu0
          %5207 = vmatprep.mubr.f32.mxu0 %v4731
          %5208 = vmatmul.mubr.f32.gmra.mrb[0].mxu0 %v4729
          %v5209 = vpop.f32.mrb[0].mxu0
          %v5210 = vadd.f32 0.0, %v5209
          %v5211 = vpop.f32.mrb[0].mxu0
          %5212 = vmatprep.mubr.f32.mxu0 %v4735
          %5213 = vmatmul.mubr.f32.gmra.mrb[0].mxu0 %v4733
          %v5214 = vpop.f32.mrb[0].mxu0
          %v5215 = vadd.f32 0.0, %v5214
          %v5216 = vpop.f32.mrb[0].mxu0
          %5217 = vdwg.mxu0
          %v5218 = vld [vmem:[#allocation4] sm:$0xff]
          %v5219 = vld [vmem:[#allocation4 + $0x8] sm:$0xff]
          %v5220 = vld [vmem:[#allocation4 + $0x10] sm:$0xff]
          %v5221 = vld [vmem:[#allocation4 + $0x18] sm:$0xff]
          %v5222 = vld [vmem:[#allocation4 + $0x20] sm:$0xff]
          %v5223 = vld [vmem:[#allocation4 + $0x28] sm:$0xff]
          %v5224 = vld [vmem:[#allocation4 + $0x30] sm:$0xff]
          %v5225 = vld [vmem:[#allocation4 + $0x38] sm:$0xff]
          %v5226 = vld [vmem:[#allocation4 + $0x40] sm:$0xff]
          %v5227 = vld [vmem:[#allocation4 + $0x48] sm:$0xff]
          %v5228 = vld [vmem:[#allocation4 + $0x50] sm:$0xff]
          %v5229 = vld [vmem:[#allocation4 + $0x58] sm:$0xff]
          %v5230 = vld [vmem:[#allocation4 + $0x60] sm:$0xff]
          %v5231 = vld [vmem:[#allocation4 + $0x68] sm:$0xff]
          %v5232 = vld [vmem:[#allocation4 + $0x70] sm:$0xff]
          %v5233 = vld [vmem:[#allocation4 + $0x78] sm:$0xff]
          %v5234 = vld [vmem:[#allocation4 + $0x80] sm:$0xff]
          %v5235 = vld [vmem:[#allocation4 + $0x88] sm:$0xff]
          %v5236 = vld [vmem:[#allocation4 + $0x90] sm:$0xff]
          %v5237 = vld [vmem:[#allocation4 + $0x98] sm:$0xff]
          %v5238 = vld [vmem:[#allocation4 + $0xa0] sm:$0xff]
          %v5239 = vld [vmem:[#allocation4 + $0xa8] sm:$0xff]
          %v5240 = vld [vmem:[#allocation4 + $0xb0] sm:$0xff]
          %v5241 = vld [vmem:[#allocation4 + $0xb8] sm:$0xff]
          %v5242 = vld [vmem:[#allocation4 + $0xc0] sm:$0xff]
          %v5243 = vld [vmem:[#allocation4 + $0xc8] sm:$0xff]
          %v5244 = vld [vmem:[#allocation4 + $0xd0] sm:$0xff]
          %v5245 = vld [vmem:[#allocation4 + $0xd8] sm:$0xff]
          %v5246 = vld [vmem:[#allocation4 + $0xe0] sm:$0xff]
          %v5247 = vld [vmem:[#allocation4 + $0xe8] sm:$0xff]
          %v5248 = vld [vmem:[#allocation4 + $0xf0] sm:$0xff]
          %v5249 = vld [vmem:[#allocation4 + $0xf8] sm:$0xff]
          %5251 = vset.pattern.permute.xlu0 0
          %5252 = vperm.xlu0 %5251, %v4321
          %v5253 = vpop.permute.xlu0 %5252
          %5256 = vset.pattern.permute.xlu0 0
          %5257 = vperm.xlu0 %5256, %v4323
          %v5258 = vpop.permute.xlu0 %5257
          %5261 = vset.pattern.permute.xlu0 0
          %5262 = vperm.xlu0 %5261, %v4325
          %v5263 = vpop.permute.xlu0 %5262
          %5266 = vset.pattern.permute.xlu0 0
          %5267 = vperm.xlu0 %5266, %v4327
          %v5268 = vpop.permute.xlu0 %5267
          %5271 = vset.pattern.permute.xlu0 0
          %5272 = vperm.xlu0 %5271, %v4329
          %v5273 = vpop.permute.xlu0 %5272
          %5276 = vset.pattern.permute.xlu0 0
          %5277 = vperm.xlu0 %5276, %v4331
          %v5278 = vpop.permute.xlu0 %5277
          %5281 = vset.pattern.permute.xlu0 0
          %5282 = vperm.xlu0 %5281, %v4333
          %v5283 = vpop.permute.xlu0 %5282
          %5286 = vset.pattern.permute.xlu0 0
          %5287 = vperm.xlu0 %5286, %v4335
          %v5288 = vpop.permute.xlu0 %5287
          %5291 = vset.pattern.permute.xlu0 0
          %5292 = vperm.xlu0 %5291, %v4337
          %v5293 = vpop.permute.xlu0 %5292
          %5296 = vset.pattern.permute.xlu0 0
          %5297 = vperm.xlu0 %5296, %v4339
          %v5298 = vpop.permute.xlu0 %5297
          %5301 = vset.pattern.permute.xlu0 0
          %5302 = vperm.xlu0 %5301, %v4341
          %v5303 = vpop.permute.xlu0 %5302
          %5306 = vset.pattern.permute.xlu0 0
          %5307 = vperm.xlu0 %5306, %v4343
          %v5308 = vpop.permute.xlu0 %5307
          %5311 = vset.pattern.permute.xlu0 0
          %5312 = vperm.xlu0 %5311, %v4345
          %v5313 = vpop.permute.xlu0 %5312
          %5316 = vset.pattern.permute.xlu0 0
          %5317 = vperm.xlu0 %5316, %v4347
          %v5318 = vpop.permute.xlu0 %5317
          %5321 = vset.pattern.permute.xlu0 0
          %5322 = vperm.xlu0 %5321, %v4349
          %v5323 = vpop.permute.xlu0 %5322
          %5326 = vset.pattern.permute.xlu0 0
          %5327 = vperm.xlu0 %5326, %v4351
          %v5328 = vpop.permute.xlu0 %5327
          %5331 = vset.pattern.permute.xlu0 0
          %5332 = vperm.xlu0 %5331, %v4353
          %v5333 = vpop.permute.xlu0 %5332
          %5336 = vset.pattern.permute.xlu0 0
          %5337 = vperm.xlu0 %5336, %v4355
          %v5338 = vpop.permute.xlu0 %5337
          %5341 = vset.pattern.permute.xlu0 0
          %5342 = vperm.xlu0 %5341, %v4357
          %v5343 = vpop.permute.xlu0 %5342
          %5346 = vset.pattern.permute.xlu0 0
          %5347 = vperm.xlu0 %5346, %v4359
          %v5348 = vpop.permute.xlu0 %5347
          %5351 = vset.pattern.permute.xlu0 0
          %5352 = vperm.xlu0 %5351, %v4361
          %v5353 = vpop.permute.xlu0 %5352
          %5356 = vset.pattern.permute.xlu0 0
          %5357 = vperm.xlu0 %5356, %v4363
          %v5358 = vpop.permute.xlu0 %5357
          %5361 = vset.pattern.permute.xlu0 0
          %5362 = vperm.xlu0 %5361, %v4365
          %v5363 = vpop.permute.xlu0 %5362
          %5366 = vset.pattern.permute.xlu0 0
          %5367 = vperm.xlu0 %5366, %v4367
          %v5368 = vpop.permute.xlu0 %5367
          %5371 = vset.pattern.permute.xlu0 0
          %5372 = vperm.xlu0 %5371, %v4369
          %v5373 = vpop.permute.xlu0 %5372
          %5376 = vset.pattern.permute.xlu0 0
          %5377 = vperm.xlu0 %5376, %v4371
          %v5378 = vpop.permute.xlu0 %5377
          %5381 = vset.pattern.permute.xlu0 0
          %5382 = vperm.xlu0 %5381, %v4373
          %v5383 = vpop.permute.xlu0 %5382
          %5386 = vset.pattern.permute.xlu0 0
          %5387 = vperm.xlu0 %5386, %v4375
          %v5388 = vpop.permute.xlu0 %5387
          %5391 = vset.pattern.permute.xlu0 0
          %5392 = vperm.xlu0 %5391, %v4377
          %v5393 = vpop.permute.xlu0 %5392
          %5396 = vset.pattern.permute.xlu0 0
          %5397 = vperm.xlu0 %5396, %v4379
          %v5398 = vpop.permute.xlu0 %5397
          %5401 = vset.pattern.permute.xlu0 0
          %5402 = vperm.xlu0 %5401, %v4381
          %v5403 = vpop.permute.xlu0 %5402
          %5406 = vset.pattern.permute.xlu0 0
          %5407 = vperm.xlu0 %5406, %v4383
          %v5408 = vpop.permute.xlu0 %5407
          %v5410 = vmul.f32 %v5253, %v5218
          %v5411 = vmul.f32 %v5258, %v5219
          %v5412 = vmul.f32 %v5263, %v5220
          %v5413 = vmul.f32 %v5268, %v5221
          %v5414 = vmul.f32 %v5273, %v5222
          %v5415 = vmul.f32 %v5278, %v5223
          %v5416 = vmul.f32 %v5283, %v5224
          %v5417 = vmul.f32 %v5288, %v5225
          %v5418 = vmul.f32 %v5293, %v5226
          %v5419 = vmul.f32 %v5298, %v5227
          %v5420 = vmul.f32 %v5303, %v5228
          %v5421 = vmul.f32 %v5308, %v5229
          %v5422 = vmul.f32 %v5313, %v5230
          %v5423 = vmul.f32 %v5318, %v5231
          %v5424 = vmul.f32 %v5323, %v5232
          %v5425 = vmul.f32 %v5328, %v5233
          %v5426 = vmul.f32 %v5333, %v5234
          %v5427 = vmul.f32 %v5338, %v5235
          %v5428 = vmul.f32 %v5343, %v5236
          %v5429 = vmul.f32 %v5348, %v5237
          %v5430 = vmul.f32 %v5353, %v5238
          %v5431 = vmul.f32 %v5358, %v5239
          %v5432 = vmul.f32 %v5363, %v5240
          %v5433 = vmul.f32 %v5368, %v5241
          %v5434 = vmul.f32 %v5373, %v5242
          %v5435 = vmul.f32 %v5378, %v5243
          %v5436 = vmul.f32 %v5383, %v5244
          %v5437 = vmul.f32 %v5388, %v5245
          %v5438 = vmul.f32 %v5393, %v5246
          %v5439 = vmul.f32 %v5398, %v5247
          %v5440 = vmul.f32 %v5403, %v5248
          %v5441 = vmul.f32 %v5408, %v5249
          %v5442 = vadd.f32 %v5410, %v5060
          %v5443 = vadd.f32 %v5411, %v5065
          %v5444 = vadd.f32 %v5412, %v5070
          %v5445 = vadd.f32 %v5413, %v5075
          %v5446 = vadd.f32 %v5414, %v5080
          %v5447 = vadd.f32 %v5415, %v5085
          %v5448 = vadd.f32 %v5416, %v5090
          %v5449 = vadd.f32 %v5417, %v5095
          %v5450 = vadd.f32 %v5418, %v5100
          %v5451 = vadd.f32 %v5419, %v5105
          %v5452 = vadd.f32 %v5420, %v5110
          %v5453 = vadd.f32 %v5421, %v5115
          %v5454 = vadd.f32 %v5422, %v5120
          %v5455 = vadd.f32 %v5423, %v5125
          %v5456 = vadd.f32 %v5424, %v5130
          %v5457 = vadd.f32 %v5425, %v5135
          %v5458 = vadd.f32 %v5426, %v5140
          %v5459 = vadd.f32 %v5427, %v5145
          %v5460 = vadd.f32 %v5428, %v5150
          %v5461 = vadd.f32 %v5429, %v5155
          %v5462 = vadd.f32 %v5430, %v5160
          %v5463 = vadd.f32 %v5431, %v5165
          %v5464 = vadd.f32 %v5432, %v5170
          %v5465 = vadd.f32 %v5433, %v5175
          %v5466 = vadd.f32 %v5434, %v5180
          %v5467 = vadd.f32 %v5435, %v5185
          %v5468 = vadd.f32 %v5436, %v5190
          %v5469 = vadd.f32 %v5437, %v5195
          %v5470 = vadd.f32 %v5438, %v5200
          %v5471 = vadd.f32 %v5439, %v5205
          %v5472 = vadd.f32 %v5440, %v5210
          %v5473 = vadd.f32 %v5441, %v5215
          %5474 = vst [vmem:[#allocation4] sm:$0xff] %v5442
          %5475 = vst [vmem:[#allocation4 + $0x8] sm:$0xff] %v5443
          %5476 = vst [vmem:[#allocation4 + $0x10] sm:$0xff] %v5444
          %5477 = vst [vmem:[#allocation4 + $0x18] sm:$0xff] %v5445
          %5478 = vst [vmem:[#allocation4 + $0x20] sm:$0xff] %v5446
          %5479 = vst [vmem:[#allocation4 + $0x28] sm:$0xff] %v5447
          %5480 = vst [vmem:[#allocation4 + $0x30] sm:$0xff] %v5448
          %5481 = vst [vmem:[#allocation4 + $0x38] sm:$0xff] %v5449
          %5482 = vst [vmem:[#allocation4 + $0x40] sm:$0xff] %v5450
          %5483 = vst [vmem:[#allocation4 + $0x48] sm:$0xff] %v5451
          %5484 = vst [vmem:[#allocation4 + $0x50] sm:$0xff] %v5452
          %5485 = vst [vmem:[#allocation4 + $0x58] sm:$0xff] %v5453
          %5486 = vst [vmem:[#allocation4 + $0x60] sm:$0xff] %v5454
          %5487 = vst [vmem:[#allocation4 + $0x68] sm:$0xff] %v5455
          %5488 = vst [vmem:[#allocation4 + $0x70] sm:$0xff] %v5456
          %5489 = vst [vmem:[#allocation4 + $0x78] sm:$0xff] %v5457
          %5490 = vst [vmem:[#allocation4 + $0x80] sm:$0xff] %v5458
          %5491 = vst [vmem:[#allocation4 + $0x88] sm:$0xff] %v5459
          %5492 = vst [vmem:[#allocation4 + $0x90] sm:$0xff] %v5460
          %5493 = vst [vmem:[#allocation4 + $0x98] sm:$0xff] %v5461
          %5494 = vst [vmem:[#allocation4 + $0xa0] sm:$0xff] %v5462
          %5495 = vst [vmem:[#allocation4 + $0xa8] sm:$0xff] %v5463
          %5496 = vst [vmem:[#allocation4 + $0xb0] sm:$0xff] %v5464
          %5497 = vst [vmem:[#allocation4 + $0xb8] sm:$0xff] %v5465
          %5498 = vst [vmem:[#allocation4 + $0xc0] sm:$0xff] %v5466
          %5499 = vst [vmem:[#allocation4 + $0xc8] sm:$0xff] %v5467
          %5500 = vst [vmem:[#allocation4 + $0xd0] sm:$0xff] %v5468
          %5501 = vst [vmem:[#allocation4 + $0xd8] sm:$0xff] %v5469
          %5502 = vst [vmem:[#allocation4 + $0xe0] sm:$0xff] %v5470
          %5503 = vst [vmem:[#allocation4 + $0xe8] sm:$0xff] %v5471
          %5504 = vst [vmem:[#allocation4 + $0xf0] sm:$0xff] %v5472
          %5505 = vst [vmem:[#allocation4 + $0xf8] sm:$0xff] %v5473
          %5506 = vst.msk [vmem:[#allocation2] sm:$0xff] %vm4928, %v4256
          %5507 = vst.msk [vmem:[#allocation2 + $0x8] sm:$0xff] %vm4928, %v4257
          %5508 = vst.msk [vmem:[#allocation2 + $0x10] sm:$0xff] %vm4928, %v4258
          %5509 = vst.msk [vmem:[#allocation2 + $0x18] sm:$0xff] %vm4928, %v4259
          %5510 = vst.msk [vmem:[#allocation2 + $0x20] sm:$0xff] %vm4928, %v4260
          %5511 = vst.msk [vmem:[#allocation2 + $0x28] sm:$0xff] %vm4928, %v4261
          %5512 = vst.msk [vmem:[#allocation2 + $0x30] sm:$0xff] %vm4928, %v4262
          %5513 = vst.msk [vmem:[#allocation2 + $0x38] sm:$0xff] %vm4928, %v4263
          %5514 = vst.msk [vmem:[#allocation2 + $0x40] sm:$0xff] %vm4928, %v4264
          %5515 = vst.msk [vmem:[#allocation2 + $0x48] sm:$0xff] %vm4928, %v4265
          %5516 = vst.msk [vmem:[#allocation2 + $0x50] sm:$0xff] %vm4928, %v4266
          %5517 = vst.msk [vmem:[#allocation2 + $0x58] sm:$0xff] %vm4928, %v4267
          %5518 = vst.msk [vmem:[#allocation2 + $0x60] sm:$0xff] %vm4928, %v4268
          %5519 = vst.msk [vmem:[#allocation2 + $0x68] sm:$0xff] %vm4928, %v4269
          %5520 = vst.msk [vmem:[#allocation2 + $0x70] sm:$0xff] %vm4928, %v4270
          %5521 = vst.msk [vmem:[#allocation2 + $0x78] sm:$0xff] %vm4928, %v4271
          %5522 = vst.msk [vmem:[#allocation2 + $0x80] sm:$0xff] %vm4928, %v4272
          %5523 = vst.msk [vmem:[#allocation2 + $0x88] sm:$0xff] %vm4928, %v4273
          %5524 = vst.msk [vmem:[#allocation2 + $0x90] sm:$0xff] %vm4928, %v4274
          %5525 = vst.msk [vmem:[#allocation2 + $0x98] sm:$0xff] %vm4928, %v4275
          %5526 = vst.msk [vmem:[#allocation2 + $0xa0] sm:$0xff] %vm4928, %v4276
          %5527 = vst.msk [vmem:[#allocation2 + $0xa8] sm:$0xff] %vm4928, %v4277
          %5528 = vst.msk [vmem:[#allocation2 + $0xb0] sm:$0xff] %vm4928, %v4278
          %5529 = vst.msk [vmem:[#allocation2 + $0xb8] sm:$0xff] %vm4928, %v4279
          %5530 = vst.msk [vmem:[#allocation2 + $0xc0] sm:$0xff] %vm4928, %v4280
          %5531 = vst.msk [vmem:[#allocation2 + $0xc8] sm:$0xff] %vm4928, %v4281
          %5532 = vst.msk [vmem:[#allocation2 + $0xd0] sm:$0xff] %vm4928, %v4282
          %5533 = vst.msk [vmem:[#allocation2 + $0xd8] sm:$0xff] %vm4928, %v4283
          %5534 = vst.msk [vmem:[#allocation2 + $0xe0] sm:$0xff] %vm4928, %v4284
          %5535 = vst.msk [vmem:[#allocation2 + $0xe8] sm:$0xff] %vm4928, %v4285
          %5536 = vst.msk [vmem:[#allocation2 + $0xf0] sm:$0xff] %vm4928, %v4286
          %5537 = vst.msk [vmem:[#allocation2 + $0xf8] sm:$0xff] %vm4928, %v4287
        $region64: #{tpu_custom_call.1} parent=39 // pred_fallthru
          _
        // Predicated region
        $region65: #{tpu_custom_call.1} parent=39 // pred_check
          %p5538 = pneg %p465
        $region66: #{tpu_custom_call.1} parent=39 // pred_check_branch
          %5540 = sbr.rel (%p5538) target = $region68
        $region67: #{tpu_custom_call.1} parent=39 // pred_region
          %v5541 = vld [vmem:[#allocation3] sm:$0xff]
          %v5542 = vld [vmem:[#allocation3 + $0x8] sm:$0xff]
          %v5543 = vld [vmem:[#allocation3 + $0x10] sm:$0xff]
          %v5544 = vld [vmem:[#allocation3 + $0x18] sm:$0xff]
          %v5545 = vld [vmem:[#allocation3 + $0x20] sm:$0xff]
          %v5546 = vld [vmem:[#allocation3 + $0x28] sm:$0xff]
          %v5547 = vld [vmem:[#allocation3 + $0x30] sm:$0xff]
          %v5548 = vld [vmem:[#allocation3 + $0x38] sm:$0xff]
          %v5549 = vld [vmem:[#allocation3 + $0x40] sm:$0xff]
          %v5550 = vld [vmem:[#allocation3 + $0x48] sm:$0xff]
          %v5551 = vld [vmem:[#allocation3 + $0x50] sm:$0xff]
          %v5552 = vld [vmem:[#allocation3 + $0x58] sm:$0xff]
          %v5553 = vld [vmem:[#allocation3 + $0x60] sm:$0xff]
          %v5554 = vld [vmem:[#allocation3 + $0x68] sm:$0xff]
          %v5555 = vld [vmem:[#allocation3 + $0x70] sm:$0xff]
          %v5556 = vld [vmem:[#allocation3 + $0x78] sm:$0xff]
          %v5557 = vld [vmem:[#allocation3 + $0x80] sm:$0xff]
          %v5558 = vld [vmem:[#allocation3 + $0x88] sm:$0xff]
          %v5559 = vld [vmem:[#allocation3 + $0x90] sm:$0xff]
          %v5560 = vld [vmem:[#allocation3 + $0x98] sm:$0xff]
          %v5561 = vld [vmem:[#allocation3 + $0xa0] sm:$0xff]
          %v5562 = vld [vmem:[#allocation3 + $0xa8] sm:$0xff]
          %v5563 = vld [vmem:[#allocation3 + $0xb0] sm:$0xff]
          %v5564 = vld [vmem:[#allocation3 + $0xb8] sm:$0xff]
          %v5565 = vld [vmem:[#allocation3 + $0xc0] sm:$0xff]
          %v5566 = vld [vmem:[#allocation3 + $0xc8] sm:$0xff]
          %v5567 = vld [vmem:[#allocation3 + $0xd0] sm:$0xff]
          %v5568 = vld [vmem:[#allocation3 + $0xd8] sm:$0xff]
          %v5569 = vld [vmem:[#allocation3 + $0xe0] sm:$0xff]
          %v5570 = vld [vmem:[#allocation3 + $0xe8] sm:$0xff]
          %v5571 = vld [vmem:[#allocation3 + $0xf0] sm:$0xff]
          %v5572 = vld [vmem:[#allocation3 + $0xf8] sm:$0xff]
          %v5573 = vrcp.pop %v5541
          %v5574 = vrcp.pop %v5542
          %v5575 = vrcp.pop %v5543
          %v5576 = vrcp.pop %v5544
          %v5577 = vrcp.pop %v5545
          %v5578 = vrcp.pop %v5546
          %v5579 = vrcp.pop %v5547
          %v5580 = vrcp.pop %v5548
          %v5581 = vrcp.pop %v5549
          %v5582 = vrcp.pop %v5550
          %v5583 = vrcp.pop %v5551
          %v5584 = vrcp.pop %v5552
          %v5585 = vrcp.pop %v5553
          %v5586 = vrcp.pop %v5554
          %v5587 = vrcp.pop %v5555
          %v5588 = vrcp.pop %v5556
          %v5589 = vrcp.pop %v5557
          %v5590 = vrcp.pop %v5558
          %v5591 = vrcp.pop %v5559
          %v5592 = vrcp.pop %v5560
          %v5593 = vrcp.pop %v5561
          %v5594 = vrcp.pop %v5562
          %v5595 = vrcp.pop %v5563
          %v5596 = vrcp.pop %v5564
          %v5597 = vrcp.pop %v5565
          %v5598 = vrcp.pop %v5566
          %v5599 = vrcp.pop %v5567
          %v5600 = vrcp.pop %v5568
          %v5601 = vrcp.pop %v5569
          %v5602 = vrcp.pop %v5570
          %v5603 = vrcp.pop %v5571
          %v5604 = vrcp.pop %v5572
          %v5605 = vld [vmem:[#allocation4] sm:$0xff]
          %v5606 = vld [vmem:[#allocation4 + $0x8] sm:$0xff]
          %v5607 = vld [vmem:[#allocation4 + $0x10] sm:$0xff]
          %v5608 = vld [vmem:[#allocation4 + $0x18] sm:$0xff]
          %v5609 = vld [vmem:[#allocation4 + $0x20] sm:$0xff]
          %v5610 = vld [vmem:[#allocation4 + $0x28] sm:$0xff]
          %v5611 = vld [vmem:[#allocation4 + $0x30] sm:$0xff]
          %v5612 = vld [vmem:[#allocation4 + $0x38] sm:$0xff]
          %v5613 = vld [vmem:[#allocation4 + $0x40] sm:$0xff]
          %v5614 = vld [vmem:[#allocation4 + $0x48] sm:$0xff]
          %v5615 = vld [vmem:[#allocation4 + $0x50] sm:$0xff]
          %v5616 = vld [vmem:[#allocation4 + $0x58] sm:$0xff]
          %v5617 = vld [vmem:[#allocation4 + $0x60] sm:$0xff]
          %v5618 = vld [vmem:[#allocation4 + $0x68] sm:$0xff]
          %v5619 = vld [vmem:[#allocation4 + $0x70] sm:$0xff]
          %v5620 = vld [vmem:[#allocation4 + $0x78] sm:$0xff]
          %v5621 = vld [vmem:[#allocation4 + $0x80] sm:$0xff]
          %v5622 = vld [vmem:[#allocation4 + $0x88] sm:$0xff]
          %v5623 = vld [vmem:[#allocation4 + $0x90] sm:$0xff]
          %v5624 = vld [vmem:[#allocation4 + $0x98] sm:$0xff]
          %v5625 = vld [vmem:[#allocation4 + $0xa0] sm:$0xff]
          %v5626 = vld [vmem:[#allocation4 + $0xa8] sm:$0xff]
          %v5627 = vld [vmem:[#allocation4 + $0xb0] sm:$0xff]
          %v5628 = vld [vmem:[#allocation4 + $0xb8] sm:$0xff]
          %v5629 = vld [vmem:[#allocation4 + $0xc0] sm:$0xff]
          %v5630 = vld [vmem:[#allocation4 + $0xc8] sm:$0xff]
          %v5631 = vld [vmem:[#allocation4 + $0xd0] sm:$0xff]
          %v5632 = vld [vmem:[#allocation4 + $0xd8] sm:$0xff]
          %v5633 = vld [vmem:[#allocation4 + $0xe0] sm:$0xff]
          %v5634 = vld [vmem:[#allocation4 + $0xe8] sm:$0xff]
          %v5635 = vld [vmem:[#allocation4 + $0xf0] sm:$0xff]
          %v5636 = vld [vmem:[#allocation4 + $0xf8] sm:$0xff]
          %5638 = vset.pattern.permute.xlu0 0
          %5639 = vperm.xlu0 %5638, %v5573
          %v5640 = vpop.permute.xlu0 %5639
          %5643 = vset.pattern.permute.xlu0 0
          %5644 = vperm.xlu0 %5643, %v5574
          %v5645 = vpop.permute.xlu0 %5644
          %5648 = vset.pattern.permute.xlu0 0
          %5649 = vperm.xlu0 %5648, %v5575
          %v5650 = vpop.permute.xlu0 %5649
          %5653 = vset.pattern.permute.xlu0 0
          %5654 = vperm.xlu0 %5653, %v5576
          %v5655 = vpop.permute.xlu0 %5654
          %5658 = vset.pattern.permute.xlu0 0
          %5659 = vperm.xlu0 %5658, %v5577
          %v5660 = vpop.permute.xlu0 %5659
          %5663 = vset.pattern.permute.xlu0 0
          %5664 = vperm.xlu0 %5663, %v5578
          %v5665 = vpop.permute.xlu0 %5664
          %5668 = vset.pattern.permute.xlu0 0
          %5669 = vperm.xlu0 %5668, %v5579
          %v5670 = vpop.permute.xlu0 %5669
          %5673 = vset.pattern.permute.xlu0 0
          %5674 = vperm.xlu0 %5673, %v5580
          %v5675 = vpop.permute.xlu0 %5674
          %5678 = vset.pattern.permute.xlu0 0
          %5679 = vperm.xlu0 %5678, %v5581
          %v5680 = vpop.permute.xlu0 %5679
          %5683 = vset.pattern.permute.xlu0 0
          %5684 = vperm.xlu0 %5683, %v5582
          %v5685 = vpop.permute.xlu0 %5684
          %5688 = vset.pattern.permute.xlu0 0
          %5689 = vperm.xlu0 %5688, %v5583
          %v5690 = vpop.permute.xlu0 %5689
          %5693 = vset.pattern.permute.xlu0 0
          %5694 = vperm.xlu0 %5693, %v5584
          %v5695 = vpop.permute.xlu0 %5694
          %5698 = vset.pattern.permute.xlu0 0
          %5699 = vperm.xlu0 %5698, %v5585
          %v5700 = vpop.permute.xlu0 %5699
          %5703 = vset.pattern.permute.xlu0 0
          %5704 = vperm.xlu0 %5703, %v5586
          %v5705 = vpop.permute.xlu0 %5704
          %5708 = vset.pattern.permute.xlu0 0
          %5709 = vperm.xlu0 %5708, %v5587
          %v5710 = vpop.permute.xlu0 %5709
          %5713 = vset.pattern.permute.xlu0 0
          %5714 = vperm.xlu0 %5713, %v5588
          %v5715 = vpop.permute.xlu0 %5714
          %5718 = vset.pattern.permute.xlu0 0
          %5719 = vperm.xlu0 %5718, %v5589
          %v5720 = vpop.permute.xlu0 %5719
          %5723 = vset.pattern.permute.xlu0 0
          %5724 = vperm.xlu0 %5723, %v5590
          %v5725 = vpop.permute.xlu0 %5724
          %5728 = vset.pattern.permute.xlu0 0
          %5729 = vperm.xlu0 %5728, %v5591
          %v5730 = vpop.permute.xlu0 %5729
          %5733 = vset.pattern.permute.xlu0 0
          %5734 = vperm.xlu0 %5733, %v5592
          %v5735 = vpop.permute.xlu0 %5734
          %5738 = vset.pattern.permute.xlu0 0
          %5739 = vperm.xlu0 %5738, %v5593
          %v5740 = vpop.permute.xlu0 %5739
          %5743 = vset.pattern.permute.xlu0 0
          %5744 = vperm.xlu0 %5743, %v5594
          %v5745 = vpop.permute.xlu0 %5744
          %5748 = vset.pattern.permute.xlu0 0
          %5749 = vperm.xlu0 %5748, %v5595
          %v5750 = vpop.permute.xlu0 %5749
          %5753 = vset.pattern.permute.xlu0 0
          %5754 = vperm.xlu0 %5753, %v5596
          %v5755 = vpop.permute.xlu0 %5754
          %5758 = vset.pattern.permute.xlu0 0
          %5759 = vperm.xlu0 %5758, %v5597
          %v5760 = vpop.permute.xlu0 %5759
          %5763 = vset.pattern.permute.xlu0 0
          %5764 = vperm.xlu0 %5763, %v5598
          %v5765 = vpop.permute.xlu0 %5764
          %5768 = vset.pattern.permute.xlu0 0
          %5769 = vperm.xlu0 %5768, %v5599
          %v5770 = vpop.permute.xlu0 %5769
          %5773 = vset.pattern.permute.xlu0 0
          %5774 = vperm.xlu0 %5773, %v5600
          %v5775 = vpop.permute.xlu0 %5774
          %5778 = vset.pattern.permute.xlu0 0
          %5779 = vperm.xlu0 %5778, %v5601
          %v5780 = vpop.permute.xlu0 %5779
          %5783 = vset.pattern.permute.xlu0 0
          %5784 = vperm.xlu0 %5783, %v5602
          %v5785 = vpop.permute.xlu0 %5784
          %5788 = vset.pattern.permute.xlu0 0
          %5789 = vperm.xlu0 %5788, %v5603
          %v5790 = vpop.permute.xlu0 %5789
          %5793 = vset.pattern.permute.xlu0 0
          %5794 = vperm.xlu0 %5793, %v5604
          %v5795 = vpop.permute.xlu0 %5794
          %v5797 = vmul.f32 %v5605, %v5640
          %v5798 = vmul.f32 %v5606, %v5645
          %v5799 = vmul.f32 %v5607, %v5650
          %v5800 = vmul.f32 %v5608, %v5655
          %v5801 = vmul.f32 %v5609, %v5660
          %v5802 = vmul.f32 %v5610, %v5665
          %v5803 = vmul.f32 %v5611, %v5670
          %v5804 = vmul.f32 %v5612, %v5675
          %v5805 = vmul.f32 %v5613, %v5680
          %v5806 = vmul.f32 %v5614, %v5685
          %v5807 = vmul.f32 %v5615, %v5690
          %v5808 = vmul.f32 %v5616, %v5695
          %v5809 = vmul.f32 %v5617, %v5700
          %v5810 = vmul.f32 %v5618, %v5705
          %v5811 = vmul.f32 %v5619, %v5710
          %v5812 = vmul.f32 %v5620, %v5715
          %v5813 = vmul.f32 %v5621, %v5720
          %v5814 = vmul.f32 %v5622, %v5725
          %v5815 = vmul.f32 %v5623, %v5730
          %v5816 = vmul.f32 %v5624, %v5735
          %v5817 = vmul.f32 %v5625, %v5740
          %v5818 = vmul.f32 %v5626, %v5745
          %v5819 = vmul.f32 %v5627, %v5750
          %v5820 = vmul.f32 %v5628, %v5755
          %v5821 = vmul.f32 %v5629, %v5760
          %v5822 = vmul.f32 %v5630, %v5765
          %v5823 = vmul.f32 %v5631, %v5770
          %v5824 = vmul.f32 %v5632, %v5775
          %v5825 = vmul.f32 %v5633, %v5780
          %v5826 = vmul.f32 %v5634, %v5785
          %v5827 = vmul.f32 %v5635, %v5790
          %v5828 = vmul.f32 %v5636, %v5795
          %5829 = vst [vmem:[%s436] sm:$0xff] %v5797
          %5830 = vst [vmem:[%s436 + $0x8] sm:$0xff] %v5798
          %5831 = vst [vmem:[%s436 + $0x10] sm:$0xff] %v5799
          %5832 = vst [vmem:[%s436 + $0x18] sm:$0xff] %v5800
          %5833 = vst [vmem:[%s436 + $0x20] sm:$0xff] %v5801
          %5834 = vst [vmem:[%s436 + $0x28] sm:$0xff] %v5802
          %5835 = vst [vmem:[%s436 + $0x30] sm:$0xff] %v5803
          %5836 = vst [vmem:[%s436 + $0x38] sm:$0xff] %v5804
          %5837 = vst [vmem:[%s436 + $0x40] sm:$0xff] %v5805
          %5838 = vst [vmem:[%s436 + $0x48] sm:$0xff] %v5806
          %5839 = vst [vmem:[%s436 + $0x50] sm:$0xff] %v5807
          %5840 = vst [vmem:[%s436 + $0x58] sm:$0xff] %v5808
          %5841 = vst [vmem:[%s436 + $0x60] sm:$0xff] %v5809
          %5842 = vst [vmem:[%s436 + $0x68] sm:$0xff] %v5810
          %5843 = vst [vmem:[%s436 + $0x70] sm:$0xff] %v5811
          %5844 = vst [vmem:[%s436 + $0x78] sm:$0xff] %v5812
          %5845 = vst [vmem:[%s436 + $0x80] sm:$0xff] %v5813
          %5846 = vst [vmem:[%s436 + $0x88] sm:$0xff] %v5814
          %5847 = vst [vmem:[%s436 + $0x90] sm:$0xff] %v5815
          %5848 = vst [vmem:[%s436 + $0x98] sm:$0xff] %v5816
          %5849 = vst [vmem:[%s436 + $0xa0] sm:$0xff] %v5817
          %5850 = vst [vmem:[%s436 + $0xa8] sm:$0xff] %v5818
          %5851 = vst [vmem:[%s436 + $0xb0] sm:$0xff] %v5819
          %5852 = vst [vmem:[%s436 + $0xb8] sm:$0xff] %v5820
          %5853 = vst [vmem:[%s436 + $0xc0] sm:$0xff] %v5821
          %5854 = vst [vmem:[%s436 + $0xc8] sm:$0xff] %v5822
          %5855 = vst [vmem:[%s436 + $0xd0] sm:$0xff] %v5823
          %5856 = vst [vmem:[%s436 + $0xd8] sm:$0xff] %v5824
          %5857 = vst [vmem:[%s436 + $0xe0] sm:$0xff] %v5825
          %5858 = vst [vmem:[%s436 + $0xe8] sm:$0xff] %v5826
          %5859 = vst [vmem:[%s436 + $0xf0] sm:$0xff] %v5827
          %5860 = vst [vmem:[%s436 + $0xf8] sm:$0xff] %v5828
        $region68: #{tpu_custom_call.1} parent=39 // pred_fallthru
          _
        %s5861 = sand.u32 %s227, 1
        %s5862 = scalar_lea.sflag [#allocation12], %s5861
        %s5863 = sand.u32 %s227, 1
        %s5864 = smul.addr %s5863, 256
        %s5865 = scalar_lea.vmem [#allocation16], %s5864
        // Predicated region
        $region69: #{tpu_custom_call.1} parent=39 // pred_check
          %p5866 = pneg %p237
        $region70: #{tpu_custom_call.1} parent=39 // pred_check_branch
          %5868 = sbr.rel (%p5866) target = $region72
        $region71: #{tpu_custom_call.1} parent=39 // pred_region
          %s5869 = sld [smem:[#allocation7 + %s49]]
          %s5870 = smul.u32 32, %s5869
          %s5872 = ssub.s32 4096, 4096
          %5873 = vsyncadd %s5862, %s5872
          %s5874 = smul.addr %s5870, 2
          %s5875 = sadd.s32 %s48, %s5874
          %s5876 = smul.addr %s47, 128
          %s5877 = sadd.s32 %s5875, %s5876
          %s5878 = smul.addr %s5877, 128
          %s5879 = scalar_lea.hbm %s8, %s5878
          %s5880 = sshll.u32 %s5865, 4
          %s5881 = int_to_ptr.vmem [resolvable:$true] %s5880
          %5886 = dma.vmem_to_hbm [thread:$0]  %s5881, 4096, %s5879, %s5862, 128, 256, 8
        $region72: #{tpu_custom_call.1} parent=39 // pred_fallthru
          _
      $region40: #{tpu_custom_call.1} parent=5 // pred_fallthru
        _
      %p5887 = scmp.le.s32.totalorder 2, %s37
      // Predicated region
      $region73: #{tpu_custom_call.1} parent=5 // pred_check
        %p5888 = pneg %p5887
      $region74: #{tpu_custom_call.1} parent=5 // pred_check_branch
        %5890 = sbr.rel (%p5888) target = $region76
      $region75: #{tpu_custom_call.1} parent=5 // pred_region
        %s5891 = ssub.s32 %s37, 2
        // Predicated region
        $region77: #{tpu_custom_call.1} parent=75 // pred_check
          %p5892 = pneg %p243
        $region78: #{tpu_custom_call.1} parent=75 // pred_check_branch
          %5894 = sbr.rel (%p5892) target = $region80
        $region79: #{tpu_custom_call.1} parent=75 // pred_region
          %s5895 = sand.u32 %s228, 1
          %s5896 = scalar_lea.sflag [#allocation12], %s5895
          %s5897 = sand.u32 %s228, 1
          %s5898 = smul.addr %s5897, 256
          %s5899 = scalar_lea.vmem [#allocation16], %s5898
          %5900 = dma.done %s5896, 4096
        $region80: #{tpu_custom_call.1} parent=75 // pred_fallthru
          _
      $region76: #{tpu_custom_call.1} parent=5 // pred_fallthru
        _
    $region6: #{tpu_custom_call.1} parent=1 // loop_footer
      %s41 = sadd.s32 1, %s37
    $region7: #{tpu_custom_call.1} parent=1 // loop_footer_branch
      %36 = sbr.rel target = $region3
    $region8: #{tpu_custom_call.1} parent=1 // loop_exit
      _
    %5901 = vsyncpa [#allocation11], 1
    %s5902 = scalar_lea.sflag [#allocation11], 1
    %5903 = vsyncpa %s5902, 1
    %5904 = vsyncpa [#allocation14], 1
    %s5905 = scalar_lea.sflag [#allocation14], 1
    %5906 = vsyncpa %s5905, 1
    %5907 = vsyncpa [#allocation12], 1
    %s5908 = scalar_lea.sflag [#allocation12], 1
    %5909 = vsyncpa %s5908, 1

</llo_original>
